<compile_context>
chip_gen: v7x
topology: tpu7x:2x2x1
jax: 0.10.0
libtpu: 0.0.40
codegen_flags: <defaults>
</compile_context>

<pallas_src>
import functools

import jax
import jax.numpy as jnp
from jax.experimental import pallas as pl
from jax.experimental.pallas import tpu as pltpu

_MM_TM = 256   # matmul row tile
_EW_TM = 512   # elementwise row tile


def _round_up(x, m):
    return (x + m - 1) // m * m


def _row_tile(m, target):
    # bf16 blocks: keep the sublane (row) tile a multiple of 16.
    return target if m >= target else _round_up(max(m, 1), 16)


# ----------------------------------------------------------------------------
# Pallas kernels
# ----------------------------------------------------------------------------
def _mm_stats_kernel(a_ref, w_ref, o_ref, stats_ref):
    """bf16 x bf16 -> f32 MXU matmul.  Also emits per-tile channel sum (row 0)
    and sum-of-squares (row 1) so BatchNorm stats never re-read the output."""
    acc = jnp.dot(a_ref[...], w_ref[...], preferred_element_type=jnp.float32)
    o_ref[...] = acc.astype(o_ref.dtype)
    s = jnp.sum(acc, axis=0, keepdims=True)            # (1, Nc)
    ss = jnp.sum(acc * acc, axis=0, keepdims=True)     # (1, Nc)
    row = jax.lax.broadcasted_iota(jnp.int32, (8, acc.shape[1]), 0)
    stats_ref[...] = jnp.where(row == 0, s, jnp.where(row == 1, ss, 0.0))[None]


def _mm_bias_tanh_kernel(a_ref, w_ref, b_ref, o_ref):
    """Final conv: matmul + bias + tanh fused in the epilogue (EUP slot)."""
    acc = jnp.dot(a_ref[...], w_ref[...], preferred_element_type=jnp.float32)
    o_ref[...] = jnp.tanh(acc + b_ref[...]).astype(o_ref.dtype)


def _affine_kernel(x_ref, s_ref, t_ref, o_ref, *, act):
    y = x_ref[...].astype(jnp.float32) * s_ref[...] + t_ref[...]
    if act == "relu":
        y = jnp.maximum(y, 0.0)
    elif act == "tanh":
        y = jnp.tanh(y)
    o_ref[...] = y.astype(o_ref.dtype)


def _affine_res_kernel(x_ref, s_ref, t_ref, r_ref, o_ref, *, act):
    y = (x_ref[...].astype(jnp.float32) * s_ref[...] + t_ref[...]
         + r_ref[...].astype(jnp.float32))
    if act == "relu":
        y = jnp.maximum(y, 0.0)
    o_ref[...] = y.astype(o_ref.dtype)


# ----------------------------------------------------------------------------
# Pallas-call wrappers
# ----------------------------------------------------------------------------
def matmul_stats(a, w, out_dtype=jnp.bfloat16):
    """a: (M, K) bf16, w: (K, Nc) bf16 -> (out (M, Nc), chan_sum, chan_sumsq)."""
    M, K = a.shape
    Nc = w.shape[1]
    tm = _row_tile(M, _MM_TM)
    Mp = _round_up(M, tm)
    if Mp != M:
        a = jnp.pad(a, ((0, Mp - M), (0, 0)))   # zero rows: no effect on sums
    G = Mp // tm

    out, stats = pl.pallas_call(
        _mm_stats_kernel,
        out_shape=(jax.ShapeDtypeStruct((Mp, Nc), out_dtype),
                   jax.ShapeDtypeStruct((G, 8, Nc), jnp.float32)),
        grid=(G,),
        in_specs=[
            pl.BlockSpec((tm, K), lambda i: (i, 0)),
            pl.BlockSpec((K, Nc), lambda i: (0, 0)),
        ],
        out_specs=(
            pl.BlockSpec((tm, Nc), lambda i: (i, 0)),
            pl.BlockSpec((1, 8, Nc), lambda i: (i, 0, 0)),
        ),
        compiler_params=pltpu.CompilerParams(dimension_semantics=("parallel",)),
        cost_estimate=pl.CostEstimate(
            flops=2 * Mp * K * Nc,
            transcendentals=0,
            bytes_accessed=Mp * K * 2 + K * Nc * 2 + Mp * Nc * 2 + G * 8 * Nc * 4),
    )(a, w)

    ch_sum = jnp.sum(stats[:, 0, :], axis=0)
    ch_sumsq = jnp.sum(stats[:, 1, :], axis=0)
    if Mp != M:
        out = out[:M]
    return out, ch_sum, ch_sumsq


def matmul_bias_tanh(a, w, b):
    """a: (M, K) bf16, w: (K, Nc) bf16, b: (Nc,) -> f32 tanh(a@w + b)."""
    M, K = a.shape
    Nc = w.shape[1]
    tm = _row_tile(M, _MM_TM)
    Mp = _round_up(M, tm)
    if Mp != M:
        a = jnp.pad(a, ((0, Mp - M), (0, 0)))
    b2 = b.reshape(1, Nc).astype(jnp.float32)

    out = pl.pallas_call(
        _mm_bias_tanh_kernel,
        out_shape=jax.ShapeDtypeStruct((Mp, Nc), jnp.float32),
        grid=(Mp // tm,),
        in_specs=[
            pl.BlockSpec((tm, K), lambda i: (i, 0)),
            pl.BlockSpec((K, Nc), lambda i: (0, 0)),
            pl.BlockSpec((1, Nc), lambda i: (0, 0)),
        ],
        out_specs=pl.BlockSpec((tm, Nc), lambda i: (i, 0)),
        compiler_params=pltpu.CompilerParams(dimension_semantics=("parallel",)),
        cost_estimate=pl.CostEstimate(
            flops=2 * Mp * K * Nc,
            transcendentals=Mp * Nc,
            bytes_accessed=Mp * K * 2 + K * Nc * 2 + Mp * Nc * 4),
    )(a, w, b2)
    return out[:M] if Mp != M else out


def affine_act(x2d, scale, shift, residual=None, act="none",
               out_dtype=jnp.bfloat16):
    """y = x*scale + shift (+ residual) ; activation.  x2d/residual bf16."""
    M, C = x2d.shape
    tm = _row_tile(M, _EW_TM)
    Mp = _round_up(M, tm)
    if Mp != M:
        x2d = jnp.pad(x2d, ((0, Mp - M), (0, 0)))
        if residual is not None:
            residual = jnp.pad(residual, ((0, Mp - M), (0, 0)))
    s = scale.reshape(1, C).astype(jnp.float32)
    t = shift.reshape(1, C).astype(jnp.float32)
    grid = (Mp // tm,)

    if residual is None:
        out = pl.pallas_call(
            functools.partial(_affine_kernel, act=act),
            out_shape=jax.ShapeDtypeStruct((Mp, C), out_dtype),
            grid=grid,
            in_specs=[
                pl.BlockSpec((tm, C), lambda i: (i, 0)),
                pl.BlockSpec((1, C), lambda i: (0, 0)),
                pl.BlockSpec((1, C), lambda i: (0, 0)),
            ],
            out_specs=pl.BlockSpec((tm, C), lambda i: (i, 0)),
            compiler_params=pltpu.CompilerParams(
                dimension_semantics=("parallel",)),
        )(x2d, s, t)
    else:
        out = pl.pallas_call(
            functools.partial(_affine_res_kernel, act=act),
            out_shape=jax.ShapeDtypeStruct((Mp, C), out_dtype),
            grid=grid,
            in_specs=[
                pl.BlockSpec((tm, C), lambda i: (i, 0)),
                pl.BlockSpec((1, C), lambda i: (0, 0)),
                pl.BlockSpec((1, C), lambda i: (0, 0)),
                pl.BlockSpec((tm, C), lambda i: (i, 0)),
            ],
            out_specs=pl.BlockSpec((tm, C), lambda i: (i, 0)),
            compiler_params=pltpu.CompilerParams(
                dimension_semantics=("parallel",)),
        )(x2d, s, t, residual)
    return out[:M] if Mp != M else out


# ----------------------------------------------------------------------------
# Conv / BN helpers (im2col in JAX glue, matmul + BN-stat fusion in Pallas)
# ----------------------------------------------------------------------------
def _im2col(x, KH, KW, stride):
    x = x.astype(jnp.bfloat16)
    N, H, W, Cin = x.shape
    OH = (H - KH) // stride + 1
    OW = (W - KW) // stride + 1
    cols = []
    for kh in range(KH):
        for kw in range(KW):
            cols.append(
                x[:, kh: kh + stride * (OH - 1) + 1: stride,
                     kw: kw + stride * (OW - 1) + 1: stride, :])
    patches = jnp.concatenate(cols, axis=-1).reshape(N * OH * OW, KH * KW * Cin)
    return patches, OH, OW


def _bn_scale_shift(ch_sum, ch_sumsq, count, gamma, beta, eps=1e-5):
    # Training-mode batch statistics (biased variance), as in nn.BatchNorm2d.
    mean = ch_sum / count
    var = jnp.maximum(ch_sumsq / count - mean * mean, 0.0)
    scale = gamma * jax.lax.rsqrt(var + eps)
    shift = beta - mean * scale
    return scale, shift


def conv_bn_act(x_pad, w, gamma, beta, stride=1, act="relu", residual=None):
    """x_pad: (N,Hp,Wp,Cin) already spatially padded, bf16; w: (KH,KW,Cin,Cout)."""
    N = x_pad.shape[0]
    KH, KW, Cin, Cout = w.shape
    patches, OH, OW = _im2col(x_pad, KH, KW, stride)
    out2d, s, ss = matmul_stats(
        patches, w.reshape(KH * KW * Cin, Cout).astype(jnp.bfloat16))
    M = N * OH * OW
    scale, shift = _bn_scale_shift(s, ss, M, gamma, beta)
    r2d = None if residual is None else residual.reshape(M, Cout)
    y2d = affine_act(out2d, scale, shift, residual=r2d, act=act)
    return y2d.reshape(N, OH, OW, Cout)


def _shift(x, axis):
    """x shifted by +1 along `axis` with zero fill at the end."""
    pad = [(0, 0)] * x.ndim
    pad[axis] = (0, 1)
    xp = jnp.pad(x, pad)
    idx = [slice(None)] * x.ndim
    idx[axis] = slice(1, None)
    return xp[tuple(idx)]


def conv_transpose_bn_relu(x, w_t, gamma, beta):
    """ConvTranspose2d(k=3, s=2, p=1, op=1, bias=False) + BN + ReLU via a
    4-phase sub-pixel decomposition (no zero-dilated input)."""
    N, H, W, Cin = x.shape
    Cout = w_t.shape[1]
    wt = w_t.astype(jnp.bfloat16)          # (Cin, Cout, 3, 3)
    x = x.astype(jnp.bfloat16)

    xw = _shift(x, axis=2)                 # x[:, :, n+1, :]
    xh = _shift(x, axis=1)                 # x[:, m+1, :, :]
    xhw = _shift(xh, axis=2)               # x[:, m+1, n+1, :]
    M = N * H * W

    def flat(t):
        return t.reshape(M, Cin)

    # even-y / even-x : tap (1,1)
    p_ee, s_ee, q_ee = matmul_stats(flat(x), wt[:, :, 1, 1])
    # even-y / odd-x : taps (1,2) on x, (1,0) on x shifted in W
    p_eo, s_eo, q_eo = matmul_stats(
        jnp.concatenate([flat(x), flat(xw)], axis=-1),
        jnp.concatenate([wt[:, :, 1, 2], wt[:, :, 1, 0]], axis=0))
    # odd-y / even-x : taps (2,1) on x, (0,1) on x shifted in H
    p_oe, s_oe, q_oe = matmul_stats(
        jnp.concatenate([flat(x), flat(xh)], axis=-1),
        jnp.concatenate([wt[:, :, 2, 1], wt[:, :, 0, 1]], axis=0))
    # odd-y / odd-x : taps (2,2), (2,0), (0,2), (0,0)
    p_oo, s_oo, q_oo = matmul_stats(
        jnp.concatenate([flat(x), flat(xw), flat(xh), flat(xhw)], axis=-1),
        jnp.concatenate([wt[:, :, 2, 2], wt[:, :, 2, 0],
                         wt[:, :, 0, 2], wt[:, :, 0, 0]], axis=0))

    # interleave the four phases into the 2x-upsampled output
    ph = [t.reshape(N, H, W, Cout) for t in (p_ee, p_eo, p_oe, p_oo)]
    top = jnp.stack([ph[0], ph[1]], axis=3)       # (N,H,W,2,C)
    bot = jnp.stack([ph[2], ph[3]], axis=3)       # (N,H,W,2,C)
    y = jnp.stack([top, bot], axis=2).reshape(N, 2 * H, 2 * W, Cout)

    Mtot = N * 4 * H * W
    scale, shift = _bn_scale_shift(s_ee + s_eo + s_oe + s_oo,
                                   q_ee + q_eo + q_oe + q_oo,
                                   Mtot, gamma, beta)
    y2 = affine_act(y.reshape(Mtot, Cout), scale, shift, act="relu")
    return y2.reshape(N, 2 * H, 2 * W, Cout)


def conv_bias_tanh(x_pad, w, b):
    """Final 7x7 conv with bias + tanh fused into the matmul epilogue."""
    N = x_pad.shape[0]
    KH, KW, Cin, Cout = w.shape
    patches, OH, OW = _im2col(x_pad, KH, KW, 1)
    out = matmul_bias_tanh(
        patches, w.reshape(KH * KW * Cin, Cout).astype(jnp.bfloat16), b)
    return out.reshape(N, OH, OW, Cout)


# ----------------------------------------------------------------------------
# ResnetGenerator forward
# ----------------------------------------------------------------------------
def init_params(key, input_nc, output_nc, ngf, n_blocks):
    p = {}
    keys = iter(jax.random.split(key, 64))
    gain = 0.02

    def normal(shape):
        return (gain * jax.random.normal(next(keys), shape)).astype(jnp.float32)

    # encoder: ReflPad(3) -> Conv 7x7 (no bias) -> BN -> ReLU
    p["enc_c1_w"] = normal((7, 7, input_nc, ngf))
    p["enc_bn1_g"] = jnp.ones((ngf,), jnp.float32)
    p["enc_bn1_b"] = jnp.zeros((ngf,), jnp.float32)
    # two downsampling convs 3x3 stride 2 (no bias)
    for i in range(2):
        mult = 2 ** i
        cin, cout = ngf * mult, ngf * mult * 2
        p[f"enc_d{i}_w"] = normal((3, 3, cin, cout))
        p[f"enc_d{i}_bn_g"] = jnp.ones((cout,), jnp.float32)
        p[f"enc_d{i}_bn_b"] = jnp.zeros((cout,), jnp.float32)
    # resnet blocks at dim ngf*4
    dim = ngf * 4
    for bi in range(n_blocks):
        p[f"rb{bi}_w1"] = normal((3, 3, dim, dim))
        p[f"rb{bi}_bn1_g"] = jnp.ones((dim,), jnp.float32)
        p[f"rb{bi}_bn1_b"] = jnp.zeros((dim,), jnp.float32)
        p[f"rb{bi}_w2"] = normal((3, 3, dim, dim))
        p[f"rb{bi}_bn2_g"] = jnp.ones((dim,), jnp.float32)
        p[f"rb{bi}_bn2_b"] = jnp.zeros((dim,), jnp.float32)
    # decoder: two ConvTranspose2d (no bias), PyTorch weight layout (Cin,Cout,3,3)
    for i in range(2):
        mult = 2 ** (2 - i)
        cin, cout = ngf * mult, ngf * mult // 2
        p[f"dec_u{i}_w"] = normal((cin, cout, 3, 3))
        p[f"dec_u{i}_bn_g"] = jnp.ones((cout,), jnp.float32)
        p[f"dec_u{i}_bn_b"] = jnp.zeros((cout,), jnp.float32)
    # final: ReflPad(3) -> Conv 7x7 (with bias) -> Tanh
    p["dec_cf_w"] = normal((7, 7, ngf, output_nc))
    p["dec_cf_b"] = jnp.zeros((output_nc,), jnp.float32)
    return p


def _reflect_pad(x, k):
    return jnp.pad(x, ((0, 0), (k, k), (k, k), (0, 0)), mode="reflect")


def resnet_generator_forward(x_nchw, params, n_blocks):
    # NCHW -> NHWC, activations carried in bf16
    x = jnp.transpose(x_nchw, (0, 2, 3, 1)).astype(jnp.bfloat16)

    # --- encoder ---
    h = conv_bn_act(_reflect_pad(x, 3), params["enc_c1_w"],
                    params["enc_bn1_g"], params["enc_bn1_b"], act="relu")
    for i in range(2):
        hp = jnp.pad(h, ((0, 0), (1, 1), (1, 1), (0, 0)))   # zero pad = padding 1
        h = conv_bn_act(hp, params[f"enc_d{i}_w"],
                        params[f"enc_d{i}_bn_g"], params[f"enc_d{i}_bn_b"],
                        stride=2, act="relu")

    for bi in range(n_blocks):
        y = conv_bn_act(_reflect_pad(h, 1), params[f"rb{bi}_w1"],
                        params[f"rb{bi}_bn1_g"], params[f"rb{bi}_bn1_b"],
                        act="relu")
        # second conv + BN + skip connection fused (no activation on the sum)
        h = conv_bn_act(_reflect_pad(y, 1), params[f"rb{bi}_w2"],
                        params[f"rb{bi}_bn2_g"], params[f"rb{bi}_bn2_b"],
                        act="none", residual=h)

    # --- decoder ---
    for i in range(2):
        h = conv_transpose_bn_relu(h, params[f"dec_u{i}_w"],
                                   params[f"dec_u{i}_bn_g"],
                                   params[f"dec_u{i}_bn_b"])

    out = conv_bias_tanh(_reflect_pad(h, 3), params["dec_cf_w"],
                         params["dec_cf_b"])
    return jnp.transpose(out, (0, 3, 1, 2)).astype(jnp.float32)   # NHWC -> NCHW


if __name__ == "__main__":
    # small, shape-consistent configuration
    input_nc, output_nc, ngf, n_blocks = 4, 4, 8, 2
    N, H, W = 2, 16, 16

    key = jax.random.PRNGKey(0)
    k_x, k_p = jax.random.split(key)
    x = jax.random.normal(k_x, (N, input_nc, H, W), dtype=jnp.float32)
    params = init_params(k_p, input_nc, output_nc, ngf, n_blocks)

    fwd = jax.jit(functools.partial(resnet_generator_forward, n_blocks=n_blocks))
    out = fwd(x, params)
    out = jax.block_until_ready(out)

    assert out.shape == (N, output_nc, H, W), out.shape
    assert bool(jnp.all(jnp.isfinite(out)))
    print("KERNEL_OK")
</pallas_src>

<mosaic_0001>
module attributes {stable_mosaic.version = 11 : i64} {
  func.func @_mm_stats_kernel(%arg0: i32, %arg1: memref<256x196xbf16, #tpu.memory_space<vmem>>, %arg2: memref<196x8xbf16, #tpu.memory_space<vmem>>, %arg3: memref<256x8xbf16, #tpu.memory_space<vmem>>, %arg4: memref<1x8x8xf32, #tpu.memory_space<vmem>>) attributes {dimension_semantics = [#tpu.dimension_semantics<parallel>], iteration_bounds = array<i64: 2>, scalar_prefetch = 0 : i64, scratch_operands = 0 : i64, tpu.core_type = #tpu.core_type<tc>, window_params = [{transform_indices = @transform_0, window_bounds = array<i64: 256, 196>}, {pipeline_mode = #tpu.pipeline_mode<synchronous>, transform_indices = @transform_1, window_bounds = array<i64: 196, 8>}, {transform_indices = @transform_2, window_bounds = array<i64: 256, 8>}, {transform_indices = @transform_3, window_bounds = array<i64: 1, 8, 8>}]} {
    %c0 = arith.constant 0 : index
    %c0_0 = arith.constant 0 : index
    %0 = vector.load %arg1[%c0, %c0_0] : memref<256x196xbf16, #tpu.memory_space<vmem>>, vector<256x196xbf16>
    %c0_1 = arith.constant 0 : index
    %c0_2 = arith.constant 0 : index
    %1 = vector.load %arg2[%c0_1, %c0_2] : memref<196x8xbf16, #tpu.memory_space<vmem>>, vector<196x8xbf16>
    %cst = arith.constant dense<0.000000e+00> : vector<256x8xf32>
    %2 = tpu.matmul %0, %1, %cst {dimension_numbers = #tpu.dot_dimension_numbers<[1], [0], [0], [1], [0, 0, 1, 1], [], []>} : vector<256x196xbf16>, vector<196x8xbf16>, vector<256x8xf32> -> vector<256x8xf32>
    %3 = arith.truncf %2 : vector<256x8xf32> to vector<256x8xbf16>
    %c0_3 = arith.constant 0 : index
    %c0_4 = arith.constant 0 : index
    %4 = vector.load %arg3[%c0_3, %c0_4] : memref<256x8xbf16, #tpu.memory_space<vmem>>, vector<256x8xbf16>
    tpu.vector_store %arg3[%c0_3, %c0_4], %3 {strides = array<i32>} : memref<256x8xbf16, #tpu.memory_space<vmem>>, vector<256x8xbf16>,
    %cst_5 = arith.constant dense<0.000000e+00> : vector<8xf32>
    %5 = vector.multi_reduction <add>, %2, %cst_5 [0] : vector<256x8xf32> to vector<8xf32>
    %6 = vector.shape_cast %5 : vector<8xf32> to vector<1x8xf32>
    %7 = arith.mulf %2, %2 : vector<256x8xf32>
    %cst_6 = arith.constant dense<0.000000e+00> : vector<8xf32>
    %8 = vector.multi_reduction <add>, %7, %cst_6 [0] : vector<256x8xf32> to vector<8xf32>
    %9 = vector.shape_cast %8 : vector<8xf32> to vector<1x8xf32>
    %10 = tpu.iota {dimensions = array<i32: 0>} : vector<8x8xi32>
    %c0_i32 = arith.constant 0 : i32
    %11 = vector.broadcast %c0_i32 : i32 to vector<8x8xi32>
    %12 = arith.cmpi eq, %10, %11 : vector<8x8xi32>
    %c1_i32 = arith.constant 1 : i32
    %13 = vector.broadcast %c1_i32 : i32 to vector<8x8xi32>
    %14 = arith.cmpi eq, %10, %13 : vector<8x8xi32>
    %cst_7 = arith.constant 0.000000e+00 : f32
    %15 = vector.shape_cast %9 : vector<1x8xf32> to vector<1x8xf32>
    %16 = vector.broadcast %15 : vector<1x8xf32> to vector<8x8xf32>
    %17 = vector.broadcast %cst_7 : f32 to vector<8x8xf32>
    %18 = arith.select %14, %16, %17 : vector<8x8xi1>, vector<8x8xf32>
    %19 = vector.shape_cast %6 : vector<1x8xf32> to vector<1x8xf32>
    %20 = vector.broadcast %19 : vector<1x8xf32> to vector<8x8xf32>
    %21 = arith.select %12, %20, %18 : vector<8x8xi1>, vector<8x8xf32>
    %22 = vector.shape_cast %21 : vector<8x8xf32> to vector<1x8x8xf32>
    %c0_8 = arith.constant 0 : index
    %c0_9 = arith.constant 0 : index
    %c0_10 = arith.constant 0 : index
    %23 = vector.load %arg4[%c0_8, %c0_9, %c0_10] : memref<1x8x8xf32, #tpu.memory_space<vmem>>, vector<1x8x8xf32>
    tpu.vector_store %arg4[%c0_8, %c0_9, %c0_10], %22 {strides = array<i32>} : memref<1x8x8xf32, #tpu.memory_space<vmem>>, vector<1x8x8xf32>,
    return
  }
  func.func @transform_0(%arg0: i32) -> (i32, i32) {
    %c0_i32 = arith.constant 0 : i32
    %c0_i32_0 = arith.constant 0 : i32
    return %arg0, %c0_i32 : i32, i32
  }
  func.func @transform_1(%arg0: i32) -> (i32, i32) {
    %c0_i32 = arith.constant 0 : i32
    %c0_i32_0 = arith.constant 0 : i32
    %c0_i32_1 = arith.constant 0 : i32
    return %c0_i32, %c0_i32_0 : i32, i32
  }
  func.func @transform_2(%arg0: i32) -> (i32, i32) {
    %c0_i32 = arith.constant 0 : i32
    %c0_i32_0 = arith.constant 0 : i32
    return %arg0, %c0_i32 : i32, i32
  }
  func.func @transform_3(%arg0: i32) -> (i32, i32, i32) {
    %c0_i32 = arith.constant 0 : i32
    %c0_i32_0 = arith.constant 0 : i32
    %c0_i32_1 = arith.constant 0 : i32
    return %arg0, %c0_i32, %c0_i32_0 : i32, i32, i32
  }
}

module attributes {stable_mosaic.version = 11 : i64} {
  func.func @_affine_kernel(%arg0: i32, %arg1: memref<512x8xbf16, #tpu.memory_space<vmem>>, %arg2: memref<1x8xf32, #tpu.memory_space<vmem>>, %arg3: memref<1x8xf32, #tpu.memory_space<vmem>>, %arg4: memref<512x8xbf16, #tpu.memory_space<vmem>>) attributes {dimension_semantics = [#tpu.dimension_semantics<parallel>], iteration_bounds = array<i64: 1>, scalar_prefetch = 0 : i64, scratch_operands = 0 : i64, tpu.core_type = #tpu.core_type<tc>, window_params = [{transform_indices = @transform_0, window_bounds = array<i64: 512, 8>}, {pipeline_mode = #tpu.pipeline_mode<synchronous>, transform_indices = @transform_1, window_bounds = array<i64: 1, 8>}, {pipeline_mode = #tpu.pipeline_mode<synchronous>, transform_indices = @transform_2, window_bounds = array<i64: 1, 8>}, {transform_indices = @transform_3, window_bounds = array<i64: 512, 8>}]} {
    %c0 = arith.constant 0 : index
    %c0_0 = arith.constant 0 : index
    %0 = vector.load %arg1[%c0, %c0_0] : memref<512x8xbf16, #tpu.memory_space<vmem>>, vector<512x8xbf16>
    %1 = arith.extf %0 : vector<512x8xbf16> to vector<512x8xf32>
    %c0_1 = arith.constant 0 : index
    %c0_2 = arith.constant 0 : index
    %2 = vector.load %arg2[%c0_1, %c0_2] : memref<1x8xf32, #tpu.memory_space<vmem>>, vector<1x8xf32>
    %3 = vector.broadcast %2 : vector<1x8xf32> to vector<512x8xf32>
    %4 = arith.mulf %1, %3 : vector<512x8xf32>
    %c0_3 = arith.constant 0 : index
    %c0_4 = arith.constant 0 : index
    %5 = vector.load %arg3[%c0_3, %c0_4] : memref<1x8xf32, #tpu.memory_space<vmem>>, vector<1x8xf32>
    %6 = vector.broadcast %5 : vector<1x8xf32> to vector<512x8xf32>
    %7 = arith.addf %4, %6 : vector<512x8xf32>
    %cst = arith.constant 0.000000e+00 : f32
    %8 = vector.broadcast %cst : f32 to vector<512x8xf32>
    %9 = arith.maximumf %7, %8 : vector<512x8xf32>
    %10 = arith.truncf %9 : vector<512x8xf32> to vector<512x8xbf16>
    %c0_5 = arith.constant 0 : index
    %c0_6 = arith.constant 0 : index
    %11 = vector.load %arg4[%c0_5, %c0_6] : memref<512x8xbf16, #tpu.memory_space<vmem>>, vector<512x8xbf16>
    tpu.vector_store %arg4[%c0_5, %c0_6], %10 {strides = array<i32>} : memref<512x8xbf16, #tpu.memory_space<vmem>>, vector<512x8xbf16>,
    return
  }
  func.func @transform_0(%arg0: i32) -> (i32, i32) {
    %c0_i32 = arith.constant 0 : i32
    %c0_i32_0 = arith.constant 0 : i32
    return %arg0, %c0_i32 : i32, i32
  }
  func.func @transform_1(%arg0: i32) -> (i32, i32) {
    %c0_i32 = arith.constant 0 : i32
    %c0_i32_0 = arith.constant 0 : i32
    %c0_i32_1 = arith.constant 0 : i32
    return %c0_i32, %c0_i32_0 : i32, i32
  }
  func.func @transform_2(%arg0: i32) -> (i32, i32) {
    %c0_i32 = arith.constant 0 : i32
    %c0_i32_0 = arith.constant 0 : i32
    %c0_i32_1 = arith.constant 0 : i32
    return %c0_i32, %c0_i32_0 : i32, i32
  }
  func.func @transform_3(%arg0: i32) -> (i32, i32) {
    %c0_i32 = arith.constant 0 : i32
    %c0_i32_0 = arith.constant 0 : i32
    return %arg0, %c0_i32 : i32, i32
  }
}

module attributes {stable_mosaic.version = 11 : i64} {
  func.func @_mm_stats_kernel(%arg0: i32, %arg1: memref<128x72xbf16, #tpu.memory_space<vmem>>, %arg2: memref<72x16xbf16, #tpu.memory_space<vmem>>, %arg3: memref<128x16xbf16, #tpu.memory_space<vmem>>, %arg4: memref<1x8x16xf32, #tpu.memory_space<vmem>>) attributes {dimension_semantics = [#tpu.dimension_semantics<parallel>], iteration_bounds = array<i64: 1>, scalar_prefetch = 0 : i64, scratch_operands = 0 : i64, tpu.core_type = #tpu.core_type<tc>, window_params = [{transform_indices = @transform_0, window_bounds = array<i64: 128, 72>}, {pipeline_mode = #tpu.pipeline_mode<synchronous>, transform_indices = @transform_1, window_bounds = array<i64: 72, 16>}, {transform_indices = @transform_2, window_bounds = array<i64: 128, 16>}, {transform_indices = @transform_3, window_bounds = array<i64: 1, 8, 16>}]} {
    %c0 = arith.constant 0 : index
    %c0_0 = arith.constant 0 : index
    %0 = vector.load %arg1[%c0, %c0_0] : memref<128x72xbf16, #tpu.memory_space<vmem>>, vector<128x72xbf16>
    %c0_1 = arith.constant 0 : index
    %c0_2 = arith.constant 0 : index
    %1 = vector.load %arg2[%c0_1, %c0_2] : memref<72x16xbf16, #tpu.memory_space<vmem>>, vector<72x16xbf16>
    %cst = arith.constant dense<0.000000e+00> : vector<128x16xf32>
    %2 = tpu.matmul %0, %1, %cst {dimension_numbers = #tpu.dot_dimension_numbers<[1], [0], [0], [1], [0, 0, 1, 1], [], []>} : vector<128x72xbf16>, vector<72x16xbf16>, vector<128x16xf32> -> vector<128x16xf32>
    %3 = arith.truncf %2 : vector<128x16xf32> to vector<128x16xbf16>
    %c0_3 = arith.constant 0 : index
    %c0_4 = arith.constant 0 : index
    %4 = vector.load %arg3[%c0_3, %c0_4] : memref<128x16xbf16, #tpu.memory_space<vmem>>, vector<128x16xbf16>
    tpu.vector_store %arg3[%c0_3, %c0_4], %3 {strides = array<i32>} : memref<128x16xbf16, #tpu.memory_space<vmem>>, vector<128x16xbf16>,
    %cst_5 = arith.constant dense<0.000000e+00> : vector<16xf32>
    %5 = vector.multi_reduction <add>, %2, %cst_5 [0] : vector<128x16xf32> to vector<16xf32>
    %6 = vector.shape_cast %5 : vector<16xf32> to vector<1x16xf32>
    %7 = arith.mulf %2, %2 : vector<128x16xf32>
    %cst_6 = arith.constant dense<0.000000e+00> : vector<16xf32>
    %8 = vector.multi_reduction <add>, %7, %cst_6 [0] : vector<128x16xf32> to vector<16xf32>
    %9 = vector.shape_cast %8 : vector<16xf32> to vector<1x16xf32>
    %10 = tpu.iota {dimensions = array<i32: 0>} : vector<8x16xi32>
    %c0_i32 = arith.constant 0 : i32
    %11 = vector.broadcast %c0_i32 : i32 to vector<8x16xi32>
    %12 = arith.cmpi eq, %10, %11 : vector<8x16xi32>
    %c1_i32 = arith.constant 1 : i32
    %13 = vector.broadcast %c1_i32 : i32 to vector<8x16xi32>
    %14 = arith.cmpi eq, %10, %13 : vector<8x16xi32>
    %cst_7 = arith.constant 0.000000e+00 : f32
    %15 = vector.shape_cast %9 : vector<1x16xf32> to vector<1x16xf32>
    %16 = vector.broadcast %15 : vector<1x16xf32> to vector<8x16xf32>
    %17 = vector.broadcast %cst_7 : f32 to vector<8x16xf32>
    %18 = arith.select %14, %16, %17 : vector<8x16xi1>, vector<8x16xf32>
    %19 = vector.shape_cast %6 : vector<1x16xf32> to vector<1x16xf32>
    %20 = vector.broadcast %19 : vector<1x16xf32> to vector<8x16xf32>
    %21 = arith.select %12, %20, %18 : vector<8x16xi1>, vector<8x16xf32>
    %22 = vector.shape_cast %21 : vector<8x16xf32> to vector<1x8x16xf32>
    %c0_8 = arith.constant 0 : index
    %c0_9 = arith.constant 0 : index
    %c0_10 = arith.constant 0 : index
    %23 = vector.load %arg4[%c0_8, %c0_9, %c0_10] : memref<1x8x16xf32, #tpu.memory_space<vmem>>, vector<1x8x16xf32>
    tpu.vector_store %arg4[%c0_8, %c0_9, %c0_10], %22 {strides = array<i32>} : memref<1x8x16xf32, #tpu.memory_space<vmem>>, vector<1x8x16xf32>,
    return
  }
  func.func @transform_0(%arg0: i32) -> (i32, i32) {
    %c0_i32 = arith.constant 0 : i32
    %c0_i32_0 = arith.constant 0 : i32
    return %arg0, %c0_i32 : i32, i32
  }
  func.func @transform_1(%arg0: i32) -> (i32, i32) {
    %c0_i32 = arith.constant 0 : i32
    %c0_i32_0 = arith.constant 0 : i32
    %c0_i32_1 = arith.constant 0 : i32
    return %c0_i32, %c0_i32_0 : i32, i32
  }
  func.func @transform_2(%arg0: i32) -> (i32, i32) {
    %c0_i32 = arith.constant 0 : i32
    %c0_i32_0 = arith.constant 0 : i32
    return %arg0, %c0_i32 : i32, i32
  }
  func.func @transform_3(%arg0: i32) -> (i32, i32, i32) {
    %c0_i32 = arith.constant 0 : i32
    %c0_i32_0 = arith.constant 0 : i32
    %c0_i32_1 = arith.constant 0 : i32
    return %arg0, %c0_i32, %c0_i32_0 : i32, i32, i32
  }
}

module attributes {stable_mosaic.version = 11 : i64} {
  func.func @_affine_kernel(%arg0: i32, %arg1: memref<128x16xbf16, #tpu.memory_space<vmem>>, %arg2: memref<1x16xf32, #tpu.memory_space<vmem>>, %arg3: memref<1x16xf32, #tpu.memory_space<vmem>>, %arg4: memref<128x16xbf16, #tpu.memory_space<vmem>>) attributes {dimension_semantics = [#tpu.dimension_semantics<parallel>], iteration_bounds = array<i64: 1>, scalar_prefetch = 0 : i64, scratch_operands = 0 : i64, tpu.core_type = #tpu.core_type<tc>, window_params = [{transform_indices = @transform_0, window_bounds = array<i64: 128, 16>}, {pipeline_mode = #tpu.pipeline_mode<synchronous>, transform_indices = @transform_1, window_bounds = array<i64: 1, 16>}, {pipeline_mode = #tpu.pipeline_mode<synchronous>, transform_indices = @transform_2, window_bounds = array<i64: 1, 16>}, {transform_indices = @transform_3, window_bounds = array<i64: 128, 16>}]} {
    %c0 = arith.constant 0 : index
    %c0_0 = arith.constant 0 : index
    %0 = vector.load %arg1[%c0, %c0_0] : memref<128x16xbf16, #tpu.memory_space<vmem>>, vector<128x16xbf16>
    %1 = arith.extf %0 : vector<128x16xbf16> to vector<128x16xf32>
    %c0_1 = arith.constant 0 : index
    %c0_2 = arith.constant 0 : index
    %2 = vector.load %arg2[%c0_1, %c0_2] : memref<1x16xf32, #tpu.memory_space<vmem>>, vector<1x16xf32>
    %3 = vector.broadcast %2 : vector<1x16xf32> to vector<128x16xf32>
    %4 = arith.mulf %1, %3 : vector<128x16xf32>
    %c0_3 = arith.constant 0 : index
    %c0_4 = arith.constant 0 : index
    %5 = vector.load %arg3[%c0_3, %c0_4] : memref<1x16xf32, #tpu.memory_space<vmem>>, vector<1x16xf32>
    %6 = vector.broadcast %5 : vector<1x16xf32> to vector<128x16xf32>
    %7 = arith.addf %4, %6 : vector<128x16xf32>
    %cst = arith.constant 0.000000e+00 : f32
    %8 = vector.broadcast %cst : f32 to vector<128x16xf32>
    %9 = arith.maximumf %7, %8 : vector<128x16xf32>
    %10 = arith.truncf %9 : vector<128x16xf32> to vector<128x16xbf16>
    %c0_5 = arith.constant 0 : index
    %c0_6 = arith.constant 0 : index
    %11 = vector.load %arg4[%c0_5, %c0_6] : memref<128x16xbf16, #tpu.memory_space<vmem>>, vector<128x16xbf16>
    tpu.vector_store %arg4[%c0_5, %c0_6], %10 {strides = array<i32>} : memref<128x16xbf16, #tpu.memory_space<vmem>>, vector<128x16xbf16>,
    return
  }
  func.func @transform_0(%arg0: i32) -> (i32, i32) {
    %c0_i32 = arith.constant 0 : i32
    %c0_i32_0 = arith.constant 0 : i32
    return %arg0, %c0_i32 : i32, i32
  }
  func.func @transform_1(%arg0: i32) -> (i32, i32) {
    %c0_i32 = arith.constant 0 : i32
    %c0_i32_0 = arith.constant 0 : i32
    %c0_i32_1 = arith.constant 0 : i32
    return %c0_i32, %c0_i32_0 : i32, i32
  }
  func.func @transform_2(%arg0: i32) -> (i32, i32) {
    %c0_i32 = arith.constant 0 : i32
    %c0_i32_0 = arith.constant 0 : i32
    %c0_i32_1 = arith.constant 0 : i32
    return %c0_i32, %c0_i32_0 : i32, i32
  }
  func.func @transform_3(%arg0: i32) -> (i32, i32) {
    %c0_i32 = arith.constant 0 : i32
    %c0_i32_0 = arith.constant 0 : i32
    return %arg0, %c0_i32 : i32, i32
  }
}

module attributes {stable_mosaic.version = 11 : i64} {
  func.func @_mm_stats_kernel(%arg0: i32, %arg1: memref<32x144xbf16, #tpu.memory_space<vmem>>, %arg2: memref<144x32xbf16, #tpu.memory_space<vmem>>, %arg3: memref<32x32xbf16, #tpu.memory_space<vmem>>, %arg4: memref<1x8x32xf32, #tpu.memory_space<vmem>>) attributes {dimension_semantics = [#tpu.dimension_semantics<parallel>], iteration_bounds = array<i64: 1>, scalar_prefetch = 0 : i64, scratch_operands = 0 : i64, tpu.core_type = #tpu.core_type<tc>, window_params = [{transform_indices = @transform_0, window_bounds = array<i64: 32, 144>}, {pipeline_mode = #tpu.pipeline_mode<synchronous>, transform_indices = @transform_1, window_bounds = array<i64: 144, 32>}, {transform_indices = @transform_2, window_bounds = array<i64: 32, 32>}, {transform_indices = @transform_3, window_bounds = array<i64: 1, 8, 32>}]} {
    %c0 = arith.constant 0 : index
    %c0_0 = arith.constant 0 : index
    %0 = vector.load %arg1[%c0, %c0_0] : memref<32x144xbf16, #tpu.memory_space<vmem>>, vector<32x144xbf16>
    %c0_1 = arith.constant 0 : index
    %c0_2 = arith.constant 0 : index
    %1 = vector.load %arg2[%c0_1, %c0_2] : memref<144x32xbf16, #tpu.memory_space<vmem>>, vector<144x32xbf16>
    %cst = arith.constant dense<0.000000e+00> : vector<32x32xf32>
    %2 = tpu.matmul %0, %1, %cst {dimension_numbers = #tpu.dot_dimension_numbers<[1], [0], [0], [1], [0, 0, 1, 1], [], []>} : vector<32x144xbf16>, vector<144x32xbf16>, vector<32x32xf32> -> vector<32x32xf32>
    %3 = arith.truncf %2 : vector<32x32xf32> to vector<32x32xbf16>
    %c0_3 = arith.constant 0 : index
    %c0_4 = arith.constant 0 : index
    %4 = vector.load %arg3[%c0_3, %c0_4] : memref<32x32xbf16, #tpu.memory_space<vmem>>, vector<32x32xbf16>
    tpu.vector_store %arg3[%c0_3, %c0_4], %3 {strides = array<i32>} : memref<32x32xbf16, #tpu.memory_space<vmem>>, vector<32x32xbf16>,
    %cst_5 = arith.constant dense<0.000000e+00> : vector<32xf32>
    %5 = vector.multi_reduction <add>, %2, %cst_5 [0] : vector<32x32xf32> to vector<32xf32>
    %6 = vector.shape_cast %5 : vector<32xf32> to vector<1x32xf32>
    %7 = arith.mulf %2, %2 : vector<32x32xf32>
    %cst_6 = arith.constant dense<0.000000e+00> : vector<32xf32>
    %8 = vector.multi_reduction <add>, %7, %cst_6 [0] : vector<32x32xf32> to vector<32xf32>
    %9 = vector.shape_cast %8 : vector<32xf32> to vector<1x32xf32>
    %10 = tpu.iota {dimensions = array<i32: 0>} : vector<8x32xi32>
    %c0_i32 = arith.constant 0 : i32
    %11 = vector.broadcast %c0_i32 : i32 to vector<8x32xi32>
    %12 = arith.cmpi eq, %10, %11 : vector<8x32xi32>
    %c1_i32 = arith.constant 1 : i32
    %13 = vector.broadcast %c1_i32 : i32 to vector<8x32xi32>
    %14 = arith.cmpi eq, %10, %13 : vector<8x32xi32>
    %cst_7 = arith.constant 0.000000e+00 : f32
    %15 = vector.shape_cast %9 : vector<1x32xf32> to vector<1x32xf32>
    %16 = vector.broadcast %15 : vector<1x32xf32> to vector<8x32xf32>
    %17 = vector.broadcast %cst_7 : f32 to vector<8x32xf32>
    %18 = arith.select %14, %16, %17 : vector<8x32xi1>, vector<8x32xf32>
    %19 = vector.shape_cast %6 : vector<1x32xf32> to vector<1x32xf32>
    %20 = vector.broadcast %19 : vector<1x32xf32> to vector<8x32xf32>
    %21 = arith.select %12, %20, %18 : vector<8x32xi1>, vector<8x32xf32>
    %22 = vector.shape_cast %21 : vector<8x32xf32> to vector<1x8x32xf32>
    %c0_8 = arith.constant 0 : index
    %c0_9 = arith.constant 0 : index
    %c0_10 = arith.constant 0 : index
    %23 = vector.load %arg4[%c0_8, %c0_9, %c0_10] : memref<1x8x32xf32, #tpu.memory_space<vmem>>, vector<1x8x32xf32>
    tpu.vector_store %arg4[%c0_8, %c0_9, %c0_10], %22 {strides = array<i32>} : memref<1x8x32xf32, #tpu.memory_space<vmem>>, vector<1x8x32xf32>,
    return
  }
  func.func @transform_0(%arg0: i32) -> (i32, i32) {
    %c0_i32 = arith.constant 0 : i32
    %c0_i32_0 = arith.constant 0 : i32
    return %arg0, %c0_i32 : i32, i32
  }
  func.func @transform_1(%arg0: i32) -> (i32, i32) {
    %c0_i32 = arith.constant 0 : i32
    %c0_i32_0 = arith.constant 0 : i32
    %c0_i32_1 = arith.constant 0 : i32
    return %c0_i32, %c0_i32_0 : i32, i32
  }
  func.func @transform_2(%arg0: i32) -> (i32, i32) {
    %c0_i32 = arith.constant 0 : i32
    %c0_i32_0 = arith.constant 0 : i32
    return %arg0, %c0_i32 : i32, i32
  }
  func.func @transform_3(%arg0: i32) -> (i32, i32, i32) {
    %c0_i32 = arith.constant 0 : i32
    %c0_i32_0 = arith.constant 0 : i32
    %c0_i32_1 = arith.constant 0 : i32
    return %arg0, %c0_i32, %c0_i32_0 : i32, i32, i32
  }
}

module attributes {stable_mosaic.version = 11 : i64} {
  func.func @_affine_kernel(%arg0: i32, %arg1: memref<32x32xbf16, #tpu.memory_space<vmem>>, %arg2: memref<1x32xf32, #tpu.memory_space<vmem>>, %arg3: memref<1x32xf32, #tpu.memory_space<vmem>>, %arg4: memref<32x32xbf16, #tpu.memory_space<vmem>>) attributes {dimension_semantics = [#tpu.dimension_semantics<parallel>], iteration_bounds = array<i64: 1>, scalar_prefetch = 0 : i64, scratch_operands = 0 : i64, tpu.core_type = #tpu.core_type<tc>, window_params = [{transform_indices = @transform_0, window_bounds = array<i64: 32, 32>}, {pipeline_mode = #tpu.pipeline_mode<synchronous>, transform_indices = @transform_1, window_bounds = array<i64: 1, 32>}, {pipeline_mode = #tpu.pipeline_mode<synchronous>, transform_indices = @transform_2, window_bounds = array<i64: 1, 32>}, {transform_indices = @transform_3, window_bounds = array<i64: 32, 32>}]} {
    %c0 = arith.constant 0 : index
    %c0_0 = arith.constant 0 : index
    %0 = vector.load %arg1[%c0, %c0_0] : memref<32x32xbf16, #tpu.memory_space<vmem>>, vector<32x32xbf16>
    %1 = arith.extf %0 : vector<32x32xbf16> to vector<32x32xf32>
    %c0_1 = arith.constant 0 : index
    %c0_2 = arith.constant 0 : index
    %2 = vector.load %arg2[%c0_1, %c0_2] : memref<1x32xf32, #tpu.memory_space<vmem>>, vector<1x32xf32>
    %3 = vector.broadcast %2 : vector<1x32xf32> to vector<32x32xf32>
    %4 = arith.mulf %1, %3 : vector<32x32xf32>
    %c0_3 = arith.constant 0 : index
    %c0_4 = arith.constant 0 : index
    %5 = vector.load %arg3[%c0_3, %c0_4] : memref<1x32xf32, #tpu.memory_space<vmem>>, vector<1x32xf32>
    %6 = vector.broadcast %5 : vector<1x32xf32> to vector<32x32xf32>
    %7 = arith.addf %4, %6 : vector<32x32xf32>
    %cst = arith.constant 0.000000e+00 : f32
    %8 = vector.broadcast %cst : f32 to vector<32x32xf32>
    %9 = arith.maximumf %7, %8 : vector<32x32xf32>
    %10 = arith.truncf %9 : vector<32x32xf32> to vector<32x32xbf16>
    %c0_5 = arith.constant 0 : index
    %c0_6 = arith.constant 0 : index
    %11 = vector.load %arg4[%c0_5, %c0_6] : memref<32x32xbf16, #tpu.memory_space<vmem>>, vector<32x32xbf16>
    tpu.vector_store %arg4[%c0_5, %c0_6], %10 {strides = array<i32>} : memref<32x32xbf16, #tpu.memory_space<vmem>>, vector<32x32xbf16>,
    return
  }
  func.func @transform_0(%arg0: i32) -> (i32, i32) {
    %c0_i32 = arith.constant 0 : i32
    %c0_i32_0 = arith.constant 0 : i32
    return %arg0, %c0_i32 : i32, i32
  }
  func.func @transform_1(%arg0: i32) -> (i32, i32) {
    %c0_i32 = arith.constant 0 : i32
    %c0_i32_0 = arith.constant 0 : i32
    %c0_i32_1 = arith.constant 0 : i32
    return %c0_i32, %c0_i32_0 : i32, i32
  }
  func.func @transform_2(%arg0: i32) -> (i32, i32) {
    %c0_i32 = arith.constant 0 : i32
    %c0_i32_0 = arith.constant 0 : i32
    %c0_i32_1 = arith.constant 0 : i32
    return %c0_i32, %c0_i32_0 : i32, i32
  }
  func.func @transform_3(%arg0: i32) -> (i32, i32) {
    %c0_i32 = arith.constant 0 : i32
    %c0_i32_0 = arith.constant 0 : i32
    return %arg0, %c0_i32 : i32, i32
  }
}

module attributes {stable_mosaic.version = 11 : i64} {
  func.func @_mm_stats_kernel(%arg0: i32, %arg1: memref<32x288xbf16, #tpu.memory_space<vmem>>, %arg2: memref<288x32xbf16, #tpu.memory_space<vmem>>, %arg3: memref<32x32xbf16, #tpu.memory_space<vmem>>, %arg4: memref<1x8x32xf32, #tpu.memory_space<vmem>>) attributes {dimension_semantics = [#tpu.dimension_semantics<parallel>], iteration_bounds = array<i64: 1>, scalar_prefetch = 0 : i64, scratch_operands = 0 : i64, tpu.core_type = #tpu.core_type<tc>, window_params = [{transform_indices = @transform_0, window_bounds = array<i64: 32, 288>}, {pipeline_mode = #tpu.pipeline_mode<synchronous>, transform_indices = @transform_1, window_bounds = array<i64: 288, 32>}, {transform_indices = @transform_2, window_bounds = array<i64: 32, 32>}, {transform_indices = @transform_3, window_bounds = array<i64: 1, 8, 32>}]} {
    %c0 = arith.constant 0 : index
    %c0_0 = arith.constant 0 : index
    %0 = vector.load %arg1[%c0, %c0_0] : memref<32x288xbf16, #tpu.memory_space<vmem>>, vector<32x288xbf16>
    %c0_1 = arith.constant 0 : index
    %c0_2 = arith.constant 0 : index
    %1 = vector.load %arg2[%c0_1, %c0_2] : memref<288x32xbf16, #tpu.memory_space<vmem>>, vector<288x32xbf16>
    %cst = arith.constant dense<0.000000e+00> : vector<32x32xf32>
    %2 = tpu.matmul %0, %1, %cst {dimension_numbers = #tpu.dot_dimension_numbers<[1], [0], [0], [1], [0, 0, 1, 1], [], []>} : vector<32x288xbf16>, vector<288x32xbf16>, vector<32x32xf32> -> vector<32x32xf32>
    %3 = arith.truncf %2 : vector<32x32xf32> to vector<32x32xbf16>
    %c0_3 = arith.constant 0 : index
    %c0_4 = arith.constant 0 : index
    %4 = vector.load %arg3[%c0_3, %c0_4] : memref<32x32xbf16, #tpu.memory_space<vmem>>, vector<32x32xbf16>
    tpu.vector_store %arg3[%c0_3, %c0_4], %3 {strides = array<i32>} : memref<32x32xbf16, #tpu.memory_space<vmem>>, vector<32x32xbf16>,
    %cst_5 = arith.constant dense<0.000000e+00> : vector<32xf32>
    %5 = vector.multi_reduction <add>, %2, %cst_5 [0] : vector<32x32xf32> to vector<32xf32>
    %6 = vector.shape_cast %5 : vector<32xf32> to vector<1x32xf32>
    %7 = arith.mulf %2, %2 : vector<32x32xf32>
    %cst_6 = arith.constant dense<0.000000e+00> : vector<32xf32>
    %8 = vector.multi_reduction <add>, %7, %cst_6 [0] : vector<32x32xf32> to vector<32xf32>
    %9 = vector.shape_cast %8 : vector<32xf32> to vector<1x32xf32>
    %10 = tpu.iota {dimensions = array<i32: 0>} : vector<8x32xi32>
    %c0_i32 = arith.constant 0 : i32
    %11 = vector.broadcast %c0_i32 : i32 to vector<8x32xi32>
    %12 = arith.cmpi eq, %10, %11 : vector<8x32xi32>
    %c1_i32 = arith.constant 1 : i32
    %13 = vector.broadcast %c1_i32 : i32 to vector<8x32xi32>
    %14 = arith.cmpi eq, %10, %13 : vector<8x32xi32>
    %cst_7 = arith.constant 0.000000e+00 : f32
    %15 = vector.shape_cast %9 : vector<1x32xf32> to vector<1x32xf32>
    %16 = vector.broadcast %15 : vector<1x32xf32> to vector<8x32xf32>
    %17 = vector.broadcast %cst_7 : f32 to vector<8x32xf32>
    %18 = arith.select %14, %16, %17 : vector<8x32xi1>, vector<8x32xf32>
    %19 = vector.shape_cast %6 : vector<1x32xf32> to vector<1x32xf32>
    %20 = vector.broadcast %19 : vector<1x32xf32> to vector<8x32xf32>
    %21 = arith.select %12, %20, %18 : vector<8x32xi1>, vector<8x32xf32>
    %22 = vector.shape_cast %21 : vector<8x32xf32> to vector<1x8x32xf32>
    %c0_8 = arith.constant 0 : index
    %c0_9 = arith.constant 0 : index
    %c0_10 = arith.constant 0 : index
    %23 = vector.load %arg4[%c0_8, %c0_9, %c0_10] : memref<1x8x32xf32, #tpu.memory_space<vmem>>, vector<1x8x32xf32>
    tpu.vector_store %arg4[%c0_8, %c0_9, %c0_10], %22 {strides = array<i32>} : memref<1x8x32xf32, #tpu.memory_space<vmem>>, vector<1x8x32xf32>,
    return
  }
  func.func @transform_0(%arg0: i32) -> (i32, i32) {
    %c0_i32 = arith.constant 0 : i32
    %c0_i32_0 = arith.constant 0 : i32
    return %arg0, %c0_i32 : i32, i32
  }
  func.func @transform_1(%arg0: i32) -> (i32, i32) {
    %c0_i32 = arith.constant 0 : i32
    %c0_i32_0 = arith.constant 0 : i32
    %c0_i32_1 = arith.constant 0 : i32
    return %c0_i32, %c0_i32_0 : i32, i32
  }
  func.func @transform_2(%arg0: i32) -> (i32, i32) {
    %c0_i32 = arith.constant 0 : i32
    %c0_i32_0 = arith.constant 0 : i32
    return %arg0, %c0_i32 : i32, i32
  }
  func.func @transform_3(%arg0: i32) -> (i32, i32, i32) {
    %c0_i32 = arith.constant 0 : i32
    %c0_i32_0 = arith.constant 0 : i32
    %c0_i32_1 = arith.constant 0 : i32
    return %arg0, %c0_i32, %c0_i32_0 : i32, i32, i32
  }
}

module attributes {stable_mosaic.version = 11 : i64} {
  func.func @_affine_res_kernel(%arg0: i32, %arg1: memref<32x32xbf16, #tpu.memory_space<vmem>>, %arg2: memref<1x32xf32, #tpu.memory_space<vmem>>, %arg3: memref<1x32xf32, #tpu.memory_space<vmem>>, %arg4: memref<32x32xbf16, #tpu.memory_space<vmem>>, %arg5: memref<32x32xbf16, #tpu.memory_space<vmem>>) attributes {dimension_semantics = [#tpu.dimension_semantics<parallel>], iteration_bounds = array<i64: 1>, scalar_prefetch = 0 : i64, scratch_operands = 0 : i64, tpu.core_type = #tpu.core_type<tc>, window_params = [{transform_indices = @transform_0, window_bounds = array<i64: 32, 32>}, {pipeline_mode = #tpu.pipeline_mode<synchronous>, transform_indices = @transform_1, window_bounds = array<i64: 1, 32>}, {pipeline_mode = #tpu.pipeline_mode<synchronous>, transform_indices = @transform_2, window_bounds = array<i64: 1, 32>}, {transform_indices = @transform_3, window_bounds = array<i64: 32, 32>}, {transform_indices = @transform_4, window_bounds = array<i64: 32, 32>}]} {
    %c0 = arith.constant 0 : index
    %c0_0 = arith.constant 0 : index
    %0 = vector.load %arg1[%c0, %c0_0] : memref<32x32xbf16, #tpu.memory_space<vmem>>, vector<32x32xbf16>
    %1 = arith.extf %0 : vector<32x32xbf16> to vector<32x32xf32>
    %c0_1 = arith.constant 0 : index
    %c0_2 = arith.constant 0 : index
    %2 = vector.load %arg2[%c0_1, %c0_2] : memref<1x32xf32, #tpu.memory_space<vmem>>, vector<1x32xf32>
    %3 = vector.broadcast %2 : vector<1x32xf32> to vector<32x32xf32>
    %4 = arith.mulf %1, %3 : vector<32x32xf32>
    %c0_3 = arith.constant 0 : index
    %c0_4 = arith.constant 0 : index
    %5 = vector.load %arg3[%c0_3, %c0_4] : memref<1x32xf32, #tpu.memory_space<vmem>>, vector<1x32xf32>
    %6 = vector.broadcast %5 : vector<1x32xf32> to vector<32x32xf32>
    %7 = arith.addf %4, %6 : vector<32x32xf32>
    %c0_5 = arith.constant 0 : index
    %c0_6 = arith.constant 0 : index
    %8 = vector.load %arg4[%c0_5, %c0_6] : memref<32x32xbf16, #tpu.memory_space<vmem>>, vector<32x32xbf16>
    %9 = arith.extf %8 : vector<32x32xbf16> to vector<32x32xf32>
    %10 = arith.addf %7, %9 : vector<32x32xf32>
    %11 = arith.truncf %10 : vector<32x32xf32> to vector<32x32xbf16>
    %c0_7 = arith.constant 0 : index
    %c0_8 = arith.constant 0 : index
    %12 = vector.load %arg5[%c0_7, %c0_8] : memref<32x32xbf16, #tpu.memory_space<vmem>>, vector<32x32xbf16>
    tpu.vector_store %arg5[%c0_7, %c0_8], %11 {strides = array<i32>} : memref<32x32xbf16, #tpu.memory_space<vmem>>, vector<32x32xbf16>,
    return
  }
  func.func @transform_0(%arg0: i32) -> (i32, i32) {
    %c0_i32 = arith.constant 0 : i32
    %c0_i32_0 = arith.constant 0 : i32
    return %arg0, %c0_i32 : i32, i32
  }
  func.func @transform_1(%arg0: i32) -> (i32, i32) {
    %c0_i32 = arith.constant 0 : i32
    %c0_i32_0 = arith.constant 0 : i32
    %c0_i32_1 = arith.constant 0 : i32
    return %c0_i32, %c0_i32_0 : i32, i32
  }
  func.func @transform_2(%arg0: i32) -> (i32, i32) {
    %c0_i32 = arith.constant 0 : i32
    %c0_i32_0 = arith.constant 0 : i32
    %c0_i32_1 = arith.constant 0 : i32
    return %c0_i32, %c0_i32_0 : i32, i32
  }
  func.func @transform_3(%arg0: i32) -> (i32, i32) {
    %c0_i32 = arith.constant 0 : i32
    %c0_i32_0 = arith.constant 0 : i32
    return %arg0, %c0_i32 : i32, i32
  }
  func.func @transform_4(%arg0: i32) -> (i32, i32) {
    %c0_i32 = arith.constant 0 : i32
    %c0_i32_0 = arith.constant 0 : i32
    return %arg0, %c0_i32 : i32, i32
  }
}

module attributes {stable_mosaic.version = 11 : i64} {
  func.func @_mm_stats_kernel(%arg0: i32, %arg1: memref<32x64xbf16, #tpu.memory_space<vmem>>, %arg2: memref<64x16xbf16, #tpu.memory_space<vmem>>, %arg3: memref<32x16xbf16, #tpu.memory_space<vmem>>, %arg4: memref<1x8x16xf32, #tpu.memory_space<vmem>>) attributes {dimension_semantics = [#tpu.dimension_semantics<parallel>], iteration_bounds = array<i64: 1>, scalar_prefetch = 0 : i64, scratch_operands = 0 : i64, tpu.core_type = #tpu.core_type<tc>, window_params = [{transform_indices = @transform_0, window_bounds = array<i64: 32, 64>}, {pipeline_mode = #tpu.pipeline_mode<synchronous>, transform_indices = @transform_1, window_bounds = array<i64: 64, 16>}, {transform_indices = @transform_2, window_bounds = array<i64: 32, 16>}, {transform_indices = @transform_3, window_bounds = array<i64: 1, 8, 16>}]} {
    %c0 = arith.constant 0 : index
    %c0_0 = arith.constant 0 : index
    %0 = vector.load %arg1[%c0, %c0_0] : memref<32x64xbf16, #tpu.memory_space<vmem>>, vector<32x64xbf16>
    %c0_1 = arith.constant 0 : index
    %c0_2 = arith.constant 0 : index
    %1 = vector.load %arg2[%c0_1, %c0_2] : memref<64x16xbf16, #tpu.memory_space<vmem>>, vector<64x16xbf16>
    %cst = arith.constant dense<0.000000e+00> : vector<32x16xf32>
    %2 = tpu.matmul %0, %1, %cst {dimension_numbers = #tpu.dot_dimension_numbers<[1], [0], [0], [1], [0, 0, 1, 1], [], []>} : vector<32x64xbf16>, vector<64x16xbf16>, vector<32x16xf32> -> vector<32x16xf32>
    %3 = arith.truncf %2 : vector<32x16xf32> to vector<32x16xbf16>
    %c0_3 = arith.constant 0 : index
    %c0_4 = arith.constant 0 : index
    %4 = vector.load %arg3[%c0_3, %c0_4] : memref<32x16xbf16, #tpu.memory_space<vmem>>, vector<32x16xbf16>
    tpu.vector_store %arg3[%c0_3, %c0_4], %3 {strides = array<i32>} : memref<32x16xbf16, #tpu.memory_space<vmem>>, vector<32x16xbf16>,
    %cst_5 = arith.constant dense<0.000000e+00> : vector<16xf32>
    %5 = vector.multi_reduction <add>, %2, %cst_5 [0] : vector<32x16xf32> to vector<16xf32>
    %6 = vector.shape_cast %5 : vector<16xf32> to vector<1x16xf32>
    %7 = arith.mulf %2, %2 : vector<32x16xf32>
    %cst_6 = arith.constant dense<0.000000e+00> : vector<16xf32>
    %8 = vector.multi_reduction <add>, %7, %cst_6 [0] : vector<32x16xf32> to vector<16xf32>
    %9 = vector.shape_cast %8 : vector<16xf32> to vector<1x16xf32>
    %10 = tpu.iota {dimensions = array<i32: 0>} : vector<8x16xi32>
    %c0_i32 = arith.constant 0 : i32
    %11 = vector.broadcast %c0_i32 : i32 to vector<8x16xi32>
    %12 = arith.cmpi eq, %10, %11 : vector<8x16xi32>
    %c1_i32 = arith.constant 1 : i32
    %13 = vector.broadcast %c1_i32 : i32 to vector<8x16xi32>
    %14 = arith.cmpi eq, %10, %13 : vector<8x16xi32>
    %cst_7 = arith.constant 0.000000e+00 : f32
    %15 = vector.shape_cast %9 : vector<1x16xf32> to vector<1x16xf32>
    %16 = vector.broadcast %15 : vector<1x16xf32> to vector<8x16xf32>
    %17 = vector.broadcast %cst_7 : f32 to vector<8x16xf32>
    %18 = arith.select %14, %16, %17 : vector<8x16xi1>, vector<8x16xf32>
    %19 = vector.shape_cast %6 : vector<1x16xf32> to vector<1x16xf32>
    %20 = vector.broadcast %19 : vector<1x16xf32> to vector<8x16xf32>
    %21 = arith.select %12, %20, %18 : vector<8x16xi1>, vector<8x16xf32>
    %22 = vector.shape_cast %21 : vector<8x16xf32> to vector<1x8x16xf32>
    %c0_8 = arith.constant 0 : index
    %c0_9 = arith.constant 0 : index
    %c0_10 = arith.constant 0 : index
    %23 = vector.load %arg4[%c0_8, %c0_9, %c0_10] : memref<1x8x16xf32, #tpu.memory_space<vmem>>, vector<1x8x16xf32>
    tpu.vector_store %arg4[%c0_8, %c0_9, %c0_10], %22 {strides = array<i32>} : memref<1x8x16xf32, #tpu.memory_space<vmem>>, vector<1x8x16xf32>,
    return
  }
  func.func @transform_0(%arg0: i32) -> (i32, i32) {
    %c0_i32 = arith.constant 0 : i32
    %c0_i32_0 = arith.constant 0 : i32
    return %arg0, %c0_i32 : i32, i32
  }
  func.func @transform_1(%arg0: i32) -> (i32, i32) {
    %c0_i32 = arith.constant 0 : i32
    %c0_i32_0 = arith.constant 0 : i32
    %c0_i32_1 = arith.constant 0 : i32
    return %c0_i32, %c0_i32_0 : i32, i32
  }
  func.func @transform_2(%arg0: i32) -> (i32, i32) {
    %c0_i32 = arith.constant 0 : i32
    %c0_i32_0 = arith.constant 0 : i32
    return %arg0, %c0_i32 : i32, i32
  }
  func.func @transform_3(%arg0: i32) -> (i32, i32, i32) {
    %c0_i32 = arith.constant 0 : i32
    %c0_i32_0 = arith.constant 0 : i32
    %c0_i32_1 = arith.constant 0 : i32
    return %arg0, %c0_i32, %c0_i32_0 : i32, i32, i32
  }
}

module attributes {stable_mosaic.version = 11 : i64} {
  func.func @_mm_stats_kernel(%arg0: i32, %arg1: memref<32x32xbf16, #tpu.memory_space<vmem>>, %arg2: memref<32x16xbf16, #tpu.memory_space<vmem>>, %arg3: memref<32x16xbf16, #tpu.memory_space<vmem>>, %arg4: memref<1x8x16xf32, #tpu.memory_space<vmem>>) attributes {dimension_semantics = [#tpu.dimension_semantics<parallel>], iteration_bounds = array<i64: 1>, scalar_prefetch = 0 : i64, scratch_operands = 0 : i64, tpu.core_type = #tpu.core_type<tc>, window_params = [{transform_indices = @transform_0, window_bounds = array<i64: 32, 32>}, {pipeline_mode = #tpu.pipeline_mode<synchronous>, transform_indices = @transform_1, window_bounds = array<i64: 32, 16>}, {transform_indices = @transform_2, window_bounds = array<i64: 32, 16>}, {transform_indices = @transform_3, window_bounds = array<i64: 1, 8, 16>}]} {
    %c0 = arith.constant 0 : index
    %c0_0 = arith.constant 0 : index
    %0 = vector.load %arg1[%c0, %c0_0] : memref<32x32xbf16, #tpu.memory_space<vmem>>, vector<32x32xbf16>
    %c0_1 = arith.constant 0 : index
    %c0_2 = arith.constant 0 : index
    %1 = vector.load %arg2[%c0_1, %c0_2] : memref<32x16xbf16, #tpu.memory_space<vmem>>, vector<32x16xbf16>
    %cst = arith.constant dense<0.000000e+00> : vector<32x16xf32>
    %2 = tpu.matmul %0, %1, %cst {dimension_numbers = #tpu.dot_dimension_numbers<[1], [0], [0], [1], [0, 0, 1, 1], [], []>} : vector<32x32xbf16>, vector<32x16xbf16>, vector<32x16xf32> -> vector<32x16xf32>
    %3 = arith.truncf %2 : vector<32x16xf32> to vector<32x16xbf16>
    %c0_3 = arith.constant 0 : index
    %c0_4 = arith.constant 0 : index
    %4 = vector.load %arg3[%c0_3, %c0_4] : memref<32x16xbf16, #tpu.memory_space<vmem>>, vector<32x16xbf16>
    tpu.vector_store %arg3[%c0_3, %c0_4], %3 {strides = array<i32>} : memref<32x16xbf16, #tpu.memory_space<vmem>>, vector<32x16xbf16>,
    %cst_5 = arith.constant dense<0.000000e+00> : vector<16xf32>
    %5 = vector.multi_reduction <add>, %2, %cst_5 [0] : vector<32x16xf32> to vector<16xf32>
    %6 = vector.shape_cast %5 : vector<16xf32> to vector<1x16xf32>
    %7 = arith.mulf %2, %2 : vector<32x16xf32>
    %cst_6 = arith.constant dense<0.000000e+00> : vector<16xf32>
    %8 = vector.multi_reduction <add>, %7, %cst_6 [0] : vector<32x16xf32> to vector<16xf32>
    %9 = vector.shape_cast %8 : vector<16xf32> to vector<1x16xf32>
    %10 = tpu.iota {dimensions = array<i32: 0>} : vector<8x16xi32>
    %c0_i32 = arith.constant 0 : i32
    %11 = vector.broadcast %c0_i32 : i32 to vector<8x16xi32>
    %12 = arith.cmpi eq, %10, %11 : vector<8x16xi32>
    %c1_i32 = arith.constant 1 : i32
    %13 = vector.broadcast %c1_i32 : i32 to vector<8x16xi32>
    %14 = arith.cmpi eq, %10, %13 : vector<8x16xi32>
    %cst_7 = arith.constant 0.000000e+00 : f32
    %15 = vector.shape_cast %9 : vector<1x16xf32> to vector<1x16xf32>
    %16 = vector.broadcast %15 : vector<1x16xf32> to vector<8x16xf32>
    %17 = vector.broadcast %cst_7 : f32 to vector<8x16xf32>
    %18 = arith.select %14, %16, %17 : vector<8x16xi1>, vector<8x16xf32>
    %19 = vector.shape_cast %6 : vector<1x16xf32> to vector<1x16xf32>
    %20 = vector.broadcast %19 : vector<1x16xf32> to vector<8x16xf32>
    %21 = arith.select %12, %20, %18 : vector<8x16xi1>, vector<8x16xf32>
    %22 = vector.shape_cast %21 : vector<8x16xf32> to vector<1x8x16xf32>
    %c0_8 = arith.constant 0 : index
    %c0_9 = arith.constant 0 : index
    %c0_10 = arith.constant 0 : index
    %23 = vector.load %arg4[%c0_8, %c0_9, %c0_10] : memref<1x8x16xf32, #tpu.memory_space<vmem>>, vector<1x8x16xf32>
    tpu.vector_store %arg4[%c0_8, %c0_9, %c0_10], %22 {strides = array<i32>} : memref<1x8x16xf32, #tpu.memory_space<vmem>>, vector<1x8x16xf32>,
    return
  }
  func.func @transform_0(%arg0: i32) -> (i32, i32) {
    %c0_i32 = arith.constant 0 : i32
    %c0_i32_0 = arith.constant 0 : i32
    return %arg0, %c0_i32 : i32, i32
  }
  func.func @transform_1(%arg0: i32) -> (i32, i32) {
    %c0_i32 = arith.constant 0 : i32
    %c0_i32_0 = arith.constant 0 : i32
    %c0_i32_1 = arith.constant 0 : i32
    return %c0_i32, %c0_i32_0 : i32, i32
  }
  func.func @transform_2(%arg0: i32) -> (i32, i32) {
    %c0_i32 = arith.constant 0 : i32
    %c0_i32_0 = arith.constant 0 : i32
    return %arg0, %c0_i32 : i32, i32
  }
  func.func @transform_3(%arg0: i32) -> (i32, i32, i32) {
    %c0_i32 = arith.constant 0 : i32
    %c0_i32_0 = arith.constant 0 : i32
    %c0_i32_1 = arith.constant 0 : i32
    return %arg0, %c0_i32, %c0_i32_0 : i32, i32, i32
  }
}

module attributes {stable_mosaic.version = 11 : i64} {
  func.func @_mm_stats_kernel(%arg0: i32, %arg1: memref<32x128xbf16, #tpu.memory_space<vmem>>, %arg2: memref<128x16xbf16, #tpu.memory_space<vmem>>, %arg3: memref<32x16xbf16, #tpu.memory_space<vmem>>, %arg4: memref<1x8x16xf32, #tpu.memory_space<vmem>>) attributes {dimension_semantics = [#tpu.dimension_semantics<parallel>], iteration_bounds = array<i64: 1>, scalar_prefetch = 0 : i64, scratch_operands = 0 : i64, tpu.core_type = #tpu.core_type<tc>, window_params = [{transform_indices = @transform_0, window_bounds = array<i64: 32, 128>}, {pipeline_mode = #tpu.pipeline_mode<synchronous>, transform_indices = @transform_1, window_bounds = array<i64: 128, 16>}, {transform_indices = @transform_2, window_bounds = array<i64: 32, 16>}, {transform_indices = @transform_3, window_bounds = array<i64: 1, 8, 16>}]} {
    %c0 = arith.constant 0 : index
    %c0_0 = arith.constant 0 : index
    %0 = vector.load %arg1[%c0, %c0_0] : memref<32x128xbf16, #tpu.memory_space<vmem>>, vector<32x128xbf16>
    %c0_1 = arith.constant 0 : index
    %c0_2 = arith.constant 0 : index
    %1 = vector.load %arg2[%c0_1, %c0_2] : memref<128x16xbf16, #tpu.memory_space<vmem>>, vector<128x16xbf16>
    %cst = arith.constant dense<0.000000e+00> : vector<32x16xf32>
    %2 = tpu.matmul %0, %1, %cst {dimension_numbers = #tpu.dot_dimension_numbers<[1], [0], [0], [1], [0, 0, 1, 1], [], []>} : vector<32x128xbf16>, vector<128x16xbf16>, vector<32x16xf32> -> vector<32x16xf32>
    %3 = arith.truncf %2 : vector<32x16xf32> to vector<32x16xbf16>
    %c0_3 = arith.constant 0 : index
    %c0_4 = arith.constant 0 : index
    %4 = vector.load %arg3[%c0_3, %c0_4] : memref<32x16xbf16, #tpu.memory_space<vmem>>, vector<32x16xbf16>
    tpu.vector_store %arg3[%c0_3, %c0_4], %3 {strides = array<i32>} : memref<32x16xbf16, #tpu.memory_space<vmem>>, vector<32x16xbf16>,
    %cst_5 = arith.constant dense<0.000000e+00> : vector<16xf32>
    %5 = vector.multi_reduction <add>, %2, %cst_5 [0] : vector<32x16xf32> to vector<16xf32>
    %6 = vector.shape_cast %5 : vector<16xf32> to vector<1x16xf32>
    %7 = arith.mulf %2, %2 : vector<32x16xf32>
    %cst_6 = arith.constant dense<0.000000e+00> : vector<16xf32>
    %8 = vector.multi_reduction <add>, %7, %cst_6 [0] : vector<32x16xf32> to vector<16xf32>
    %9 = vector.shape_cast %8 : vector<16xf32> to vector<1x16xf32>
    %10 = tpu.iota {dimensions = array<i32: 0>} : vector<8x16xi32>
    %c0_i32 = arith.constant 0 : i32
    %11 = vector.broadcast %c0_i32 : i32 to vector<8x16xi32>
    %12 = arith.cmpi eq, %10, %11 : vector<8x16xi32>
    %c1_i32 = arith.constant 1 : i32
    %13 = vector.broadcast %c1_i32 : i32 to vector<8x16xi32>
    %14 = arith.cmpi eq, %10, %13 : vector<8x16xi32>
    %cst_7 = arith.constant 0.000000e+00 : f32
    %15 = vector.shape_cast %9 : vector<1x16xf32> to vector<1x16xf32>
    %16 = vector.broadcast %15 : vector<1x16xf32> to vector<8x16xf32>
    %17 = vector.broadcast %cst_7 : f32 to vector<8x16xf32>
    %18 = arith.select %14, %16, %17 : vector<8x16xi1>, vector<8x16xf32>
    %19 = vector.shape_cast %6 : vector<1x16xf32> to vector<1x16xf32>
    %20 = vector.broadcast %19 : vector<1x16xf32> to vector<8x16xf32>
    %21 = arith.select %12, %20, %18 : vector<8x16xi1>, vector<8x16xf32>
    %22 = vector.shape_cast %21 : vector<8x16xf32> to vector<1x8x16xf32>
    %c0_8 = arith.constant 0 : index
    %c0_9 = arith.constant 0 : index
    %c0_10 = arith.constant 0 : index
    %23 = vector.load %arg4[%c0_8, %c0_9, %c0_10] : memref<1x8x16xf32, #tpu.memory_space<vmem>>, vector<1x8x16xf32>
    tpu.vector_store %arg4[%c0_8, %c0_9, %c0_10], %22 {strides = array<i32>} : memref<1x8x16xf32, #tpu.memory_space<vmem>>, vector<1x8x16xf32>,
    return
  }
  func.func @transform_0(%arg0: i32) -> (i32, i32) {
    %c0_i32 = arith.constant 0 : i32
    %c0_i32_0 = arith.constant 0 : i32
    return %arg0, %c0_i32 : i32, i32
  }
  func.func @transform_1(%arg0: i32) -> (i32, i32) {
    %c0_i32 = arith.constant 0 : i32
    %c0_i32_0 = arith.constant 0 : i32
    %c0_i32_1 = arith.constant 0 : i32
    return %c0_i32, %c0_i32_0 : i32, i32
  }
  func.func @transform_2(%arg0: i32) -> (i32, i32) {
    %c0_i32 = arith.constant 0 : i32
    %c0_i32_0 = arith.constant 0 : i32
    return %arg0, %c0_i32 : i32, i32
  }
  func.func @transform_3(%arg0: i32) -> (i32, i32, i32) {
    %c0_i32 = arith.constant 0 : i32
    %c0_i32_0 = arith.constant 0 : i32
    %c0_i32_1 = arith.constant 0 : i32
    return %arg0, %c0_i32, %c0_i32_0 : i32, i32, i32
  }
}

module attributes {stable_mosaic.version = 11 : i64} {
  func.func @_mm_stats_kernel(%arg0: i32, %arg1: memref<128x32xbf16, #tpu.memory_space<vmem>>, %arg2: memref<32x8xbf16, #tpu.memory_space<vmem>>, %arg3: memref<128x8xbf16, #tpu.memory_space<vmem>>, %arg4: memref<1x8x8xf32, #tpu.memory_space<vmem>>) attributes {dimension_semantics = [#tpu.dimension_semantics<parallel>], iteration_bounds = array<i64: 1>, scalar_prefetch = 0 : i64, scratch_operands = 0 : i64, tpu.core_type = #tpu.core_type<tc>, window_params = [{transform_indices = @transform_0, window_bounds = array<i64: 128, 32>}, {pipeline_mode = #tpu.pipeline_mode<synchronous>, transform_indices = @transform_1, window_bounds = array<i64: 32, 8>}, {transform_indices = @transform_2, window_bounds = array<i64: 128, 8>}, {transform_indices = @transform_3, window_bounds = array<i64: 1, 8, 8>}]} {
    %c0 = arith.constant 0 : index
    %c0_0 = arith.constant 0 : index
    %0 = vector.load %arg1[%c0, %c0_0] : memref<128x32xbf16, #tpu.memory_space<vmem>>, vector<128x32xbf16>
    %c0_1 = arith.constant 0 : index
    %c0_2 = arith.constant 0 : index
    %1 = vector.load %arg2[%c0_1, %c0_2] : memref<32x8xbf16, #tpu.memory_space<vmem>>, vector<32x8xbf16>
    %cst = arith.constant dense<0.000000e+00> : vector<128x8xf32>
    %2 = tpu.matmul %0, %1, %cst {dimension_numbers = #tpu.dot_dimension_numbers<[1], [0], [0], [1], [0, 0, 1, 1], [], []>} : vector<128x32xbf16>, vector<32x8xbf16>, vector<128x8xf32> -> vector<128x8xf32>
    %3 = arith.truncf %2 : vector<128x8xf32> to vector<128x8xbf16>
    %c0_3 = arith.constant 0 : index
    %c0_4 = arith.constant 0 : index
    %4 = vector.load %arg3[%c0_3, %c0_4] : memref<128x8xbf16, #tpu.memory_space<vmem>>, vector<128x8xbf16>
    tpu.vector_store %arg3[%c0_3, %c0_4], %3 {strides = array<i32>} : memref<128x8xbf16, #tpu.memory_space<vmem>>, vector<128x8xbf16>,
    %cst_5 = arith.constant dense<0.000000e+00> : vector<8xf32>
    %5 = vector.multi_reduction <add>, %2, %cst_5 [0] : vector<128x8xf32> to vector<8xf32>
    %6 = vector.shape_cast %5 : vector<8xf32> to vector<1x8xf32>
    %7 = arith.mulf %2, %2 : vector<128x8xf32>
    %cst_6 = arith.constant dense<0.000000e+00> : vector<8xf32>
    %8 = vector.multi_reduction <add>, %7, %cst_6 [0] : vector<128x8xf32> to vector<8xf32>
    %9 = vector.shape_cast %8 : vector<8xf32> to vector<1x8xf32>
    %10 = tpu.iota {dimensions = array<i32: 0>} : vector<8x8xi32>
    %c0_i32 = arith.constant 0 : i32
    %11 = vector.broadcast %c0_i32 : i32 to vector<8x8xi32>
    %12 = arith.cmpi eq, %10, %11 : vector<8x8xi32>
    %c1_i32 = arith.constant 1 : i32
    %13 = vector.broadcast %c1_i32 : i32 to vector<8x8xi32>
    %14 = arith.cmpi eq, %10, %13 : vector<8x8xi32>
    %cst_7 = arith.constant 0.000000e+00 : f32
    %15 = vector.shape_cast %9 : vector<1x8xf32> to vector<1x8xf32>
    %16 = vector.broadcast %15 : vector<1x8xf32> to vector<8x8xf32>
    %17 = vector.broadcast %cst_7 : f32 to vector<8x8xf32>
    %18 = arith.select %14, %16, %17 : vector<8x8xi1>, vector<8x8xf32>
    %19 = vector.shape_cast %6 : vector<1x8xf32> to vector<1x8xf32>
    %20 = vector.broadcast %19 : vector<1x8xf32> to vector<8x8xf32>
    %21 = arith.select %12, %20, %18 : vector<8x8xi1>, vector<8x8xf32>
    %22 = vector.shape_cast %21 : vector<8x8xf32> to vector<1x8x8xf32>
    %c0_8 = arith.constant 0 : index
    %c0_9 = arith.constant 0 : index
    %c0_10 = arith.constant 0 : index
    %23 = vector.load %arg4[%c0_8, %c0_9, %c0_10] : memref<1x8x8xf32, #tpu.memory_space<vmem>>, vector<1x8x8xf32>
    tpu.vector_store %arg4[%c0_8, %c0_9, %c0_10], %22 {strides = array<i32>} : memref<1x8x8xf32, #tpu.memory_space<vmem>>, vector<1x8x8xf32>,
    return
  }
  func.func @transform_0(%arg0: i32) -> (i32, i32) {
    %c0_i32 = arith.constant 0 : i32
    %c0_i32_0 = arith.constant 0 : i32
    return %arg0, %c0_i32 : i32, i32
  }
  func.func @transform_1(%arg0: i32) -> (i32, i32) {
    %c0_i32 = arith.constant 0 : i32
    %c0_i32_0 = arith.constant 0 : i32
    %c0_i32_1 = arith.constant 0 : i32
    return %c0_i32, %c0_i32_0 : i32, i32
  }
  func.func @transform_2(%arg0: i32) -> (i32, i32) {
    %c0_i32 = arith.constant 0 : i32
    %c0_i32_0 = arith.constant 0 : i32
    return %arg0, %c0_i32 : i32, i32
  }
  func.func @transform_3(%arg0: i32) -> (i32, i32, i32) {
    %c0_i32 = arith.constant 0 : i32
    %c0_i32_0 = arith.constant 0 : i32
    %c0_i32_1 = arith.constant 0 : i32
    return %arg0, %c0_i32, %c0_i32_0 : i32, i32, i32
  }
}

module attributes {stable_mosaic.version = 11 : i64} {
  func.func @_mm_stats_kernel(%arg0: i32, %arg1: memref<128x64xbf16, #tpu.memory_space<vmem>>, %arg2: memref<64x8xbf16, #tpu.memory_space<vmem>>, %arg3: memref<128x8xbf16, #tpu.memory_space<vmem>>, %arg4: memref<1x8x8xf32, #tpu.memory_space<vmem>>) attributes {dimension_semantics = [#tpu.dimension_semantics<parallel>], iteration_bounds = array<i64: 1>, scalar_prefetch = 0 : i64, scratch_operands = 0 : i64, tpu.core_type = #tpu.core_type<tc>, window_params = [{transform_indices = @transform_0, window_bounds = array<i64: 128, 64>}, {pipeline_mode = #tpu.pipeline_mode<synchronous>, transform_indices = @transform_1, window_bounds = array<i64: 64, 8>}, {transform_indices = @transform_2, window_bounds = array<i64: 128, 8>}, {transform_indices = @transform_3, window_bounds = array<i64: 1, 8, 8>}]} {
    %c0 = arith.constant 0 : index
    %c0_0 = arith.constant 0 : index
    %0 = vector.load %arg1[%c0, %c0_0] : memref<128x64xbf16, #tpu.memory_space<vmem>>, vector<128x64xbf16>
    %c0_1 = arith.constant 0 : index
    %c0_2 = arith.constant 0 : index
    %1 = vector.load %arg2[%c0_1, %c0_2] : memref<64x8xbf16, #tpu.memory_space<vmem>>, vector<64x8xbf16>
    %cst = arith.constant dense<0.000000e+00> : vector<128x8xf32>
    %2 = tpu.matmul %0, %1, %cst {dimension_numbers = #tpu.dot_dimension_numbers<[1], [0], [0], [1], [0, 0, 1, 1], [], []>} : vector<128x64xbf16>, vector<64x8xbf16>, vector<128x8xf32> -> vector<128x8xf32>
    %3 = arith.truncf %2 : vector<128x8xf32> to vector<128x8xbf16>
    %c0_3 = arith.constant 0 : index
    %c0_4 = arith.constant 0 : index
    %4 = vector.load %arg3[%c0_3, %c0_4] : memref<128x8xbf16, #tpu.memory_space<vmem>>, vector<128x8xbf16>
    tpu.vector_store %arg3[%c0_3, %c0_4], %3 {strides = array<i32>} : memref<128x8xbf16, #tpu.memory_space<vmem>>, vector<128x8xbf16>,
    %cst_5 = arith.constant dense<0.000000e+00> : vector<8xf32>
    %5 = vector.multi_reduction <add>, %2, %cst_5 [0] : vector<128x8xf32> to vector<8xf32>
    %6 = vector.shape_cast %5 : vector<8xf32> to vector<1x8xf32>
    %7 = arith.mulf %2, %2 : vector<128x8xf32>
    %cst_6 = arith.constant dense<0.000000e+00> : vector<8xf32>
    %8 = vector.multi_reduction <add>, %7, %cst_6 [0] : vector<128x8xf32> to vector<8xf32>
    %9 = vector.shape_cast %8 : vector<8xf32> to vector<1x8xf32>
    %10 = tpu.iota {dimensions = array<i32: 0>} : vector<8x8xi32>
    %c0_i32 = arith.constant 0 : i32
    %11 = vector.broadcast %c0_i32 : i32 to vector<8x8xi32>
    %12 = arith.cmpi eq, %10, %11 : vector<8x8xi32>
    %c1_i32 = arith.constant 1 : i32
    %13 = vector.broadcast %c1_i32 : i32 to vector<8x8xi32>
    %14 = arith.cmpi eq, %10, %13 : vector<8x8xi32>
    %cst_7 = arith.constant 0.000000e+00 : f32
    %15 = vector.shape_cast %9 : vector<1x8xf32> to vector<1x8xf32>
    %16 = vector.broadcast %15 : vector<1x8xf32> to vector<8x8xf32>
    %17 = vector.broadcast %cst_7 : f32 to vector<8x8xf32>
    %18 = arith.select %14, %16, %17 : vector<8x8xi1>, vector<8x8xf32>
    %19 = vector.shape_cast %6 : vector<1x8xf32> to vector<1x8xf32>
    %20 = vector.broadcast %19 : vector<1x8xf32> to vector<8x8xf32>
    %21 = arith.select %12, %20, %18 : vector<8x8xi1>, vector<8x8xf32>
    %22 = vector.shape_cast %21 : vector<8x8xf32> to vector<1x8x8xf32>
    %c0_8 = arith.constant 0 : index
    %c0_9 = arith.constant 0 : index
    %c0_10 = arith.constant 0 : index
    %23 = vector.load %arg4[%c0_8, %c0_9, %c0_10] : memref<1x8x8xf32, #tpu.memory_space<vmem>>, vector<1x8x8xf32>
    tpu.vector_store %arg4[%c0_8, %c0_9, %c0_10], %22 {strides = array<i32>} : memref<1x8x8xf32, #tpu.memory_space<vmem>>, vector<1x8x8xf32>,
    return
  }
  func.func @transform_0(%arg0: i32) -> (i32, i32) {
    %c0_i32 = arith.constant 0 : i32
    %c0_i32_0 = arith.constant 0 : i32
    return %arg0, %c0_i32 : i32, i32
  }
  func.func @transform_1(%arg0: i32) -> (i32, i32) {
    %c0_i32 = arith.constant 0 : i32
    %c0_i32_0 = arith.constant 0 : i32
    %c0_i32_1 = arith.constant 0 : i32
    return %c0_i32, %c0_i32_0 : i32, i32
  }
  func.func @transform_2(%arg0: i32) -> (i32, i32) {
    %c0_i32 = arith.constant 0 : i32
    %c0_i32_0 = arith.constant 0 : i32
    return %arg0, %c0_i32 : i32, i32
  }
  func.func @transform_3(%arg0: i32) -> (i32, i32, i32) {
    %c0_i32 = arith.constant 0 : i32
    %c0_i32_0 = arith.constant 0 : i32
    %c0_i32_1 = arith.constant 0 : i32
    return %arg0, %c0_i32, %c0_i32_0 : i32, i32, i32
  }
}

module attributes {stable_mosaic.version = 11 : i64} {
  func.func @_mm_stats_kernel(%arg0: i32, %arg1: memref<128x16xbf16, #tpu.memory_space<vmem>>, %arg2: memref<16x8xbf16, #tpu.memory_space<vmem>>, %arg3: memref<128x8xbf16, #tpu.memory_space<vmem>>, %arg4: memref<1x8x8xf32, #tpu.memory_space<vmem>>) attributes {dimension_semantics = [#tpu.dimension_semantics<parallel>], iteration_bounds = array<i64: 1>, scalar_prefetch = 0 : i64, scratch_operands = 0 : i64, tpu.core_type = #tpu.core_type<tc>, window_params = [{transform_indices = @transform_0, window_bounds = array<i64: 128, 16>}, {pipeline_mode = #tpu.pipeline_mode<synchronous>, transform_indices = @transform_1, window_bounds = array<i64: 16, 8>}, {transform_indices = @transform_2, window_bounds = array<i64: 128, 8>}, {transform_indices = @transform_3, window_bounds = array<i64: 1, 8, 8>}]} {
    %c0 = arith.constant 0 : index
    %c0_0 = arith.constant 0 : index
    %0 = vector.load %arg1[%c0, %c0_0] : memref<128x16xbf16, #tpu.memory_space<vmem>>, vector<128x16xbf16>
    %c0_1 = arith.constant 0 : index
    %c0_2 = arith.constant 0 : index
    %1 = vector.load %arg2[%c0_1, %c0_2] : memref<16x8xbf16, #tpu.memory_space<vmem>>, vector<16x8xbf16>
    %cst = arith.constant dense<0.000000e+00> : vector<128x8xf32>
    %2 = tpu.matmul %0, %1, %cst {dimension_numbers = #tpu.dot_dimension_numbers<[1], [0], [0], [1], [0, 0, 1, 1], [], []>} : vector<128x16xbf16>, vector<16x8xbf16>, vector<128x8xf32> -> vector<128x8xf32>
    %3 = arith.truncf %2 : vector<128x8xf32> to vector<128x8xbf16>
    %c0_3 = arith.constant 0 : index
    %c0_4 = arith.constant 0 : index
    %4 = vector.load %arg3[%c0_3, %c0_4] : memref<128x8xbf16, #tpu.memory_space<vmem>>, vector<128x8xbf16>
    tpu.vector_store %arg3[%c0_3, %c0_4], %3 {strides = array<i32>} : memref<128x8xbf16, #tpu.memory_space<vmem>>, vector<128x8xbf16>,
    %cst_5 = arith.constant dense<0.000000e+00> : vector<8xf32>
    %5 = vector.multi_reduction <add>, %2, %cst_5 [0] : vector<128x8xf32> to vector<8xf32>
    %6 = vector.shape_cast %5 : vector<8xf32> to vector<1x8xf32>
    %7 = arith.mulf %2, %2 : vector<128x8xf32>
    %cst_6 = arith.constant dense<0.000000e+00> : vector<8xf32>
    %8 = vector.multi_reduction <add>, %7, %cst_6 [0] : vector<128x8xf32> to vector<8xf32>
    %9 = vector.shape_cast %8 : vector<8xf32> to vector<1x8xf32>
    %10 = tpu.iota {dimensions = array<i32: 0>} : vector<8x8xi32>
    %c0_i32 = arith.constant 0 : i32
    %11 = vector.broadcast %c0_i32 : i32 to vector<8x8xi32>
    %12 = arith.cmpi eq, %10, %11 : vector<8x8xi32>
    %c1_i32 = arith.constant 1 : i32
    %13 = vector.broadcast %c1_i32 : i32 to vector<8x8xi32>
    %14 = arith.cmpi eq, %10, %13 : vector<8x8xi32>
    %cst_7 = arith.constant 0.000000e+00 : f32
    %15 = vector.shape_cast %9 : vector<1x8xf32> to vector<1x8xf32>
    %16 = vector.broadcast %15 : vector<1x8xf32> to vector<8x8xf32>
    %17 = vector.broadcast %cst_7 : f32 to vector<8x8xf32>
    %18 = arith.select %14, %16, %17 : vector<8x8xi1>, vector<8x8xf32>
    %19 = vector.shape_cast %6 : vector<1x8xf32> to vector<1x8xf32>
    %20 = vector.broadcast %19 : vector<1x8xf32> to vector<8x8xf32>
    %21 = arith.select %12, %20, %18 : vector<8x8xi1>, vector<8x8xf32>
    %22 = vector.shape_cast %21 : vector<8x8xf32> to vector<1x8x8xf32>
    %c0_8 = arith.constant 0 : index
    %c0_9 = arith.constant 0 : index
    %c0_10 = arith.constant 0 : index
    %23 = vector.load %arg4[%c0_8, %c0_9, %c0_10] : memref<1x8x8xf32, #tpu.memory_space<vmem>>, vector<1x8x8xf32>
    tpu.vector_store %arg4[%c0_8, %c0_9, %c0_10], %22 {strides = array<i32>} : memref<1x8x8xf32, #tpu.memory_space<vmem>>, vector<1x8x8xf32>,
    return
  }
  func.func @transform_0(%arg0: i32) -> (i32, i32) {
    %c0_i32 = arith.constant 0 : i32
    %c0_i32_0 = arith.constant 0 : i32
    return %arg0, %c0_i32 : i32, i32
  }
  func.func @transform_1(%arg0: i32) -> (i32, i32) {
    %c0_i32 = arith.constant 0 : i32
    %c0_i32_0 = arith.constant 0 : i32
    %c0_i32_1 = arith.constant 0 : i32
    return %c0_i32, %c0_i32_0 : i32, i32
  }
  func.func @transform_2(%arg0: i32) -> (i32, i32) {
    %c0_i32 = arith.constant 0 : i32
    %c0_i32_0 = arith.constant 0 : i32
    return %arg0, %c0_i32 : i32, i32
  }
  func.func @transform_3(%arg0: i32) -> (i32, i32, i32) {
    %c0_i32 = arith.constant 0 : i32
    %c0_i32_0 = arith.constant 0 : i32
    %c0_i32_1 = arith.constant 0 : i32
    return %arg0, %c0_i32, %c0_i32_0 : i32, i32, i32
  }
}

module attributes {stable_mosaic.version = 11 : i64} {
  func.func @_mm_bias_tanh_kernel(%arg0: i32, %arg1: memref<256x392xbf16, #tpu.memory_space<vmem>>, %arg2: memref<392x4xbf16, #tpu.memory_space<vmem>>, %arg3: memref<1x4xf32, #tpu.memory_space<vmem>>, %arg4: memref<256x4xf32, #tpu.memory_space<vmem>>) attributes {dimension_semantics = [#tpu.dimension_semantics<parallel>], iteration_bounds = array<i64: 2>, scalar_prefetch = 0 : i64, scratch_operands = 0 : i64, tpu.core_type = #tpu.core_type<tc>, window_params = [{transform_indices = @transform_0, window_bounds = array<i64: 256, 392>}, {pipeline_mode = #tpu.pipeline_mode<synchronous>, transform_indices = @transform_1, window_bounds = array<i64: 392, 4>}, {pipeline_mode = #tpu.pipeline_mode<synchronous>, transform_indices = @transform_2, window_bounds = array<i64: 1, 4>}, {transform_indices = @transform_3, window_bounds = array<i64: 256, 4>}]} {
    %c0 = arith.constant 0 : index
    %c0_0 = arith.constant 0 : index
    %0 = vector.load %arg1[%c0, %c0_0] : memref<256x392xbf16, #tpu.memory_space<vmem>>, vector<256x392xbf16>
    %c0_1 = arith.constant 0 : index
    %c0_2 = arith.constant 0 : index
    %1 = vector.load %arg2[%c0_1, %c0_2] : memref<392x4xbf16, #tpu.memory_space<vmem>>, vector<392x4xbf16>
    %cst = arith.constant dense<0.000000e+00> : vector<256x4xf32>
    %2 = tpu.matmul %0, %1, %cst {dimension_numbers = #tpu.dot_dimension_numbers<[1], [0], [0], [1], [0, 0, 1, 1], [], []>} : vector<256x392xbf16>, vector<392x4xbf16>, vector<256x4xf32> -> vector<256x4xf32>
    %c0_3 = arith.constant 0 : index
    %c0_4 = arith.constant 0 : index
    %3 = vector.load %arg3[%c0_3, %c0_4] : memref<1x4xf32, #tpu.memory_space<vmem>>, vector<1x4xf32>
    %4 = vector.broadcast %3 : vector<1x4xf32> to vector<256x4xf32>
    %5 = arith.addf %2, %4 : vector<256x4xf32>
    %6 = math.tanh %5 : vector<256x4xf32>
    %c0_5 = arith.constant 0 : index
    %c0_6 = arith.constant 0 : index
    %7 = vector.load %arg4[%c0_5, %c0_6] : memref<256x4xf32, #tpu.memory_space<vmem>>, vector<256x4xf32>
    tpu.vector_store %arg4[%c0_5, %c0_6], %6 {strides = array<i32>} : memref<256x4xf32, #tpu.memory_space<vmem>>, vector<256x4xf32>,
    return
  }
  func.func @transform_0(%arg0: i32) -> (i32, i32) {
    %c0_i32 = arith.constant 0 : i32
    %c0_i32_0 = arith.constant 0 : i32
    return %arg0, %c0_i32 : i32, i32
  }
  func.func @transform_1(%arg0: i32) -> (i32, i32) {
    %c0_i32 = arith.constant 0 : i32
    %c0_i32_0 = arith.constant 0 : i32
    %c0_i32_1 = arith.constant 0 : i32
    return %c0_i32, %c0_i32_0 : i32, i32
  }
  func.func @transform_2(%arg0: i32) -> (i32, i32) {
    %c0_i32 = arith.constant 0 : i32
    %c0_i32_0 = arith.constant 0 : i32
    %c0_i32_1 = arith.constant 0 : i32
    return %c0_i32, %c0_i32_0 : i32, i32
  }
  func.func @transform_3(%arg0: i32) -> (i32, i32) {
    %c0_i32 = arith.constant 0 : i32
    %c0_i32_0 = arith.constant 0 : i32
    return %arg0, %c0_i32 : i32, i32
  }
}

</mosaic_0001>

<llo_original>
// kernel: resnet_generator_forward.26
$region0: #{resnet_generator_forward.26}
  #allocation0 [shape = 'u32[]', space=smem, size = 0x4, offset = 0x4, fixed_abs, tag = 'smem constant byte address 0x4 - core index']
  #allocation1 [shape = 'u32[144,128]{1,0:T(1,128)}', space=vmem, size = 0x12000, scoped, tag = 'internal scratch']
  %s0 = inlined_call_operand.vmem [shape: bf16[512,8], index: 0, kind: input, shape index: {}]
  %s1 = inlined_call_operand.vmem [shape: f32[1,8], index: 1, kind: input, shape index: {}]
  %s2 = inlined_call_operand.vmem [shape: f32[1,8], index: 2, kind: input, shape index: {}]
  %s3 = inlined_call_operand.vmem [shape: bf16[512,8], index: 3, kind: output, shape index: {}]
  %s4 = sld [smem:[#allocation0]]
  $region22: #{resnet_generator_forward.26} parent=0
    _
  %s6 = ssub.s32 1, %s4
  %s7 = scalar_select 0, %s6, %s4
  // Predicated region
  $region2: #{resnet_generator_forward.26} parent=0 // pred_check
    _
  $region3: #{resnet_generator_forward.26} parent=0 // pred_check_branch
    %9 = sbr.rel (0) target = $region5
  $region4: #{resnet_generator_forward.26} parent=0 // pred_region
    _
  $region5: #{resnet_generator_forward.26} parent=0 // pred_fallthru
    _
  // Predicated region
  $region6: #{resnet_generator_forward.26} parent=0 // pred_check
    _
  $region7: #{resnet_generator_forward.26} parent=0 // pred_check_branch
    %11 = sbr.rel (0) target = $region9
  $region8: #{resnet_generator_forward.26} parent=0 // pred_region
    _
  $region9: #{resnet_generator_forward.26} parent=0 // pred_fallthru
    _
  // Predicated region
  $region10: #{resnet_generator_forward.26} parent=0 // pred_check
    _
  $region11: #{resnet_generator_forward.26} parent=0 // pred_check_branch
    %13 = sbr.rel (0) target = $region13
  $region12: #{resnet_generator_forward.26} parent=0 // pred_region
    _
  $region13: #{resnet_generator_forward.26} parent=0 // pred_fallthru
    _
  %v14 = vld [vmem:[%s0] sm:$0xf]
  %v15 = vld [vmem:[%s0 + $0x4] sm:$0xf]
  %v16 = vld [vmem:[%s0 + $0x8] sm:$0xf]
  %v17 = vld [vmem:[%s0 + $0xc] sm:$0xf]
  %v18 = vld [vmem:[%s0 + $0x10] sm:$0xf]
  %v19 = vld [vmem:[%s0 + $0x14] sm:$0xf]
  %v20 = vld [vmem:[%s0 + $0x18] sm:$0xf]
  %v21 = vld [vmem:[%s0 + $0x1c] sm:$0xf]
  %v22 = vld [vmem:[%s0 + $0x20] sm:$0xf]
  %v23 = vld [vmem:[%s0 + $0x24] sm:$0xf]
  %v24 = vld [vmem:[%s0 + $0x28] sm:$0xf]
  %v25 = vld [vmem:[%s0 + $0x2c] sm:$0xf]
  %v26 = vld [vmem:[%s0 + $0x30] sm:$0xf]
  %v27 = vld [vmem:[%s0 + $0x34] sm:$0xf]
  %v28 = vld [vmem:[%s0 + $0x38] sm:$0xf]
  %v29 = vld [vmem:[%s0 + $0x3c] sm:$0xf]
  %v30 = vld [vmem:[%s0 + $0x40] sm:$0xf]
  %v31 = vld [vmem:[%s0 + $0x44] sm:$0xf]
  %v32 = vld [vmem:[%s0 + $0x48] sm:$0xf]
  %v33 = vld [vmem:[%s0 + $0x4c] sm:$0xf]
  %v34 = vld [vmem:[%s0 + $0x50] sm:$0xf]
  %v35 = vld [vmem:[%s0 + $0x54] sm:$0xf]
  %v36 = vld [vmem:[%s0 + $0x58] sm:$0xf]
  %v37 = vld [vmem:[%s0 + $0x5c] sm:$0xf]
  %v38 = vld [vmem:[%s0 + $0x60] sm:$0xf]
  %v39 = vld [vmem:[%s0 + $0x64] sm:$0xf]
  %v40 = vld [vmem:[%s0 + $0x68] sm:$0xf]
  %v41 = vld [vmem:[%s0 + $0x6c] sm:$0xf]
  %v42 = vld [vmem:[%s0 + $0x70] sm:$0xf]
  %v43 = vld [vmem:[%s0 + $0x74] sm:$0xf]
  %v44 = vld [vmem:[%s0 + $0x78] sm:$0xf]
  %v45 = vld [vmem:[%s0 + $0x7c] sm:$0xf]
  %v46 = vld [vmem:[%s0 + $0x80] sm:$0xf]
  %v47 = vld [vmem:[%s0 + $0x84] sm:$0xf]
  %v48 = vld [vmem:[%s0 + $0x88] sm:$0xf]
  %v49 = vld [vmem:[%s0 + $0x8c] sm:$0xf]
  %v50 = vld [vmem:[%s0 + $0x90] sm:$0xf]
  %v51 = vld [vmem:[%s0 + $0x94] sm:$0xf]
  %v52 = vld [vmem:[%s0 + $0x98] sm:$0xf]
  %v53 = vld [vmem:[%s0 + $0x9c] sm:$0xf]
  %v54 = vld [vmem:[%s0 + $0xa0] sm:$0xf]
  %v55 = vld [vmem:[%s0 + $0xa4] sm:$0xf]
  %v56 = vld [vmem:[%s0 + $0xa8] sm:$0xf]
  %v57 = vld [vmem:[%s0 + $0xac] sm:$0xf]
  %v58 = vld [vmem:[%s0 + $0xb0] sm:$0xf]
  %v59 = vld [vmem:[%s0 + $0xb4] sm:$0xf]
  %v60 = vld [vmem:[%s0 + $0xb8] sm:$0xf]
  %v61 = vld [vmem:[%s0 + $0xbc] sm:$0xf]
  %v62 = vld [vmem:[%s0 + $0xc0] sm:$0xf]
  %v63 = vld [vmem:[%s0 + $0xc4] sm:$0xf]
  %v64 = vld [vmem:[%s0 + $0xc8] sm:$0xf]
  %v65 = vld [vmem:[%s0 + $0xcc] sm:$0xf]
  %v66 = vld [vmem:[%s0 + $0xd0] sm:$0xf]
  %v67 = vld [vmem:[%s0 + $0xd4] sm:$0xf]
  %v68 = vld [vmem:[%s0 + $0xd8] sm:$0xf]
  %v69 = vld [vmem:[%s0 + $0xdc] sm:$0xf]
  %v70 = vld [vmem:[%s0 + $0xe0] sm:$0xf]
  %v71 = vld [vmem:[%s0 + $0xe4] sm:$0xf]
  %v72 = vld [vmem:[%s0 + $0xe8] sm:$0xf]
  %v73 = vld [vmem:[%s0 + $0xec] sm:$0xf]
  %v74 = vld [vmem:[%s0 + $0xf0] sm:$0xf]
  %v75 = vld [vmem:[%s0 + $0xf4] sm:$0xf]
  %v76 = vld [vmem:[%s0 + $0xf8] sm:$0xf]
  %v77 = vld [vmem:[%s0 + $0xfc] sm:$0xf]
  %v78 = vunpack.c.l.bf16 %v14
  %v79 = vunpack.c.l.bf16 %v15
  %v80 = vunpack.c.l.bf16 %v16
  %v81 = vunpack.c.l.bf16 %v17
  %v82 = vunpack.c.l.bf16 %v18
  %v83 = vunpack.c.l.bf16 %v19
  %v84 = vunpack.c.l.bf16 %v20
  %v85 = vunpack.c.l.bf16 %v21
  %v86 = vunpack.c.l.bf16 %v22
  %v87 = vunpack.c.l.bf16 %v23
  %v88 = vunpack.c.l.bf16 %v24
  %v89 = vunpack.c.l.bf16 %v25
  %v90 = vunpack.c.l.bf16 %v26
  %v91 = vunpack.c.l.bf16 %v27
  %v92 = vunpack.c.l.bf16 %v28
  %v93 = vunpack.c.l.bf16 %v29
  %v94 = vunpack.c.l.bf16 %v30
  %v95 = vunpack.c.l.bf16 %v31
  %v96 = vunpack.c.l.bf16 %v32
  %v97 = vunpack.c.l.bf16 %v33
  %v98 = vunpack.c.l.bf16 %v34
  %v99 = vunpack.c.l.bf16 %v35
  %v100 = vunpack.c.l.bf16 %v36
  %v101 = vunpack.c.l.bf16 %v37
  %v102 = vunpack.c.l.bf16 %v38
  %v103 = vunpack.c.l.bf16 %v39
  %v104 = vunpack.c.l.bf16 %v40
  %v105 = vunpack.c.l.bf16 %v41
  %v106 = vunpack.c.l.bf16 %v42
  %v107 = vunpack.c.l.bf16 %v43
  %v108 = vunpack.c.l.bf16 %v44
  %v109 = vunpack.c.l.bf16 %v45
  %v110 = vunpack.c.l.bf16 %v46
  %v111 = vunpack.c.l.bf16 %v47
  %v112 = vunpack.c.l.bf16 %v48
  %v113 = vunpack.c.l.bf16 %v49
  %v114 = vunpack.c.l.bf16 %v50
  %v115 = vunpack.c.l.bf16 %v51
  %v116 = vunpack.c.l.bf16 %v52
  %v117 = vunpack.c.l.bf16 %v53
  %v118 = vunpack.c.l.bf16 %v54
  %v119 = vunpack.c.l.bf16 %v55
  %v120 = vunpack.c.l.bf16 %v56
  %v121 = vunpack.c.l.bf16 %v57
  %v122 = vunpack.c.l.bf16 %v58
  %v123 = vunpack.c.l.bf16 %v59
  %v124 = vunpack.c.l.bf16 %v60
  %v125 = vunpack.c.l.bf16 %v61
  %v126 = vunpack.c.l.bf16 %v62
  %v127 = vunpack.c.l.bf16 %v63
  %v128 = vunpack.c.l.bf16 %v64
  %v129 = vunpack.c.l.bf16 %v65
  %v130 = vunpack.c.l.bf16 %v66
  %v131 = vunpack.c.l.bf16 %v67
  %v132 = vunpack.c.l.bf16 %v68
  %v133 = vunpack.c.l.bf16 %v69
  %v134 = vunpack.c.l.bf16 %v70
  %v135 = vunpack.c.l.bf16 %v71
  %v136 = vunpack.c.l.bf16 %v72
  %v137 = vunpack.c.l.bf16 %v73
  %v138 = vunpack.c.l.bf16 %v74
  %v139 = vunpack.c.l.bf16 %v75
  %v140 = vunpack.c.l.bf16 %v76
  %v141 = vunpack.c.l.bf16 %v77
  %v142 = vld [vmem:[%s1] sm:$0x1]
  %v144 = vlaneseq
  %v145 = vshrl.u32 %v144, 7
  %v146 = vsub.s32 0, %v145
  %v147 = vrot.slane %v142, %v146
  %v149 = vmul.f32 %v78, %v147
  %v150 = vmul.f32 %v79, %v147
  %v151 = vmul.f32 %v80, %v147
  %v152 = vmul.f32 %v81, %v147
  %v153 = vmul.f32 %v82, %v147
  %v154 = vmul.f32 %v83, %v147
  %v155 = vmul.f32 %v84, %v147
  %v156 = vmul.f32 %v85, %v147
  %v157 = vmul.f32 %v86, %v147
  %v158 = vmul.f32 %v87, %v147
  %v159 = vmul.f32 %v88, %v147
  %v160 = vmul.f32 %v89, %v147
  %v161 = vmul.f32 %v90, %v147
  %v162 = vmul.f32 %v91, %v147
  %v163 = vmul.f32 %v92, %v147
  %v164 = vmul.f32 %v93, %v147
  %v165 = vmul.f32 %v94, %v147
  %v166 = vmul.f32 %v95, %v147
  %v167 = vmul.f32 %v96, %v147
  %v168 = vmul.f32 %v97, %v147
  %v169 = vmul.f32 %v98, %v147
  %v170 = vmul.f32 %v99, %v147
  %v171 = vmul.f32 %v100, %v147
  %v172 = vmul.f32 %v101, %v147
  %v173 = vmul.f32 %v102, %v147
  %v174 = vmul.f32 %v103, %v147
  %v175 = vmul.f32 %v104, %v147
  %v176 = vmul.f32 %v105, %v147
  %v177 = vmul.f32 %v106, %v147
  %v178 = vmul.f32 %v107, %v147
  %v179 = vmul.f32 %v108, %v147
  %v180 = vmul.f32 %v109, %v147
  %v181 = vmul.f32 %v110, %v147
  %v182 = vmul.f32 %v111, %v147
  %v183 = vmul.f32 %v112, %v147
  %v184 = vmul.f32 %v113, %v147
  %v185 = vmul.f32 %v114, %v147
  %v186 = vmul.f32 %v115, %v147
  %v187 = vmul.f32 %v116, %v147
  %v188 = vmul.f32 %v117, %v147
  %v189 = vmul.f32 %v118, %v147
  %v190 = vmul.f32 %v119, %v147
  %v191 = vmul.f32 %v120, %v147
  %v192 = vmul.f32 %v121, %v147
  %v193 = vmul.f32 %v122, %v147
  %v194 = vmul.f32 %v123, %v147
  %v195 = vmul.f32 %v124, %v147
  %v196 = vmul.f32 %v125, %v147
  %v197 = vmul.f32 %v126, %v147
  %v198 = vmul.f32 %v127, %v147
  %v199 = vmul.f32 %v128, %v147
  %v200 = vmul.f32 %v129, %v147
  %v201 = vmul.f32 %v130, %v147
  %v202 = vmul.f32 %v131, %v147
  %v203 = vmul.f32 %v132, %v147
  %v204 = vmul.f32 %v133, %v147
  %v205 = vmul.f32 %v134, %v147
  %v206 = vmul.f32 %v135, %v147
  %v207 = vmul.f32 %v136, %v147
  %v208 = vmul.f32 %v137, %v147
  %v209 = vmul.f32 %v138, %v147
  %v210 = vmul.f32 %v139, %v147
  %v211 = vmul.f32 %v140, %v147
  %v212 = vmul.f32 %v141, %v147
  %v213 = vld [vmem:[%s2] sm:$0x1]
  %v215 = vlaneseq
  %v216 = vshrl.u32 %v215, 7
  %v217 = vsub.s32 0, %v216
  %v218 = vrot.slane %v213, %v217
  %v220 = vadd.f32 %v149, %v218
  %v221 = vadd.f32 %v150, %v218
  %v222 = vadd.f32 %v151, %v218
  %v223 = vadd.f32 %v152, %v218
  %v224 = vadd.f32 %v153, %v218
  %v225 = vadd.f32 %v154, %v218
  %v226 = vadd.f32 %v155, %v218
  %v227 = vadd.f32 %v156, %v218
  %v228 = vadd.f32 %v157, %v218
  %v229 = vadd.f32 %v158, %v218
  %v230 = vadd.f32 %v159, %v218
  %v231 = vadd.f32 %v160, %v218
  %v232 = vadd.f32 %v161, %v218
  %v233 = vadd.f32 %v162, %v218
  %v234 = vadd.f32 %v163, %v218
  %v235 = vadd.f32 %v164, %v218
  %v236 = vadd.f32 %v165, %v218
  %v237 = vadd.f32 %v166, %v218
  %v238 = vadd.f32 %v167, %v218
  %v239 = vadd.f32 %v168, %v218
  %v240 = vadd.f32 %v169, %v218
  %v241 = vadd.f32 %v170, %v218
  %v242 = vadd.f32 %v171, %v218
  %v243 = vadd.f32 %v172, %v218
  %v244 = vadd.f32 %v173, %v218
  %v245 = vadd.f32 %v174, %v218
  %v246 = vadd.f32 %v175, %v218
  %v247 = vadd.f32 %v176, %v218
  %v248 = vadd.f32 %v177, %v218
  %v249 = vadd.f32 %v178, %v218
  %v250 = vadd.f32 %v179, %v218
  %v251 = vadd.f32 %v180, %v218
  %v252 = vadd.f32 %v181, %v218
  %v253 = vadd.f32 %v182, %v218
  %v254 = vadd.f32 %v183, %v218
  %v255 = vadd.f32 %v184, %v218
  %v256 = vadd.f32 %v185, %v218
  %v257 = vadd.f32 %v186, %v218
  %v258 = vadd.f32 %v187, %v218
  %v259 = vadd.f32 %v188, %v218
  %v260 = vadd.f32 %v189, %v218
  %v261 = vadd.f32 %v190, %v218
  %v262 = vadd.f32 %v191, %v218
  %v263 = vadd.f32 %v192, %v218
  %v264 = vadd.f32 %v193, %v218
  %v265 = vadd.f32 %v194, %v218
  %v266 = vadd.f32 %v195, %v218
  %v267 = vadd.f32 %v196, %v218
  %v268 = vadd.f32 %v197, %v218
  %v269 = vadd.f32 %v198, %v218
  %v270 = vadd.f32 %v199, %v218
  %v271 = vadd.f32 %v200, %v218
  %v272 = vadd.f32 %v201, %v218
  %v273 = vadd.f32 %v202, %v218
  %v274 = vadd.f32 %v203, %v218
  %v275 = vadd.f32 %v204, %v218
  %v276 = vadd.f32 %v205, %v218
  %v277 = vadd.f32 %v206, %v218
  %v278 = vadd.f32 %v207, %v218
  %v279 = vadd.f32 %v208, %v218
  %v280 = vadd.f32 %v209, %v218
  %v281 = vadd.f32 %v210, %v218
  %v282 = vadd.f32 %v211, %v218
  %v283 = vadd.f32 %v212, %v218
  %v284 = vmax.f32 %v220, 0.0
  %v285 = vmax.f32 %v221, 0.0
  %v286 = vmax.f32 %v222, 0.0
  %v287 = vmax.f32 %v223, 0.0
  %v288 = vmax.f32 %v224, 0.0
  %v289 = vmax.f32 %v225, 0.0
  %v290 = vmax.f32 %v226, 0.0
  %v291 = vmax.f32 %v227, 0.0
  %v292 = vmax.f32 %v228, 0.0
  %v293 = vmax.f32 %v229, 0.0
  %v294 = vmax.f32 %v230, 0.0
  %v295 = vmax.f32 %v231, 0.0
  %v296 = vmax.f32 %v232, 0.0
  %v297 = vmax.f32 %v233, 0.0
  %v298 = vmax.f32 %v234, 0.0
  %v299 = vmax.f32 %v235, 0.0
  %v300 = vmax.f32 %v236, 0.0
  %v301 = vmax.f32 %v237, 0.0
  %v302 = vmax.f32 %v238, 0.0
  %v303 = vmax.f32 %v239, 0.0
  %v304 = vmax.f32 %v240, 0.0
  %v305 = vmax.f32 %v241, 0.0
  %v306 = vmax.f32 %v242, 0.0
  %v307 = vmax.f32 %v243, 0.0
  %v308 = vmax.f32 %v244, 0.0
  %v309 = vmax.f32 %v245, 0.0
  %v310 = vmax.f32 %v246, 0.0
  %v311 = vmax.f32 %v247, 0.0
  %v312 = vmax.f32 %v248, 0.0
  %v313 = vmax.f32 %v249, 0.0
  %v314 = vmax.f32 %v250, 0.0
  %v315 = vmax.f32 %v251, 0.0
  %v316 = vmax.f32 %v252, 0.0
  %v317 = vmax.f32 %v253, 0.0
  %v318 = vmax.f32 %v254, 0.0
  %v319 = vmax.f32 %v255, 0.0
  %v320 = vmax.f32 %v256, 0.0
  %v321 = vmax.f32 %v257, 0.0
  %v322 = vmax.f32 %v258, 0.0
  %v323 = vmax.f32 %v259, 0.0
  %v324 = vmax.f32 %v260, 0.0
  %v325 = vmax.f32 %v261, 0.0
  %v326 = vmax.f32 %v262, 0.0
  %v327 = vmax.f32 %v263, 0.0
  %v328 = vmax.f32 %v264, 0.0
  %v329 = vmax.f32 %v265, 0.0
  %v330 = vmax.f32 %v266, 0.0
  %v331 = vmax.f32 %v267, 0.0
  %v332 = vmax.f32 %v268, 0.0
  %v333 = vmax.f32 %v269, 0.0
  %v334 = vmax.f32 %v270, 0.0
  %v335 = vmax.f32 %v271, 0.0
  %v336 = vmax.f32 %v272, 0.0
  %v337 = vmax.f32 %v273, 0.0
  %v338 = vmax.f32 %v274, 0.0
  %v339 = vmax.f32 %v275, 0.0
  %v340 = vmax.f32 %v276, 0.0
  %v341 = vmax.f32 %v277, 0.0
  %v342 = vmax.f32 %v278, 0.0
  %v343 = vmax.f32 %v279, 0.0
  %v344 = vmax.f32 %v280, 0.0
  %v345 = vmax.f32 %v281, 0.0
  %v346 = vmax.f32 %v282, 0.0
  %v347 = vmax.f32 %v283, 0.0
  %v348 = vpack.c.bf16 %v285, %v284
  %v349 = vpack.c.bf16 %v287, %v286
  %v350 = vpack.c.bf16 %v289, %v288
  %v351 = vpack.c.bf16 %v291, %v290
  %v352 = vpack.c.bf16 %v293, %v292
  %v353 = vpack.c.bf16 %v295, %v294
  %v354 = vpack.c.bf16 %v297, %v296
  %v355 = vpack.c.bf16 %v299, %v298
  %v356 = vpack.c.bf16 %v301, %v300
  %v357 = vpack.c.bf16 %v303, %v302
  %v358 = vpack.c.bf16 %v305, %v304
  %v359 = vpack.c.bf16 %v307, %v306
  %v360 = vpack.c.bf16 %v309, %v308
  %v361 = vpack.c.bf16 %v311, %v310
  %v362 = vpack.c.bf16 %v313, %v312
  %v363 = vpack.c.bf16 %v315, %v314
  %v364 = vpack.c.bf16 %v317, %v316
  %v365 = vpack.c.bf16 %v319, %v318
  %v366 = vpack.c.bf16 %v321, %v320
  %v367 = vpack.c.bf16 %v323, %v322
  %v368 = vpack.c.bf16 %v325, %v324
  %v369 = vpack.c.bf16 %v327, %v326
  %v370 = vpack.c.bf16 %v329, %v328
  %v371 = vpack.c.bf16 %v331, %v330
  %v372 = vpack.c.bf16 %v333, %v332
  %v373 = vpack.c.bf16 %v335, %v334
  %v374 = vpack.c.bf16 %v337, %v336
  %v375 = vpack.c.bf16 %v339, %v338
  %v376 = vpack.c.bf16 %v341, %v340
  %v377 = vpack.c.bf16 %v343, %v342
  %v378 = vpack.c.bf16 %v345, %v344
  %v379 = vpack.c.bf16 %v347, %v346
  %v412 = vunpack.c.l.b16 %v348
  %v413 = vunpack.c.h.b16 %v348
  %v414 = vunpack.c.l.b16 %v349
  %v415 = vunpack.c.h.b16 %v349
  %v416 = vunpack.c.l.b16 %v350
  %v417 = vunpack.c.h.b16 %v350
  %v418 = vunpack.c.l.b16 %v351
  %v419 = vunpack.c.h.b16 %v351
  %v420 = vunpack.c.l.b16 %v352
  %v421 = vunpack.c.h.b16 %v352
  %v422 = vunpack.c.l.b16 %v353
  %v423 = vunpack.c.h.b16 %v353
  %v424 = vunpack.c.l.b16 %v354
  %v425 = vunpack.c.h.b16 %v354
  %v426 = vunpack.c.l.b16 %v355
  %v427 = vunpack.c.h.b16 %v355
  %v428 = vunpack.c.l.b16 %v356
  %v429 = vunpack.c.h.b16 %v356
  %v430 = vunpack.c.l.b16 %v357
  %v431 = vunpack.c.h.b16 %v357
  %v432 = vunpack.c.l.b16 %v358
  %v433 = vunpack.c.h.b16 %v358
  %v434 = vunpack.c.l.b16 %v359
  %v435 = vunpack.c.h.b16 %v359
  %v436 = vunpack.c.l.b16 %v360
  %v437 = vunpack.c.h.b16 %v360
  %v438 = vunpack.c.l.b16 %v361
  %v439 = vunpack.c.h.b16 %v361
  %v440 = vunpack.c.l.b16 %v362
  %v441 = vunpack.c.h.b16 %v362
  %v442 = vunpack.c.l.b16 %v363
  %v443 = vunpack.c.h.b16 %v363
  %v444 = vunpack.c.l.b16 %v364
  %v445 = vunpack.c.h.b16 %v364
  %v446 = vunpack.c.l.b16 %v365
  %v447 = vunpack.c.h.b16 %v365
  %v448 = vunpack.c.l.b16 %v366
  %v449 = vunpack.c.h.b16 %v366
  %v450 = vunpack.c.l.b16 %v367
  %v451 = vunpack.c.h.b16 %v367
  %v452 = vunpack.c.l.b16 %v368
  %v453 = vunpack.c.h.b16 %v368
  %v454 = vunpack.c.l.b16 %v369
  %v455 = vunpack.c.h.b16 %v369
  %v456 = vunpack.c.l.b16 %v370
  %v457 = vunpack.c.h.b16 %v370
  %v458 = vunpack.c.l.b16 %v371
  %v459 = vunpack.c.h.b16 %v371
  %v460 = vunpack.c.l.b16 %v372
  %v461 = vunpack.c.h.b16 %v372
  %v462 = vunpack.c.l.b16 %v373
  %v463 = vunpack.c.h.b16 %v373
  %v464 = vunpack.c.l.b16 %v374
  %v465 = vunpack.c.h.b16 %v374
  %v466 = vunpack.c.l.b16 %v375
  %v467 = vunpack.c.h.b16 %v375
  %v468 = vunpack.c.l.b16 %v376
  %v469 = vunpack.c.h.b16 %v376
  %v470 = vunpack.c.l.b16 %v377
  %v471 = vunpack.c.h.b16 %v377
  %v472 = vunpack.c.l.b16 %v378
  %v473 = vunpack.c.h.b16 %v378
  %v474 = vunpack.c.l.b16 %v379
  %v475 = vunpack.c.h.b16 %v379
  %v476 = vpack.c.b16 %v412, %v412
  %v477 = vpack.c.b16 %v413, %v413
  %v478 = vpack.c.b16 %v414, %v414
  %v479 = vpack.c.b16 %v415, %v415
  %v480 = vpack.c.b16 %v416, %v416
  %v481 = vpack.c.b16 %v417, %v417
  %v482 = vpack.c.b16 %v418, %v418
  %v483 = vpack.c.b16 %v419, %v419
  %v484 = vpack.c.b16 %v420, %v420
  %v485 = vpack.c.b16 %v421, %v421
  %v486 = vpack.c.b16 %v422, %v422
  %v487 = vpack.c.b16 %v423, %v423
  %v488 = vpack.c.b16 %v424, %v424
  %v489 = vpack.c.b16 %v425, %v425
  %v490 = vpack.c.b16 %v426, %v426
  %v491 = vpack.c.b16 %v427, %v427
  %v492 = vpack.c.b16 %v428, %v428
  %v493 = vpack.c.b16 %v429, %v429
  %v494 = vpack.c.b16 %v430, %v430
  %v495 = vpack.c.b16 %v431, %v431
  %v496 = vpack.c.b16 %v432, %v432
  %v497 = vpack.c.b16 %v433, %v433
  %v498 = vpack.c.b16 %v434, %v434
  %v499 = vpack.c.b16 %v435, %v435
  %v500 = vpack.c.b16 %v436, %v436
  %v501 = vpack.c.b16 %v437, %v437
  %v502 = vpack.c.b16 %v438, %v438
  %v503 = vpack.c.b16 %v439, %v439
  %v504 = vpack.c.b16 %v440, %v440
  %v505 = vpack.c.b16 %v441, %v441
  %v506 = vpack.c.b16 %v442, %v442
  %v507 = vpack.c.b16 %v443, %v443
  %v508 = vpack.c.b16 %v444, %v444
  %v509 = vpack.c.b16 %v445, %v445
  %v510 = vpack.c.b16 %v446, %v446
  %v511 = vpack.c.b16 %v447, %v447
  %v512 = vpack.c.b16 %v448, %v448
  %v513 = vpack.c.b16 %v449, %v449
  %v514 = vpack.c.b16 %v450, %v450
  %v515 = vpack.c.b16 %v451, %v451
  %v516 = vpack.c.b16 %v452, %v452
  %v517 = vpack.c.b16 %v453, %v453
  %v518 = vpack.c.b16 %v454, %v454
  %v519 = vpack.c.b16 %v455, %v455
  %v520 = vpack.c.b16 %v456, %v456
  %v521 = vpack.c.b16 %v457, %v457
  %v522 = vpack.c.b16 %v458, %v458
  %v523 = vpack.c.b16 %v459, %v459
  %v524 = vpack.c.b16 %v460, %v460
  %v525 = vpack.c.b16 %v461, %v461
  %v526 = vpack.c.b16 %v462, %v462
  %v527 = vpack.c.b16 %v463, %v463
  %v528 = vpack.c.b16 %v464, %v464
  %v529 = vpack.c.b16 %v465, %v465
  %v530 = vpack.c.b16 %v466, %v466
  %v531 = vpack.c.b16 %v467, %v467
  %v532 = vpack.c.b16 %v468, %v468
  %v533 = vpack.c.b16 %v469, %v469
  %v534 = vpack.c.b16 %v470, %v470
  %v535 = vpack.c.b16 %v471, %v471
  %v536 = vpack.c.b16 %v472, %v472
  %v537 = vpack.c.b16 %v473, %v473
  %v538 = vpack.c.b16 %v474, %v474
  %v539 = vpack.c.b16 %v475, %v475
  %vm604 = vcmask 60416
  %605 = vst.msk [vmem:[%s3] sm:$0xf] %vm604, %v476
  %606 = vst.msk [vmem:[%s3 + $0x4] sm:$0xf] %vm604, %v477
  %607 = vst.msk [vmem:[%s3 + $0x8] sm:$0xf] %vm604, %v478
  %608 = vst.msk [vmem:[%s3 + $0xc] sm:$0xf] %vm604, %v479
  %609 = vst.msk [vmem:[%s3 + $0x10] sm:$0xf] %vm604, %v480
  %610 = vst.msk [vmem:[%s3 + $0x14] sm:$0xf] %vm604, %v481
  %611 = vst.msk [vmem:[%s3 + $0x18] sm:$0xf] %vm604, %v482
  %612 = vst.msk [vmem:[%s3 + $0x1c] sm:$0xf] %vm604, %v483
  %613 = vst.msk [vmem:[%s3 + $0x20] sm:$0xf] %vm604, %v484
  %614 = vst.msk [vmem:[%s3 + $0x24] sm:$0xf] %vm604, %v485
  %615 = vst.msk [vmem:[%s3 + $0x28] sm:$0xf] %vm604, %v486
  %616 = vst.msk [vmem:[%s3 + $0x2c] sm:$0xf] %vm604, %v487
  %617 = vst.msk [vmem:[%s3 + $0x30] sm:$0xf] %vm604, %v488
  %618 = vst.msk [vmem:[%s3 + $0x34] sm:$0xf] %vm604, %v489
  %619 = vst.msk [vmem:[%s3 + $0x38] sm:$0xf] %vm604, %v490
  %620 = vst.msk [vmem:[%s3 + $0x3c] sm:$0xf] %vm604, %v491
  %621 = vst.msk [vmem:[%s3 + $0x40] sm:$0xf] %vm604, %v492
  %622 = vst.msk [vmem:[%s3 + $0x44] sm:$0xf] %vm604, %v493
  %623 = vst.msk [vmem:[%s3 + $0x48] sm:$0xf] %vm604, %v494
  %624 = vst.msk [vmem:[%s3 + $0x4c] sm:$0xf] %vm604, %v495
  %625 = vst.msk [vmem:[%s3 + $0x50] sm:$0xf] %vm604, %v496
  %626 = vst.msk [vmem:[%s3 + $0x54] sm:$0xf] %vm604, %v497
  %627 = vst.msk [vmem:[%s3 + $0x58] sm:$0xf] %vm604, %v498
  %628 = vst.msk [vmem:[%s3 + $0x5c] sm:$0xf] %vm604, %v499
  %629 = vst.msk [vmem:[%s3 + $0x60] sm:$0xf] %vm604, %v500
  %630 = vst.msk [vmem:[%s3 + $0x64] sm:$0xf] %vm604, %v501
  %631 = vst.msk [vmem:[%s3 + $0x68] sm:$0xf] %vm604, %v502
  %632 = vst.msk [vmem:[%s3 + $0x6c] sm:$0xf] %vm604, %v503
  %633 = vst.msk [vmem:[%s3 + $0x70] sm:$0xf] %vm604, %v504
  %634 = vst.msk [vmem:[%s3 + $0x74] sm:$0xf] %vm604, %v505
  %635 = vst.msk [vmem:[%s3 + $0x78] sm:$0xf] %vm604, %v506
  %636 = vst.msk [vmem:[%s3 + $0x7c] sm:$0xf] %vm604, %v507
  %637 = vst.msk [vmem:[%s3 + $0x80] sm:$0xf] %vm604, %v508
  %638 = vst.msk [vmem:[%s3 + $0x84] sm:$0xf] %vm604, %v509
  %639 = vst.msk [vmem:[%s3 + $0x88] sm:$0xf] %vm604, %v510
  %640 = vst.msk [vmem:[%s3 + $0x8c] sm:$0xf] %vm604, %v511
  %641 = vst.msk [vmem:[%s3 + $0x90] sm:$0xf] %vm604, %v512
  %642 = vst.msk [vmem:[%s3 + $0x94] sm:$0xf] %vm604, %v513
  %643 = vst.msk [vmem:[%s3 + $0x98] sm:$0xf] %vm604, %v514
  %644 = vst.msk [vmem:[%s3 + $0x9c] sm:$0xf] %vm604, %v515
  %645 = vst.msk [vmem:[%s3 + $0xa0] sm:$0xf] %vm604, %v516
  %646 = vst.msk [vmem:[%s3 + $0xa4] sm:$0xf] %vm604, %v517
  %647 = vst.msk [vmem:[%s3 + $0xa8] sm:$0xf] %vm604, %v518
  %648 = vst.msk [vmem:[%s3 + $0xac] sm:$0xf] %vm604, %v519
  %649 = vst.msk [vmem:[%s3 + $0xb0] sm:$0xf] %vm604, %v520
  %650 = vst.msk [vmem:[%s3 + $0xb4] sm:$0xf] %vm604, %v521
  %651 = vst.msk [vmem:[%s3 + $0xb8] sm:$0xf] %vm604, %v522
  %652 = vst.msk [vmem:[%s3 + $0xbc] sm:$0xf] %vm604, %v523
  %653 = vst.msk [vmem:[%s3 + $0xc0] sm:$0xf] %vm604, %v524
  %654 = vst.msk [vmem:[%s3 + $0xc4] sm:$0xf] %vm604, %v525
  %655 = vst.msk [vmem:[%s3 + $0xc8] sm:$0xf] %vm604, %v526
  %656 = vst.msk [vmem:[%s3 + $0xcc] sm:$0xf] %vm604, %v527
  %657 = vst.msk [vmem:[%s3 + $0xd0] sm:$0xf] %vm604, %v528
  %658 = vst.msk [vmem:[%s3 + $0xd4] sm:$0xf] %vm604, %v529
  %659 = vst.msk [vmem:[%s3 + $0xd8] sm:$0xf] %vm604, %v530
  %660 = vst.msk [vmem:[%s3 + $0xdc] sm:$0xf] %vm604, %v531
  %661 = vst.msk [vmem:[%s3 + $0xe0] sm:$0xf] %vm604, %v532
  %662 = vst.msk [vmem:[%s3 + $0xe4] sm:$0xf] %vm604, %v533
  %663 = vst.msk [vmem:[%s3 + $0xe8] sm:$0xf] %vm604, %v534
  %664 = vst.msk [vmem:[%s3 + $0xec] sm:$0xf] %vm604, %v535
  %665 = vst.msk [vmem:[%s3 + $0xf0] sm:$0xf] %vm604, %v536
  %666 = vst.msk [vmem:[%s3 + $0xf4] sm:$0xf] %vm604, %v537
  %667 = vst.msk [vmem:[%s3 + $0xf8] sm:$0xf] %vm604, %v538
  %668 = vst.msk [vmem:[%s3 + $0xfc] sm:$0xf] %vm604, %v539
  // Predicated region
  $region14: #{resnet_generator_forward.26} parent=0 // pred_check
    _
  $region15: #{resnet_generator_forward.26} parent=0 // pred_check_branch
    %670 = sbr.rel (0) target = $region17
  $region16: #{resnet_generator_forward.26} parent=0 // pred_region
    _
  $region17: #{resnet_generator_forward.26} parent=0 // pred_fallthru
    _
  // Predicated region
  $region18: #{resnet_generator_forward.26} parent=0 // pred_check
    _
  $region19: #{resnet_generator_forward.26} parent=0 // pred_check_branch
    %672 = sbr.rel (0) target = $region21
  $region20: #{resnet_generator_forward.26} parent=0 // pred_region
    _
  $region21: #{resnet_generator_forward.26} parent=0 // pred_fallthru
    _

// kernel: resnet_generator_forward.25
$region0: #{resnet_generator_forward.25}
  #allocation0 [shape = 'u32[]', space=smem, size = 0x4, offset = 0x4, fixed_abs, tag = 'smem constant byte address 0x4 - core index']
  #allocation1 [shape = 'u32[144,128]{1,0:T(1,128)}', space=vmem, size = 0x12000, scoped, tag = 'internal scratch']
  %s0 = inlined_call_operand.vmem [shape: bf16[512,196], index: 0, kind: input, shape index: {}]
  %s1 = inlined_call_operand.vmem [shape: bf16[196,8], index: 1, kind: input, shape index: {}]
  %s2 = inlined_call_operand.vmem [shape: bf16[512,8], index: 2, kind: output, shape index: {0}]
  %s3 = inlined_call_operand.vmem [shape: f32[2,8,8], index: 3, kind: output, shape index: {1}]
  %4 = xla_tuple %s2, %s3
  %s5 = sld [smem:[#allocation0]]
  $region49: #{resnet_generator_forward.25} parent=0
    _
  %s7 = ssub.s32 1, %s5
  %s8 = scalar_select 0, %s7, %s5
  loop: start=0, step=1, limit=4
  $region2: #{resnet_generator_forward.25} parent=0 // loop_pre_header
    _
  $region3: #{resnet_generator_forward.25} parent=0 // loop_header
    %s10 = sphi 0, %s14
    %p11 = scmp.ge.s32.totalorder %s10, 4
    %s20 = sphi 0, %s22
    %s23 = sphi 0, %s20
    %s24 = sphi 0, %s23
    %s40 = sphi 0, %s24
    %s44 = sphi 0, %s44
    %s46 = sphi 0, %s44
    %s47 = sphi 0, %s46
    %s61 = sphi 0, %s47
    %s67 = sphi 0, %s69
    %s70 = sphi 0, %s67
    %s71 = sphi 0, %s70
    %s87 = sphi 0, %s71
    %s93 = sphi 0, %s95
    %s96 = sphi 0, %s93
    %s97 = sphi 0, %s96
    %s113 = sphi 0, %s97
  $region4: #{resnet_generator_forward.25} parent=0 // loop_header_branch
    %13 = sbr.rel (%p11) target = $region8
  $region5: #{resnet_generator_forward.25} parent=0 // loop_body
    %s15 = ssub.s32 %s10, 1
    %s16 = ssub.s32 %s10, 2
    %s17 = sadd.s32 %s10, 1
    %s18 = ssub.s32 %s10, %s17
    %p19 = scmp.eq.s32.totalorder %s18, 0
    %s21 = sadd.s32 %s20, 1
    %s22 = scalar_select %p19, %s20, %s21
    %p25 = pneg %p19
    %p26 = scmp.eq.s32.totalorder %s10, 1
    %p27 = por %p25, %p26
    %p28 = scmp.ne.s32.totalorder %s20, %s23
    %p29 = scmp.eq.s32.totalorder %s10, 0
    %p30 = por %p28, %p29
    %p31 = scmp.ne.s32.totalorder %s20, %s23
    %p32 = scmp.eq.s32.totalorder %s15, 1
    %p33 = por %p31, %p32
    %p34 = scmp.ne.s32.totalorder %s23, %s24
    %p35 = scmp.eq.s32.totalorder %s15, 0
    %p36 = por %p34, %p35
    %p37 = scmp.ne.s32.totalorder %s23, %s24
    %p38 = scmp.eq.s32.totalorder %s16, 1
    %p39 = por %p37, %p38
    %p41 = scmp.ne.s32.totalorder %s24, %s40
    %p42 = scmp.eq.s32.totalorder %s16, 0
    %p43 = por %p41, %p42
    %s45 = sadd.s32 %s44, 1
    %p48 = scmp.eq.s32.totalorder %s10, 1
    %p49 = scmp.ne.s32.totalorder %s44, %s46
    %p50 = scmp.eq.s32.totalorder %s10, 0
    %p51 = por %p49, %p50
    %p52 = scmp.ne.s32.totalorder %s44, %s46
    %p53 = scmp.eq.s32.totalorder %s15, 1
    %p54 = por %p52, %p53
    %p55 = scmp.ne.s32.totalorder %s46, %s47
    %p56 = scmp.eq.s32.totalorder %s15, 0
    %p57 = por %p55, %p56
    %p58 = scmp.ne.s32.totalorder %s46, %s47
    %p59 = scmp.eq.s32.totalorder %s16, 1
    %p60 = por %p58, %p59
    %p62 = scmp.ne.s32.totalorder %s47, %s61
    %p63 = scmp.eq.s32.totalorder %s16, 0
    %p64 = por %p62, %p63
    %s65 = ssub.s32 %s10, %s17
    %p66 = scmp.eq.s32.totalorder %s65, 0
    %s68 = sadd.s32 %s67, 1
    %s69 = scalar_select %p66, %s67, %s68
    %p72 = pneg %p66
    %p73 = scmp.eq.s32.totalorder %s10, 1
    %p74 = por %p72, %p73
    %p75 = scmp.ne.s32.totalorder %s67, %s70
    %p76 = scmp.eq.s32.totalorder %s10, 0
    %p77 = por %p75, %p76
    %p78 = scmp.ne.s32.totalorder %s67, %s70
    %p79 = scmp.eq.s32.totalorder %s15, 1
    %p80 = por %p78, %p79
    %p81 = scmp.ne.s32.totalorder %s70, %s71
    %p82 = scmp.eq.s32.totalorder %s15, 0
    %p83 = por %p81, %p82
    %p84 = scmp.ne.s32.totalorder %s70, %s71
    %p85 = scmp.eq.s32.totalorder %s16, 1
    %p86 = por %p84, %p85
    %p88 = scmp.ne.s32.totalorder %s71, %s87
    %p89 = scmp.eq.s32.totalorder %s16, 0
    %p90 = por %p88, %p89
    %s91 = ssub.s32 %s10, %s17
    %p92 = scmp.eq.s32.totalorder %s91, 0
    %s94 = sadd.s32 %s93, 1
    %s95 = scalar_select %p92, %s93, %s94
    %p98 = pneg %p92
    %p99 = scmp.eq.s32.totalorder %s10, 1
    %p100 = por %p98, %p99
    %p101 = scmp.ne.s32.totalorder %s93, %s96
    %p102 = scmp.eq.s32.totalorder %s10, 0
    %p103 = por %p101, %p102
    %p104 = scmp.ne.s32.totalorder %s93, %s96
    %p105 = scmp.eq.s32.totalorder %s15, 1
    %p106 = por %p104, %p105
    %p107 = scmp.ne.s32.totalorder %s96, %s97
    %p108 = scmp.eq.s32.totalorder %s15, 0
    %p109 = por %p107, %p108
    %p110 = scmp.ne.s32.totalorder %s96, %s97
    %p111 = scmp.eq.s32.totalorder %s16, 1
    %p112 = por %p110, %p111
    %p114 = scmp.ne.s32.totalorder %s97, %s113
    %p115 = scmp.eq.s32.totalorder %s16, 0
    %p116 = por %p114, %p115
    %p117 = scmp.le.s32.totalorder 1, %s10
    %p118 = scmp.lt.s32.totalorder %s10, 3
    %p119 = pnand %p117, %p118
    %p120 = pneg %p119
    // Predicated region
    $region9: #{resnet_generator_forward.25} parent=5 // pred_check
      _
    $region10: #{resnet_generator_forward.25} parent=5 // pred_check_branch
      %122 = sbr.rel (%p119) target = $region12
    $region11: #{resnet_generator_forward.25} parent=5 // pred_region
      %s123 = ssub.s32 %s10, 1
      // Predicated region
      $region13: #{resnet_generator_forward.25} parent=11 // pred_check
        %p124 = pneg %p57
      $region14: #{resnet_generator_forward.25} parent=11 // pred_check_branch
        %126 = sbr.rel (%p124) target = $region16
      $region15: #{resnet_generator_forward.25} parent=11 // pred_region
        _
      $region16: #{resnet_generator_forward.25} parent=11 // pred_fallthru
        _
    $region12: #{resnet_generator_forward.25} parent=5 // pred_fallthru
      _
    %p127 = scmp.lt.s32.totalorder %s10, 2
    // Predicated region
    $region17: #{resnet_generator_forward.25} parent=5 // pred_check
      %p128 = pneg %p127
    $region18: #{resnet_generator_forward.25} parent=5 // pred_check_branch
      %130 = sbr.rel (%p128) target = $region20
    $region19: #{resnet_generator_forward.25} parent=5 // pred_region
      // Predicated region
      $region21: #{resnet_generator_forward.25} parent=19 // pred_check
        %p131 = pneg %p30
      $region22: #{resnet_generator_forward.25} parent=19 // pred_check_branch
        %133 = sbr.rel (%p131) target = $region24
      $region23: #{resnet_generator_forward.25} parent=19 // pred_region
        %s134 = smul.u32 32, %s10
        %p135 = scmp.lt.s32.totalorder %s134, 63
        %s136 = scalar_select %p135, %s134, 63
        %s137 = smul.addr %s136, 2
        %s138 = smul.addr %s137, 4
        %s139 = scalar_lea.vmem %s0, %s138
        %s140 = smul.u32 32, %s10
      $region24: #{resnet_generator_forward.25} parent=19 // pred_fallthru
        _
    $region20: #{resnet_generator_forward.25} parent=5 // pred_fallthru
      _
    %p141 = scmp.le.s32.totalorder 1, %s10
    %p142 = scmp.lt.s32.totalorder %s10, 3
    %p143 = pnand %p141, %p142
    %p144 = pneg %p143
    // Predicated region
    $region25: #{resnet_generator_forward.25} parent=5 // pred_check
      _
    $region26: #{resnet_generator_forward.25} parent=5 // pred_check_branch
      %146 = sbr.rel (%p143) target = $region28
    $region27: #{resnet_generator_forward.25} parent=5 // pred_region
      %s147 = ssub.s32 %s10, 1
      %s148 = smul.u32 32, %s15
      %p149 = scmp.lt.s32.totalorder %s148, 63
      %s150 = scalar_select %p149, %s148, 63
      %s151 = smul.addr %s150, 2
      %s152 = smul.addr %s151, 4
      %s153 = scalar_lea.vmem %s0, %s152
      %p154 = pneg %p36
      %p155 = pneg %p33
      %p156 = pneg %p57
      %p157 = pneg %p54
      %p158 = pneg %p83
      %p159 = pneg %p80
      %s160 = smul.u32 32, %s15
      %p161 = scmp.lt.s32.totalorder %s160, 63
      %s162 = scalar_select %p161, %s160, 63
      %s163 = smul.addr %s162, 4
      %s164 = scalar_lea.vmem %s2, %s163
      %p165 = pneg %p109
      %p166 = pneg %p106
      %p167 = scmp.lt.s32.totalorder %s15, 1
      %s168 = scalar_select %p167, %s15, 1
      %s169 = smul.addr %s168, 8
      %s170 = scalar_lea.vmem %s3, %s169
      %s171 = smul.u32 32, %s15
      %p172 = scmp.lt.s32.totalorder %s171, 63
      %s173 = scalar_select %p172, %s171, 63
      %s174 = smul.addr %s173, 2
      %s175 = smul.addr %s174, 4
      %s176 = scalar_lea.vmem %s0, %s175
      %s177 = smul.u32 32, %s15
      %s178 = smul.u32 32, %s15
      %p179 = scmp.lt.s32.totalorder %s178, 63
      %s180 = scalar_select %p179, %s178, 63
      %s181 = smul.addr %s180, 4
      %s182 = scalar_lea.vmem %s2, %s181
      %s183 = smul.u32 32, %s15
      %p184 = scmp.lt.s32.totalorder %s15, 1
      %s185 = scalar_select %p184, %s15, 1
      %s186 = smul.addr %s185, 8
      %s187 = scalar_lea.vmem %s3, %s186
      %v189 = vld [vmem:[%s176] sm:$0xff]
      %v190 = vld [vmem:[%s176 + $0x8] sm:$0xff]
      %v191 = vld [vmem:[%s176 + $0x10] sm:$0xff]
      %v192 = vld [vmem:[%s176 + $0x18] sm:$0xff]
      %v193 = vld [vmem:[%s176 + $0x20] sm:$0xff]
      %v194 = vld [vmem:[%s176 + $0x28] sm:$0xff]
      %v195 = vld [vmem:[%s176 + $0x30] sm:$0xff]
      %v196 = vld [vmem:[%s176 + $0x38] sm:$0xff]
      %v197 = vld [vmem:[%s176 + $0x40] sm:$0xff]
      %v198 = vld [vmem:[%s176 + $0x48] sm:$0xff]
      %v199 = vld [vmem:[%s176 + $0x50] sm:$0xff]
      %v200 = vld [vmem:[%s176 + $0x58] sm:$0xff]
      %v201 = vld [vmem:[%s176 + $0x60] sm:$0xff]
      %v202 = vld [vmem:[%s176 + $0x68] sm:$0xff]
      %v203 = vld [vmem:[%s176 + $0x70] sm:$0xff]
      %v204 = vld [vmem:[%s176 + $0x78] sm:$0xff]
      %v205 = vld [vmem:[%s176 + $0x80] sm:$0xff]
      %v206 = vld [vmem:[%s176 + $0x88] sm:$0xff]
      %v207 = vld [vmem:[%s176 + $0x90] sm:$0xff]
      %v208 = vld [vmem:[%s176 + $0x98] sm:$0xff]
      %v209 = vld [vmem:[%s176 + $0xa0] sm:$0xff]
      %v210 = vld [vmem:[%s176 + $0xa8] sm:$0xff]
      %v211 = vld [vmem:[%s176 + $0xb0] sm:$0xff]
      %v212 = vld [vmem:[%s176 + $0xb8] sm:$0xff]
      %v213 = vld [vmem:[%s176 + $0xc0] sm:$0xff]
      %v214 = vld [vmem:[%s176 + $0xc8] sm:$0xff]
      %v215 = vld [vmem:[%s176 + $0xd0] sm:$0xff]
      %v216 = vld [vmem:[%s176 + $0xd8] sm:$0xff]
      %v217 = vld [vmem:[%s176 + $0xe0] sm:$0xff]
      %v218 = vld [vmem:[%s176 + $0xe8] sm:$0xff]
      %v219 = vld [vmem:[%s176 + $0xf0] sm:$0xff]
      %v220 = vld [vmem:[%s176 + $0xf8] sm:$0xff]
      %v221 = vld [vmem:[%s1] sm:$0xf]
      %v222 = vld [vmem:[%s1 + $0x4] sm:$0xf]
      %v223 = vld [vmem:[%s1 + $0x8] sm:$0xf]
      %v224 = vld [vmem:[%s1 + $0xc] sm:$0xf]
      %v225 = vld [vmem:[%s1 + $0x10] sm:$0xf]
      %v226 = vld [vmem:[%s1 + $0x14] sm:$0xf]
      %v227 = vld [vmem:[%s1 + $0x18] sm:$0xf]
      %v228 = vld [vmem:[%s1 + $0x1c] sm:$0xf]
      %v229 = vld [vmem:[%s1 + $0x20] sm:$0xf]
      %v230 = vld [vmem:[%s1 + $0x24] sm:$0xf]
      %v231 = vld [vmem:[%s1 + $0x28] sm:$0xf]
      %v232 = vld [vmem:[%s1 + $0x2c] sm:$0xf]
      %v233 = vld [vmem:[%s1 + $0x30] sm:$0xf]
      %v234 = vld [vmem:[%s1 + $0x34] sm:$0xf]
      %v235 = vld [vmem:[%s1 + $0x38] sm:$0xf]
      %v236 = vld [vmem:[%s1 + $0x3c] sm:$0xf]
      %v237 = vld [vmem:[%s1 + $0x40] sm:$0xf]
      %v238 = vld [vmem:[%s1 + $0x44] sm:$0xf]
      %v239 = vld [vmem:[%s1 + $0x48] sm:$0xf]
      %v240 = vld [vmem:[%s1 + $0x4c] sm:$0xf]
      %v241 = vld [vmem:[%s1 + $0x50] sm:$0xf]
      %v242 = vld [vmem:[%s1 + $0x54] sm:$0xf]
      %v243 = vld [vmem:[%s1 + $0x58] sm:$0xf]
      %v244 = vld [vmem:[%s1 + $0x5c] sm:$0xf]
      %v245 = vld [vmem:[%s1 + $0x60] sm:$0x3]
      %v278 = vunpack.c.l.b16 %v189
      %v279 = vunpack.c.h.b16 %v189
      %v280 = vunpack.c.l.b16 %v190
      %v281 = vunpack.c.h.b16 %v190
      %v282 = vunpack.c.l.b16 %v191
      %v283 = vunpack.c.h.b16 %v191
      %v284 = vunpack.c.l.b16 %v192
      %v285 = vunpack.c.h.b16 %v192
      %v286 = vunpack.c.l.b16 %v193
      %v287 = vunpack.c.h.b16 %v193
      %v288 = vunpack.c.l.b16 %v194
      %v289 = vunpack.c.h.b16 %v194
      %v290 = vunpack.c.l.b16 %v195
      %v291 = vunpack.c.h.b16 %v195
      %v292 = vunpack.c.l.b16 %v196
      %v293 = vunpack.c.h.b16 %v196
      %v294 = vunpack.c.l.b16 %v197
      %v295 = vunpack.c.h.b16 %v197
      %v296 = vunpack.c.l.b16 %v198
      %v297 = vunpack.c.h.b16 %v198
      %v298 = vunpack.c.l.b16 %v199
      %v299 = vunpack.c.h.b16 %v199
      %v300 = vunpack.c.l.b16 %v200
      %v301 = vunpack.c.h.b16 %v200
      %v302 = vunpack.c.l.b16 %v201
      %v303 = vunpack.c.h.b16 %v201
      %v304 = vunpack.c.l.b16 %v202
      %v305 = vunpack.c.h.b16 %v202
      %v306 = vunpack.c.l.b16 %v203
      %v307 = vunpack.c.h.b16 %v203
      %v308 = vunpack.c.l.b16 %v204
      %v309 = vunpack.c.h.b16 %v204
      %v310 = vunpack.c.l.b16 %v205
      %v311 = vunpack.c.h.b16 %v205
      %v312 = vunpack.c.l.b16 %v206
      %v313 = vunpack.c.h.b16 %v206
      %v314 = vunpack.c.l.b16 %v207
      %v315 = vunpack.c.h.b16 %v207
      %v316 = vunpack.c.l.b16 %v208
      %v317 = vunpack.c.h.b16 %v208
      %v318 = vunpack.c.l.b16 %v209
      %v319 = vunpack.c.h.b16 %v209
      %v320 = vunpack.c.l.b16 %v210
      %v321 = vunpack.c.h.b16 %v210
      %v322 = vunpack.c.l.b16 %v211
      %v323 = vunpack.c.h.b16 %v211
      %v324 = vunpack.c.l.b16 %v212
      %v325 = vunpack.c.h.b16 %v212
      %v326 = vunpack.c.l.b16 %v213
      %v327 = vunpack.c.h.b16 %v213
      %v328 = vunpack.c.l.b16 %v214
      %v329 = vunpack.c.h.b16 %v214
      %v330 = vunpack.c.l.b16 %v215
      %v331 = vunpack.c.h.b16 %v215
      %v332 = vunpack.c.l.b16 %v216
      %v333 = vunpack.c.h.b16 %v216
      %v334 = vunpack.c.l.b16 %v217
      %v335 = vunpack.c.h.b16 %v217
      %v336 = vunpack.c.l.b16 %v218
      %v337 = vunpack.c.h.b16 %v218
      %v338 = vunpack.c.l.b16 %v219
      %v339 = vunpack.c.h.b16 %v219
      %v340 = vunpack.c.l.b16 %v220
      %v341 = vunpack.c.h.b16 %v220
      %v342 = vpack.c.b16 %v280, %v278
      %v343 = vpack.c.b16 %v281, %v279
      %v344 = vpack.c.b16 %v284, %v282
      %v345 = vpack.c.b16 %v285, %v283
      %v346 = vpack.c.b16 %v288, %v286
      %v347 = vpack.c.b16 %v289, %v287
      %v348 = vpack.c.b16 %v292, %v290
      %v349 = vpack.c.b16 %v293, %v291
      %v350 = vpack.c.b16 %v296, %v294
      %v351 = vpack.c.b16 %v297, %v295
      %v352 = vpack.c.b16 %v300, %v298
      %v353 = vpack.c.b16 %v301, %v299
      %v354 = vpack.c.b16 %v304, %v302
      %v355 = vpack.c.b16 %v305, %v303
      %v356 = vpack.c.b16 %v308, %v306
      %v357 = vpack.c.b16 %v309, %v307
      %v358 = vpack.c.b16 %v312, %v310
      %v359 = vpack.c.b16 %v313, %v311
      %v360 = vpack.c.b16 %v316, %v314
      %v361 = vpack.c.b16 %v317, %v315
      %v362 = vpack.c.b16 %v320, %v318
      %v363 = vpack.c.b16 %v321, %v319
      %v364 = vpack.c.b16 %v324, %v322
      %v365 = vpack.c.b16 %v325, %v323
      %v366 = vpack.c.b16 %v328, %v326
      %v367 = vpack.c.b16 %v329, %v327
      %v368 = vpack.c.b16 %v332, %v330
      %v369 = vpack.c.b16 %v333, %v331
      %v370 = vpack.c.b16 %v336, %v334
      %v371 = vpack.c.b16 %v337, %v335
      %v372 = vpack.c.b16 %v340, %v338
      %v373 = vpack.c.b16 %v341, %v339
      %v415 = vunpack.c.l.b16 %v221
      %v416 = vunpack.c.l.b16 %v222
      %v417 = vunpack.c.l.b16 %v223
      %v418 = vunpack.c.l.b16 %v224
      %v419 = vunpack.c.l.b16 %v225
      %v420 = vunpack.c.l.b16 %v226
      %v421 = vunpack.c.l.b16 %v227
      %v422 = vunpack.c.l.b16 %v228
      %v423 = vunpack.c.l.b16 %v229
      %v424 = vunpack.c.l.b16 %v230
      %v425 = vunpack.c.l.b16 %v231
      %v426 = vunpack.c.l.b16 %v232
      %v427 = vunpack.c.l.b16 %v233
      %v428 = vunpack.c.l.b16 %v234
      %v429 = vunpack.c.l.b16 %v235
      %v430 = vunpack.c.l.b16 %v236
      %v431 = vunpack.c.l.b16 %v237
      %v432 = vunpack.c.l.b16 %v238
      %v433 = vunpack.c.l.b16 %v239
      %v434 = vunpack.c.l.b16 %v240
      %v435 = vunpack.c.l.b16 %v241
      %v436 = vunpack.c.l.b16 %v242
      %v437 = vunpack.c.l.b16 %v243
      %v438 = vunpack.c.l.b16 %v244
      %v439 = vunpack.c.l.b16 %v245
      %v440 = vpack.c.b16 %v416, %v415
      %v441 = vpack.c.b16 %v418, %v417
      %v442 = vpack.c.b16 %v420, %v419
      %v443 = vpack.c.b16 %v422, %v421
      %v444 = vpack.c.b16 %v424, %v423
      %v445 = vpack.c.b16 %v426, %v425
      %v446 = vpack.c.b16 %v428, %v427
      %v447 = vpack.c.b16 %v430, %v429
      %v448 = vpack.c.b16 %v432, %v431
      %v449 = vpack.c.b16 %v434, %v433
      %v450 = vpack.c.b16 %v436, %v435
      %v451 = vpack.c.b16 %v438, %v437
      %v452 = vpack.c.b16 %v439, %v439
      %vm465 = vcmask 556032
      %v467 = vsel %vm465, %v343, 0
      %v470 = vsel %vm465, %v345, 0
      %v473 = vsel %vm465, %v347, 0
      %v476 = vsel %vm465, %v349, 0
      %v479 = vsel %vm465, %v351, 0
      %v482 = vsel %vm465, %v353, 0
      %v485 = vsel %vm465, %v355, 0
      %v488 = vsel %vm465, %v357, 0
      %v491 = vsel %vm465, %v359, 0
      %v494 = vsel %vm465, %v361, 0
      %v497 = vsel %vm465, %v363, 0
      %v500 = vsel %vm465, %v365, 0
      %v503 = vsel %vm465, %v367, 0
      %v506 = vsel %vm465, %v369, 0
      %v509 = vsel %vm465, %v371, 0
      %v512 = vsel %vm465, %v373, 0
      %vm514 = vcmask 1041408
      %v516 = vsel %vm514, %v452, 0
      %518 = vmatprep.subr.bf16.mxu0 0
      %519 = vmatpush1.bf16.msra.mxu0 %v440
      %520 = vmatprep.subr.bf16.mxu0 0
      %521 = vmatpush1.bf16.msra.mxu0 %v441
      %522 = vmatprep.subr.bf16.mxu0 0
      %523 = vmatpush1.bf16.msra.mxu0 %v442
      %524 = vmatprep.subr.bf16.mxu0 0
      %525 = vmatpush1.bf16.msra.mxu0 %v443
      %526 = vmatprep.subr.bf16.mxu0 0
      %527 = vmatpush1.bf16.msra.mxu0 %v444
      %528 = vmatprep.subr.bf16.mxu0 0
      %529 = vmatpush1.bf16.msra.mxu0 %v445
      %530 = vmatprep.subr.bf16.mxu0 0
      %531 = vmatpush1.bf16.msra.mxu0 %v446
      %532 = vmatprep.subr.bf16.mxu0 0
      %533 = vmatpush1.bf16.msra.mxu0 %v447
      %534 = vmatprep.subr.bf16.mxu0 0
      %535 = vmatpush1.bf16.msra.mxu0 %v448
      %536 = vmatprep.subr.bf16.mxu0 0
      %537 = vmatpush1.bf16.msra.mxu0 %v449
      %538 = vmatprep.subr.bf16.mxu0 0
      %539 = vmatpush1.bf16.msra.mxu0 %v450
      %540 = vmatprep.subr.bf16.mxu0 0
      %541 = vmatpush1.bf16.msra.mxu0 %v451
      %542 = vmatprep.subr.bf16.mxu0 0
      %543 = vmatpush1.bf16.msra.mxu0 %v516
      %544 = vmatprep.subr.bf16.mxu0 0
      %545 = vmatpush1.bf16.msra.mxu0 0
      %546 = vmatprep.subr.bf16.mxu0 0
      %547 = vmatpush1.bf16.msra.mxu0 0
      %548 = vmatprep.subr.bf16.mxu0 0
      %549 = vmatpush1.bf16.msra.mxu0 0
      %550 = vmatprep.mubr.bf16.mxu0 %v467
      %551 = vmatmul.mubr.bf16.gmra.mrb[0].mxu0 %v342
      %v552 = vpop.f32.mrb[0].mxu0
      %v553 = vadd.f32 0.0, %v552
      %v554 = vpop.f32.mrb[0].mxu0
      %v555 = vpop.f32.mrb[0].mxu0
      %v556 = vadd.f32 0.0, %v555
      %v557 = vpop.f32.mrb[0].mxu0
      %558 = vmatprep.mubr.bf16.mxu0 %v470
      %559 = vmatmul.mubr.bf16.gmra.mrb[0].mxu0 %v344
      %v560 = vpop.f32.mrb[0].mxu0
      %v561 = vadd.f32 0.0, %v560
      %v562 = vpop.f32.mrb[0].mxu0
      %v563 = vpop.f32.mrb[0].mxu0
      %v564 = vadd.f32 0.0, %v563
      %v565 = vpop.f32.mrb[0].mxu0
      %566 = vmatprep.mubr.bf16.mxu0 %v473
      %567 = vmatmul.mubr.bf16.gmra.mrb[0].mxu0 %v346
      %v568 = vpop.f32.mrb[0].mxu0
      %v569 = vadd.f32 0.0, %v568
      %v570 = vpop.f32.mrb[0].mxu0
      %v571 = vpop.f32.mrb[0].mxu0
      %v572 = vadd.f32 0.0, %v571
      %v573 = vpop.f32.mrb[0].mxu0
      %574 = vmatprep.mubr.bf16.mxu0 %v476
      %575 = vmatmul.mubr.bf16.gmra.mrb[0].mxu0 %v348
      %v576 = vpop.f32.mrb[0].mxu0
      %v577 = vadd.f32 0.0, %v576
      %v578 = vpop.f32.mrb[0].mxu0
      %v579 = vpop.f32.mrb[0].mxu0
      %v580 = vadd.f32 0.0, %v579
      %v581 = vpop.f32.mrb[0].mxu0
      %582 = vmatprep.mubr.bf16.mxu0 %v479
      %583 = vmatmul.mubr.bf16.gmra.mrb[0].mxu0 %v350
      %v584 = vpop.f32.mrb[0].mxu0
      %v585 = vadd.f32 0.0, %v584
      %v586 = vpop.f32.mrb[0].mxu0
      %v587 = vpop.f32.mrb[0].mxu0
      %v588 = vadd.f32 0.0, %v587
      %v589 = vpop.f32.mrb[0].mxu0
      %590 = vmatprep.mubr.bf16.mxu0 %v482
      %591 = vmatmul.mubr.bf16.gmra.mrb[0].mxu0 %v352
      %v592 = vpop.f32.mrb[0].mxu0
      %v593 = vadd.f32 0.0, %v592
      %v594 = vpop.f32.mrb[0].mxu0
      %v595 = vpop.f32.mrb[0].mxu0
      %v596 = vadd.f32 0.0, %v595
      %v597 = vpop.f32.mrb[0].mxu0
      %598 = vmatprep.mubr.bf16.mxu0 %v485
      %599 = vmatmul.mubr.bf16.gmra.mrb[0].mxu0 %v354
      %v600 = vpop.f32.mrb[0].mxu0
      %v601 = vadd.f32 0.0, %v600
      %v602 = vpop.f32.mrb[0].mxu0
      %v603 = vpop.f32.mrb[0].mxu0
      %v604 = vadd.f32 0.0, %v603
      %v605 = vpop.f32.mrb[0].mxu0
      %606 = vmatprep.mubr.bf16.mxu0 %v488
      %607 = vmatmul.mubr.bf16.gmra.mrb[0].mxu0 %v356
      %v608 = vpop.f32.mrb[0].mxu0
      %v609 = vadd.f32 0.0, %v608
      %v610 = vpop.f32.mrb[0].mxu0
      %v611 = vpop.f32.mrb[0].mxu0
      %v612 = vadd.f32 0.0, %v611
      %v613 = vpop.f32.mrb[0].mxu0
      %614 = vmatprep.mubr.bf16.mxu0 %v491
      %615 = vmatmul.mubr.bf16.gmra.mrb[0].mxu0 %v358
      %v616 = vpop.f32.mrb[0].mxu0
      %v617 = vadd.f32 0.0, %v616
      %v618 = vpop.f32.mrb[0].mxu0
      %v619 = vpop.f32.mrb[0].mxu0
      %v620 = vadd.f32 0.0, %v619
      %v621 = vpop.f32.mrb[0].mxu0
      %622 = vmatprep.mubr.bf16.mxu0 %v494
      %623 = vmatmul.mubr.bf16.gmra.mrb[0].mxu0 %v360
      %v624 = vpop.f32.mrb[0].mxu0
      %v625 = vadd.f32 0.0, %v624
      %v626 = vpop.f32.mrb[0].mxu0
      %v627 = vpop.f32.mrb[0].mxu0
      %v628 = vadd.f32 0.0, %v627
      %v629 = vpop.f32.mrb[0].mxu0
      %630 = vmatprep.mubr.bf16.mxu0 %v497
      %631 = vmatmul.mubr.bf16.gmra.mrb[0].mxu0 %v362
      %v632 = vpop.f32.mrb[0].mxu0
      %v633 = vadd.f32 0.0, %v632
      %v634 = vpop.f32.mrb[0].mxu0
      %v635 = vpop.f32.mrb[0].mxu0
      %v636 = vadd.f32 0.0, %v635
      %v637 = vpop.f32.mrb[0].mxu0
      %638 = vmatprep.mubr.bf16.mxu0 %v500
      %639 = vmatmul.mubr.bf16.gmra.mrb[0].mxu0 %v364
      %v640 = vpop.f32.mrb[0].mxu0
      %v641 = vadd.f32 0.0, %v640
      %v642 = vpop.f32.mrb[0].mxu0
      %v643 = vpop.f32.mrb[0].mxu0
      %v644 = vadd.f32 0.0, %v643
      %v645 = vpop.f32.mrb[0].mxu0
      %646 = vmatprep.mubr.bf16.mxu0 %v503
      %647 = vmatmul.mubr.bf16.gmra.mrb[0].mxu0 %v366
      %v648 = vpop.f32.mrb[0].mxu0
      %v649 = vadd.f32 0.0, %v648
      %v650 = vpop.f32.mrb[0].mxu0
      %v651 = vpop.f32.mrb[0].mxu0
      %v652 = vadd.f32 0.0, %v651
      %v653 = vpop.f32.mrb[0].mxu0
      %654 = vmatprep.mubr.bf16.mxu0 %v506
      %655 = vmatmul.mubr.bf16.gmra.mrb[0].mxu0 %v368
      %v656 = vpop.f32.mrb[0].mxu0
      %v657 = vadd.f32 0.0, %v656
      %v658 = vpop.f32.mrb[0].mxu0
      %v659 = vpop.f32.mrb[0].mxu0
      %v660 = vadd.f32 0.0, %v659
      %v661 = vpop.f32.mrb[0].mxu0
      %662 = vmatprep.mubr.bf16.mxu0 %v509
      %663 = vmatmul.mubr.bf16.gmra.mrb[0].mxu0 %v370
      %v664 = vpop.f32.mrb[0].mxu0
      %v665 = vadd.f32 0.0, %v664
      %v666 = vpop.f32.mrb[0].mxu0
      %v667 = vpop.f32.mrb[0].mxu0
      %v668 = vadd.f32 0.0, %v667
      %v669 = vpop.f32.mrb[0].mxu0
      %670 = vmatprep.mubr.bf16.mxu0 %v512
      %671 = vmatmul.mubr.bf16.gmra.mrb[0].mxu0 %v372
      %v672 = vpop.f32.mrb[0].mxu0
      %v673 = vadd.f32 0.0, %v672
      %v674 = vpop.f32.mrb[0].mxu0
      %v675 = vpop.f32.mrb[0].mxu0
      %v676 = vadd.f32 0.0, %v675
      %v677 = vpop.f32.mrb[0].mxu0
      %678 = vdwg.mxu0
      %v679 = vpack.c.bf16 %v556, %v553
      %v680 = vpack.c.bf16 %v564, %v561
      %v681 = vpack.c.bf16 %v572, %v569
      %v682 = vpack.c.bf16 %v580, %v577
      %v683 = vpack.c.bf16 %v588, %v585
      %v684 = vpack.c.bf16 %v596, %v593
      %v685 = vpack.c.bf16 %v604, %v601
      %v686 = vpack.c.bf16 %v612, %v609
      %v687 = vpack.c.bf16 %v620, %v617
      %v688 = vpack.c.bf16 %v628, %v625
      %v689 = vpack.c.bf16 %v636, %v633
      %v690 = vpack.c.bf16 %v644, %v641
      %v691 = vpack.c.bf16 %v652, %v649
      %v692 = vpack.c.bf16 %v660, %v657
      %v693 = vpack.c.bf16 %v668, %v665
      %v694 = vpack.c.bf16 %v676, %v673
      %v711 = vunpack.c.l.b16 %v679
      %v712 = vunpack.c.h.b16 %v679
      %v713 = vunpack.c.l.b16 %v680
      %v714 = vunpack.c.h.b16 %v680
      %v715 = vunpack.c.l.b16 %v681
      %v716 = vunpack.c.h.b16 %v681
      %v717 = vunpack.c.l.b16 %v682
      %v718 = vunpack.c.h.b16 %v682
      %v719 = vunpack.c.l.b16 %v683
      %v720 = vunpack.c.h.b16 %v683
      %v721 = vunpack.c.l.b16 %v684
      %v722 = vunpack.c.h.b16 %v684
      %v723 = vunpack.c.l.b16 %v685
      %v724 = vunpack.c.h.b16 %v685
      %v725 = vunpack.c.l.b16 %v686
      %v726 = vunpack.c.h.b16 %v686
      %v727 = vunpack.c.l.b16 %v687
      %v728 = vunpack.c.h.b16 %v687
      %v729 = vunpack.c.l.b16 %v688
      %v730 = vunpack.c.h.b16 %v688
      %v731 = vunpack.c.l.b16 %v689
      %v732 = vunpack.c.h.b16 %v689
      %v733 = vunpack.c.l.b16 %v690
      %v734 = vunpack.c.h.b16 %v690
      %v735 = vunpack.c.l.b16 %v691
      %v736 = vunpack.c.h.b16 %v691
      %v737 = vunpack.c.l.b16 %v692
      %v738 = vunpack.c.h.b16 %v692
      %v739 = vunpack.c.l.b16 %v693
      %v740 = vunpack.c.h.b16 %v693
      %v741 = vunpack.c.l.b16 %v694
      %v742 = vunpack.c.h.b16 %v694
      %v743 = vpack.c.b16 %v711, %v711
      %v744 = vpack.c.b16 %v712, %v712
      %v745 = vpack.c.b16 %v713, %v713
      %v746 = vpack.c.b16 %v714, %v714
      %v747 = vpack.c.b16 %v715, %v715
      %v748 = vpack.c.b16 %v716, %v716
      %v749 = vpack.c.b16 %v717, %v717
      %v750 = vpack.c.b16 %v718, %v718
      %v751 = vpack.c.b16 %v719, %v719
      %v752 = vpack.c.b16 %v720, %v720
      %v753 = vpack.c.b16 %v721, %v721
      %v754 = vpack.c.b16 %v722, %v722
      %v755 = vpack.c.b16 %v723, %v723
      %v756 = vpack.c.b16 %v724, %v724
      %v757 = vpack.c.b16 %v725, %v725
      %v758 = vpack.c.b16 %v726, %v726
      %v759 = vpack.c.b16 %v727, %v727
      %v760 = vpack.c.b16 %v728, %v728
      %v761 = vpack.c.b16 %v729, %v729
      %v762 = vpack.c.b16 %v730, %v730
      %v763 = vpack.c.b16 %v731, %v731
      %v764 = vpack.c.b16 %v732, %v732
      %v765 = vpack.c.b16 %v733, %v733
      %v766 = vpack.c.b16 %v734, %v734
      %v767 = vpack.c.b16 %v735, %v735
      %v768 = vpack.c.b16 %v736, %v736
      %v769 = vpack.c.b16 %v737, %v737
      %v770 = vpack.c.b16 %v738, %v738
      %v771 = vpack.c.b16 %v739, %v739
      %v772 = vpack.c.b16 %v740, %v740
      %v773 = vpack.c.b16 %v741, %v741
      %v774 = vpack.c.b16 %v742, %v742
      %vm807 = vcmask 60416
      %808 = vst.msk [vmem:[%s182] sm:$0xf] %vm807, %v743
      %809 = vst.msk [vmem:[%s182 + $0x4] sm:$0xf] %vm807, %v744
      %810 = vst.msk [vmem:[%s182 + $0x8] sm:$0xf] %vm807, %v745
      %811 = vst.msk [vmem:[%s182 + $0xc] sm:$0xf] %vm807, %v746
      %812 = vst.msk [vmem:[%s182 + $0x10] sm:$0xf] %vm807, %v747
      %813 = vst.msk [vmem:[%s182 + $0x14] sm:$0xf] %vm807, %v748
      %814 = vst.msk [vmem:[%s182 + $0x18] sm:$0xf] %vm807, %v749
      %815 = vst.msk [vmem:[%s182 + $0x1c] sm:$0xf] %vm807, %v750
      %816 = vst.msk [vmem:[%s182 + $0x20] sm:$0xf] %vm807, %v751
      %817 = vst.msk [vmem:[%s182 + $0x24] sm:$0xf] %vm807, %v752
      %818 = vst.msk [vmem:[%s182 + $0x28] sm:$0xf] %vm807, %v753
      %819 = vst.msk [vmem:[%s182 + $0x2c] sm:$0xf] %vm807, %v754
      %820 = vst.msk [vmem:[%s182 + $0x30] sm:$0xf] %vm807, %v755
      %821 = vst.msk [vmem:[%s182 + $0x34] sm:$0xf] %vm807, %v756
      %822 = vst.msk [vmem:[%s182 + $0x38] sm:$0xf] %vm807, %v757
      %823 = vst.msk [vmem:[%s182 + $0x3c] sm:$0xf] %vm807, %v758
      %824 = vst.msk [vmem:[%s182 + $0x40] sm:$0xf] %vm807, %v759
      %825 = vst.msk [vmem:[%s182 + $0x44] sm:$0xf] %vm807, %v760
      %826 = vst.msk [vmem:[%s182 + $0x48] sm:$0xf] %vm807, %v761
      %827 = vst.msk [vmem:[%s182 + $0x4c] sm:$0xf] %vm807, %v762
      %828 = vst.msk [vmem:[%s182 + $0x50] sm:$0xf] %vm807, %v763
      %829 = vst.msk [vmem:[%s182 + $0x54] sm:$0xf] %vm807, %v764
      %830 = vst.msk [vmem:[%s182 + $0x58] sm:$0xf] %vm807, %v765
      %831 = vst.msk [vmem:[%s182 + $0x5c] sm:$0xf] %vm807, %v766
      %832 = vst.msk [vmem:[%s182 + $0x60] sm:$0xf] %vm807, %v767
      %833 = vst.msk [vmem:[%s182 + $0x64] sm:$0xf] %vm807, %v768
      %834 = vst.msk [vmem:[%s182 + $0x68] sm:$0xf] %vm807, %v769
      %835 = vst.msk [vmem:[%s182 + $0x6c] sm:$0xf] %vm807, %v770
      %836 = vst.msk [vmem:[%s182 + $0x70] sm:$0xf] %vm807, %v771
      %837 = vst.msk [vmem:[%s182 + $0x74] sm:$0xf] %vm807, %v772
      %838 = vst.msk [vmem:[%s182 + $0x78] sm:$0xf] %vm807, %v773
      %839 = vst.msk [vmem:[%s182 + $0x7c] sm:$0xf] %vm807, %v774
      %vm840 = vcmask 64512
      %v841 = vsel %vm840, %v553, 0.0
      %v842 = vsel %vm840, %v556, 0.0
      %v843 = vadd.f32 %v841, %v842
      %v844 = vsel %vm840, %v561, 0.0
      %v845 = vadd.f32 %v843, %v844
      %v846 = vsel %vm840, %v564, 0.0
      %v847 = vadd.f32 %v845, %v846
      %v848 = vsel %vm840, %v569, 0.0
      %v849 = vadd.f32 %v847, %v848
      %v850 = vsel %vm840, %v572, 0.0
      %v851 = vadd.f32 %v849, %v850
      %v852 = vsel %vm840, %v577, 0.0
      %v853 = vadd.f32 %v851, %v852
      %v854 = vsel %vm840, %v580, 0.0
      %v855 = vadd.f32 %v853, %v854
      %v856 = vsel %vm840, %v585, 0.0
      %v857 = vadd.f32 %v855, %v856
      %v858 = vsel %vm840, %v588, 0.0
      %v859 = vadd.f32 %v857, %v858
      %v860 = vsel %vm840, %v593, 0.0
      %v861 = vadd.f32 %v859, %v860
      %v862 = vsel %vm840, %v596, 0.0
      %v863 = vadd.f32 %v861, %v862
      %v864 = vsel %vm840, %v601, 0.0
      %v865 = vadd.f32 %v863, %v864
      %v866 = vsel %vm840, %v604, 0.0
      %v867 = vadd.f32 %v865, %v866
      %v868 = vsel %vm840, %v609, 0.0
      %v869 = vadd.f32 %v867, %v868
      %v870 = vsel %vm840, %v612, 0.0
      %v871 = vadd.f32 %v869, %v870
      %v872 = vsel %vm840, %v617, 0.0
      %v873 = vadd.f32 %v871, %v872
      %v874 = vsel %vm840, %v620, 0.0
      %v875 = vadd.f32 %v873, %v874
      %v876 = vsel %vm840, %v625, 0.0
      %v877 = vadd.f32 %v875, %v876
      %v878 = vsel %vm840, %v628, 0.0
      %v879 = vadd.f32 %v877, %v878
      %v880 = vsel %vm840, %v633, 0.0
      %v881 = vadd.f32 %v879, %v880
      %v882 = vsel %vm840, %v636, 0.0
      %v883 = vadd.f32 %v881, %v882
      %v884 = vsel %vm840, %v641, 0.0
      %v885 = vadd.f32 %v883, %v884
      %v886 = vsel %vm840, %v644, 0.0
      %v887 = vadd.f32 %v885, %v886
      %v888 = vsel %vm840, %v649, 0.0
      %v889 = vadd.f32 %v887, %v888
      %v890 = vsel %vm840, %v652, 0.0
      %v891 = vadd.f32 %v889, %v890
      %v892 = vsel %vm840, %v657, 0.0
      %v893 = vadd.f32 %v891, %v892
      %v894 = vsel %vm840, %v660, 0.0
      %v895 = vadd.f32 %v893, %v894
      %v896 = vsel %vm840, %v665, 0.0
      %v897 = vadd.f32 %v895, %v896
      %v898 = vsel %vm840, %v668, 0.0
      %v899 = vadd.f32 %v897, %v898
      %v900 = vsel %vm840, %v673, 0.0
      %v901 = vadd.f32 %v899, %v900
      %v902 = vsel %vm840, %v676, 0.0
      %v903 = vadd.f32 %v901, %v902
      %v904 = vrot.slane %v903, 4
      %v905 = vadd.f32 %v903, %v904
      %v906 = vrot.slane %v905, 2
      %v907 = vadd.f32 %v905, %v906
      %v908 = vrot.slane %v907, 1
      %v909 = vadd.f32 %v907, %v908
      %v910 = vmul.f32 %v553, %v553
      %v911 = vmul.f32 %v556, %v556
      %v912 = vmul.f32 %v561, %v561
      %v913 = vmul.f32 %v564, %v564
      %v914 = vmul.f32 %v569, %v569
      %v915 = vmul.f32 %v572, %v572
      %v916 = vmul.f32 %v577, %v577
      %v917 = vmul.f32 %v580, %v580
      %v918 = vmul.f32 %v585, %v585
      %v919 = vmul.f32 %v588, %v588
      %v920 = vmul.f32 %v593, %v593
      %v921 = vmul.f32 %v596, %v596
      %v922 = vmul.f32 %v601, %v601
      %v923 = vmul.f32 %v604, %v604
      %v924 = vmul.f32 %v609, %v609
      %v925 = vmul.f32 %v612, %v612
      %v926 = vmul.f32 %v617, %v617
      %v927 = vmul.f32 %v620, %v620
      %v928 = vmul.f32 %v625, %v625
      %v929 = vmul.f32 %v628, %v628
      %v930 = vmul.f32 %v633, %v633
      %v931 = vmul.f32 %v636, %v636
      %v932 = vmul.f32 %v641, %v641
      %v933 = vmul.f32 %v644, %v644
      %v934 = vmul.f32 %v649, %v649
      %v935 = vmul.f32 %v652, %v652
      %v936 = vmul.f32 %v657, %v657
      %v937 = vmul.f32 %v660, %v660
      %v938 = vmul.f32 %v665, %v665
      %v939 = vmul.f32 %v668, %v668
      %v940 = vmul.f32 %v673, %v673
      %v941 = vmul.f32 %v676, %v676
      %v942 = vsel %vm840, %v910, 0.0
      %v943 = vsel %vm840, %v911, 0.0
      %v944 = vadd.f32 %v942, %v943
      %v945 = vsel %vm840, %v912, 0.0
      %v946 = vadd.f32 %v944, %v945
      %v947 = vsel %vm840, %v913, 0.0
      %v948 = vadd.f32 %v946, %v947
      %v949 = vsel %vm840, %v914, 0.0
      %v950 = vadd.f32 %v948, %v949
      %v951 = vsel %vm840, %v915, 0.0
      %v952 = vadd.f32 %v950, %v951
      %v953 = vsel %vm840, %v916, 0.0
      %v954 = vadd.f32 %v952, %v953
      %v955 = vsel %vm840, %v917, 0.0
      %v956 = vadd.f32 %v954, %v955
      %v957 = vsel %vm840, %v918, 0.0
      %v958 = vadd.f32 %v956, %v957
      %v959 = vsel %vm840, %v919, 0.0
      %v960 = vadd.f32 %v958, %v959
      %v961 = vsel %vm840, %v920, 0.0
      %v962 = vadd.f32 %v960, %v961
      %v963 = vsel %vm840, %v921, 0.0
      %v964 = vadd.f32 %v962, %v963
      %v965 = vsel %vm840, %v922, 0.0
      %v966 = vadd.f32 %v964, %v965
      %v967 = vsel %vm840, %v923, 0.0
      %v968 = vadd.f32 %v966, %v967
      %v969 = vsel %vm840, %v924, 0.0
      %v970 = vadd.f32 %v968, %v969
      %v971 = vsel %vm840, %v925, 0.0
      %v972 = vadd.f32 %v970, %v971
      %v973 = vsel %vm840, %v926, 0.0
      %v974 = vadd.f32 %v972, %v973
      %v975 = vsel %vm840, %v927, 0.0
      %v976 = vadd.f32 %v974, %v975
      %v977 = vsel %vm840, %v928, 0.0
      %v978 = vadd.f32 %v976, %v977
      %v979 = vsel %vm840, %v929, 0.0
      %v980 = vadd.f32 %v978, %v979
      %v981 = vsel %vm840, %v930, 0.0
      %v982 = vadd.f32 %v980, %v981
      %v983 = vsel %vm840, %v931, 0.0
      %v984 = vadd.f32 %v982, %v983
      %v985 = vsel %vm840, %v932, 0.0
      %v986 = vadd.f32 %v984, %v985
      %v987 = vsel %vm840, %v933, 0.0
      %v988 = vadd.f32 %v986, %v987
      %v989 = vsel %vm840, %v934, 0.0
      %v990 = vadd.f32 %v988, %v989
      %v991 = vsel %vm840, %v935, 0.0
      %v992 = vadd.f32 %v990, %v991
      %v993 = vsel %vm840, %v936, 0.0
      %v994 = vadd.f32 %v992, %v993
      %v995 = vsel %vm840, %v937, 0.0
      %v996 = vadd.f32 %v994, %v995
      %v997 = vsel %vm840, %v938, 0.0
      %v998 = vadd.f32 %v996, %v997
      %v999 = vsel %vm840, %v939, 0.0
      %v1000 = vadd.f32 %v998, %v999
      %v1001 = vsel %vm840, %v940, 0.0
      %v1002 = vadd.f32 %v1000, %v1001
      %v1003 = vsel %vm840, %v941, 0.0
      %v1004 = vadd.f32 %v1002, %v1003
      %v1005 = vrot.slane %v1004, 4
      %v1006 = vadd.f32 %v1004, %v1005
      %v1007 = vrot.slane %v1006, 2
      %v1008 = vadd.f32 %v1006, %v1007
      %v1009 = vrot.slane %v1008, 1
      %v1010 = vadd.f32 %v1008, %v1009
      %v1011 = vlaneseq
      %v1012 = vshrl.u32 %v1011, 7
      %vm1013 = vcmp.eq.s32.totalorder %v1012, 0
      %vm1014 = vcmp.eq.s32.totalorder %v1012, 1
      %v1015 = vsel %vm1014, %v1010, 0.0
      %v1016 = vsel %vm1013, %v909, %v1015
      %1017 = vst.msk [vmem:[%s187] sm:$0xff] %vm840, %v1016
      %s1018 = smul.u32 32, %s15
      %p1019 = scmp.lt.s32.totalorder %s1018, 63
      %s1020 = scalar_select %p1019, %s1018, 63
      %s1021 = smul.addr %s1020, 4
      %s1022 = scalar_lea.vmem %s2, %s1021
      %p1023 = scmp.lt.s32.totalorder %s15, 1
      %s1024 = scalar_select %p1023, %s15, 1
      %s1025 = smul.addr %s1024, 8
      %s1026 = scalar_lea.vmem %s3, %s1025
      // Predicated region
      $region29: #{resnet_generator_forward.25} parent=27 // pred_check
        %p1027 = pneg %p80
      $region30: #{resnet_generator_forward.25} parent=27 // pred_check_branch
        %1029 = sbr.rel (%p1027) target = $region32
      $region31: #{resnet_generator_forward.25} parent=27 // pred_region
        %s1030 = smul.u32 32, %s15
      $region32: #{resnet_generator_forward.25} parent=27 // pred_fallthru
        _
      // Predicated region
      $region33: #{resnet_generator_forward.25} parent=27 // pred_check
        %p1031 = pneg %p106
      $region34: #{resnet_generator_forward.25} parent=27 // pred_check_branch
        %1033 = sbr.rel (%p1031) target = $region36
      $region35: #{resnet_generator_forward.25} parent=27 // pred_region
        _
      $region36: #{resnet_generator_forward.25} parent=27 // pred_fallthru
        _
    $region28: #{resnet_generator_forward.25} parent=5 // pred_fallthru
      _
    %p1034 = scmp.le.s32.totalorder 2, %s10
    // Predicated region
    $region37: #{resnet_generator_forward.25} parent=5 // pred_check
      %p1035 = pneg %p1034
    $region38: #{resnet_generator_forward.25} parent=5 // pred_check_branch
      %1037 = sbr.rel (%p1035) target = $region40
    $region39: #{resnet_generator_forward.25} parent=5 // pred_region
      %s1038 = ssub.s32 %s10, 2
      // Predicated region
      $region41: #{resnet_generator_forward.25} parent=39 // pred_check
        %p1039 = pneg %p86
      $region42: #{resnet_generator_forward.25} parent=39 // pred_check_branch
        %1041 = sbr.rel (%p1039) target = $region44
      $region43: #{resnet_generator_forward.25} parent=39 // pred_region
        %s1042 = smul.u32 32, %s16
        %p1043 = scmp.lt.s32.totalorder %s1042, 63
        %s1044 = scalar_select %p1043, %s1042, 63
        %s1045 = smul.addr %s1044, 4
        %s1046 = scalar_lea.vmem %s2, %s1045
      $region44: #{resnet_generator_forward.25} parent=39 // pred_fallthru
        _
      // Predicated region
      $region45: #{resnet_generator_forward.25} parent=39 // pred_check
        %p1047 = pneg %p112
      $region46: #{resnet_generator_forward.25} parent=39 // pred_check_branch
        %1049 = sbr.rel (%p1047) target = $region48
      $region47: #{resnet_generator_forward.25} parent=39 // pred_region
        %p1050 = scmp.lt.s32.totalorder %s16, 1
        %s1051 = scalar_select %p1050, %s16, 1
        %s1052 = smul.addr %s1051, 8
        %s1053 = scalar_lea.vmem %s3, %s1052
      $region48: #{resnet_generator_forward.25} parent=39 // pred_fallthru
        _
    $region40: #{resnet_generator_forward.25} parent=5 // pred_fallthru
      _
  $region6: #{resnet_generator_forward.25} parent=0 // loop_footer
    %s14 = sadd.s32 1, %s10
  $region7: #{resnet_generator_forward.25} parent=0 // loop_footer_branch
    %9 = sbr.rel target = $region3
  $region8: #{resnet_generator_forward.25} parent=0 // loop_exit
    _

// kernel: resnet_generator_forward.27
$region0: #{resnet_generator_forward.27}
  #allocation0 [shape = 'u32[]', space=smem, size = 0x4, offset = 0x4, fixed_abs, tag = 'smem constant byte address 0x4 - core index']
  #allocation1 [shape = 'u32[144,128]{1,0:T(1,128)}', space=vmem, size = 0x12000, scoped, tag = 'internal scratch']
  %s0 = inlined_call_operand.vmem [shape: bf16[128,72], index: 0, kind: input, shape index: {}]
  %s1 = inlined_call_operand.vmem [shape: bf16[72,16], index: 1, kind: input, shape index: {}]
  %s2 = inlined_call_operand.vmem [shape: bf16[128,16], index: 2, kind: output, shape index: {0}]
  %s3 = inlined_call_operand.vmem [shape: f32[1,8,16], index: 3, kind: output, shape index: {1}]
  %4 = xla_tuple %s2, %s3
  %s5 = sld [smem:[#allocation0]]
  $region26: #{resnet_generator_forward.27} parent=0
    _
  %s7 = ssub.s32 1, %s5
  %s8 = scalar_select 0, %s7, %s5
  // Predicated region
  $region2: #{resnet_generator_forward.27} parent=0 // pred_check
    _
  $region3: #{resnet_generator_forward.27} parent=0 // pred_check_branch
    %10 = sbr.rel (0) target = $region5
  $region4: #{resnet_generator_forward.27} parent=0 // pred_region
    _
  $region5: #{resnet_generator_forward.27} parent=0 // pred_fallthru
    _
  // Predicated region
  $region6: #{resnet_generator_forward.27} parent=0 // pred_check
    _
  $region7: #{resnet_generator_forward.27} parent=0 // pred_check_branch
    %12 = sbr.rel (0) target = $region9
  $region8: #{resnet_generator_forward.27} parent=0 // pred_region
    _
  $region9: #{resnet_generator_forward.27} parent=0 // pred_fallthru
    _
  %v14 = vld [vmem:[%s0] sm:$0xf]
  %v15 = vld [vmem:[%s0 + $0x4] sm:$0xf]
  %v16 = vld [vmem:[%s0 + $0x8] sm:$0xf]
  %v17 = vld [vmem:[%s0 + $0xc] sm:$0xf]
  %v18 = vld [vmem:[%s0 + $0x10] sm:$0xf]
  %v19 = vld [vmem:[%s0 + $0x14] sm:$0xf]
  %v20 = vld [vmem:[%s0 + $0x18] sm:$0xf]
  %v21 = vld [vmem:[%s0 + $0x1c] sm:$0xf]
  %v22 = vld [vmem:[%s0 + $0x20] sm:$0xf]
  %v23 = vld [vmem:[%s0 + $0x24] sm:$0xf]
  %v24 = vld [vmem:[%s0 + $0x28] sm:$0xf]
  %v25 = vld [vmem:[%s0 + $0x2c] sm:$0xf]
  %v26 = vld [vmem:[%s0 + $0x30] sm:$0xf]
  %v27 = vld [vmem:[%s0 + $0x34] sm:$0xf]
  %v28 = vld [vmem:[%s0 + $0x38] sm:$0xf]
  %v29 = vld [vmem:[%s0 + $0x3c] sm:$0xf]
  %v30 = vld [vmem:[%s1] sm:$0xf]
  %v31 = vld [vmem:[%s1 + $0x4] sm:$0xf]
  %v32 = vld [vmem:[%s1 + $0x8] sm:$0xf]
  %v33 = vld [vmem:[%s1 + $0xc] sm:$0xf]
  %v34 = vld [vmem:[%s1 + $0x10] sm:$0xf]
  %v35 = vld [vmem:[%s1 + $0x14] sm:$0xf]
  %v36 = vld [vmem:[%s1 + $0x18] sm:$0xf]
  %v37 = vld [vmem:[%s1 + $0x1c] sm:$0xf]
  %v38 = vld [vmem:[%s1 + $0x20] sm:$0xf]
  %v55 = vunpack.c.l.b16 %v14
  %v56 = vunpack.c.l.b16 %v15
  %v57 = vunpack.c.l.b16 %v16
  %v58 = vunpack.c.l.b16 %v17
  %v59 = vunpack.c.l.b16 %v18
  %v60 = vunpack.c.l.b16 %v19
  %v61 = vunpack.c.l.b16 %v20
  %v62 = vunpack.c.l.b16 %v21
  %v63 = vunpack.c.l.b16 %v22
  %v64 = vunpack.c.l.b16 %v23
  %v65 = vunpack.c.l.b16 %v24
  %v66 = vunpack.c.l.b16 %v25
  %v67 = vunpack.c.l.b16 %v26
  %v68 = vunpack.c.l.b16 %v27
  %v69 = vunpack.c.l.b16 %v28
  %v70 = vunpack.c.l.b16 %v29
  %v71 = vpack.c.b16 %v56, %v55
  %v72 = vpack.c.b16 %v58, %v57
  %v73 = vpack.c.b16 %v60, %v59
  %v74 = vpack.c.b16 %v62, %v61
  %v75 = vpack.c.b16 %v64, %v63
  %v76 = vpack.c.b16 %v66, %v65
  %v77 = vpack.c.b16 %v68, %v67
  %v78 = vpack.c.b16 %v70, %v69
  %v88 = vunpack.c.l.b16 %v30
  %v89 = vunpack.c.l.b16 %v31
  %v90 = vunpack.c.l.b16 %v32
  %v91 = vunpack.c.l.b16 %v33
  %v92 = vunpack.c.l.b16 %v34
  %v93 = vunpack.c.l.b16 %v35
  %v94 = vunpack.c.l.b16 %v36
  %v95 = vunpack.c.l.b16 %v37
  %v96 = vunpack.c.l.b16 %v38
  %v97 = vpack.c.b16 %v89, %v88
  %v98 = vpack.c.b16 %v91, %v90
  %v99 = vpack.c.b16 %v93, %v92
  %v100 = vpack.c.b16 %v95, %v94
  %v101 = vpack.c.b16 %v96, %v96
  %vm106 = vcmask 588800
  %v108 = vsel %vm106, %v71, 0
  %v111 = vsel %vm106, %v72, 0
  %v114 = vsel %vm106, %v73, 0
  %v117 = vsel %vm106, %v74, 0
  %v120 = vsel %vm106, %v75, 0
  %v123 = vsel %vm106, %v76, 0
  %v126 = vsel %vm106, %v77, 0
  %v129 = vsel %vm106, %v78, 0
  %vm131 = vcmask 1043456
  %v133 = vsel %vm131, %v101, 0
  %135 = vmatprep.subr.bf16.mxu0 0
  %136 = vmatpush1.bf16.msra.mxu0 %v97
  %137 = vmatprep.subr.bf16.mxu0 0
  %138 = vmatpush1.bf16.msra.mxu0 %v98
  %139 = vmatprep.subr.bf16.mxu0 0
  %140 = vmatpush1.bf16.msra.mxu0 %v99
  %141 = vmatprep.subr.bf16.mxu0 0
  %142 = vmatpush1.bf16.msra.mxu0 %v100
  %143 = vmatprep.subr.bf16.mxu0 0
  %144 = vmatpush1.bf16.msra.mxu0 %v133
  %145 = vmatprep.subr.bf16.mxu0 0
  %146 = vmatpush1.bf16.msra.mxu0 0
  %147 = vmatprep.subr.bf16.mxu0 0
  %148 = vmatpush1.bf16.msra.mxu0 0
  %149 = vmatprep.subr.bf16.mxu0 0
  %150 = vmatpush1.bf16.msra.mxu0 0
  %151 = vmatprep.subr.bf16.mxu0 0
  %152 = vmatpush1.bf16.msra.mxu0 0
  %153 = vmatprep.subr.bf16.mxu0 0
  %154 = vmatpush1.bf16.msra.mxu0 0
  %155 = vmatprep.subr.bf16.mxu0 0
  %156 = vmatpush1.bf16.msra.mxu0 0
  %157 = vmatprep.subr.bf16.mxu0 0
  %158 = vmatpush1.bf16.msra.mxu0 0
  %159 = vmatprep.subr.bf16.mxu0 0
  %160 = vmatpush1.bf16.msra.mxu0 0
  %161 = vmatprep.subr.bf16.mxu0 0
  %162 = vmatpush1.bf16.msra.mxu0 0
  %163 = vmatprep.subr.bf16.mxu0 0
  %164 = vmatpush1.bf16.msra.mxu0 0
  %165 = vmatprep.subr.bf16.mxu0 0
  %166 = vmatpush1.bf16.msra.mxu0 0
  %167 = vmatprep.mubr.bf16.mxu0 0
  %168 = vmatmul.mubr.bf16.gmra.mrb[0].mxu0 %v108
  %v169 = vpop.f32.mrb[0].mxu0
  %v170 = vadd.f32 0.0, %v169
  %v171 = vpop.f32.mrb[0].mxu0
  %v172 = vpop.f32.mrb[0].mxu0
  %v173 = vadd.f32 0.0, %v172
  %v174 = vpop.f32.mrb[0].mxu0
  %175 = vmatprep.mubr.bf16.mxu0 0
  %176 = vmatmul.mubr.bf16.gmra.mrb[0].mxu0 %v111
  %v177 = vpop.f32.mrb[0].mxu0
  %v178 = vadd.f32 0.0, %v177
  %v179 = vpop.f32.mrb[0].mxu0
  %v180 = vpop.f32.mrb[0].mxu0
  %v181 = vadd.f32 0.0, %v180
  %v182 = vpop.f32.mrb[0].mxu0
  %183 = vmatprep.mubr.bf16.mxu0 0
  %184 = vmatmul.mubr.bf16.gmra.mrb[0].mxu0 %v114
  %v185 = vpop.f32.mrb[0].mxu0
  %v186 = vadd.f32 0.0, %v185
  %v187 = vpop.f32.mrb[0].mxu0
  %v188 = vpop.f32.mrb[0].mxu0
  %v189 = vadd.f32 0.0, %v188
  %v190 = vpop.f32.mrb[0].mxu0
  %191 = vmatprep.mubr.bf16.mxu0 0
  %192 = vmatmul.mubr.bf16.gmra.mrb[0].mxu0 %v117
  %v193 = vpop.f32.mrb[0].mxu0
  %v194 = vadd.f32 0.0, %v193
  %v195 = vpop.f32.mrb[0].mxu0
  %v196 = vpop.f32.mrb[0].mxu0
  %v197 = vadd.f32 0.0, %v196
  %v198 = vpop.f32.mrb[0].mxu0
  %199 = vmatprep.mubr.bf16.mxu0 0
  %200 = vmatmul.mubr.bf16.gmra.mrb[0].mxu0 %v120
  %v201 = vpop.f32.mrb[0].mxu0
  %v202 = vadd.f32 0.0, %v201
  %v203 = vpop.f32.mrb[0].mxu0
  %v204 = vpop.f32.mrb[0].mxu0
  %v205 = vadd.f32 0.0, %v204
  %v206 = vpop.f32.mrb[0].mxu0
  %207 = vmatprep.mubr.bf16.mxu0 0
  %208 = vmatmul.mubr.bf16.gmra.mrb[0].mxu0 %v123
  %v209 = vpop.f32.mrb[0].mxu0
  %v210 = vadd.f32 0.0, %v209
  %v211 = vpop.f32.mrb[0].mxu0
  %v212 = vpop.f32.mrb[0].mxu0
  %v213 = vadd.f32 0.0, %v212
  %v214 = vpop.f32.mrb[0].mxu0
  %215 = vmatprep.mubr.bf16.mxu0 0
  %216 = vmatmul.mubr.bf16.gmra.mrb[0].mxu0 %v126
  %v217 = vpop.f32.mrb[0].mxu0
  %v218 = vadd.f32 0.0, %v217
  %v219 = vpop.f32.mrb[0].mxu0
  %v220 = vpop.f32.mrb[0].mxu0
  %v221 = vadd.f32 0.0, %v220
  %v222 = vpop.f32.mrb[0].mxu0
  %223 = vmatprep.mubr.bf16.mxu0 0
  %224 = vmatmul.mubr.bf16.gmra.mrb[0].mxu0 %v129
  %v225 = vpop.f32.mrb[0].mxu0
  %v226 = vadd.f32 0.0, %v225
  %v227 = vpop.f32.mrb[0].mxu0
  %v228 = vpop.f32.mrb[0].mxu0
  %v229 = vadd.f32 0.0, %v228
  %v230 = vpop.f32.mrb[0].mxu0
  %231 = vdwg.mxu0
  %v232 = vpack.c.bf16 %v173, %v170
  %v233 = vpack.c.bf16 %v181, %v178
  %v234 = vpack.c.bf16 %v189, %v186
  %v235 = vpack.c.bf16 %v197, %v194
  %v236 = vpack.c.bf16 %v205, %v202
  %v237 = vpack.c.bf16 %v213, %v210
  %v238 = vpack.c.bf16 %v221, %v218
  %v239 = vpack.c.bf16 %v229, %v226
  %v248 = vunpack.c.l.b16 %v232
  %v249 = vunpack.c.h.b16 %v232
  %v250 = vunpack.c.l.b16 %v233
  %v251 = vunpack.c.h.b16 %v233
  %v252 = vunpack.c.l.b16 %v234
  %v253 = vunpack.c.h.b16 %v234
  %v254 = vunpack.c.l.b16 %v235
  %v255 = vunpack.c.h.b16 %v235
  %v256 = vunpack.c.l.b16 %v236
  %v257 = vunpack.c.h.b16 %v236
  %v258 = vunpack.c.l.b16 %v237
  %v259 = vunpack.c.h.b16 %v237
  %v260 = vunpack.c.l.b16 %v238
  %v261 = vunpack.c.h.b16 %v238
  %v262 = vunpack.c.l.b16 %v239
  %v263 = vunpack.c.h.b16 %v239
  %v264 = vpack.c.b16 %v248, %v248
  %v265 = vpack.c.b16 %v249, %v249
  %v266 = vpack.c.b16 %v250, %v250
  %v267 = vpack.c.b16 %v251, %v251
  %v268 = vpack.c.b16 %v252, %v252
  %v269 = vpack.c.b16 %v253, %v253
  %v270 = vpack.c.b16 %v254, %v254
  %v271 = vpack.c.b16 %v255, %v255
  %v272 = vpack.c.b16 %v256, %v256
  %v273 = vpack.c.b16 %v257, %v257
  %v274 = vpack.c.b16 %v258, %v258
  %v275 = vpack.c.b16 %v259, %v259
  %v276 = vpack.c.b16 %v260, %v260
  %v277 = vpack.c.b16 %v261, %v261
  %v278 = vpack.c.b16 %v262, %v262
  %v279 = vpack.c.b16 %v263, %v263
  %vm296 = vcmask 125952
  %297 = vst.msk [vmem:[%s2] sm:$0xf] %vm296, %v264
  %298 = vst.msk [vmem:[%s2 + $0x4] sm:$0xf] %vm296, %v265
  %299 = vst.msk [vmem:[%s2 + $0x8] sm:$0xf] %vm296, %v266
  %300 = vst.msk [vmem:[%s2 + $0xc] sm:$0xf] %vm296, %v267
  %301 = vst.msk [vmem:[%s2 + $0x10] sm:$0xf] %vm296, %v268
  %302 = vst.msk [vmem:[%s2 + $0x14] sm:$0xf] %vm296, %v269
  %303 = vst.msk [vmem:[%s2 + $0x18] sm:$0xf] %vm296, %v270
  %304 = vst.msk [vmem:[%s2 + $0x1c] sm:$0xf] %vm296, %v271
  %305 = vst.msk [vmem:[%s2 + $0x20] sm:$0xf] %vm296, %v272
  %306 = vst.msk [vmem:[%s2 + $0x24] sm:$0xf] %vm296, %v273
  %307 = vst.msk [vmem:[%s2 + $0x28] sm:$0xf] %vm296, %v274
  %308 = vst.msk [vmem:[%s2 + $0x2c] sm:$0xf] %vm296, %v275
  %309 = vst.msk [vmem:[%s2 + $0x30] sm:$0xf] %vm296, %v276
  %310 = vst.msk [vmem:[%s2 + $0x34] sm:$0xf] %vm296, %v277
  %311 = vst.msk [vmem:[%s2 + $0x38] sm:$0xf] %vm296, %v278
  %312 = vst.msk [vmem:[%s2 + $0x3c] sm:$0xf] %vm296, %v279
  %vm313 = vcmask 130048
  %v314 = vsel %vm313, %v170, 0.0
  %v315 = vsel %vm313, %v173, 0.0
  %v316 = vadd.f32 %v314, %v315
  %v317 = vsel %vm313, %v178, 0.0
  %v318 = vadd.f32 %v316, %v317
  %v319 = vsel %vm313, %v181, 0.0
  %v320 = vadd.f32 %v318, %v319
  %v321 = vsel %vm313, %v186, 0.0
  %v322 = vadd.f32 %v320, %v321
  %v323 = vsel %vm313, %v189, 0.0
  %v324 = vadd.f32 %v322, %v323
  %v325 = vsel %vm313, %v194, 0.0
  %v326 = vadd.f32 %v324, %v325
  %v327 = vsel %vm313, %v197, 0.0
  %v328 = vadd.f32 %v326, %v327
  %v329 = vsel %vm313, %v202, 0.0
  %v330 = vadd.f32 %v328, %v329
  %v331 = vsel %vm313, %v205, 0.0
  %v332 = vadd.f32 %v330, %v331
  %v333 = vsel %vm313, %v210, 0.0
  %v334 = vadd.f32 %v332, %v333
  %v335 = vsel %vm313, %v213, 0.0
  %v336 = vadd.f32 %v334, %v335
  %v337 = vsel %vm313, %v218, 0.0
  %v338 = vadd.f32 %v336, %v337
  %v339 = vsel %vm313, %v221, 0.0
  %v340 = vadd.f32 %v338, %v339
  %v341 = vsel %vm313, %v226, 0.0
  %v342 = vadd.f32 %v340, %v341
  %v343 = vsel %vm313, %v229, 0.0
  %v344 = vadd.f32 %v342, %v343
  %v345 = vrot.slane %v344, 4
  %v346 = vadd.f32 %v344, %v345
  %v347 = vrot.slane %v346, 2
  %v348 = vadd.f32 %v346, %v347
  %v349 = vrot.slane %v348, 1
  %v350 = vadd.f32 %v348, %v349
  %v351 = vmul.f32 %v170, %v170
  %v352 = vmul.f32 %v173, %v173
  %v353 = vmul.f32 %v178, %v178
  %v354 = vmul.f32 %v181, %v181
  %v355 = vmul.f32 %v186, %v186
  %v356 = vmul.f32 %v189, %v189
  %v357 = vmul.f32 %v194, %v194
  %v358 = vmul.f32 %v197, %v197
  %v359 = vmul.f32 %v202, %v202
  %v360 = vmul.f32 %v205, %v205
  %v361 = vmul.f32 %v210, %v210
  %v362 = vmul.f32 %v213, %v213
  %v363 = vmul.f32 %v218, %v218
  %v364 = vmul.f32 %v221, %v221
  %v365 = vmul.f32 %v226, %v226
  %v366 = vmul.f32 %v229, %v229
  %v367 = vsel %vm313, %v351, 0.0
  %v368 = vsel %vm313, %v352, 0.0
  %v369 = vadd.f32 %v367, %v368
  %v370 = vsel %vm313, %v353, 0.0
  %v371 = vadd.f32 %v369, %v370
  %v372 = vsel %vm313, %v354, 0.0
  %v373 = vadd.f32 %v371, %v372
  %v374 = vsel %vm313, %v355, 0.0
  %v375 = vadd.f32 %v373, %v374
  %v376 = vsel %vm313, %v356, 0.0
  %v377 = vadd.f32 %v375, %v376
  %v378 = vsel %vm313, %v357, 0.0
  %v379 = vadd.f32 %v377, %v378
  %v380 = vsel %vm313, %v358, 0.0
  %v381 = vadd.f32 %v379, %v380
  %v382 = vsel %vm313, %v359, 0.0
  %v383 = vadd.f32 %v381, %v382
  %v384 = vsel %vm313, %v360, 0.0
  %v385 = vadd.f32 %v383, %v384
  %v386 = vsel %vm313, %v361, 0.0
  %v387 = vadd.f32 %v385, %v386
  %v388 = vsel %vm313, %v362, 0.0
  %v389 = vadd.f32 %v387, %v388
  %v390 = vsel %vm313, %v363, 0.0
  %v391 = vadd.f32 %v389, %v390
  %v392 = vsel %vm313, %v364, 0.0
  %v393 = vadd.f32 %v391, %v392
  %v394 = vsel %vm313, %v365, 0.0
  %v395 = vadd.f32 %v393, %v394
  %v396 = vsel %vm313, %v366, 0.0
  %v397 = vadd.f32 %v395, %v396
  %v398 = vrot.slane %v397, 4
  %v399 = vadd.f32 %v397, %v398
  %v400 = vrot.slane %v399, 2
  %v401 = vadd.f32 %v399, %v400
  %v402 = vrot.slane %v401, 1
  %v403 = vadd.f32 %v401, %v402
  %v404 = vlaneseq
  %v405 = vshrl.u32 %v404, 7
  %vm406 = vcmp.eq.s32.totalorder %v405, 0
  %vm407 = vcmp.eq.s32.totalorder %v405, 1
  %v408 = vsel %vm407, %v403, 0.0
  %v409 = vsel %vm406, %v350, %v408
  %410 = vst.msk [vmem:[%s3] sm:$0xff] %vm313, %v409
  // Predicated region
  $region10: #{resnet_generator_forward.27} parent=0 // pred_check
    _
  $region11: #{resnet_generator_forward.27} parent=0 // pred_check_branch
    %412 = sbr.rel (0) target = $region13
  $region12: #{resnet_generator_forward.27} parent=0 // pred_region
    _
  $region13: #{resnet_generator_forward.27} parent=0 // pred_fallthru
    _
  // Predicated region
  $region14: #{resnet_generator_forward.27} parent=0 // pred_check
    _
  $region15: #{resnet_generator_forward.27} parent=0 // pred_check_branch
    %414 = sbr.rel (0) target = $region17
  $region16: #{resnet_generator_forward.27} parent=0 // pred_region
    _
  $region17: #{resnet_generator_forward.27} parent=0 // pred_fallthru
    _
  // Predicated region
  $region18: #{resnet_generator_forward.27} parent=0 // pred_check
    _
  $region19: #{resnet_generator_forward.27} parent=0 // pred_check_branch
    %416 = sbr.rel (0) target = $region21
  $region20: #{resnet_generator_forward.27} parent=0 // pred_region
    _
  $region21: #{resnet_generator_forward.27} parent=0 // pred_fallthru
    _
  // Predicated region
  $region22: #{resnet_generator_forward.27} parent=0 // pred_check
    _
  $region23: #{resnet_generator_forward.27} parent=0 // pred_check_branch
    %418 = sbr.rel (0) target = $region25
  $region24: #{resnet_generator_forward.27} parent=0 // pred_region
    _
  $region25: #{resnet_generator_forward.27} parent=0 // pred_fallthru
    _

// kernel: resnet_generator_forward.28
$region0: #{resnet_generator_forward.28}
  #allocation0 [shape = 'u32[]', space=smem, size = 0x4, offset = 0x4, fixed_abs, tag = 'smem constant byte address 0x4 - core index']
  #allocation1 [shape = 'u32[144,128]{1,0:T(1,128)}', space=vmem, size = 0x12000, scoped, tag = 'internal scratch']
  %s0 = inlined_call_operand.vmem [shape: bf16[128,16], index: 0, kind: input, shape index: {}]
  %s1 = inlined_call_operand.vmem [shape: f32[1,16], index: 1, kind: input, shape index: {}]
  %s2 = inlined_call_operand.vmem [shape: f32[1,16], index: 2, kind: input, shape index: {}]
  %s3 = inlined_call_operand.vmem [shape: bf16[128,16], index: 3, kind: output, shape index: {}]
  %s4 = sld [smem:[#allocation0]]
  $region22: #{resnet_generator_forward.28} parent=0
    _
  %s6 = ssub.s32 1, %s4
  %s7 = scalar_select 0, %s6, %s4
  // Predicated region
  $region2: #{resnet_generator_forward.28} parent=0 // pred_check
    _
  $region3: #{resnet_generator_forward.28} parent=0 // pred_check_branch
    %9 = sbr.rel (0) target = $region5
  $region4: #{resnet_generator_forward.28} parent=0 // pred_region
    _
  $region5: #{resnet_generator_forward.28} parent=0 // pred_fallthru
    _
  // Predicated region
  $region6: #{resnet_generator_forward.28} parent=0 // pred_check
    _
  $region7: #{resnet_generator_forward.28} parent=0 // pred_check_branch
    %11 = sbr.rel (0) target = $region9
  $region8: #{resnet_generator_forward.28} parent=0 // pred_region
    _
  $region9: #{resnet_generator_forward.28} parent=0 // pred_fallthru
    _
  // Predicated region
  $region10: #{resnet_generator_forward.28} parent=0 // pred_check
    _
  $region11: #{resnet_generator_forward.28} parent=0 // pred_check_branch
    %13 = sbr.rel (0) target = $region13
  $region12: #{resnet_generator_forward.28} parent=0 // pred_region
    _
  $region13: #{resnet_generator_forward.28} parent=0 // pred_fallthru
    _
  %v14 = vld [vmem:[%s0] sm:$0xf]
  %v15 = vld [vmem:[%s0 + $0x4] sm:$0xf]
  %v16 = vld [vmem:[%s0 + $0x8] sm:$0xf]
  %v17 = vld [vmem:[%s0 + $0xc] sm:$0xf]
  %v18 = vld [vmem:[%s0 + $0x10] sm:$0xf]
  %v19 = vld [vmem:[%s0 + $0x14] sm:$0xf]
  %v20 = vld [vmem:[%s0 + $0x18] sm:$0xf]
  %v21 = vld [vmem:[%s0 + $0x1c] sm:$0xf]
  %v22 = vld [vmem:[%s0 + $0x20] sm:$0xf]
  %v23 = vld [vmem:[%s0 + $0x24] sm:$0xf]
  %v24 = vld [vmem:[%s0 + $0x28] sm:$0xf]
  %v25 = vld [vmem:[%s0 + $0x2c] sm:$0xf]
  %v26 = vld [vmem:[%s0 + $0x30] sm:$0xf]
  %v27 = vld [vmem:[%s0 + $0x34] sm:$0xf]
  %v28 = vld [vmem:[%s0 + $0x38] sm:$0xf]
  %v29 = vld [vmem:[%s0 + $0x3c] sm:$0xf]
  %v30 = vunpack.c.l.bf16 %v14
  %v31 = vunpack.c.l.bf16 %v15
  %v32 = vunpack.c.l.bf16 %v16
  %v33 = vunpack.c.l.bf16 %v17
  %v34 = vunpack.c.l.bf16 %v18
  %v35 = vunpack.c.l.bf16 %v19
  %v36 = vunpack.c.l.bf16 %v20
  %v37 = vunpack.c.l.bf16 %v21
  %v38 = vunpack.c.l.bf16 %v22
  %v39 = vunpack.c.l.bf16 %v23
  %v40 = vunpack.c.l.bf16 %v24
  %v41 = vunpack.c.l.bf16 %v25
  %v42 = vunpack.c.l.bf16 %v26
  %v43 = vunpack.c.l.bf16 %v27
  %v44 = vunpack.c.l.bf16 %v28
  %v45 = vunpack.c.l.bf16 %v29
  %v46 = vld [vmem:[%s1] sm:$0x1]
  %v48 = vlaneseq
  %v49 = vshrl.u32 %v48, 7
  %v50 = vsub.s32 0, %v49
  %v51 = vrot.slane %v46, %v50
  %v53 = vmul.f32 %v30, %v51
  %v54 = vmul.f32 %v31, %v51
  %v55 = vmul.f32 %v32, %v51
  %v56 = vmul.f32 %v33, %v51
  %v57 = vmul.f32 %v34, %v51
  %v58 = vmul.f32 %v35, %v51
  %v59 = vmul.f32 %v36, %v51
  %v60 = vmul.f32 %v37, %v51
  %v61 = vmul.f32 %v38, %v51
  %v62 = vmul.f32 %v39, %v51
  %v63 = vmul.f32 %v40, %v51
  %v64 = vmul.f32 %v41, %v51
  %v65 = vmul.f32 %v42, %v51
  %v66 = vmul.f32 %v43, %v51
  %v67 = vmul.f32 %v44, %v51
  %v68 = vmul.f32 %v45, %v51
  %v69 = vld [vmem:[%s2] sm:$0x1]
  %v71 = vlaneseq
  %v72 = vshrl.u32 %v71, 7
  %v73 = vsub.s32 0, %v72
  %v74 = vrot.slane %v69, %v73
  %v76 = vadd.f32 %v53, %v74
  %v77 = vadd.f32 %v54, %v74
  %v78 = vadd.f32 %v55, %v74
  %v79 = vadd.f32 %v56, %v74
  %v80 = vadd.f32 %v57, %v74
  %v81 = vadd.f32 %v58, %v74
  %v82 = vadd.f32 %v59, %v74
  %v83 = vadd.f32 %v60, %v74
  %v84 = vadd.f32 %v61, %v74
  %v85 = vadd.f32 %v62, %v74
  %v86 = vadd.f32 %v63, %v74
  %v87 = vadd.f32 %v64, %v74
  %v88 = vadd.f32 %v65, %v74
  %v89 = vadd.f32 %v66, %v74
  %v90 = vadd.f32 %v67, %v74
  %v91 = vadd.f32 %v68, %v74
  %v92 = vmax.f32 %v76, 0.0
  %v93 = vmax.f32 %v77, 0.0
  %v94 = vmax.f32 %v78, 0.0
  %v95 = vmax.f32 %v79, 0.0
  %v96 = vmax.f32 %v80, 0.0
  %v97 = vmax.f32 %v81, 0.0
  %v98 = vmax.f32 %v82, 0.0
  %v99 = vmax.f32 %v83, 0.0
  %v100 = vmax.f32 %v84, 0.0
  %v101 = vmax.f32 %v85, 0.0
  %v102 = vmax.f32 %v86, 0.0
  %v103 = vmax.f32 %v87, 0.0
  %v104 = vmax.f32 %v88, 0.0
  %v105 = vmax.f32 %v89, 0.0
  %v106 = vmax.f32 %v90, 0.0
  %v107 = vmax.f32 %v91, 0.0
  %v108 = vpack.c.bf16 %v93, %v92
  %v109 = vpack.c.bf16 %v95, %v94
  %v110 = vpack.c.bf16 %v97, %v96
  %v111 = vpack.c.bf16 %v99, %v98
  %v112 = vpack.c.bf16 %v101, %v100
  %v113 = vpack.c.bf16 %v103, %v102
  %v114 = vpack.c.bf16 %v105, %v104
  %v115 = vpack.c.bf16 %v107, %v106
  %v124 = vunpack.c.l.b16 %v108
  %v125 = vunpack.c.h.b16 %v108
  %v126 = vunpack.c.l.b16 %v109
  %v127 = vunpack.c.h.b16 %v109
  %v128 = vunpack.c.l.b16 %v110
  %v129 = vunpack.c.h.b16 %v110
  %v130 = vunpack.c.l.b16 %v111
  %v131 = vunpack.c.h.b16 %v111
  %v132 = vunpack.c.l.b16 %v112
  %v133 = vunpack.c.h.b16 %v112
  %v134 = vunpack.c.l.b16 %v113
  %v135 = vunpack.c.h.b16 %v113
  %v136 = vunpack.c.l.b16 %v114
  %v137 = vunpack.c.h.b16 %v114
  %v138 = vunpack.c.l.b16 %v115
  %v139 = vunpack.c.h.b16 %v115
  %v140 = vpack.c.b16 %v124, %v124
  %v141 = vpack.c.b16 %v125, %v125
  %v142 = vpack.c.b16 %v126, %v126
  %v143 = vpack.c.b16 %v127, %v127
  %v144 = vpack.c.b16 %v128, %v128
  %v145 = vpack.c.b16 %v129, %v129
  %v146 = vpack.c.b16 %v130, %v130
  %v147 = vpack.c.b16 %v131, %v131
  %v148 = vpack.c.b16 %v132, %v132
  %v149 = vpack.c.b16 %v133, %v133
  %v150 = vpack.c.b16 %v134, %v134
  %v151 = vpack.c.b16 %v135, %v135
  %v152 = vpack.c.b16 %v136, %v136
  %v153 = vpack.c.b16 %v137, %v137
  %v154 = vpack.c.b16 %v138, %v138
  %v155 = vpack.c.b16 %v139, %v139
  %vm172 = vcmask 125952
  %173 = vst.msk [vmem:[%s3] sm:$0xf] %vm172, %v140
  %174 = vst.msk [vmem:[%s3 + $0x4] sm:$0xf] %vm172, %v141
  %175 = vst.msk [vmem:[%s3 + $0x8] sm:$0xf] %vm172, %v142
  %176 = vst.msk [vmem:[%s3 + $0xc] sm:$0xf] %vm172, %v143
  %177 = vst.msk [vmem:[%s3 + $0x10] sm:$0xf] %vm172, %v144
  %178 = vst.msk [vmem:[%s3 + $0x14] sm:$0xf] %vm172, %v145
  %179 = vst.msk [vmem:[%s3 + $0x18] sm:$0xf] %vm172, %v146
  %180 = vst.msk [vmem:[%s3 + $0x1c] sm:$0xf] %vm172, %v147
  %181 = vst.msk [vmem:[%s3 + $0x20] sm:$0xf] %vm172, %v148
  %182 = vst.msk [vmem:[%s3 + $0x24] sm:$0xf] %vm172, %v149
  %183 = vst.msk [vmem:[%s3 + $0x28] sm:$0xf] %vm172, %v150
  %184 = vst.msk [vmem:[%s3 + $0x2c] sm:$0xf] %vm172, %v151
  %185 = vst.msk [vmem:[%s3 + $0x30] sm:$0xf] %vm172, %v152
  %186 = vst.msk [vmem:[%s3 + $0x34] sm:$0xf] %vm172, %v153
  %187 = vst.msk [vmem:[%s3 + $0x38] sm:$0xf] %vm172, %v154
  %188 = vst.msk [vmem:[%s3 + $0x3c] sm:$0xf] %vm172, %v155
  // Predicated region
  $region14: #{resnet_generator_forward.28} parent=0 // pred_check
    _
  $region15: #{resnet_generator_forward.28} parent=0 // pred_check_branch
    %190 = sbr.rel (0) target = $region17
  $region16: #{resnet_generator_forward.28} parent=0 // pred_region
    _
  $region17: #{resnet_generator_forward.28} parent=0 // pred_fallthru
    _
  // Predicated region
  $region18: #{resnet_generator_forward.28} parent=0 // pred_check
    _
  $region19: #{resnet_generator_forward.28} parent=0 // pred_check_branch
    %192 = sbr.rel (0) target = $region21
  $region20: #{resnet_generator_forward.28} parent=0 // pred_region
    _
  $region21: #{resnet_generator_forward.28} parent=0 // pred_fallthru
    _

// kernel: resnet_generator_forward.30
$region0: #{resnet_generator_forward.30}
  #allocation0 [shape = 'u32[]', space=smem, size = 0x4, offset = 0x4, fixed_abs, tag = 'smem constant byte address 0x4 - core index']
  #allocation1 [shape = 'u32[144,128]{1,0:T(1,128)}', space=vmem, size = 0x12000, scoped, tag = 'internal scratch']
  %s0 = inlined_call_operand.vmem [shape: bf16[32,32], index: 0, kind: input, shape index: {}]
  %s1 = inlined_call_operand.vmem [shape: f32[1,32], index: 1, kind: input, shape index: {}]
  %s2 = inlined_call_operand.vmem [shape: f32[1,32], index: 2, kind: input, shape index: {}]
  %s3 = inlined_call_operand.vmem [shape: bf16[32,32], index: 3, kind: output, shape index: {}]
  %s4 = sld [smem:[#allocation0]]
  $region22: #{resnet_generator_forward.30} parent=0
    _
  %s6 = ssub.s32 1, %s4
  %s7 = scalar_select 0, %s6, %s4
  // Predicated region
  $region2: #{resnet_generator_forward.30} parent=0 // pred_check
    _
  $region3: #{resnet_generator_forward.30} parent=0 // pred_check_branch
    %9 = sbr.rel (0) target = $region5
  $region4: #{resnet_generator_forward.30} parent=0 // pred_region
    _
  $region5: #{resnet_generator_forward.30} parent=0 // pred_fallthru
    _
  // Predicated region
  $region6: #{resnet_generator_forward.30} parent=0 // pred_check
    _
  $region7: #{resnet_generator_forward.30} parent=0 // pred_check_branch
    %11 = sbr.rel (0) target = $region9
  $region8: #{resnet_generator_forward.30} parent=0 // pred_region
    _
  $region9: #{resnet_generator_forward.30} parent=0 // pred_fallthru
    _
  // Predicated region
  $region10: #{resnet_generator_forward.30} parent=0 // pred_check
    _
  $region11: #{resnet_generator_forward.30} parent=0 // pred_check_branch
    %13 = sbr.rel (0) target = $region13
  $region12: #{resnet_generator_forward.30} parent=0 // pred_region
    _
  $region13: #{resnet_generator_forward.30} parent=0 // pred_fallthru
    _
  %v14 = vld [vmem:[%s0] sm:$0xf]
  %v15 = vld [vmem:[%s0 + $0x4] sm:$0xf]
  %v16 = vld [vmem:[%s0 + $0x8] sm:$0xf]
  %v17 = vld [vmem:[%s0 + $0xc] sm:$0xf]
  %v18 = vunpack.c.l.bf16 %v14
  %v19 = vunpack.c.l.bf16 %v15
  %v20 = vunpack.c.l.bf16 %v16
  %v21 = vunpack.c.l.bf16 %v17
  %v22 = vld [vmem:[%s1] sm:$0x1]
  %v24 = vlaneseq
  %v25 = vshrl.u32 %v24, 7
  %v26 = vsub.s32 0, %v25
  %v27 = vrot.slane %v22, %v26
  %v29 = vmul.f32 %v18, %v27
  %v30 = vmul.f32 %v19, %v27
  %v31 = vmul.f32 %v20, %v27
  %v32 = vmul.f32 %v21, %v27
  %v33 = vld [vmem:[%s2] sm:$0x1]
  %v35 = vlaneseq
  %v36 = vshrl.u32 %v35, 7
  %v37 = vsub.s32 0, %v36
  %v38 = vrot.slane %v33, %v37
  %v40 = vadd.f32 %v29, %v38
  %v41 = vadd.f32 %v30, %v38
  %v42 = vadd.f32 %v31, %v38
  %v43 = vadd.f32 %v32, %v38
  %v44 = vmax.f32 %v40, 0.0
  %v45 = vmax.f32 %v41, 0.0
  %v46 = vmax.f32 %v42, 0.0
  %v47 = vmax.f32 %v43, 0.0
  %v48 = vpack.c.bf16 %v45, %v44
  %v49 = vpack.c.bf16 %v47, %v46
  %v52 = vunpack.c.l.b16 %v48
  %v53 = vunpack.c.h.b16 %v48
  %v54 = vunpack.c.l.b16 %v49
  %v55 = vunpack.c.h.b16 %v49
  %v56 = vpack.c.b16 %v52, %v52
  %v57 = vpack.c.b16 %v53, %v53
  %v58 = vpack.c.b16 %v54, %v54
  %v59 = vpack.c.b16 %v55, %v55
  %vm64 = vcmask 257024
  %65 = vst.msk [vmem:[%s3] sm:$0xf] %vm64, %v56
  %66 = vst.msk [vmem:[%s3 + $0x4] sm:$0xf] %vm64, %v57
  %67 = vst.msk [vmem:[%s3 + $0x8] sm:$0xf] %vm64, %v58
  %68 = vst.msk [vmem:[%s3 + $0xc] sm:$0xf] %vm64, %v59
  // Predicated region
  $region14: #{resnet_generator_forward.30} parent=0 // pred_check
    _
  $region15: #{resnet_generator_forward.30} parent=0 // pred_check_branch
    %70 = sbr.rel (0) target = $region17
  $region16: #{resnet_generator_forward.30} parent=0 // pred_region
    _
  $region17: #{resnet_generator_forward.30} parent=0 // pred_fallthru
    _
  // Predicated region
  $region18: #{resnet_generator_forward.30} parent=0 // pred_check
    _
  $region19: #{resnet_generator_forward.30} parent=0 // pred_check_branch
    %72 = sbr.rel (0) target = $region21
  $region20: #{resnet_generator_forward.30} parent=0 // pred_region
    _
  $region21: #{resnet_generator_forward.30} parent=0 // pred_fallthru
    _

// kernel: resnet_generator_forward.29
$region0: #{resnet_generator_forward.29}
  #allocation0 [shape = 'u32[]', space=smem, size = 0x4, offset = 0x4, fixed_abs, tag = 'smem constant byte address 0x4 - core index']
  #allocation1 [shape = 'u32[144,128]{1,0:T(1,128)}', space=vmem, size = 0x12000, scoped, tag = 'internal scratch']
  %s0 = inlined_call_operand.vmem [shape: bf16[32,144], index: 0, kind: input, shape index: {}]
  %s1 = inlined_call_operand.vmem [shape: bf16[144,32], index: 1, kind: input, shape index: {}]
  %s2 = inlined_call_operand.vmem [shape: bf16[32,32], index: 2, kind: output, shape index: {0}]
  %s3 = inlined_call_operand.vmem [shape: f32[1,8,32], index: 3, kind: output, shape index: {1}]
  %4 = xla_tuple %s2, %s3
  %s5 = sld [smem:[#allocation0]]
  $region26: #{resnet_generator_forward.29} parent=0
    _
  %s7 = ssub.s32 1, %s5
  %s8 = scalar_select 0, %s7, %s5
  // Predicated region
  $region2: #{resnet_generator_forward.29} parent=0 // pred_check
    _
  $region3: #{resnet_generator_forward.29} parent=0 // pred_check_branch
    %10 = sbr.rel (0) target = $region5
  $region4: #{resnet_generator_forward.29} parent=0 // pred_region
    _
  $region5: #{resnet_generator_forward.29} parent=0 // pred_fallthru
    _
  // Predicated region
  $region6: #{resnet_generator_forward.29} parent=0 // pred_check
    _
  $region7: #{resnet_generator_forward.29} parent=0 // pred_check_branch
    %12 = sbr.rel (0) target = $region9
  $region8: #{resnet_generator_forward.29} parent=0 // pred_region
    _
  $region9: #{resnet_generator_forward.29} parent=0 // pred_fallthru
    _
  %v14 = vld [vmem:[%s0] sm:$0xff]
  %v15 = vld [vmem:[%s0 + $0x8] sm:$0xff]
  %v16 = vld [vmem:[%s0 + $0x10] sm:$0xff]
  %v17 = vld [vmem:[%s0 + $0x18] sm:$0xff]
  %v18 = vld [vmem:[%s1] sm:$0xf]
  %v19 = vld [vmem:[%s1 + $0x4] sm:$0xf]
  %v20 = vld [vmem:[%s1 + $0x8] sm:$0xf]
  %v21 = vld [vmem:[%s1 + $0xc] sm:$0xf]
  %v22 = vld [vmem:[%s1 + $0x10] sm:$0xf]
  %v23 = vld [vmem:[%s1 + $0x14] sm:$0xf]
  %v24 = vld [vmem:[%s1 + $0x18] sm:$0xf]
  %v25 = vld [vmem:[%s1 + $0x1c] sm:$0xf]
  %v26 = vld [vmem:[%s1 + $0x20] sm:$0xf]
  %v27 = vld [vmem:[%s1 + $0x24] sm:$0xf]
  %v28 = vld [vmem:[%s1 + $0x28] sm:$0xf]
  %v29 = vld [vmem:[%s1 + $0x2c] sm:$0xf]
  %v30 = vld [vmem:[%s1 + $0x30] sm:$0xf]
  %v31 = vld [vmem:[%s1 + $0x34] sm:$0xf]
  %v32 = vld [vmem:[%s1 + $0x38] sm:$0xf]
  %v33 = vld [vmem:[%s1 + $0x3c] sm:$0xf]
  %v34 = vld [vmem:[%s1 + $0x40] sm:$0xf]
  %v35 = vld [vmem:[%s1 + $0x44] sm:$0xf]
  %v40 = vunpack.c.l.b16 %v14
  %v41 = vunpack.c.h.b16 %v14
  %v42 = vunpack.c.l.b16 %v15
  %v43 = vunpack.c.h.b16 %v15
  %v44 = vunpack.c.l.b16 %v16
  %v45 = vunpack.c.h.b16 %v16
  %v46 = vunpack.c.l.b16 %v17
  %v47 = vunpack.c.h.b16 %v17
  %v48 = vpack.c.b16 %v42, %v40
  %v49 = vpack.c.b16 %v43, %v41
  %v50 = vpack.c.b16 %v46, %v44
  %v51 = vpack.c.b16 %v47, %v45
  %v72 = vunpack.c.l.b16 %v18
  %v73 = vunpack.c.l.b16 %v19
  %v74 = vunpack.c.l.b16 %v20
  %v75 = vunpack.c.l.b16 %v21
  %v76 = vunpack.c.l.b16 %v22
  %v77 = vunpack.c.l.b16 %v23
  %v78 = vunpack.c.l.b16 %v24
  %v79 = vunpack.c.l.b16 %v25
  %v80 = vunpack.c.l.b16 %v26
  %v81 = vunpack.c.l.b16 %v27
  %v82 = vunpack.c.l.b16 %v28
  %v83 = vunpack.c.l.b16 %v29
  %v84 = vunpack.c.l.b16 %v30
  %v85 = vunpack.c.l.b16 %v31
  %v86 = vunpack.c.l.b16 %v32
  %v87 = vunpack.c.l.b16 %v33
  %v88 = vunpack.c.l.b16 %v34
  %v89 = vunpack.c.l.b16 %v35
  %v90 = vpack.c.b16 %v73, %v72
  %v91 = vpack.c.b16 %v75, %v74
  %v92 = vpack.c.b16 %v77, %v76
  %v93 = vpack.c.b16 %v79, %v78
  %v94 = vpack.c.b16 %v81, %v80
  %v95 = vpack.c.b16 %v83, %v82
  %v96 = vpack.c.b16 %v85, %v84
  %v97 = vpack.c.b16 %v87, %v86
  %v98 = vpack.c.b16 %v89, %v88
  %vm108 = vcmask 130048
  %v110 = vsel %vm108, %v49, 0
  %v113 = vsel %vm108, %v51, 0
  %115 = vmatprep.subr.bf16.mxu0 0
  %116 = vmatpush1.bf16.msra.mxu0 %v90
  %117 = vmatprep.subr.bf16.mxu0 0
  %118 = vmatpush1.bf16.msra.mxu0 %v91
  %119 = vmatprep.subr.bf16.mxu0 0
  %120 = vmatpush1.bf16.msra.mxu0 %v92
  %121 = vmatprep.subr.bf16.mxu0 0
  %122 = vmatpush1.bf16.msra.mxu0 %v93
  %123 = vmatprep.subr.bf16.mxu0 0
  %124 = vmatpush1.bf16.msra.mxu0 %v94
  %125 = vmatprep.subr.bf16.mxu0 0
  %126 = vmatpush1.bf16.msra.mxu0 %v95
  %127 = vmatprep.subr.bf16.mxu0 0
  %128 = vmatpush1.bf16.msra.mxu0 %v96
  %129 = vmatprep.subr.bf16.mxu0 0
  %130 = vmatpush1.bf16.msra.mxu0 %v97
  %131 = vmatprep.subr.bf16.mxu0 0
  %132 = vmatpush1.bf16.msra.mxu0 %v98
  %133 = vmatprep.subr.bf16.mxu0 0
  %134 = vmatpush1.bf16.msra.mxu0 0
  %135 = vmatprep.subr.bf16.mxu0 0
  %136 = vmatpush1.bf16.msra.mxu0 0
  %137 = vmatprep.subr.bf16.mxu0 0
  %138 = vmatpush1.bf16.msra.mxu0 0
  %139 = vmatprep.subr.bf16.mxu0 0
  %140 = vmatpush1.bf16.msra.mxu0 0
  %141 = vmatprep.subr.bf16.mxu0 0
  %142 = vmatpush1.bf16.msra.mxu0 0
  %143 = vmatprep.subr.bf16.mxu0 0
  %144 = vmatpush1.bf16.msra.mxu0 0
  %145 = vmatprep.subr.bf16.mxu0 0
  %146 = vmatpush1.bf16.msra.mxu0 0
  %147 = vmatprep.mubr.bf16.mxu0 %v110
  %148 = vmatmul.mubr.bf16.gmra.mrb[0].mxu0 %v48
  %v149 = vpop.f32.mrb[0].mxu0
  %v150 = vadd.f32 0.0, %v149
  %v151 = vpop.f32.mrb[0].mxu0
  %v152 = vpop.f32.mrb[0].mxu0
  %v153 = vadd.f32 0.0, %v152
  %v154 = vpop.f32.mrb[0].mxu0
  %155 = vmatprep.mubr.bf16.mxu0 %v113
  %156 = vmatmul.mubr.bf16.gmra.mrb[0].mxu0 %v50
  %v157 = vpop.f32.mrb[0].mxu0
  %v158 = vadd.f32 0.0, %v157
  %v159 = vpop.f32.mrb[0].mxu0
  %v160 = vpop.f32.mrb[0].mxu0
  %v161 = vadd.f32 0.0, %v160
  %v162 = vpop.f32.mrb[0].mxu0
  %163 = vdwg.mxu0
  %v164 = vpack.c.bf16 %v153, %v150
  %v165 = vpack.c.bf16 %v161, %v158
  %v168 = vunpack.c.l.b16 %v164
  %v169 = vunpack.c.h.b16 %v164
  %v170 = vunpack.c.l.b16 %v165
  %v171 = vunpack.c.h.b16 %v165
  %v172 = vpack.c.b16 %v168, %v168
  %v173 = vpack.c.b16 %v169, %v169
  %v174 = vpack.c.b16 %v170, %v170
  %v175 = vpack.c.b16 %v171, %v171
  %vm180 = vcmask 257024
  %181 = vst.msk [vmem:[%s2] sm:$0xf] %vm180, %v172
  %182 = vst.msk [vmem:[%s2 + $0x4] sm:$0xf] %vm180, %v173
  %183 = vst.msk [vmem:[%s2 + $0x8] sm:$0xf] %vm180, %v174
  %184 = vst.msk [vmem:[%s2 + $0xc] sm:$0xf] %vm180, %v175
  %vm185 = vcmask 261120
  %v186 = vsel %vm185, %v150, 0.0
  %v187 = vsel %vm185, %v153, 0.0
  %v188 = vadd.f32 %v186, %v187
  %v189 = vsel %vm185, %v158, 0.0
  %v190 = vadd.f32 %v188, %v189
  %v191 = vsel %vm185, %v161, 0.0
  %v192 = vadd.f32 %v190, %v191
  %v193 = vrot.slane %v192, 4
  %v194 = vadd.f32 %v192, %v193
  %v195 = vrot.slane %v194, 2
  %v196 = vadd.f32 %v194, %v195
  %v197 = vrot.slane %v196, 1
  %v198 = vadd.f32 %v196, %v197
  %v199 = vmul.f32 %v150, %v150
  %v200 = vmul.f32 %v153, %v153
  %v201 = vmul.f32 %v158, %v158
  %v202 = vmul.f32 %v161, %v161
  %v203 = vsel %vm185, %v199, 0.0
  %v204 = vsel %vm185, %v200, 0.0
  %v205 = vadd.f32 %v203, %v204
  %v206 = vsel %vm185, %v201, 0.0
  %v207 = vadd.f32 %v205, %v206
  %v208 = vsel %vm185, %v202, 0.0
  %v209 = vadd.f32 %v207, %v208
  %v210 = vrot.slane %v209, 4
  %v211 = vadd.f32 %v209, %v210
  %v212 = vrot.slane %v211, 2
  %v213 = vadd.f32 %v211, %v212
  %v214 = vrot.slane %v213, 1
  %v215 = vadd.f32 %v213, %v214
  %v216 = vlaneseq
  %v217 = vshrl.u32 %v216, 7
  %vm218 = vcmp.eq.s32.totalorder %v217, 0
  %vm219 = vcmp.eq.s32.totalorder %v217, 1
  %v220 = vsel %vm219, %v215, 0.0
  %v221 = vsel %vm218, %v198, %v220
  %222 = vst.msk [vmem:[%s3] sm:$0xff] %vm185, %v221
  // Predicated region
  $region10: #{resnet_generator_forward.29} parent=0 // pred_check
    _
  $region11: #{resnet_generator_forward.29} parent=0 // pred_check_branch
    %224 = sbr.rel (0) target = $region13
  $region12: #{resnet_generator_forward.29} parent=0 // pred_region
    _
  $region13: #{resnet_generator_forward.29} parent=0 // pred_fallthru
    _
  // Predicated region
  $region14: #{resnet_generator_forward.29} parent=0 // pred_check
    _
  $region15: #{resnet_generator_forward.29} parent=0 // pred_check_branch
    %226 = sbr.rel (0) target = $region17
  $region16: #{resnet_generator_forward.29} parent=0 // pred_region
    _
  $region17: #{resnet_generator_forward.29} parent=0 // pred_fallthru
    _
  // Predicated region
  $region18: #{resnet_generator_forward.29} parent=0 // pred_check
    _
  $region19: #{resnet_generator_forward.29} parent=0 // pred_check_branch
    %228 = sbr.rel (0) target = $region21
  $region20: #{resnet_generator_forward.29} parent=0 // pred_region
    _
  $region21: #{resnet_generator_forward.29} parent=0 // pred_fallthru
    _
  // Predicated region
  $region22: #{resnet_generator_forward.29} parent=0 // pred_check
    _
  $region23: #{resnet_generator_forward.29} parent=0 // pred_check_branch
    %230 = sbr.rel (0) target = $region25
  $region24: #{resnet_generator_forward.29} parent=0 // pred_region
    _
  $region25: #{resnet_generator_forward.29} parent=0 // pred_fallthru
    _

// kernel: resnet_generator_forward.34
$region0: #{resnet_generator_forward.34}
  #allocation0 [shape = 'u32[]', space=smem, size = 0x4, offset = 0x4, fixed_abs, tag = 'smem constant byte address 0x4 - core index']
  #allocation1 [shape = 'u32[144,128]{1,0:T(1,128)}', space=vmem, size = 0x12000, scoped, tag = 'internal scratch']
  %s0 = inlined_call_operand.vmem [shape: bf16[32,32], index: 0, kind: input, shape index: {}]
  %s1 = inlined_call_operand.vmem [shape: f32[1,32], index: 1, kind: input, shape index: {}]
  %s2 = inlined_call_operand.vmem [shape: f32[1,32], index: 2, kind: input, shape index: {}]
  %s3 = inlined_call_operand.vmem [shape: bf16[32,32], index: 3, kind: input, shape index: {}]
  %s4 = inlined_call_operand.vmem [shape: bf16[32,32], index: 4, kind: output, shape index: {}]
  %s5 = sld [smem:[#allocation0]]
  $region26: #{resnet_generator_forward.34} parent=0
    _
  %s7 = ssub.s32 1, %s5
  %s8 = scalar_select 0, %s7, %s5
  // Predicated region
  $region2: #{resnet_generator_forward.34} parent=0 // pred_check
    _
  $region3: #{resnet_generator_forward.34} parent=0 // pred_check_branch
    %10 = sbr.rel (0) target = $region5
  $region4: #{resnet_generator_forward.34} parent=0 // pred_region
    _
  $region5: #{resnet_generator_forward.34} parent=0 // pred_fallthru
    _
  // Predicated region
  $region6: #{resnet_generator_forward.34} parent=0 // pred_check
    _
  $region7: #{resnet_generator_forward.34} parent=0 // pred_check_branch
    %12 = sbr.rel (0) target = $region9
  $region8: #{resnet_generator_forward.34} parent=0 // pred_region
    _
  $region9: #{resnet_generator_forward.34} parent=0 // pred_fallthru
    _
  // Predicated region
  $region10: #{resnet_generator_forward.34} parent=0 // pred_check
    _
  $region11: #{resnet_generator_forward.34} parent=0 // pred_check_branch
    %14 = sbr.rel (0) target = $region13
  $region12: #{resnet_generator_forward.34} parent=0 // pred_region
    _
  $region13: #{resnet_generator_forward.34} parent=0 // pred_fallthru
    _
  // Predicated region
  $region14: #{resnet_generator_forward.34} parent=0 // pred_check
    _
  $region15: #{resnet_generator_forward.34} parent=0 // pred_check_branch
    %16 = sbr.rel (0) target = $region17
  $region16: #{resnet_generator_forward.34} parent=0 // pred_region
    _
  $region17: #{resnet_generator_forward.34} parent=0 // pred_fallthru
    _
  %v17 = vld [vmem:[%s0] sm:$0xf]
  %v18 = vld [vmem:[%s0 + $0x4] sm:$0xf]
  %v19 = vld [vmem:[%s0 + $0x8] sm:$0xf]
  %v20 = vld [vmem:[%s0 + $0xc] sm:$0xf]
  %v21 = vunpack.c.l.bf16 %v17
  %v22 = vunpack.c.l.bf16 %v18
  %v23 = vunpack.c.l.bf16 %v19
  %v24 = vunpack.c.l.bf16 %v20
  %v25 = vld [vmem:[%s1] sm:$0x1]
  %v27 = vlaneseq
  %v28 = vshrl.u32 %v27, 7
  %v29 = vsub.s32 0, %v28
  %v30 = vrot.slane %v25, %v29
  %v32 = vmul.f32 %v21, %v30
  %v33 = vmul.f32 %v22, %v30
  %v34 = vmul.f32 %v23, %v30
  %v35 = vmul.f32 %v24, %v30
  %v36 = vld [vmem:[%s2] sm:$0x1]
  %v38 = vlaneseq
  %v39 = vshrl.u32 %v38, 7
  %v40 = vsub.s32 0, %v39
  %v41 = vrot.slane %v36, %v40
  %v43 = vadd.f32 %v32, %v41
  %v44 = vadd.f32 %v33, %v41
  %v45 = vadd.f32 %v34, %v41
  %v46 = vadd.f32 %v35, %v41
  %v47 = vld [vmem:[%s3] sm:$0xf]
  %v48 = vld [vmem:[%s3 + $0x4] sm:$0xf]
  %v49 = vld [vmem:[%s3 + $0x8] sm:$0xf]
  %v50 = vld [vmem:[%s3 + $0xc] sm:$0xf]
  %v51 = vunpack.c.l.bf16 %v47
  %v52 = vunpack.c.l.bf16 %v48
  %v53 = vunpack.c.l.bf16 %v49
  %v54 = vunpack.c.l.bf16 %v50
  %v55 = vadd.f32 %v43, %v51
  %v56 = vadd.f32 %v44, %v52
  %v57 = vadd.f32 %v45, %v53
  %v58 = vadd.f32 %v46, %v54
  %v59 = vpack.c.bf16 %v56, %v55
  %v60 = vpack.c.bf16 %v58, %v57
  %v63 = vunpack.c.l.b16 %v59
  %v64 = vunpack.c.h.b16 %v59
  %v65 = vunpack.c.l.b16 %v60
  %v66 = vunpack.c.h.b16 %v60
  %v67 = vpack.c.b16 %v63, %v63
  %v68 = vpack.c.b16 %v64, %v64
  %v69 = vpack.c.b16 %v65, %v65
  %v70 = vpack.c.b16 %v66, %v66
  %vm75 = vcmask 257024
  %76 = vst.msk [vmem:[%s4] sm:$0xf] %vm75, %v67
  %77 = vst.msk [vmem:[%s4 + $0x4] sm:$0xf] %vm75, %v68
  %78 = vst.msk [vmem:[%s4 + $0x8] sm:$0xf] %vm75, %v69
  %79 = vst.msk [vmem:[%s4 + $0xc] sm:$0xf] %vm75, %v70
  // Predicated region
  $region18: #{resnet_generator_forward.34} parent=0 // pred_check
    _
  $region19: #{resnet_generator_forward.34} parent=0 // pred_check_branch
    %81 = sbr.rel (0) target = $region21
  $region20: #{resnet_generator_forward.34} parent=0 // pred_region
    _
  $region21: #{resnet_generator_forward.34} parent=0 // pred_fallthru
    _
  // Predicated region
  $region22: #{resnet_generator_forward.34} parent=0 // pred_check
    _
  $region23: #{resnet_generator_forward.34} parent=0 // pred_check_branch
    %83 = sbr.rel (0) target = $region25
  $region24: #{resnet_generator_forward.34} parent=0 // pred_region
    _
  $region25: #{resnet_generator_forward.34} parent=0 // pred_fallthru
    _

// kernel: resnet_generator_forward.31
$region0: #{resnet_generator_forward.31}
  #allocation0 [shape = 'u32[]', space=smem, size = 0x4, offset = 0x4, fixed_abs, tag = 'smem constant byte address 0x4 - core index']
  #allocation1 [shape = 'u32[144,128]{1,0:T(1,128)}', space=vmem, size = 0x12000, scoped, tag = 'internal scratch']
  %s0 = inlined_call_operand.vmem [shape: bf16[32,288], index: 0, kind: input, shape index: {}]
  %s1 = inlined_call_operand.vmem [shape: bf16[288,32], index: 1, kind: input, shape index: {}]
  %s2 = inlined_call_operand.vmem [shape: bf16[32,32], index: 2, kind: output, shape index: {0}]
  %s3 = inlined_call_operand.vmem [shape: f32[1,8,32], index: 3, kind: output, shape index: {1}]
  %4 = xla_tuple %s2, %s3
  %s5 = sld [smem:[#allocation0]]
  $region26: #{resnet_generator_forward.31} parent=0
    _
  %s7 = ssub.s32 1, %s5
  %s8 = scalar_select 0, %s7, %s5
  // Predicated region
  $region2: #{resnet_generator_forward.31} parent=0 // pred_check
    _
  $region3: #{resnet_generator_forward.31} parent=0 // pred_check_branch
    %10 = sbr.rel (0) target = $region5
  $region4: #{resnet_generator_forward.31} parent=0 // pred_region
    _
  $region5: #{resnet_generator_forward.31} parent=0 // pred_fallthru
    _
  // Predicated region
  $region6: #{resnet_generator_forward.31} parent=0 // pred_check
    _
  $region7: #{resnet_generator_forward.31} parent=0 // pred_check_branch
    %12 = sbr.rel (0) target = $region9
  $region8: #{resnet_generator_forward.31} parent=0 // pred_region
    _
  $region9: #{resnet_generator_forward.31} parent=0 // pred_fallthru
    _
  %v14 = vld [vmem:[%s0] sm:$0xff]
  %v15 = vld [vmem:[%s0 + $0x8] sm:$0xf]
  %v16 = vld [vmem:[%s0 + $0xc] sm:$0xff]
  %v17 = vld [vmem:[%s0 + $0x14] sm:$0xf]
  %v18 = vld [vmem:[%s0 + $0x18] sm:$0xff]
  %v19 = vld [vmem:[%s0 + $0x20] sm:$0xf]
  %v20 = vld [vmem:[%s0 + $0x24] sm:$0xff]
  %v21 = vld [vmem:[%s0 + $0x2c] sm:$0xf]
  %v22 = vld [vmem:[%s1] sm:$0xf]
  %v23 = vld [vmem:[%s1 + $0x4] sm:$0xf]
  %v24 = vld [vmem:[%s1 + $0x8] sm:$0xf]
  %v25 = vld [vmem:[%s1 + $0xc] sm:$0xf]
  %v26 = vld [vmem:[%s1 + $0x10] sm:$0xf]
  %v27 = vld [vmem:[%s1 + $0x14] sm:$0xf]
  %v28 = vld [vmem:[%s1 + $0x18] sm:$0xf]
  %v29 = vld [vmem:[%s1 + $0x1c] sm:$0xf]
  %v30 = vld [vmem:[%s1 + $0x20] sm:$0xf]
  %v31 = vld [vmem:[%s1 + $0x24] sm:$0xf]
  %v32 = vld [vmem:[%s1 + $0x28] sm:$0xf]
  %v33 = vld [vmem:[%s1 + $0x2c] sm:$0xf]
  %v34 = vld [vmem:[%s1 + $0x30] sm:$0xf]
  %v35 = vld [vmem:[%s1 + $0x34] sm:$0xf]
  %v36 = vld [vmem:[%s1 + $0x38] sm:$0xf]
  %v37 = vld [vmem:[%s1 + $0x3c] sm:$0xf]
  %v38 = vld [vmem:[%s1 + $0x40] sm:$0xf]
  %v39 = vld [vmem:[%s1 + $0x44] sm:$0xf]
  %v40 = vld [vmem:[%s1 + $0x48] sm:$0xf]
  %v41 = vld [vmem:[%s1 + $0x4c] sm:$0xf]
  %v42 = vld [vmem:[%s1 + $0x50] sm:$0xf]
  %v43 = vld [vmem:[%s1 + $0x54] sm:$0xf]
  %v44 = vld [vmem:[%s1 + $0x58] sm:$0xf]
  %v45 = vld [vmem:[%s1 + $0x5c] sm:$0xf]
  %v46 = vld [vmem:[%s1 + $0x60] sm:$0xf]
  %v47 = vld [vmem:[%s1 + $0x64] sm:$0xf]
  %v48 = vld [vmem:[%s1 + $0x68] sm:$0xf]
  %v49 = vld [vmem:[%s1 + $0x6c] sm:$0xf]
  %v50 = vld [vmem:[%s1 + $0x70] sm:$0xf]
  %v51 = vld [vmem:[%s1 + $0x74] sm:$0xf]
  %v52 = vld [vmem:[%s1 + $0x78] sm:$0xf]
  %v53 = vld [vmem:[%s1 + $0x7c] sm:$0xf]
  %v54 = vld [vmem:[%s1 + $0x80] sm:$0xf]
  %v55 = vld [vmem:[%s1 + $0x84] sm:$0xf]
  %v56 = vld [vmem:[%s1 + $0x88] sm:$0xf]
  %v57 = vld [vmem:[%s1 + $0x8c] sm:$0xf]
  %v66 = vunpack.c.l.b16 %v14
  %v67 = vunpack.c.h.b16 %v14
  %v68 = vunpack.c.l.b16 %v15
  %v69 = vunpack.c.l.b16 %v16
  %v70 = vunpack.c.h.b16 %v16
  %v71 = vunpack.c.l.b16 %v17
  %v72 = vunpack.c.l.b16 %v18
  %v73 = vunpack.c.h.b16 %v18
  %v74 = vunpack.c.l.b16 %v19
  %v75 = vunpack.c.l.b16 %v20
  %v76 = vunpack.c.h.b16 %v20
  %v77 = vunpack.c.l.b16 %v21
  %v78 = vpack.c.b16 %v69, %v66
  %v79 = vpack.c.b16 %v70, %v67
  %v80 = vpack.c.b16 %v71, %v68
  %v81 = vpack.c.b16 %v75, %v72
  %v82 = vpack.c.b16 %v76, %v73
  %v83 = vpack.c.b16 %v77, %v74
  %v124 = vunpack.c.l.b16 %v22
  %v125 = vunpack.c.l.b16 %v23
  %v126 = vunpack.c.l.b16 %v24
  %v127 = vunpack.c.l.b16 %v25
  %v128 = vunpack.c.l.b16 %v26
  %v129 = vunpack.c.l.b16 %v27
  %v130 = vunpack.c.l.b16 %v28
  %v131 = vunpack.c.l.b16 %v29
  %v132 = vunpack.c.l.b16 %v30
  %v133 = vunpack.c.l.b16 %v31
  %v134 = vunpack.c.l.b16 %v32
  %v135 = vunpack.c.l.b16 %v33
  %v136 = vunpack.c.l.b16 %v34
  %v137 = vunpack.c.l.b16 %v35
  %v138 = vunpack.c.l.b16 %v36
  %v139 = vunpack.c.l.b16 %v37
  %v140 = vunpack.c.l.b16 %v38
  %v141 = vunpack.c.l.b16 %v39
  %v142 = vunpack.c.l.b16 %v40
  %v143 = vunpack.c.l.b16 %v41
  %v144 = vunpack.c.l.b16 %v42
  %v145 = vunpack.c.l.b16 %v43
  %v146 = vunpack.c.l.b16 %v44
  %v147 = vunpack.c.l.b16 %v45
  %v148 = vunpack.c.l.b16 %v46
  %v149 = vunpack.c.l.b16 %v47
  %v150 = vunpack.c.l.b16 %v48
  %v151 = vunpack.c.l.b16 %v49
  %v152 = vunpack.c.l.b16 %v50
  %v153 = vunpack.c.l.b16 %v51
  %v154 = vunpack.c.l.b16 %v52
  %v155 = vunpack.c.l.b16 %v53
  %v156 = vunpack.c.l.b16 %v54
  %v157 = vunpack.c.l.b16 %v55
  %v158 = vunpack.c.l.b16 %v56
  %v159 = vunpack.c.l.b16 %v57
  %v160 = vpack.c.b16 %v125, %v124
  %v161 = vpack.c.b16 %v127, %v126
  %v162 = vpack.c.b16 %v129, %v128
  %v163 = vpack.c.b16 %v131, %v130
  %v164 = vpack.c.b16 %v133, %v132
  %v165 = vpack.c.b16 %v135, %v134
  %v166 = vpack.c.b16 %v137, %v136
  %v167 = vpack.c.b16 %v139, %v138
  %v168 = vpack.c.b16 %v141, %v140
  %v169 = vpack.c.b16 %v143, %v142
  %v170 = vpack.c.b16 %v145, %v144
  %v171 = vpack.c.b16 %v147, %v146
  %v172 = vpack.c.b16 %v149, %v148
  %v173 = vpack.c.b16 %v151, %v150
  %v174 = vpack.c.b16 %v153, %v152
  %v175 = vpack.c.b16 %v155, %v154
  %v176 = vpack.c.b16 %v157, %v156
  %v177 = vpack.c.b16 %v159, %v158
  %vm196 = vcmask 261120
  %v198 = vsel %vm196, %v80, 0
  %v201 = vsel %vm196, %v83, 0
  %203 = vmatprep.subr.bf16.mxu0 0
  %204 = vmatpush1.bf16.msra.mxu0 %v160
  %205 = vmatprep.subr.bf16.mxu0 0
  %206 = vmatpush1.bf16.msra.mxu0 %v161
  %207 = vmatprep.subr.bf16.mxu0 0
  %208 = vmatpush1.bf16.msra.mxu0 %v162
  %209 = vmatprep.subr.bf16.mxu0 0
  %210 = vmatpush1.bf16.msra.mxu0 %v163
  %211 = vmatprep.subr.bf16.mxu0 0
  %212 = vmatpush1.bf16.msra.mxu0 %v164
  %213 = vmatprep.subr.bf16.mxu0 0
  %214 = vmatpush1.bf16.msra.mxu0 %v165
  %215 = vmatprep.subr.bf16.mxu0 0
  %216 = vmatpush1.bf16.msra.mxu0 %v166
  %217 = vmatprep.subr.bf16.mxu0 0
  %218 = vmatpush1.bf16.msra.mxu0 %v167
  %219 = vmatprep.subr.bf16.mxu0 0
  %220 = vmatpush1.bf16.msra.mxu0 %v168
  %221 = vmatprep.subr.bf16.mxu0 0
  %222 = vmatpush1.bf16.msra.mxu0 %v169
  %223 = vmatprep.subr.bf16.mxu0 0
  %224 = vmatpush1.bf16.msra.mxu0 %v170
  %225 = vmatprep.subr.bf16.mxu0 0
  %226 = vmatpush1.bf16.msra.mxu0 %v171
  %227 = vmatprep.subr.bf16.mxu0 0
  %228 = vmatpush1.bf16.msra.mxu0 %v172
  %229 = vmatprep.subr.bf16.mxu0 0
  %230 = vmatpush1.bf16.msra.mxu0 %v173
  %231 = vmatprep.subr.bf16.mxu0 0
  %232 = vmatpush1.bf16.msra.mxu0 %v174
  %233 = vmatprep.subr.bf16.mxu0 0
  %234 = vmatpush1.bf16.msra.mxu0 %v175
  %235 = vmatprep.mubr.bf16.mxu0 %v79
  %236 = vmatmul.mubr.bf16.gmra.mrb[0].mxu0 %v78
  %v237 = vpop.f32.mrb[0].mxu0
  %v238 = vadd.f32 0.0, %v237
  %v239 = vpop.f32.mrb[0].mxu0
  %v240 = vpop.f32.mrb[0].mxu0
  %v241 = vadd.f32 0.0, %v240
  %v242 = vpop.f32.mrb[0].mxu0
  %243 = vmatprep.mubr.bf16.mxu0 %v82
  %244 = vmatmul.mubr.bf16.gmra.mrb[0].mxu0 %v81
  %v245 = vpop.f32.mrb[0].mxu0
  %v246 = vadd.f32 0.0, %v245
  %v247 = vpop.f32.mrb[0].mxu0
  %v248 = vpop.f32.mrb[0].mxu0
  %v249 = vadd.f32 0.0, %v248
  %v250 = vpop.f32.mrb[0].mxu0
  %251 = vdwg.mxu0
  %252 = vmatprep.subr.bf16.mxu0 0
  %253 = vmatpush1.bf16.msra.mxu0 %v176
  %254 = vmatprep.subr.bf16.mxu0 0
  %255 = vmatpush1.bf16.msra.mxu0 %v177
  %256 = vmatprep.subr.bf16.mxu0 0
  %257 = vmatpush1.bf16.msra.mxu0 0
  %258 = vmatprep.subr.bf16.mxu0 0
  %259 = vmatpush1.bf16.msra.mxu0 0
  %260 = vmatprep.subr.bf16.mxu0 0
  %261 = vmatpush1.bf16.msra.mxu0 0
  %262 = vmatprep.subr.bf16.mxu0 0
  %263 = vmatpush1.bf16.msra.mxu0 0
  %264 = vmatprep.subr.bf16.mxu0 0
  %265 = vmatpush1.bf16.msra.mxu0 0
  %266 = vmatprep.subr.bf16.mxu0 0
  %267 = vmatpush1.bf16.msra.mxu0 0
  %268 = vmatprep.subr.bf16.mxu0 0
  %269 = vmatpush1.bf16.msra.mxu0 0
  %270 = vmatprep.subr.bf16.mxu0 0
  %271 = vmatpush1.bf16.msra.mxu0 0
  %272 = vmatprep.subr.bf16.mxu0 0
  %273 = vmatpush1.bf16.msra.mxu0 0
  %274 = vmatprep.subr.bf16.mxu0 0
  %275 = vmatpush1.bf16.msra.mxu0 0
  %276 = vmatprep.subr.bf16.mxu0 0
  %277 = vmatpush1.bf16.msra.mxu0 0
  %278 = vmatprep.subr.bf16.mxu0 0
  %279 = vmatpush1.bf16.msra.mxu0 0
  %280 = vmatprep.subr.bf16.mxu0 0
  %281 = vmatpush1.bf16.msra.mxu0 0
  %282 = vmatprep.subr.bf16.mxu0 0
  %283 = vmatpush1.bf16.msra.mxu0 0
  %284 = vmatprep.mubr.bf16.mxu0 0
  %285 = vmatmul.mubr.bf16.gmra.mrb[0].mxu0 %v198
  %v286 = vpop.f32.mrb[0].mxu0
  %v287 = vadd.f32 %v238, %v286
  %v288 = vpop.f32.mrb[0].mxu0
  %v289 = vpop.f32.mrb[0].mxu0
  %v290 = vadd.f32 %v241, %v289
  %v291 = vpop.f32.mrb[0].mxu0
  %292 = vmatprep.mubr.bf16.mxu0 0
  %293 = vmatmul.mubr.bf16.gmra.mrb[0].mxu0 %v201
  %v294 = vpop.f32.mrb[0].mxu0
  %v295 = vadd.f32 %v246, %v294
  %v296 = vpop.f32.mrb[0].mxu0
  %v297 = vpop.f32.mrb[0].mxu0
  %v298 = vadd.f32 %v249, %v297
  %v299 = vpop.f32.mrb[0].mxu0
  %300 = vdwg.mxu0
  %v301 = vpack.c.bf16 %v290, %v287
  %v302 = vpack.c.bf16 %v298, %v295
  %v305 = vunpack.c.l.b16 %v301
  %v306 = vunpack.c.h.b16 %v301
  %v307 = vunpack.c.l.b16 %v302
  %v308 = vunpack.c.h.b16 %v302
  %v309 = vpack.c.b16 %v305, %v305
  %v310 = vpack.c.b16 %v306, %v306
  %v311 = vpack.c.b16 %v307, %v307
  %v312 = vpack.c.b16 %v308, %v308
  %vm317 = vcmask 257024
  %318 = vst.msk [vmem:[%s2] sm:$0xf] %vm317, %v309
  %319 = vst.msk [vmem:[%s2 + $0x4] sm:$0xf] %vm317, %v310
  %320 = vst.msk [vmem:[%s2 + $0x8] sm:$0xf] %vm317, %v311
  %321 = vst.msk [vmem:[%s2 + $0xc] sm:$0xf] %vm317, %v312
  %v322 = vsel %vm196, %v287, 0.0
  %v323 = vsel %vm196, %v290, 0.0
  %v324 = vadd.f32 %v322, %v323
  %v325 = vsel %vm196, %v295, 0.0
  %v326 = vadd.f32 %v324, %v325
  %v327 = vsel %vm196, %v298, 0.0
  %v328 = vadd.f32 %v326, %v327
  %v329 = vrot.slane %v328, 4
  %v330 = vadd.f32 %v328, %v329
  %v331 = vrot.slane %v330, 2
  %v332 = vadd.f32 %v330, %v331
  %v333 = vrot.slane %v332, 1
  %v334 = vadd.f32 %v332, %v333
  %v335 = vmul.f32 %v287, %v287
  %v336 = vmul.f32 %v290, %v290
  %v337 = vmul.f32 %v295, %v295
  %v338 = vmul.f32 %v298, %v298
  %v339 = vsel %vm196, %v335, 0.0
  %v340 = vsel %vm196, %v336, 0.0
  %v341 = vadd.f32 %v339, %v340
  %v342 = vsel %vm196, %v337, 0.0
  %v343 = vadd.f32 %v341, %v342
  %v344 = vsel %vm196, %v338, 0.0
  %v345 = vadd.f32 %v343, %v344
  %v346 = vrot.slane %v345, 4
  %v347 = vadd.f32 %v345, %v346
  %v348 = vrot.slane %v347, 2
  %v349 = vadd.f32 %v347, %v348
  %v350 = vrot.slane %v349, 1
  %v351 = vadd.f32 %v349, %v350
  %v352 = vlaneseq
  %v353 = vshrl.u32 %v352, 7
  %vm354 = vcmp.eq.s32.totalorder %v353, 0
  %vm355 = vcmp.eq.s32.totalorder %v353, 1
  %v356 = vsel %vm355, %v351, 0.0
  %v357 = vsel %vm354, %v334, %v356
  %358 = vst.msk [vmem:[%s3] sm:$0xff] %vm196, %v357
  // Predicated region
  $region10: #{resnet_generator_forward.31} parent=0 // pred_check
    _
  $region11: #{resnet_generator_forward.31} parent=0 // pred_check_branch
    %360 = sbr.rel (0) target = $region13
  $region12: #{resnet_generator_forward.31} parent=0 // pred_region
    _
  $region13: #{resnet_generator_forward.31} parent=0 // pred_fallthru
    _
  // Predicated region
  $region14: #{resnet_generator_forward.31} parent=0 // pred_check
    _
  $region15: #{resnet_generator_forward.31} parent=0 // pred_check_branch
    %362 = sbr.rel (0) target = $region17
  $region16: #{resnet_generator_forward.31} parent=0 // pred_region
    _
  $region17: #{resnet_generator_forward.31} parent=0 // pred_fallthru
    _
  // Predicated region
  $region18: #{resnet_generator_forward.31} parent=0 // pred_check
    _
  $region19: #{resnet_generator_forward.31} parent=0 // pred_check_branch
    %364 = sbr.rel (0) target = $region21
  $region20: #{resnet_generator_forward.31} parent=0 // pred_region
    _
  $region21: #{resnet_generator_forward.31} parent=0 // pred_fallthru
    _
  // Predicated region
  $region22: #{resnet_generator_forward.31} parent=0 // pred_check
    _
  $region23: #{resnet_generator_forward.31} parent=0 // pred_check_branch
    %366 = sbr.rel (0) target = $region25
  $region24: #{resnet_generator_forward.31} parent=0 // pred_region
    _
  $region25: #{resnet_generator_forward.31} parent=0 // pred_fallthru
    _

// kernel: resnet_generator_forward.40
$region0: #{resnet_generator_forward.40}
  #allocation0 [shape = 'u32[]', space=smem, size = 0x4, offset = 0x4, fixed_abs, tag = 'smem constant byte address 0x4 - core index']
  #allocation1 [shape = 'u32[144,128]{1,0:T(1,128)}', space=vmem, size = 0x12000, scoped, tag = 'internal scratch']
  %s0 = inlined_call_operand.vmem [shape: bf16[32,64], index: 0, kind: input, shape index: {}]
  %s1 = inlined_call_operand.vmem [shape: bf16[64,16], index: 1, kind: input, shape index: {}]
  %s2 = inlined_call_operand.vmem [shape: bf16[32,16], index: 2, kind: output, shape index: {0}]
  %s3 = inlined_call_operand.vmem [shape: f32[1,8,16], index: 3, kind: output, shape index: {1}]
  %4 = xla_tuple %s2, %s3
  %s5 = sld [smem:[#allocation0]]
  $region26: #{resnet_generator_forward.40} parent=0
    _
  %s7 = ssub.s32 1, %s5
  %s8 = scalar_select 0, %s7, %s5
  // Predicated region
  $region2: #{resnet_generator_forward.40} parent=0 // pred_check
    _
  $region3: #{resnet_generator_forward.40} parent=0 // pred_check_branch
    %10 = sbr.rel (0) target = $region5
  $region4: #{resnet_generator_forward.40} parent=0 // pred_region
    _
  $region5: #{resnet_generator_forward.40} parent=0 // pred_fallthru
    _
  // Predicated region
  $region6: #{resnet_generator_forward.40} parent=0 // pred_check
    _
  $region7: #{resnet_generator_forward.40} parent=0 // pred_check_branch
    %12 = sbr.rel (0) target = $region9
  $region8: #{resnet_generator_forward.40} parent=0 // pred_region
    _
  $region9: #{resnet_generator_forward.40} parent=0 // pred_fallthru
    _
  %v14 = vld [vmem:[%s0] sm:$0xf]
  %v15 = vld [vmem:[%s0 + $0x4] sm:$0xf]
  %v16 = vld [vmem:[%s0 + $0x8] sm:$0xf]
  %v17 = vld [vmem:[%s0 + $0xc] sm:$0xf]
  %v18 = vld [vmem:[%s1] sm:$0xf]
  %v19 = vld [vmem:[%s1 + $0x4] sm:$0xf]
  %v20 = vld [vmem:[%s1 + $0x8] sm:$0xf]
  %v21 = vld [vmem:[%s1 + $0xc] sm:$0xf]
  %v22 = vld [vmem:[%s1 + $0x10] sm:$0xf]
  %v23 = vld [vmem:[%s1 + $0x14] sm:$0xf]
  %v24 = vld [vmem:[%s1 + $0x18] sm:$0xf]
  %v25 = vld [vmem:[%s1 + $0x1c] sm:$0xf]
  %v30 = vunpack.c.l.b16 %v14
  %v31 = vunpack.c.l.b16 %v15
  %v32 = vunpack.c.l.b16 %v16
  %v33 = vunpack.c.l.b16 %v17
  %v34 = vpack.c.b16 %v31, %v30
  %v35 = vpack.c.b16 %v33, %v32
  %v44 = vunpack.c.l.b16 %v18
  %v45 = vunpack.c.l.b16 %v19
  %v46 = vunpack.c.l.b16 %v20
  %v47 = vunpack.c.l.b16 %v21
  %v48 = vunpack.c.l.b16 %v22
  %v49 = vunpack.c.l.b16 %v23
  %v50 = vunpack.c.l.b16 %v24
  %v51 = vunpack.c.l.b16 %v25
  %v52 = vpack.c.b16 %v45, %v44
  %v53 = vpack.c.b16 %v47, %v46
  %v54 = vpack.c.b16 %v49, %v48
  %v55 = vpack.c.b16 %v51, %v50
  %vm60 = vcmask 523264
  %v62 = vsel %vm60, %v34, 0
  %v65 = vsel %vm60, %v35, 0
  %67 = vmatprep.subr.bf16.mxu0 0
  %68 = vmatpush1.bf16.msra.mxu0 %v52
  %69 = vmatprep.subr.bf16.mxu0 0
  %70 = vmatpush1.bf16.msra.mxu0 %v53
  %71 = vmatprep.subr.bf16.mxu0 0
  %72 = vmatpush1.bf16.msra.mxu0 %v54
  %73 = vmatprep.subr.bf16.mxu0 0
  %74 = vmatpush1.bf16.msra.mxu0 %v55
  %75 = vmatprep.subr.bf16.mxu0 0
  %76 = vmatpush1.bf16.msra.mxu0 0
  %77 = vmatprep.subr.bf16.mxu0 0
  %78 = vmatpush1.bf16.msra.mxu0 0
  %79 = vmatprep.subr.bf16.mxu0 0
  %80 = vmatpush1.bf16.msra.mxu0 0
  %81 = vmatprep.subr.bf16.mxu0 0
  %82 = vmatpush1.bf16.msra.mxu0 0
  %83 = vmatprep.subr.bf16.mxu0 0
  %84 = vmatpush1.bf16.msra.mxu0 0
  %85 = vmatprep.subr.bf16.mxu0 0
  %86 = vmatpush1.bf16.msra.mxu0 0
  %87 = vmatprep.subr.bf16.mxu0 0
  %88 = vmatpush1.bf16.msra.mxu0 0
  %89 = vmatprep.subr.bf16.mxu0 0
  %90 = vmatpush1.bf16.msra.mxu0 0
  %91 = vmatprep.subr.bf16.mxu0 0
  %92 = vmatpush1.bf16.msra.mxu0 0
  %93 = vmatprep.subr.bf16.mxu0 0
  %94 = vmatpush1.bf16.msra.mxu0 0
  %95 = vmatprep.subr.bf16.mxu0 0
  %96 = vmatpush1.bf16.msra.mxu0 0
  %97 = vmatprep.subr.bf16.mxu0 0
  %98 = vmatpush1.bf16.msra.mxu0 0
  %99 = vmatprep.mubr.bf16.mxu0 0
  %100 = vmatmul.mubr.bf16.gmra.mrb[0].mxu0 %v62
  %v101 = vpop.f32.mrb[0].mxu0
  %v102 = vadd.f32 0.0, %v101
  %v103 = vpop.f32.mrb[0].mxu0
  %v104 = vpop.f32.mrb[0].mxu0
  %v105 = vadd.f32 0.0, %v104
  %v106 = vpop.f32.mrb[0].mxu0
  %107 = vmatprep.mubr.bf16.mxu0 0
  %108 = vmatmul.mubr.bf16.gmra.mrb[0].mxu0 %v65
  %v109 = vpop.f32.mrb[0].mxu0
  %v110 = vadd.f32 0.0, %v109
  %v111 = vpop.f32.mrb[0].mxu0
  %v112 = vpop.f32.mrb[0].mxu0
  %v113 = vadd.f32 0.0, %v112
  %v114 = vpop.f32.mrb[0].mxu0
  %115 = vdwg.mxu0
  %v116 = vpack.c.bf16 %v105, %v102
  %v117 = vpack.c.bf16 %v113, %v110
  %v120 = vunpack.c.l.b16 %v116
  %v121 = vunpack.c.h.b16 %v116
  %v122 = vunpack.c.l.b16 %v117
  %v123 = vunpack.c.h.b16 %v117
  %v124 = vpack.c.b16 %v120, %v120
  %v125 = vpack.c.b16 %v121, %v121
  %v126 = vpack.c.b16 %v122, %v122
  %v127 = vpack.c.b16 %v123, %v123
  %vm132 = vcmask 125952
  %133 = vst.msk [vmem:[%s2] sm:$0xf] %vm132, %v124
  %134 = vst.msk [vmem:[%s2 + $0x4] sm:$0xf] %vm132, %v125
  %135 = vst.msk [vmem:[%s2 + $0x8] sm:$0xf] %vm132, %v126
  %136 = vst.msk [vmem:[%s2 + $0xc] sm:$0xf] %vm132, %v127
  %vm137 = vcmask 130048
  %v138 = vsel %vm137, %v102, 0.0
  %v139 = vsel %vm137, %v105, 0.0
  %v140 = vadd.f32 %v138, %v139
  %v141 = vsel %vm137, %v110, 0.0
  %v142 = vadd.f32 %v140, %v141
  %v143 = vsel %vm137, %v113, 0.0
  %v144 = vadd.f32 %v142, %v143
  %v145 = vrot.slane %v144, 4
  %v146 = vadd.f32 %v144, %v145
  %v147 = vrot.slane %v146, 2
  %v148 = vadd.f32 %v146, %v147
  %v149 = vrot.slane %v148, 1
  %v150 = vadd.f32 %v148, %v149
  %v151 = vmul.f32 %v102, %v102
  %v152 = vmul.f32 %v105, %v105
  %v153 = vmul.f32 %v110, %v110
  %v154 = vmul.f32 %v113, %v113
  %v155 = vsel %vm137, %v151, 0.0
  %v156 = vsel %vm137, %v152, 0.0
  %v157 = vadd.f32 %v155, %v156
  %v158 = vsel %vm137, %v153, 0.0
  %v159 = vadd.f32 %v157, %v158
  %v160 = vsel %vm137, %v154, 0.0
  %v161 = vadd.f32 %v159, %v160
  %v162 = vrot.slane %v161, 4
  %v163 = vadd.f32 %v161, %v162
  %v164 = vrot.slane %v163, 2
  %v165 = vadd.f32 %v163, %v164
  %v166 = vrot.slane %v165, 1
  %v167 = vadd.f32 %v165, %v166
  %v168 = vlaneseq
  %v169 = vshrl.u32 %v168, 7
  %vm170 = vcmp.eq.s32.totalorder %v169, 0
  %vm171 = vcmp.eq.s32.totalorder %v169, 1
  %v172 = vsel %vm171, %v167, 0.0
  %v173 = vsel %vm170, %v150, %v172
  %174 = vst.msk [vmem:[%s3] sm:$0xff] %vm137, %v173
  // Predicated region
  $region10: #{resnet_generator_forward.40} parent=0 // pred_check
    _
  $region11: #{resnet_generator_forward.40} parent=0 // pred_check_branch
    %176 = sbr.rel (0) target = $region13
  $region12: #{resnet_generator_forward.40} parent=0 // pred_region
    _
  $region13: #{resnet_generator_forward.40} parent=0 // pred_fallthru
    _
  // Predicated region
  $region14: #{resnet_generator_forward.40} parent=0 // pred_check
    _
  $region15: #{resnet_generator_forward.40} parent=0 // pred_check_branch
    %178 = sbr.rel (0) target = $region17
  $region16: #{resnet_generator_forward.40} parent=0 // pred_region
    _
  $region17: #{resnet_generator_forward.40} parent=0 // pred_fallthru
    _
  // Predicated region
  $region18: #{resnet_generator_forward.40} parent=0 // pred_check
    _
  $region19: #{resnet_generator_forward.40} parent=0 // pred_check_branch
    %180 = sbr.rel (0) target = $region21
  $region20: #{resnet_generator_forward.40} parent=0 // pred_region
    _
  $region21: #{resnet_generator_forward.40} parent=0 // pred_fallthru
    _
  // Predicated region
  $region22: #{resnet_generator_forward.40} parent=0 // pred_check
    _
  $region23: #{resnet_generator_forward.40} parent=0 // pred_check_branch
    %182 = sbr.rel (0) target = $region25
  $region24: #{resnet_generator_forward.40} parent=0 // pred_region
    _
  $region25: #{resnet_generator_forward.40} parent=0 // pred_fallthru
    _

// kernel: resnet_generator_forward.39
$region0: #{resnet_generator_forward.39}
  #allocation0 [shape = 'u32[]', space=smem, size = 0x4, offset = 0x4, fixed_abs, tag = 'smem constant byte address 0x4 - core index']
  #allocation1 [shape = 'u32[144,128]{1,0:T(1,128)}', space=vmem, size = 0x12000, scoped, tag = 'internal scratch']
  %s0 = inlined_call_operand.vmem [shape: bf16[32,32], index: 0, kind: input, shape index: {}]
  %s1 = inlined_call_operand.vmem [shape: bf16[32,16], index: 1, kind: input, shape index: {}]
  %s2 = inlined_call_operand.vmem [shape: bf16[32,16], index: 2, kind: output, shape index: {0}]
  %s3 = inlined_call_operand.vmem [shape: f32[1,8,16], index: 3, kind: output, shape index: {1}]
  %4 = xla_tuple %s2, %s3
  %s5 = sld [smem:[#allocation0]]
  $region26: #{resnet_generator_forward.39} parent=0
    _
  %s7 = ssub.s32 1, %s5
  %s8 = scalar_select 0, %s7, %s5
  // Predicated region
  $region2: #{resnet_generator_forward.39} parent=0 // pred_check
    _
  $region3: #{resnet_generator_forward.39} parent=0 // pred_check_branch
    %10 = sbr.rel (0) target = $region5
  $region4: #{resnet_generator_forward.39} parent=0 // pred_region
    _
  $region5: #{resnet_generator_forward.39} parent=0 // pred_fallthru
    _
  // Predicated region
  $region6: #{resnet_generator_forward.39} parent=0 // pred_check
    _
  $region7: #{resnet_generator_forward.39} parent=0 // pred_check_branch
    %12 = sbr.rel (0) target = $region9
  $region8: #{resnet_generator_forward.39} parent=0 // pred_region
    _
  $region9: #{resnet_generator_forward.39} parent=0 // pred_fallthru
    _
  %v14 = vld [vmem:[%s0] sm:$0xf]
  %v15 = vld [vmem:[%s0 + $0x4] sm:$0xf]
  %v16 = vld [vmem:[%s0 + $0x8] sm:$0xf]
  %v17 = vld [vmem:[%s0 + $0xc] sm:$0xf]
  %v18 = vld [vmem:[%s1] sm:$0xf]
  %v19 = vld [vmem:[%s1 + $0x4] sm:$0xf]
  %v20 = vld [vmem:[%s1 + $0x8] sm:$0xf]
  %v21 = vld [vmem:[%s1 + $0xc] sm:$0xf]
  %v26 = vunpack.c.l.b16 %v14
  %v27 = vunpack.c.l.b16 %v15
  %v28 = vunpack.c.l.b16 %v16
  %v29 = vunpack.c.l.b16 %v17
  %v30 = vpack.c.b16 %v27, %v26
  %v31 = vpack.c.b16 %v29, %v28
  %v36 = vunpack.c.l.b16 %v18
  %v37 = vunpack.c.l.b16 %v19
  %v38 = vunpack.c.l.b16 %v20
  %v39 = vunpack.c.l.b16 %v21
  %v40 = vpack.c.b16 %v37, %v36
  %v41 = vpack.c.b16 %v39, %v38
  %vm44 = vcmask 261120
  %v46 = vsel %vm44, %v30, 0
  %v49 = vsel %vm44, %v31, 0
  %51 = vmatprep.subr.bf16.mxu0 0
  %52 = vmatpush1.bf16.msra.mxu0 %v40
  %53 = vmatprep.subr.bf16.mxu0 0
  %54 = vmatpush1.bf16.msra.mxu0 %v41
  %55 = vmatprep.subr.bf16.mxu0 0
  %56 = vmatpush1.bf16.msra.mxu0 0
  %57 = vmatprep.subr.bf16.mxu0 0
  %58 = vmatpush1.bf16.msra.mxu0 0
  %59 = vmatprep.subr.bf16.mxu0 0
  %60 = vmatpush1.bf16.msra.mxu0 0
  %61 = vmatprep.subr.bf16.mxu0 0
  %62 = vmatpush1.bf16.msra.mxu0 0
  %63 = vmatprep.subr.bf16.mxu0 0
  %64 = vmatpush1.bf16.msra.mxu0 0
  %65 = vmatprep.subr.bf16.mxu0 0
  %66 = vmatpush1.bf16.msra.mxu0 0
  %67 = vmatprep.subr.bf16.mxu0 0
  %68 = vmatpush1.bf16.msra.mxu0 0
  %69 = vmatprep.subr.bf16.mxu0 0
  %70 = vmatpush1.bf16.msra.mxu0 0
  %71 = vmatprep.subr.bf16.mxu0 0
  %72 = vmatpush1.bf16.msra.mxu0 0
  %73 = vmatprep.subr.bf16.mxu0 0
  %74 = vmatpush1.bf16.msra.mxu0 0
  %75 = vmatprep.subr.bf16.mxu0 0
  %76 = vmatpush1.bf16.msra.mxu0 0
  %77 = vmatprep.subr.bf16.mxu0 0
  %78 = vmatpush1.bf16.msra.mxu0 0
  %79 = vmatprep.subr.bf16.mxu0 0
  %80 = vmatpush1.bf16.msra.mxu0 0
  %81 = vmatprep.subr.bf16.mxu0 0
  %82 = vmatpush1.bf16.msra.mxu0 0
  %83 = vmatprep.mubr.bf16.mxu0 0
  %84 = vmatmul.mubr.bf16.gmra.mrb[0].mxu0 %v46
  %v85 = vpop.f32.mrb[0].mxu0
  %v86 = vadd.f32 0.0, %v85
  %v87 = vpop.f32.mrb[0].mxu0
  %v88 = vpop.f32.mrb[0].mxu0
  %v89 = vadd.f32 0.0, %v88
  %v90 = vpop.f32.mrb[0].mxu0
  %91 = vmatprep.mubr.bf16.mxu0 0
  %92 = vmatmul.mubr.bf16.gmra.mrb[0].mxu0 %v49
  %v93 = vpop.f32.mrb[0].mxu0
  %v94 = vadd.f32 0.0, %v93
  %v95 = vpop.f32.mrb[0].mxu0
  %v96 = vpop.f32.mrb[0].mxu0
  %v97 = vadd.f32 0.0, %v96
  %v98 = vpop.f32.mrb[0].mxu0
  %99 = vdwg.mxu0
  %v100 = vpack.c.bf16 %v89, %v86
  %v101 = vpack.c.bf16 %v97, %v94
  %v104 = vunpack.c.l.b16 %v100
  %v105 = vunpack.c.h.b16 %v100
  %v106 = vunpack.c.l.b16 %v101
  %v107 = vunpack.c.h.b16 %v101
  %v108 = vpack.c.b16 %v104, %v104
  %v109 = vpack.c.b16 %v105, %v105
  %v110 = vpack.c.b16 %v106, %v106
  %v111 = vpack.c.b16 %v107, %v107
  %vm116 = vcmask 125952
  %117 = vst.msk [vmem:[%s2] sm:$0xf] %vm116, %v108
  %118 = vst.msk [vmem:[%s2 + $0x4] sm:$0xf] %vm116, %v109
  %119 = vst.msk [vmem:[%s2 + $0x8] sm:$0xf] %vm116, %v110
  %120 = vst.msk [vmem:[%s2 + $0xc] sm:$0xf] %vm116, %v111
  %vm121 = vcmask 130048
  %v122 = vsel %vm121, %v86, 0.0
  %v123 = vsel %vm121, %v89, 0.0
  %v124 = vadd.f32 %v122, %v123
  %v125 = vsel %vm121, %v94, 0.0
  %v126 = vadd.f32 %v124, %v125
  %v127 = vsel %vm121, %v97, 0.0
  %v128 = vadd.f32 %v126, %v127
  %v129 = vrot.slane %v128, 4
  %v130 = vadd.f32 %v128, %v129
  %v131 = vrot.slane %v130, 2
  %v132 = vadd.f32 %v130, %v131
  %v133 = vrot.slane %v132, 1
  %v134 = vadd.f32 %v132, %v133
  %v135 = vmul.f32 %v86, %v86
  %v136 = vmul.f32 %v89, %v89
  %v137 = vmul.f32 %v94, %v94
  %v138 = vmul.f32 %v97, %v97
  %v139 = vsel %vm121, %v135, 0.0
  %v140 = vsel %vm121, %v136, 0.0
  %v141 = vadd.f32 %v139, %v140
  %v142 = vsel %vm121, %v137, 0.0
  %v143 = vadd.f32 %v141, %v142
  %v144 = vsel %vm121, %v138, 0.0
  %v145 = vadd.f32 %v143, %v144
  %v146 = vrot.slane %v145, 4
  %v147 = vadd.f32 %v145, %v146
  %v148 = vrot.slane %v147, 2
  %v149 = vadd.f32 %v147, %v148
  %v150 = vrot.slane %v149, 1
  %v151 = vadd.f32 %v149, %v150
  %v152 = vlaneseq
  %v153 = vshrl.u32 %v152, 7
  %vm154 = vcmp.eq.s32.totalorder %v153, 0
  %vm155 = vcmp.eq.s32.totalorder %v153, 1
  %v156 = vsel %vm155, %v151, 0.0
  %v157 = vsel %vm154, %v134, %v156
  %158 = vst.msk [vmem:[%s3] sm:$0xff] %vm121, %v157
  // Predicated region
  $region10: #{resnet_generator_forward.39} parent=0 // pred_check
    _
  $region11: #{resnet_generator_forward.39} parent=0 // pred_check_branch
    %160 = sbr.rel (0) target = $region13
  $region12: #{resnet_generator_forward.39} parent=0 // pred_region
    _
  $region13: #{resnet_generator_forward.39} parent=0 // pred_fallthru
    _
  // Predicated region
  $region14: #{resnet_generator_forward.39} parent=0 // pred_check
    _
  $region15: #{resnet_generator_forward.39} parent=0 // pred_check_branch
    %162 = sbr.rel (0) target = $region17
  $region16: #{resnet_generator_forward.39} parent=0 // pred_region
    _
  $region17: #{resnet_generator_forward.39} parent=0 // pred_fallthru
    _
  // Predicated region
  $region18: #{resnet_generator_forward.39} parent=0 // pred_check
    _
  $region19: #{resnet_generator_forward.39} parent=0 // pred_check_branch
    %164 = sbr.rel (0) target = $region21
  $region20: #{resnet_generator_forward.39} parent=0 // pred_region
    _
  $region21: #{resnet_generator_forward.39} parent=0 // pred_fallthru
    _
  // Predicated region
  $region22: #{resnet_generator_forward.39} parent=0 // pred_check
    _
  $region23: #{resnet_generator_forward.39} parent=0 // pred_check_branch
    %166 = sbr.rel (0) target = $region25
  $region24: #{resnet_generator_forward.39} parent=0 // pred_region
    _
  $region25: #{resnet_generator_forward.39} parent=0 // pred_fallthru
    _

// kernel: resnet_generator_forward.42
$region0: #{resnet_generator_forward.42}
  #allocation0 [shape = 'u32[]', space=smem, size = 0x4, offset = 0x4, fixed_abs, tag = 'smem constant byte address 0x4 - core index']
  #allocation1 [shape = 'u32[144,128]{1,0:T(1,128)}', space=vmem, size = 0x12000, scoped, tag = 'internal scratch']
  %s0 = inlined_call_operand.vmem [shape: bf16[32,128], index: 0, kind: input, shape index: {}]
  %s1 = inlined_call_operand.vmem [shape: bf16[128,16], index: 1, kind: input, shape index: {}]
  %s2 = inlined_call_operand.vmem [shape: bf16[32,16], index: 2, kind: output, shape index: {0}]
  %s3 = inlined_call_operand.vmem [shape: f32[1,8,16], index: 3, kind: output, shape index: {1}]
  %4 = xla_tuple %s2, %s3
  %s5 = sld [smem:[#allocation0]]
  $region26: #{resnet_generator_forward.42} parent=0
    _
  %s7 = ssub.s32 1, %s5
  %s8 = scalar_select 0, %s7, %s5
  // Predicated region
  $region2: #{resnet_generator_forward.42} parent=0 // pred_check
    _
  $region3: #{resnet_generator_forward.42} parent=0 // pred_check_branch
    %10 = sbr.rel (0) target = $region5
  $region4: #{resnet_generator_forward.42} parent=0 // pred_region
    _
  $region5: #{resnet_generator_forward.42} parent=0 // pred_fallthru
    _
  // Predicated region
  $region6: #{resnet_generator_forward.42} parent=0 // pred_check
    _
  $region7: #{resnet_generator_forward.42} parent=0 // pred_check_branch
    %12 = sbr.rel (0) target = $region9
  $region8: #{resnet_generator_forward.42} parent=0 // pred_region
    _
  $region9: #{resnet_generator_forward.42} parent=0 // pred_fallthru
    _
  %v14 = vld [vmem:[%s0] sm:$0xf]
  %v15 = vld [vmem:[%s0 + $0x4] sm:$0xf]
  %v16 = vld [vmem:[%s0 + $0x8] sm:$0xf]
  %v17 = vld [vmem:[%s0 + $0xc] sm:$0xf]
  %v18 = vld [vmem:[%s1] sm:$0xf]
  %v19 = vld [vmem:[%s1 + $0x4] sm:$0xf]
  %v20 = vld [vmem:[%s1 + $0x8] sm:$0xf]
  %v21 = vld [vmem:[%s1 + $0xc] sm:$0xf]
  %v22 = vld [vmem:[%s1 + $0x10] sm:$0xf]
  %v23 = vld [vmem:[%s1 + $0x14] sm:$0xf]
  %v24 = vld [vmem:[%s1 + $0x18] sm:$0xf]
  %v25 = vld [vmem:[%s1 + $0x1c] sm:$0xf]
  %v26 = vld [vmem:[%s1 + $0x20] sm:$0xf]
  %v27 = vld [vmem:[%s1 + $0x24] sm:$0xf]
  %v28 = vld [vmem:[%s1 + $0x28] sm:$0xf]
  %v29 = vld [vmem:[%s1 + $0x2c] sm:$0xf]
  %v30 = vld [vmem:[%s1 + $0x30] sm:$0xf]
  %v31 = vld [vmem:[%s1 + $0x34] sm:$0xf]
  %v32 = vld [vmem:[%s1 + $0x38] sm:$0xf]
  %v33 = vld [vmem:[%s1 + $0x3c] sm:$0xf]
  %v38 = vunpack.c.l.b16 %v14
  %v39 = vunpack.c.l.b16 %v15
  %v40 = vunpack.c.l.b16 %v16
  %v41 = vunpack.c.l.b16 %v17
  %v42 = vpack.c.b16 %v39, %v38
  %v43 = vpack.c.b16 %v41, %v40
  %v62 = vunpack.c.l.b16 %v18
  %v63 = vunpack.c.l.b16 %v19
  %v64 = vunpack.c.l.b16 %v20
  %v65 = vunpack.c.l.b16 %v21
  %v66 = vunpack.c.l.b16 %v22
  %v67 = vunpack.c.l.b16 %v23
  %v68 = vunpack.c.l.b16 %v24
  %v69 = vunpack.c.l.b16 %v25
  %v70 = vunpack.c.l.b16 %v26
  %v71 = vunpack.c.l.b16 %v27
  %v72 = vunpack.c.l.b16 %v28
  %v73 = vunpack.c.l.b16 %v29
  %v74 = vunpack.c.l.b16 %v30
  %v75 = vunpack.c.l.b16 %v31
  %v76 = vunpack.c.l.b16 %v32
  %v77 = vunpack.c.l.b16 %v33
  %v78 = vpack.c.b16 %v63, %v62
  %v79 = vpack.c.b16 %v65, %v64
  %v80 = vpack.c.b16 %v67, %v66
  %v81 = vpack.c.b16 %v69, %v68
  %v82 = vpack.c.b16 %v71, %v70
  %v83 = vpack.c.b16 %v73, %v72
  %v84 = vpack.c.b16 %v75, %v74
  %v85 = vpack.c.b16 %v77, %v76
  %94 = vmatprep.subr.bf16.mxu0 0
  %95 = vmatpush1.bf16.msra.mxu0 %v78
  %96 = vmatprep.subr.bf16.mxu0 0
  %97 = vmatpush1.bf16.msra.mxu0 %v79
  %98 = vmatprep.subr.bf16.mxu0 0
  %99 = vmatpush1.bf16.msra.mxu0 %v80
  %100 = vmatprep.subr.bf16.mxu0 0
  %101 = vmatpush1.bf16.msra.mxu0 %v81
  %102 = vmatprep.subr.bf16.mxu0 0
  %103 = vmatpush1.bf16.msra.mxu0 %v82
  %104 = vmatprep.subr.bf16.mxu0 0
  %105 = vmatpush1.bf16.msra.mxu0 %v83
  %106 = vmatprep.subr.bf16.mxu0 0
  %107 = vmatpush1.bf16.msra.mxu0 %v84
  %108 = vmatprep.subr.bf16.mxu0 0
  %109 = vmatpush1.bf16.msra.mxu0 %v85
  %110 = vmatprep.subr.bf16.mxu0 0
  %111 = vmatpush1.bf16.msra.mxu0 0
  %112 = vmatprep.subr.bf16.mxu0 0
  %113 = vmatpush1.bf16.msra.mxu0 0
  %114 = vmatprep.subr.bf16.mxu0 0
  %115 = vmatpush1.bf16.msra.mxu0 0
  %116 = vmatprep.subr.bf16.mxu0 0
  %117 = vmatpush1.bf16.msra.mxu0 0
  %118 = vmatprep.subr.bf16.mxu0 0
  %119 = vmatpush1.bf16.msra.mxu0 0
  %120 = vmatprep.subr.bf16.mxu0 0
  %121 = vmatpush1.bf16.msra.mxu0 0
  %122 = vmatprep.subr.bf16.mxu0 0
  %123 = vmatpush1.bf16.msra.mxu0 0
  %124 = vmatprep.subr.bf16.mxu0 0
  %125 = vmatpush1.bf16.msra.mxu0 0
  %126 = vmatprep.mubr.bf16.mxu0 0
  %127 = vmatmul.mubr.bf16.gmra.mrb[0].mxu0 %v42
  %v128 = vpop.f32.mrb[0].mxu0
  %v129 = vadd.f32 0.0, %v128
  %v130 = vpop.f32.mrb[0].mxu0
  %v131 = vpop.f32.mrb[0].mxu0
  %v132 = vadd.f32 0.0, %v131
  %v133 = vpop.f32.mrb[0].mxu0
  %134 = vmatprep.mubr.bf16.mxu0 0
  %135 = vmatmul.mubr.bf16.gmra.mrb[0].mxu0 %v43
  %v136 = vpop.f32.mrb[0].mxu0
  %v137 = vadd.f32 0.0, %v136
  %v138 = vpop.f32.mrb[0].mxu0
  %v139 = vpop.f32.mrb[0].mxu0
  %v140 = vadd.f32 0.0, %v139
  %v141 = vpop.f32.mrb[0].mxu0
  %142 = vdwg.mxu0
  %v143 = vpack.c.bf16 %v132, %v129
  %v144 = vpack.c.bf16 %v140, %v137
  %v147 = vunpack.c.l.b16 %v143
  %v148 = vunpack.c.h.b16 %v143
  %v149 = vunpack.c.l.b16 %v144
  %v150 = vunpack.c.h.b16 %v144
  %v151 = vpack.c.b16 %v147, %v147
  %v152 = vpack.c.b16 %v148, %v148
  %v153 = vpack.c.b16 %v149, %v149
  %v154 = vpack.c.b16 %v150, %v150
  %vm159 = vcmask 125952
  %160 = vst.msk [vmem:[%s2] sm:$0xf] %vm159, %v151
  %161 = vst.msk [vmem:[%s2 + $0x4] sm:$0xf] %vm159, %v152
  %162 = vst.msk [vmem:[%s2 + $0x8] sm:$0xf] %vm159, %v153
  %163 = vst.msk [vmem:[%s2 + $0xc] sm:$0xf] %vm159, %v154
  %vm164 = vcmask 130048
  %v165 = vsel %vm164, %v129, 0.0
  %v166 = vsel %vm164, %v132, 0.0
  %v167 = vadd.f32 %v165, %v166
  %v168 = vsel %vm164, %v137, 0.0
  %v169 = vadd.f32 %v167, %v168
  %v170 = vsel %vm164, %v140, 0.0
  %v171 = vadd.f32 %v169, %v170
  %v172 = vrot.slane %v171, 4
  %v173 = vadd.f32 %v171, %v172
  %v174 = vrot.slane %v173, 2
  %v175 = vadd.f32 %v173, %v174
  %v176 = vrot.slane %v175, 1
  %v177 = vadd.f32 %v175, %v176
  %v178 = vmul.f32 %v129, %v129
  %v179 = vmul.f32 %v132, %v132
  %v180 = vmul.f32 %v137, %v137
  %v181 = vmul.f32 %v140, %v140
  %v182 = vsel %vm164, %v178, 0.0
  %v183 = vsel %vm164, %v179, 0.0
  %v184 = vadd.f32 %v182, %v183
  %v185 = vsel %vm164, %v180, 0.0
  %v186 = vadd.f32 %v184, %v185
  %v187 = vsel %vm164, %v181, 0.0
  %v188 = vadd.f32 %v186, %v187
  %v189 = vrot.slane %v188, 4
  %v190 = vadd.f32 %v188, %v189
  %v191 = vrot.slane %v190, 2
  %v192 = vadd.f32 %v190, %v191
  %v193 = vrot.slane %v192, 1
  %v194 = vadd.f32 %v192, %v193
  %v195 = vlaneseq
  %v196 = vshrl.u32 %v195, 7
  %vm197 = vcmp.eq.s32.totalorder %v196, 0
  %vm198 = vcmp.eq.s32.totalorder %v196, 1
  %v199 = vsel %vm198, %v194, 0.0
  %v200 = vsel %vm197, %v177, %v199
  %201 = vst.msk [vmem:[%s3] sm:$0xff] %vm164, %v200
  // Predicated region
  $region10: #{resnet_generator_forward.42} parent=0 // pred_check
    _
  $region11: #{resnet_generator_forward.42} parent=0 // pred_check_branch
    %203 = sbr.rel (0) target = $region13
  $region12: #{resnet_generator_forward.42} parent=0 // pred_region
    _
  $region13: #{resnet_generator_forward.42} parent=0 // pred_fallthru
    _
  // Predicated region
  $region14: #{resnet_generator_forward.42} parent=0 // pred_check
    _
  $region15: #{resnet_generator_forward.42} parent=0 // pred_check_branch
    %205 = sbr.rel (0) target = $region17
  $region16: #{resnet_generator_forward.42} parent=0 // pred_region
    _
  $region17: #{resnet_generator_forward.42} parent=0 // pred_fallthru
    _
  // Predicated region
  $region18: #{resnet_generator_forward.42} parent=0 // pred_check
    _
  $region19: #{resnet_generator_forward.42} parent=0 // pred_check_branch
    %207 = sbr.rel (0) target = $region21
  $region20: #{resnet_generator_forward.42} parent=0 // pred_region
    _
  $region21: #{resnet_generator_forward.42} parent=0 // pred_fallthru
    _
  // Predicated region
  $region22: #{resnet_generator_forward.42} parent=0 // pred_check
    _
  $region23: #{resnet_generator_forward.42} parent=0 // pred_check_branch
    %209 = sbr.rel (0) target = $region25
  $region24: #{resnet_generator_forward.42} parent=0 // pred_region
    _
  $region25: #{resnet_generator_forward.42} parent=0 // pred_fallthru
    _

// kernel: resnet_generator_forward.45
$region0: #{resnet_generator_forward.45}
  #allocation0 [shape = 'u32[]', space=smem, size = 0x4, offset = 0x4, fixed_abs, tag = 'smem constant byte address 0x4 - core index']
  #allocation1 [shape = 'u32[144,128]{1,0:T(1,128)}', space=vmem, size = 0x12000, scoped, tag = 'internal scratch']
  %s0 = inlined_call_operand.vmem [shape: bf16[128,32], index: 0, kind: input, shape index: {}]
  %s1 = inlined_call_operand.vmem [shape: bf16[32,8], index: 1, kind: input, shape index: {}]
  %s2 = inlined_call_operand.vmem [shape: bf16[128,8], index: 2, kind: output, shape index: {0}]
  %s3 = inlined_call_operand.vmem [shape: f32[1,8,8], index: 3, kind: output, shape index: {1}]
  %4 = xla_tuple %s2, %s3
  %s5 = sld [smem:[#allocation0]]
  $region26: #{resnet_generator_forward.45} parent=0
    _
  %s7 = ssub.s32 1, %s5
  %s8 = scalar_select 0, %s7, %s5
  // Predicated region
  $region2: #{resnet_generator_forward.45} parent=0 // pred_check
    _
  $region3: #{resnet_generator_forward.45} parent=0 // pred_check_branch
    %10 = sbr.rel (0) target = $region5
  $region4: #{resnet_generator_forward.45} parent=0 // pred_region
    _
  $region5: #{resnet_generator_forward.45} parent=0 // pred_fallthru
    _
  // Predicated region
  $region6: #{resnet_generator_forward.45} parent=0 // pred_check
    _
  $region7: #{resnet_generator_forward.45} parent=0 // pred_check_branch
    %12 = sbr.rel (0) target = $region9
  $region8: #{resnet_generator_forward.45} parent=0 // pred_region
    _
  $region9: #{resnet_generator_forward.45} parent=0 // pred_fallthru
    _
  %v14 = vld [vmem:[%s0] sm:$0xf]
  %v15 = vld [vmem:[%s0 + $0x4] sm:$0xf]
  %v16 = vld [vmem:[%s0 + $0x8] sm:$0xf]
  %v17 = vld [vmem:[%s0 + $0xc] sm:$0xf]
  %v18 = vld [vmem:[%s0 + $0x10] sm:$0xf]
  %v19 = vld [vmem:[%s0 + $0x14] sm:$0xf]
  %v20 = vld [vmem:[%s0 + $0x18] sm:$0xf]
  %v21 = vld [vmem:[%s0 + $0x1c] sm:$0xf]
  %v22 = vld [vmem:[%s0 + $0x20] sm:$0xf]
  %v23 = vld [vmem:[%s0 + $0x24] sm:$0xf]
  %v24 = vld [vmem:[%s0 + $0x28] sm:$0xf]
  %v25 = vld [vmem:[%s0 + $0x2c] sm:$0xf]
  %v26 = vld [vmem:[%s0 + $0x30] sm:$0xf]
  %v27 = vld [vmem:[%s0 + $0x34] sm:$0xf]
  %v28 = vld [vmem:[%s0 + $0x38] sm:$0xf]
  %v29 = vld [vmem:[%s0 + $0x3c] sm:$0xf]
  %v30 = vld [vmem:[%s1] sm:$0xf]
  %v31 = vld [vmem:[%s1 + $0x4] sm:$0xf]
  %v32 = vld [vmem:[%s1 + $0x8] sm:$0xf]
  %v33 = vld [vmem:[%s1 + $0xc] sm:$0xf]
  %v50 = vunpack.c.l.b16 %v14
  %v51 = vunpack.c.l.b16 %v15
  %v52 = vunpack.c.l.b16 %v16
  %v53 = vunpack.c.l.b16 %v17
  %v54 = vunpack.c.l.b16 %v18
  %v55 = vunpack.c.l.b16 %v19
  %v56 = vunpack.c.l.b16 %v20
  %v57 = vunpack.c.l.b16 %v21
  %v58 = vunpack.c.l.b16 %v22
  %v59 = vunpack.c.l.b16 %v23
  %v60 = vunpack.c.l.b16 %v24
  %v61 = vunpack.c.l.b16 %v25
  %v62 = vunpack.c.l.b16 %v26
  %v63 = vunpack.c.l.b16 %v27
  %v64 = vunpack.c.l.b16 %v28
  %v65 = vunpack.c.l.b16 %v29
  %v66 = vpack.c.b16 %v51, %v50
  %v67 = vpack.c.b16 %v53, %v52
  %v68 = vpack.c.b16 %v55, %v54
  %v69 = vpack.c.b16 %v57, %v56
  %v70 = vpack.c.b16 %v59, %v58
  %v71 = vpack.c.b16 %v61, %v60
  %v72 = vpack.c.b16 %v63, %v62
  %v73 = vpack.c.b16 %v65, %v64
  %v78 = vunpack.c.l.b16 %v30
  %v79 = vunpack.c.l.b16 %v31
  %v80 = vunpack.c.l.b16 %v32
  %v81 = vunpack.c.l.b16 %v33
  %v82 = vpack.c.b16 %v79, %v78
  %v83 = vpack.c.b16 %v81, %v80
  %vm86 = vcmask 261120
  %v88 = vsel %vm86, %v66, 0
  %v91 = vsel %vm86, %v67, 0
  %v94 = vsel %vm86, %v68, 0
  %v97 = vsel %vm86, %v69, 0
  %v100 = vsel %vm86, %v70, 0
  %v103 = vsel %vm86, %v71, 0
  %v106 = vsel %vm86, %v72, 0
  %v109 = vsel %vm86, %v73, 0
  %111 = vmatprep.subr.bf16.mxu0 0
  %112 = vmatpush1.bf16.msra.mxu0 %v82
  %113 = vmatprep.subr.bf16.mxu0 0
  %114 = vmatpush1.bf16.msra.mxu0 %v83
  %115 = vmatprep.subr.bf16.mxu0 0
  %116 = vmatpush1.bf16.msra.mxu0 0
  %117 = vmatprep.subr.bf16.mxu0 0
  %118 = vmatpush1.bf16.msra.mxu0 0
  %119 = vmatprep.subr.bf16.mxu0 0
  %120 = vmatpush1.bf16.msra.mxu0 0
  %121 = vmatprep.subr.bf16.mxu0 0
  %122 = vmatpush1.bf16.msra.mxu0 0
  %123 = vmatprep.subr.bf16.mxu0 0
  %124 = vmatpush1.bf16.msra.mxu0 0
  %125 = vmatprep.subr.bf16.mxu0 0
  %126 = vmatpush1.bf16.msra.mxu0 0
  %127 = vmatprep.subr.bf16.mxu0 0
  %128 = vmatpush1.bf16.msra.mxu0 0
  %129 = vmatprep.subr.bf16.mxu0 0
  %130 = vmatpush1.bf16.msra.mxu0 0
  %131 = vmatprep.subr.bf16.mxu0 0
  %132 = vmatpush1.bf16.msra.mxu0 0
  %133 = vmatprep.subr.bf16.mxu0 0
  %134 = vmatpush1.bf16.msra.mxu0 0
  %135 = vmatprep.subr.bf16.mxu0 0
  %136 = vmatpush1.bf16.msra.mxu0 0
  %137 = vmatprep.subr.bf16.mxu0 0
  %138 = vmatpush1.bf16.msra.mxu0 0
  %139 = vmatprep.subr.bf16.mxu0 0
  %140 = vmatpush1.bf16.msra.mxu0 0
  %141 = vmatprep.subr.bf16.mxu0 0
  %142 = vmatpush1.bf16.msra.mxu0 0
  %143 = vmatprep.mubr.bf16.mxu0 0
  %144 = vmatmul.mubr.bf16.gmra.mrb[0].mxu0 %v88
  %v145 = vpop.f32.mrb[0].mxu0
  %v146 = vadd.f32 0.0, %v145
  %v147 = vpop.f32.mrb[0].mxu0
  %v148 = vpop.f32.mrb[0].mxu0
  %v149 = vadd.f32 0.0, %v148
  %v150 = vpop.f32.mrb[0].mxu0
  %151 = vmatprep.mubr.bf16.mxu0 0
  %152 = vmatmul.mubr.bf16.gmra.mrb[0].mxu0 %v91
  %v153 = vpop.f32.mrb[0].mxu0
  %v154 = vadd.f32 0.0, %v153
  %v155 = vpop.f32.mrb[0].mxu0
  %v156 = vpop.f32.mrb[0].mxu0
  %v157 = vadd.f32 0.0, %v156
  %v158 = vpop.f32.mrb[0].mxu0
  %159 = vmatprep.mubr.bf16.mxu0 0
  %160 = vmatmul.mubr.bf16.gmra.mrb[0].mxu0 %v94
  %v161 = vpop.f32.mrb[0].mxu0
  %v162 = vadd.f32 0.0, %v161
  %v163 = vpop.f32.mrb[0].mxu0
  %v164 = vpop.f32.mrb[0].mxu0
  %v165 = vadd.f32 0.0, %v164
  %v166 = vpop.f32.mrb[0].mxu0
  %167 = vmatprep.mubr.bf16.mxu0 0
  %168 = vmatmul.mubr.bf16.gmra.mrb[0].mxu0 %v97
  %v169 = vpop.f32.mrb[0].mxu0
  %v170 = vadd.f32 0.0, %v169
  %v171 = vpop.f32.mrb[0].mxu0
  %v172 = vpop.f32.mrb[0].mxu0
  %v173 = vadd.f32 0.0, %v172
  %v174 = vpop.f32.mrb[0].mxu0
  %175 = vmatprep.mubr.bf16.mxu0 0
  %176 = vmatmul.mubr.bf16.gmra.mrb[0].mxu0 %v100
  %v177 = vpop.f32.mrb[0].mxu0
  %v178 = vadd.f32 0.0, %v177
  %v179 = vpop.f32.mrb[0].mxu0
  %v180 = vpop.f32.mrb[0].mxu0
  %v181 = vadd.f32 0.0, %v180
  %v182 = vpop.f32.mrb[0].mxu0
  %183 = vmatprep.mubr.bf16.mxu0 0
  %184 = vmatmul.mubr.bf16.gmra.mrb[0].mxu0 %v103
  %v185 = vpop.f32.mrb[0].mxu0
  %v186 = vadd.f32 0.0, %v185
  %v187 = vpop.f32.mrb[0].mxu0
  %v188 = vpop.f32.mrb[0].mxu0
  %v189 = vadd.f32 0.0, %v188
  %v190 = vpop.f32.mrb[0].mxu0
  %191 = vmatprep.mubr.bf16.mxu0 0
  %192 = vmatmul.mubr.bf16.gmra.mrb[0].mxu0 %v106
  %v193 = vpop.f32.mrb[0].mxu0
  %v194 = vadd.f32 0.0, %v193
  %v195 = vpop.f32.mrb[0].mxu0
  %v196 = vpop.f32.mrb[0].mxu0
  %v197 = vadd.f32 0.0, %v196
  %v198 = vpop.f32.mrb[0].mxu0
  %199 = vmatprep.mubr.bf16.mxu0 0
  %200 = vmatmul.mubr.bf16.gmra.mrb[0].mxu0 %v109
  %v201 = vpop.f32.mrb[0].mxu0
  %v202 = vadd.f32 0.0, %v201
  %v203 = vpop.f32.mrb[0].mxu0
  %v204 = vpop.f32.mrb[0].mxu0
  %v205 = vadd.f32 0.0, %v204
  %v206 = vpop.f32.mrb[0].mxu0
  %207 = vdwg.mxu0
  %v208 = vpack.c.bf16 %v149, %v146
  %v209 = vpack.c.bf16 %v157, %v154
  %v210 = vpack.c.bf16 %v165, %v162
  %v211 = vpack.c.bf16 %v173, %v170
  %v212 = vpack.c.bf16 %v181, %v178
  %v213 = vpack.c.bf16 %v189, %v186
  %v214 = vpack.c.bf16 %v197, %v194
  %v215 = vpack.c.bf16 %v205, %v202
  %v224 = vunpack.c.l.b16 %v208
  %v225 = vunpack.c.h.b16 %v208
  %v226 = vunpack.c.l.b16 %v209
  %v227 = vunpack.c.h.b16 %v209
  %v228 = vunpack.c.l.b16 %v210
  %v229 = vunpack.c.h.b16 %v210
  %v230 = vunpack.c.l.b16 %v211
  %v231 = vunpack.c.h.b16 %v211
  %v232 = vunpack.c.l.b16 %v212
  %v233 = vunpack.c.h.b16 %v212
  %v234 = vunpack.c.l.b16 %v213
  %v235 = vunpack.c.h.b16 %v213
  %v236 = vunpack.c.l.b16 %v214
  %v237 = vunpack.c.h.b16 %v214
  %v238 = vunpack.c.l.b16 %v215
  %v239 = vunpack.c.h.b16 %v215
  %v240 = vpack.c.b16 %v224, %v224
  %v241 = vpack.c.b16 %v225, %v225
  %v242 = vpack.c.b16 %v226, %v226
  %v243 = vpack.c.b16 %v227, %v227
  %v244 = vpack.c.b16 %v228, %v228
  %v245 = vpack.c.b16 %v229, %v229
  %v246 = vpack.c.b16 %v230, %v230
  %v247 = vpack.c.b16 %v231, %v231
  %v248 = vpack.c.b16 %v232, %v232
  %v249 = vpack.c.b16 %v233, %v233
  %v250 = vpack.c.b16 %v234, %v234
  %v251 = vpack.c.b16 %v235, %v235
  %v252 = vpack.c.b16 %v236, %v236
  %v253 = vpack.c.b16 %v237, %v237
  %v254 = vpack.c.b16 %v238, %v238
  %v255 = vpack.c.b16 %v239, %v239
  %vm272 = vcmask 60416
  %273 = vst.msk [vmem:[%s2] sm:$0xf] %vm272, %v240
  %274 = vst.msk [vmem:[%s2 + $0x4] sm:$0xf] %vm272, %v241
  %275 = vst.msk [vmem:[%s2 + $0x8] sm:$0xf] %vm272, %v242
  %276 = vst.msk [vmem:[%s2 + $0xc] sm:$0xf] %vm272, %v243
  %277 = vst.msk [vmem:[%s2 + $0x10] sm:$0xf] %vm272, %v244
  %278 = vst.msk [vmem:[%s2 + $0x14] sm:$0xf] %vm272, %v245
  %279 = vst.msk [vmem:[%s2 + $0x18] sm:$0xf] %vm272, %v246
  %280 = vst.msk [vmem:[%s2 + $0x1c] sm:$0xf] %vm272, %v247
  %281 = vst.msk [vmem:[%s2 + $0x20] sm:$0xf] %vm272, %v248
  %282 = vst.msk [vmem:[%s2 + $0x24] sm:$0xf] %vm272, %v249
  %283 = vst.msk [vmem:[%s2 + $0x28] sm:$0xf] %vm272, %v250
  %284 = vst.msk [vmem:[%s2 + $0x2c] sm:$0xf] %vm272, %v251
  %285 = vst.msk [vmem:[%s2 + $0x30] sm:$0xf] %vm272, %v252
  %286 = vst.msk [vmem:[%s2 + $0x34] sm:$0xf] %vm272, %v253
  %287 = vst.msk [vmem:[%s2 + $0x38] sm:$0xf] %vm272, %v254
  %288 = vst.msk [vmem:[%s2 + $0x3c] sm:$0xf] %vm272, %v255
  %vm289 = vcmask 64512
  %v290 = vsel %vm289, %v146, 0.0
  %v291 = vsel %vm289, %v149, 0.0
  %v292 = vadd.f32 %v290, %v291
  %v293 = vsel %vm289, %v154, 0.0
  %v294 = vadd.f32 %v292, %v293
  %v295 = vsel %vm289, %v157, 0.0
  %v296 = vadd.f32 %v294, %v295
  %v297 = vsel %vm289, %v162, 0.0
  %v298 = vadd.f32 %v296, %v297
  %v299 = vsel %vm289, %v165, 0.0
  %v300 = vadd.f32 %v298, %v299
  %v301 = vsel %vm289, %v170, 0.0
  %v302 = vadd.f32 %v300, %v301
  %v303 = vsel %vm289, %v173, 0.0
  %v304 = vadd.f32 %v302, %v303
  %v305 = vsel %vm289, %v178, 0.0
  %v306 = vadd.f32 %v304, %v305
  %v307 = vsel %vm289, %v181, 0.0
  %v308 = vadd.f32 %v306, %v307
  %v309 = vsel %vm289, %v186, 0.0
  %v310 = vadd.f32 %v308, %v309
  %v311 = vsel %vm289, %v189, 0.0
  %v312 = vadd.f32 %v310, %v311
  %v313 = vsel %vm289, %v194, 0.0
  %v314 = vadd.f32 %v312, %v313
  %v315 = vsel %vm289, %v197, 0.0
  %v316 = vadd.f32 %v314, %v315
  %v317 = vsel %vm289, %v202, 0.0
  %v318 = vadd.f32 %v316, %v317
  %v319 = vsel %vm289, %v205, 0.0
  %v320 = vadd.f32 %v318, %v319
  %v321 = vrot.slane %v320, 4
  %v322 = vadd.f32 %v320, %v321
  %v323 = vrot.slane %v322, 2
  %v324 = vadd.f32 %v322, %v323
  %v325 = vrot.slane %v324, 1
  %v326 = vadd.f32 %v324, %v325
  %v327 = vmul.f32 %v146, %v146
  %v328 = vmul.f32 %v149, %v149
  %v329 = vmul.f32 %v154, %v154
  %v330 = vmul.f32 %v157, %v157
  %v331 = vmul.f32 %v162, %v162
  %v332 = vmul.f32 %v165, %v165
  %v333 = vmul.f32 %v170, %v170
  %v334 = vmul.f32 %v173, %v173
  %v335 = vmul.f32 %v178, %v178
  %v336 = vmul.f32 %v181, %v181
  %v337 = vmul.f32 %v186, %v186
  %v338 = vmul.f32 %v189, %v189
  %v339 = vmul.f32 %v194, %v194
  %v340 = vmul.f32 %v197, %v197
  %v341 = vmul.f32 %v202, %v202
  %v342 = vmul.f32 %v205, %v205
  %v343 = vsel %vm289, %v327, 0.0
  %v344 = vsel %vm289, %v328, 0.0
  %v345 = vadd.f32 %v343, %v344
  %v346 = vsel %vm289, %v329, 0.0
  %v347 = vadd.f32 %v345, %v346
  %v348 = vsel %vm289, %v330, 0.0
  %v349 = vadd.f32 %v347, %v348
  %v350 = vsel %vm289, %v331, 0.0
  %v351 = vadd.f32 %v349, %v350
  %v352 = vsel %vm289, %v332, 0.0
  %v353 = vadd.f32 %v351, %v352
  %v354 = vsel %vm289, %v333, 0.0
  %v355 = vadd.f32 %v353, %v354
  %v356 = vsel %vm289, %v334, 0.0
  %v357 = vadd.f32 %v355, %v356
  %v358 = vsel %vm289, %v335, 0.0
  %v359 = vadd.f32 %v357, %v358
  %v360 = vsel %vm289, %v336, 0.0
  %v361 = vadd.f32 %v359, %v360
  %v362 = vsel %vm289, %v337, 0.0
  %v363 = vadd.f32 %v361, %v362
  %v364 = vsel %vm289, %v338, 0.0
  %v365 = vadd.f32 %v363, %v364
  %v366 = vsel %vm289, %v339, 0.0
  %v367 = vadd.f32 %v365, %v366
  %v368 = vsel %vm289, %v340, 0.0
  %v369 = vadd.f32 %v367, %v368
  %v370 = vsel %vm289, %v341, 0.0
  %v371 = vadd.f32 %v369, %v370
  %v372 = vsel %vm289, %v342, 0.0
  %v373 = vadd.f32 %v371, %v372
  %v374 = vrot.slane %v373, 4
  %v375 = vadd.f32 %v373, %v374
  %v376 = vrot.slane %v375, 2
  %v377 = vadd.f32 %v375, %v376
  %v378 = vrot.slane %v377, 1
  %v379 = vadd.f32 %v377, %v378
  %v380 = vlaneseq
  %v381 = vshrl.u32 %v380, 7
  %vm382 = vcmp.eq.s32.totalorder %v381, 0
  %vm383 = vcmp.eq.s32.totalorder %v381, 1
  %v384 = vsel %vm383, %v379, 0.0
  %v385 = vsel %vm382, %v326, %v384
  %386 = vst.msk [vmem:[%s3] sm:$0xff] %vm289, %v385
  // Predicated region
  $region10: #{resnet_generator_forward.45} parent=0 // pred_check
    _
  $region11: #{resnet_generator_forward.45} parent=0 // pred_check_branch
    %388 = sbr.rel (0) target = $region13
  $region12: #{resnet_generator_forward.45} parent=0 // pred_region
    _
  $region13: #{resnet_generator_forward.45} parent=0 // pred_fallthru
    _
  // Predicated region
  $region14: #{resnet_generator_forward.45} parent=0 // pred_check
    _
  $region15: #{resnet_generator_forward.45} parent=0 // pred_check_branch
    %390 = sbr.rel (0) target = $region17
  $region16: #{resnet_generator_forward.45} parent=0 // pred_region
    _
  $region17: #{resnet_generator_forward.45} parent=0 // pred_fallthru
    _
  // Predicated region
  $region18: #{resnet_generator_forward.45} parent=0 // pred_check
    _
  $region19: #{resnet_generator_forward.45} parent=0 // pred_check_branch
    %392 = sbr.rel (0) target = $region21
  $region20: #{resnet_generator_forward.45} parent=0 // pred_region
    _
  $region21: #{resnet_generator_forward.45} parent=0 // pred_fallthru
    _
  // Predicated region
  $region22: #{resnet_generator_forward.45} parent=0 // pred_check
    _
  $region23: #{resnet_generator_forward.45} parent=0 // pred_check_branch
    %394 = sbr.rel (0) target = $region25
  $region24: #{resnet_generator_forward.45} parent=0 // pred_region
    _
  $region25: #{resnet_generator_forward.45} parent=0 // pred_fallthru
    _

// kernel: resnet_generator_forward.47
$region0: #{resnet_generator_forward.47}
  #allocation0 [shape = 'u32[]', space=smem, size = 0x4, offset = 0x4, fixed_abs, tag = 'smem constant byte address 0x4 - core index']
  #allocation1 [shape = 'u32[144,128]{1,0:T(1,128)}', space=vmem, size = 0x12000, scoped, tag = 'internal scratch']
  %s0 = inlined_call_operand.vmem [shape: bf16[128,64], index: 0, kind: input, shape index: {}]
  %s1 = inlined_call_operand.vmem [shape: bf16[64,8], index: 1, kind: input, shape index: {}]
  %s2 = inlined_call_operand.vmem [shape: bf16[128,8], index: 2, kind: output, shape index: {0}]
  %s3 = inlined_call_operand.vmem [shape: f32[1,8,8], index: 3, kind: output, shape index: {1}]
  %4 = xla_tuple %s2, %s3
  %s5 = sld [smem:[#allocation0]]
  $region26: #{resnet_generator_forward.47} parent=0
    _
  %s7 = ssub.s32 1, %s5
  %s8 = scalar_select 0, %s7, %s5
  // Predicated region
  $region2: #{resnet_generator_forward.47} parent=0 // pred_check
    _
  $region3: #{resnet_generator_forward.47} parent=0 // pred_check_branch
    %10 = sbr.rel (0) target = $region5
  $region4: #{resnet_generator_forward.47} parent=0 // pred_region
    _
  $region5: #{resnet_generator_forward.47} parent=0 // pred_fallthru
    _
  // Predicated region
  $region6: #{resnet_generator_forward.47} parent=0 // pred_check
    _
  $region7: #{resnet_generator_forward.47} parent=0 // pred_check_branch
    %12 = sbr.rel (0) target = $region9
  $region8: #{resnet_generator_forward.47} parent=0 // pred_region
    _
  $region9: #{resnet_generator_forward.47} parent=0 // pred_fallthru
    _
  %v14 = vld [vmem:[%s0] sm:$0xf]
  %v15 = vld [vmem:[%s0 + $0x4] sm:$0xf]
  %v16 = vld [vmem:[%s0 + $0x8] sm:$0xf]
  %v17 = vld [vmem:[%s0 + $0xc] sm:$0xf]
  %v18 = vld [vmem:[%s0 + $0x10] sm:$0xf]
  %v19 = vld [vmem:[%s0 + $0x14] sm:$0xf]
  %v20 = vld [vmem:[%s0 + $0x18] sm:$0xf]
  %v21 = vld [vmem:[%s0 + $0x1c] sm:$0xf]
  %v22 = vld [vmem:[%s0 + $0x20] sm:$0xf]
  %v23 = vld [vmem:[%s0 + $0x24] sm:$0xf]
  %v24 = vld [vmem:[%s0 + $0x28] sm:$0xf]
  %v25 = vld [vmem:[%s0 + $0x2c] sm:$0xf]
  %v26 = vld [vmem:[%s0 + $0x30] sm:$0xf]
  %v27 = vld [vmem:[%s0 + $0x34] sm:$0xf]
  %v28 = vld [vmem:[%s0 + $0x38] sm:$0xf]
  %v29 = vld [vmem:[%s0 + $0x3c] sm:$0xf]
  %v30 = vld [vmem:[%s1] sm:$0xf]
  %v31 = vld [vmem:[%s1 + $0x4] sm:$0xf]
  %v32 = vld [vmem:[%s1 + $0x8] sm:$0xf]
  %v33 = vld [vmem:[%s1 + $0xc] sm:$0xf]
  %v34 = vld [vmem:[%s1 + $0x10] sm:$0xf]
  %v35 = vld [vmem:[%s1 + $0x14] sm:$0xf]
  %v36 = vld [vmem:[%s1 + $0x18] sm:$0xf]
  %v37 = vld [vmem:[%s1 + $0x1c] sm:$0xf]
  %v54 = vunpack.c.l.b16 %v14
  %v55 = vunpack.c.l.b16 %v15
  %v56 = vunpack.c.l.b16 %v16
  %v57 = vunpack.c.l.b16 %v17
  %v58 = vunpack.c.l.b16 %v18
  %v59 = vunpack.c.l.b16 %v19
  %v60 = vunpack.c.l.b16 %v20
  %v61 = vunpack.c.l.b16 %v21
  %v62 = vunpack.c.l.b16 %v22
  %v63 = vunpack.c.l.b16 %v23
  %v64 = vunpack.c.l.b16 %v24
  %v65 = vunpack.c.l.b16 %v25
  %v66 = vunpack.c.l.b16 %v26
  %v67 = vunpack.c.l.b16 %v27
  %v68 = vunpack.c.l.b16 %v28
  %v69 = vunpack.c.l.b16 %v29
  %v70 = vpack.c.b16 %v55, %v54
  %v71 = vpack.c.b16 %v57, %v56
  %v72 = vpack.c.b16 %v59, %v58
  %v73 = vpack.c.b16 %v61, %v60
  %v74 = vpack.c.b16 %v63, %v62
  %v75 = vpack.c.b16 %v65, %v64
  %v76 = vpack.c.b16 %v67, %v66
  %v77 = vpack.c.b16 %v69, %v68
  %v86 = vunpack.c.l.b16 %v30
  %v87 = vunpack.c.l.b16 %v31
  %v88 = vunpack.c.l.b16 %v32
  %v89 = vunpack.c.l.b16 %v33
  %v90 = vunpack.c.l.b16 %v34
  %v91 = vunpack.c.l.b16 %v35
  %v92 = vunpack.c.l.b16 %v36
  %v93 = vunpack.c.l.b16 %v37
  %v94 = vpack.c.b16 %v87, %v86
  %v95 = vpack.c.b16 %v89, %v88
  %v96 = vpack.c.b16 %v91, %v90
  %v97 = vpack.c.b16 %v93, %v92
  %vm102 = vcmask 523264
  %v104 = vsel %vm102, %v70, 0
  %v107 = vsel %vm102, %v71, 0
  %v110 = vsel %vm102, %v72, 0
  %v113 = vsel %vm102, %v73, 0
  %v116 = vsel %vm102, %v74, 0
  %v119 = vsel %vm102, %v75, 0
  %v122 = vsel %vm102, %v76, 0
  %v125 = vsel %vm102, %v77, 0
  %127 = vmatprep.subr.bf16.mxu0 0
  %128 = vmatpush1.bf16.msra.mxu0 %v94
  %129 = vmatprep.subr.bf16.mxu0 0
  %130 = vmatpush1.bf16.msra.mxu0 %v95
  %131 = vmatprep.subr.bf16.mxu0 0
  %132 = vmatpush1.bf16.msra.mxu0 %v96
  %133 = vmatprep.subr.bf16.mxu0 0
  %134 = vmatpush1.bf16.msra.mxu0 %v97
  %135 = vmatprep.subr.bf16.mxu0 0
  %136 = vmatpush1.bf16.msra.mxu0 0
  %137 = vmatprep.subr.bf16.mxu0 0
  %138 = vmatpush1.bf16.msra.mxu0 0
  %139 = vmatprep.subr.bf16.mxu0 0
  %140 = vmatpush1.bf16.msra.mxu0 0
  %141 = vmatprep.subr.bf16.mxu0 0
  %142 = vmatpush1.bf16.msra.mxu0 0
  %143 = vmatprep.subr.bf16.mxu0 0
  %144 = vmatpush1.bf16.msra.mxu0 0
  %145 = vmatprep.subr.bf16.mxu0 0
  %146 = vmatpush1.bf16.msra.mxu0 0
  %147 = vmatprep.subr.bf16.mxu0 0
  %148 = vmatpush1.bf16.msra.mxu0 0
  %149 = vmatprep.subr.bf16.mxu0 0
  %150 = vmatpush1.bf16.msra.mxu0 0
  %151 = vmatprep.subr.bf16.mxu0 0
  %152 = vmatpush1.bf16.msra.mxu0 0
  %153 = vmatprep.subr.bf16.mxu0 0
  %154 = vmatpush1.bf16.msra.mxu0 0
  %155 = vmatprep.subr.bf16.mxu0 0
  %156 = vmatpush1.bf16.msra.mxu0 0
  %157 = vmatprep.subr.bf16.mxu0 0
  %158 = vmatpush1.bf16.msra.mxu0 0
  %159 = vmatprep.mubr.bf16.mxu0 0
  %160 = vmatmul.mubr.bf16.gmra.mrb[0].mxu0 %v104
  %v161 = vpop.f32.mrb[0].mxu0
  %v162 = vadd.f32 0.0, %v161
  %v163 = vpop.f32.mrb[0].mxu0
  %v164 = vpop.f32.mrb[0].mxu0
  %v165 = vadd.f32 0.0, %v164
  %v166 = vpop.f32.mrb[0].mxu0
  %167 = vmatprep.mubr.bf16.mxu0 0
  %168 = vmatmul.mubr.bf16.gmra.mrb[0].mxu0 %v107
  %v169 = vpop.f32.mrb[0].mxu0
  %v170 = vadd.f32 0.0, %v169
  %v171 = vpop.f32.mrb[0].mxu0
  %v172 = vpop.f32.mrb[0].mxu0
  %v173 = vadd.f32 0.0, %v172
  %v174 = vpop.f32.mrb[0].mxu0
  %175 = vmatprep.mubr.bf16.mxu0 0
  %176 = vmatmul.mubr.bf16.gmra.mrb[0].mxu0 %v110
  %v177 = vpop.f32.mrb[0].mxu0
  %v178 = vadd.f32 0.0, %v177
  %v179 = vpop.f32.mrb[0].mxu0
  %v180 = vpop.f32.mrb[0].mxu0
  %v181 = vadd.f32 0.0, %v180
  %v182 = vpop.f32.mrb[0].mxu0
  %183 = vmatprep.mubr.bf16.mxu0 0
  %184 = vmatmul.mubr.bf16.gmra.mrb[0].mxu0 %v113
  %v185 = vpop.f32.mrb[0].mxu0
  %v186 = vadd.f32 0.0, %v185
  %v187 = vpop.f32.mrb[0].mxu0
  %v188 = vpop.f32.mrb[0].mxu0
  %v189 = vadd.f32 0.0, %v188
  %v190 = vpop.f32.mrb[0].mxu0
  %191 = vmatprep.mubr.bf16.mxu0 0
  %192 = vmatmul.mubr.bf16.gmra.mrb[0].mxu0 %v116
  %v193 = vpop.f32.mrb[0].mxu0
  %v194 = vadd.f32 0.0, %v193
  %v195 = vpop.f32.mrb[0].mxu0
  %v196 = vpop.f32.mrb[0].mxu0
  %v197 = vadd.f32 0.0, %v196
  %v198 = vpop.f32.mrb[0].mxu0
  %199 = vmatprep.mubr.bf16.mxu0 0
  %200 = vmatmul.mubr.bf16.gmra.mrb[0].mxu0 %v119
  %v201 = vpop.f32.mrb[0].mxu0
  %v202 = vadd.f32 0.0, %v201
  %v203 = vpop.f32.mrb[0].mxu0
  %v204 = vpop.f32.mrb[0].mxu0
  %v205 = vadd.f32 0.0, %v204
  %v206 = vpop.f32.mrb[0].mxu0
  %207 = vmatprep.mubr.bf16.mxu0 0
  %208 = vmatmul.mubr.bf16.gmra.mrb[0].mxu0 %v122
  %v209 = vpop.f32.mrb[0].mxu0
  %v210 = vadd.f32 0.0, %v209
  %v211 = vpop.f32.mrb[0].mxu0
  %v212 = vpop.f32.mrb[0].mxu0
  %v213 = vadd.f32 0.0, %v212
  %v214 = vpop.f32.mrb[0].mxu0
  %215 = vmatprep.mubr.bf16.mxu0 0
  %216 = vmatmul.mubr.bf16.gmra.mrb[0].mxu0 %v125
  %v217 = vpop.f32.mrb[0].mxu0
  %v218 = vadd.f32 0.0, %v217
  %v219 = vpop.f32.mrb[0].mxu0
  %v220 = vpop.f32.mrb[0].mxu0
  %v221 = vadd.f32 0.0, %v220
  %v222 = vpop.f32.mrb[0].mxu0
  %223 = vdwg.mxu0
  %v224 = vpack.c.bf16 %v165, %v162
  %v225 = vpack.c.bf16 %v173, %v170
  %v226 = vpack.c.bf16 %v181, %v178
  %v227 = vpack.c.bf16 %v189, %v186
  %v228 = vpack.c.bf16 %v197, %v194
  %v229 = vpack.c.bf16 %v205, %v202
  %v230 = vpack.c.bf16 %v213, %v210
  %v231 = vpack.c.bf16 %v221, %v218
  %v240 = vunpack.c.l.b16 %v224
  %v241 = vunpack.c.h.b16 %v224
  %v242 = vunpack.c.l.b16 %v225
  %v243 = vunpack.c.h.b16 %v225
  %v244 = vunpack.c.l.b16 %v226
  %v245 = vunpack.c.h.b16 %v226
  %v246 = vunpack.c.l.b16 %v227
  %v247 = vunpack.c.h.b16 %v227
  %v248 = vunpack.c.l.b16 %v228
  %v249 = vunpack.c.h.b16 %v228
  %v250 = vunpack.c.l.b16 %v229
  %v251 = vunpack.c.h.b16 %v229
  %v252 = vunpack.c.l.b16 %v230
  %v253 = vunpack.c.h.b16 %v230
  %v254 = vunpack.c.l.b16 %v231
  %v255 = vunpack.c.h.b16 %v231
  %v256 = vpack.c.b16 %v240, %v240
  %v257 = vpack.c.b16 %v241, %v241
  %v258 = vpack.c.b16 %v242, %v242
  %v259 = vpack.c.b16 %v243, %v243
  %v260 = vpack.c.b16 %v244, %v244
  %v261 = vpack.c.b16 %v245, %v245
  %v262 = vpack.c.b16 %v246, %v246
  %v263 = vpack.c.b16 %v247, %v247
  %v264 = vpack.c.b16 %v248, %v248
  %v265 = vpack.c.b16 %v249, %v249
  %v266 = vpack.c.b16 %v250, %v250
  %v267 = vpack.c.b16 %v251, %v251
  %v268 = vpack.c.b16 %v252, %v252
  %v269 = vpack.c.b16 %v253, %v253
  %v270 = vpack.c.b16 %v254, %v254
  %v271 = vpack.c.b16 %v255, %v255
  %vm288 = vcmask 60416
  %289 = vst.msk [vmem:[%s2] sm:$0xf] %vm288, %v256
  %290 = vst.msk [vmem:[%s2 + $0x4] sm:$0xf] %vm288, %v257
  %291 = vst.msk [vmem:[%s2 + $0x8] sm:$0xf] %vm288, %v258
  %292 = vst.msk [vmem:[%s2 + $0xc] sm:$0xf] %vm288, %v259
  %293 = vst.msk [vmem:[%s2 + $0x10] sm:$0xf] %vm288, %v260
  %294 = vst.msk [vmem:[%s2 + $0x14] sm:$0xf] %vm288, %v261
  %295 = vst.msk [vmem:[%s2 + $0x18] sm:$0xf] %vm288, %v262
  %296 = vst.msk [vmem:[%s2 + $0x1c] sm:$0xf] %vm288, %v263
  %297 = vst.msk [vmem:[%s2 + $0x20] sm:$0xf] %vm288, %v264
  %298 = vst.msk [vmem:[%s2 + $0x24] sm:$0xf] %vm288, %v265
  %299 = vst.msk [vmem:[%s2 + $0x28] sm:$0xf] %vm288, %v266
  %300 = vst.msk [vmem:[%s2 + $0x2c] sm:$0xf] %vm288, %v267
  %301 = vst.msk [vmem:[%s2 + $0x30] sm:$0xf] %vm288, %v268
  %302 = vst.msk [vmem:[%s2 + $0x34] sm:$0xf] %vm288, %v269
  %303 = vst.msk [vmem:[%s2 + $0x38] sm:$0xf] %vm288, %v270
  %304 = vst.msk [vmem:[%s2 + $0x3c] sm:$0xf] %vm288, %v271
  %vm305 = vcmask 64512
  %v306 = vsel %vm305, %v162, 0.0
  %v307 = vsel %vm305, %v165, 0.0
  %v308 = vadd.f32 %v306, %v307
  %v309 = vsel %vm305, %v170, 0.0
  %v310 = vadd.f32 %v308, %v309
  %v311 = vsel %vm305, %v173, 0.0
  %v312 = vadd.f32 %v310, %v311
  %v313 = vsel %vm305, %v178, 0.0
  %v314 = vadd.f32 %v312, %v313
  %v315 = vsel %vm305, %v181, 0.0
  %v316 = vadd.f32 %v314, %v315
  %v317 = vsel %vm305, %v186, 0.0
  %v318 = vadd.f32 %v316, %v317
  %v319 = vsel %vm305, %v189, 0.0
  %v320 = vadd.f32 %v318, %v319
  %v321 = vsel %vm305, %v194, 0.0
  %v322 = vadd.f32 %v320, %v321
  %v323 = vsel %vm305, %v197, 0.0
  %v324 = vadd.f32 %v322, %v323
  %v325 = vsel %vm305, %v202, 0.0
  %v326 = vadd.f32 %v324, %v325
  %v327 = vsel %vm305, %v205, 0.0
  %v328 = vadd.f32 %v326, %v327
  %v329 = vsel %vm305, %v210, 0.0
  %v330 = vadd.f32 %v328, %v329
  %v331 = vsel %vm305, %v213, 0.0
  %v332 = vadd.f32 %v330, %v331
  %v333 = vsel %vm305, %v218, 0.0
  %v334 = vadd.f32 %v332, %v333
  %v335 = vsel %vm305, %v221, 0.0
  %v336 = vadd.f32 %v334, %v335
  %v337 = vrot.slane %v336, 4
  %v338 = vadd.f32 %v336, %v337
  %v339 = vrot.slane %v338, 2
  %v340 = vadd.f32 %v338, %v339
  %v341 = vrot.slane %v340, 1
  %v342 = vadd.f32 %v340, %v341
  %v343 = vmul.f32 %v162, %v162
  %v344 = vmul.f32 %v165, %v165
  %v345 = vmul.f32 %v170, %v170
  %v346 = vmul.f32 %v173, %v173
  %v347 = vmul.f32 %v178, %v178
  %v348 = vmul.f32 %v181, %v181
  %v349 = vmul.f32 %v186, %v186
  %v350 = vmul.f32 %v189, %v189
  %v351 = vmul.f32 %v194, %v194
  %v352 = vmul.f32 %v197, %v197
  %v353 = vmul.f32 %v202, %v202
  %v354 = vmul.f32 %v205, %v205
  %v355 = vmul.f32 %v210, %v210
  %v356 = vmul.f32 %v213, %v213
  %v357 = vmul.f32 %v218, %v218
  %v358 = vmul.f32 %v221, %v221
  %v359 = vsel %vm305, %v343, 0.0
  %v360 = vsel %vm305, %v344, 0.0
  %v361 = vadd.f32 %v359, %v360
  %v362 = vsel %vm305, %v345, 0.0
  %v363 = vadd.f32 %v361, %v362
  %v364 = vsel %vm305, %v346, 0.0
  %v365 = vadd.f32 %v363, %v364
  %v366 = vsel %vm305, %v347, 0.0
  %v367 = vadd.f32 %v365, %v366
  %v368 = vsel %vm305, %v348, 0.0
  %v369 = vadd.f32 %v367, %v368
  %v370 = vsel %vm305, %v349, 0.0
  %v371 = vadd.f32 %v369, %v370
  %v372 = vsel %vm305, %v350, 0.0
  %v373 = vadd.f32 %v371, %v372
  %v374 = vsel %vm305, %v351, 0.0
  %v375 = vadd.f32 %v373, %v374
  %v376 = vsel %vm305, %v352, 0.0
  %v377 = vadd.f32 %v375, %v376
  %v378 = vsel %vm305, %v353, 0.0
  %v379 = vadd.f32 %v377, %v378
  %v380 = vsel %vm305, %v354, 0.0
  %v381 = vadd.f32 %v379, %v380
  %v382 = vsel %vm305, %v355, 0.0
  %v383 = vadd.f32 %v381, %v382
  %v384 = vsel %vm305, %v356, 0.0
  %v385 = vadd.f32 %v383, %v384
  %v386 = vsel %vm305, %v357, 0.0
  %v387 = vadd.f32 %v385, %v386
  %v388 = vsel %vm305, %v358, 0.0
  %v389 = vadd.f32 %v387, %v388
  %v390 = vrot.slane %v389, 4
  %v391 = vadd.f32 %v389, %v390
  %v392 = vrot.slane %v391, 2
  %v393 = vadd.f32 %v391, %v392
  %v394 = vrot.slane %v393, 1
  %v395 = vadd.f32 %v393, %v394
  %v396 = vlaneseq
  %v397 = vshrl.u32 %v396, 7
  %vm398 = vcmp.eq.s32.totalorder %v397, 0
  %vm399 = vcmp.eq.s32.totalorder %v397, 1
  %v400 = vsel %vm399, %v395, 0.0
  %v401 = vsel %vm398, %v342, %v400
  %402 = vst.msk [vmem:[%s3] sm:$0xff] %vm305, %v401
  // Predicated region
  $region10: #{resnet_generator_forward.47} parent=0 // pred_check
    _
  $region11: #{resnet_generator_forward.47} parent=0 // pred_check_branch
    %404 = sbr.rel (0) target = $region13
  $region12: #{resnet_generator_forward.47} parent=0 // pred_region
    _
  $region13: #{resnet_generator_forward.47} parent=0 // pred_fallthru
    _
  // Predicated region
  $region14: #{resnet_generator_forward.47} parent=0 // pred_check
    _
  $region15: #{resnet_generator_forward.47} parent=0 // pred_check_branch
    %406 = sbr.rel (0) target = $region17
  $region16: #{resnet_generator_forward.47} parent=0 // pred_region
    _
  $region17: #{resnet_generator_forward.47} parent=0 // pred_fallthru
    _
  // Predicated region
  $region18: #{resnet_generator_forward.47} parent=0 // pred_check
    _
  $region19: #{resnet_generator_forward.47} parent=0 // pred_check_branch
    %408 = sbr.rel (0) target = $region21
  $region20: #{resnet_generator_forward.47} parent=0 // pred_region
    _
  $region21: #{resnet_generator_forward.47} parent=0 // pred_fallthru
    _
  // Predicated region
  $region22: #{resnet_generator_forward.47} parent=0 // pred_check
    _
  $region23: #{resnet_generator_forward.47} parent=0 // pred_check_branch
    %410 = sbr.rel (0) target = $region25
  $region24: #{resnet_generator_forward.47} parent=0 // pred_region
    _
  $region25: #{resnet_generator_forward.47} parent=0 // pred_fallthru
    _

// kernel: resnet_generator_forward.44
$region0: #{resnet_generator_forward.44}
  #allocation0 [shape = 'u32[]', space=smem, size = 0x4, offset = 0x4, fixed_abs, tag = 'smem constant byte address 0x4 - core index']
  #allocation1 [shape = 'u32[144,128]{1,0:T(1,128)}', space=vmem, size = 0x12000, scoped, tag = 'internal scratch']
  %s0 = inlined_call_operand.vmem [shape: bf16[128,16], index: 0, kind: input, shape index: {}]
  %s1 = inlined_call_operand.vmem [shape: bf16[16,8], index: 1, kind: input, shape index: {}]
  %s2 = inlined_call_operand.vmem [shape: bf16[128,8], index: 2, kind: output, shape index: {0}]
  %s3 = inlined_call_operand.vmem [shape: f32[1,8,8], index: 3, kind: output, shape index: {1}]
  %4 = xla_tuple %s2, %s3
  %s5 = sld [smem:[#allocation0]]
  $region26: #{resnet_generator_forward.44} parent=0
    _
  %s7 = ssub.s32 1, %s5
  %s8 = scalar_select 0, %s7, %s5
  // Predicated region
  $region2: #{resnet_generator_forward.44} parent=0 // pred_check
    _
  $region3: #{resnet_generator_forward.44} parent=0 // pred_check_branch
    %10 = sbr.rel (0) target = $region5
  $region4: #{resnet_generator_forward.44} parent=0 // pred_region
    _
  $region5: #{resnet_generator_forward.44} parent=0 // pred_fallthru
    _
  // Predicated region
  $region6: #{resnet_generator_forward.44} parent=0 // pred_check
    _
  $region7: #{resnet_generator_forward.44} parent=0 // pred_check_branch
    %12 = sbr.rel (0) target = $region9
  $region8: #{resnet_generator_forward.44} parent=0 // pred_region
    _
  $region9: #{resnet_generator_forward.44} parent=0 // pred_fallthru
    _
  %v14 = vld [vmem:[%s0] sm:$0xf]
  %v15 = vld [vmem:[%s0 + $0x4] sm:$0xf]
  %v16 = vld [vmem:[%s0 + $0x8] sm:$0xf]
  %v17 = vld [vmem:[%s0 + $0xc] sm:$0xf]
  %v18 = vld [vmem:[%s0 + $0x10] sm:$0xf]
  %v19 = vld [vmem:[%s0 + $0x14] sm:$0xf]
  %v20 = vld [vmem:[%s0 + $0x18] sm:$0xf]
  %v21 = vld [vmem:[%s0 + $0x1c] sm:$0xf]
  %v22 = vld [vmem:[%s0 + $0x20] sm:$0xf]
  %v23 = vld [vmem:[%s0 + $0x24] sm:$0xf]
  %v24 = vld [vmem:[%s0 + $0x28] sm:$0xf]
  %v25 = vld [vmem:[%s0 + $0x2c] sm:$0xf]
  %v26 = vld [vmem:[%s0 + $0x30] sm:$0xf]
  %v27 = vld [vmem:[%s0 + $0x34] sm:$0xf]
  %v28 = vld [vmem:[%s0 + $0x38] sm:$0xf]
  %v29 = vld [vmem:[%s0 + $0x3c] sm:$0xf]
  %v30 = vld [vmem:[%s1] sm:$0xf]
  %v31 = vld [vmem:[%s1 + $0x4] sm:$0xf]
  %v48 = vunpack.c.l.b16 %v14
  %v49 = vunpack.c.l.b16 %v15
  %v50 = vunpack.c.l.b16 %v16
  %v51 = vunpack.c.l.b16 %v17
  %v52 = vunpack.c.l.b16 %v18
  %v53 = vunpack.c.l.b16 %v19
  %v54 = vunpack.c.l.b16 %v20
  %v55 = vunpack.c.l.b16 %v21
  %v56 = vunpack.c.l.b16 %v22
  %v57 = vunpack.c.l.b16 %v23
  %v58 = vunpack.c.l.b16 %v24
  %v59 = vunpack.c.l.b16 %v25
  %v60 = vunpack.c.l.b16 %v26
  %v61 = vunpack.c.l.b16 %v27
  %v62 = vunpack.c.l.b16 %v28
  %v63 = vunpack.c.l.b16 %v29
  %v64 = vpack.c.b16 %v49, %v48
  %v65 = vpack.c.b16 %v51, %v50
  %v66 = vpack.c.b16 %v53, %v52
  %v67 = vpack.c.b16 %v55, %v54
  %v68 = vpack.c.b16 %v57, %v56
  %v69 = vpack.c.b16 %v59, %v58
  %v70 = vpack.c.b16 %v61, %v60
  %v71 = vpack.c.b16 %v63, %v62
  %v74 = vunpack.c.l.b16 %v30
  %v75 = vunpack.c.l.b16 %v31
  %v76 = vpack.c.b16 %v75, %v74
  %vm78 = vcmask 130048
  %v80 = vsel %vm78, %v64, 0
  %v83 = vsel %vm78, %v65, 0
  %v86 = vsel %vm78, %v66, 0
  %v89 = vsel %vm78, %v67, 0
  %v92 = vsel %vm78, %v68, 0
  %v95 = vsel %vm78, %v69, 0
  %v98 = vsel %vm78, %v70, 0
  %v101 = vsel %vm78, %v71, 0
  %103 = vmatprep.subr.bf16.mxu0 0
  %104 = vmatpush1.bf16.msra.mxu0 %v76
  %105 = vmatprep.subr.bf16.mxu0 0
  %106 = vmatpush1.bf16.msra.mxu0 0
  %107 = vmatprep.subr.bf16.mxu0 0
  %108 = vmatpush1.bf16.msra.mxu0 0
  %109 = vmatprep.subr.bf16.mxu0 0
  %110 = vmatpush1.bf16.msra.mxu0 0
  %111 = vmatprep.subr.bf16.mxu0 0
  %112 = vmatpush1.bf16.msra.mxu0 0
  %113 = vmatprep.subr.bf16.mxu0 0
  %114 = vmatpush1.bf16.msra.mxu0 0
  %115 = vmatprep.subr.bf16.mxu0 0
  %116 = vmatpush1.bf16.msra.mxu0 0
  %117 = vmatprep.subr.bf16.mxu0 0
  %118 = vmatpush1.bf16.msra.mxu0 0
  %119 = vmatprep.subr.bf16.mxu0 0
  %120 = vmatpush1.bf16.msra.mxu0 0
  %121 = vmatprep.subr.bf16.mxu0 0
  %122 = vmatpush1.bf16.msra.mxu0 0
  %123 = vmatprep.subr.bf16.mxu0 0
  %124 = vmatpush1.bf16.msra.mxu0 0
  %125 = vmatprep.subr.bf16.mxu0 0
  %126 = vmatpush1.bf16.msra.mxu0 0
  %127 = vmatprep.subr.bf16.mxu0 0
  %128 = vmatpush1.bf16.msra.mxu0 0
  %129 = vmatprep.subr.bf16.mxu0 0
  %130 = vmatpush1.bf16.msra.mxu0 0
  %131 = vmatprep.subr.bf16.mxu0 0
  %132 = vmatpush1.bf16.msra.mxu0 0
  %133 = vmatprep.subr.bf16.mxu0 0
  %134 = vmatpush1.bf16.msra.mxu0 0
  %135 = vmatprep.mubr.bf16.mxu0 0
  %136 = vmatmul.mubr.bf16.gmra.mrb[0].mxu0 %v80
  %v137 = vpop.f32.mrb[0].mxu0
  %v138 = vadd.f32 0.0, %v137
  %v139 = vpop.f32.mrb[0].mxu0
  %v140 = vpop.f32.mrb[0].mxu0
  %v141 = vadd.f32 0.0, %v140
  %v142 = vpop.f32.mrb[0].mxu0
  %143 = vmatprep.mubr.bf16.mxu0 0
  %144 = vmatmul.mubr.bf16.gmra.mrb[0].mxu0 %v83
  %v145 = vpop.f32.mrb[0].mxu0
  %v146 = vadd.f32 0.0, %v145
  %v147 = vpop.f32.mrb[0].mxu0
  %v148 = vpop.f32.mrb[0].mxu0
  %v149 = vadd.f32 0.0, %v148
  %v150 = vpop.f32.mrb[0].mxu0
  %151 = vmatprep.mubr.bf16.mxu0 0
  %152 = vmatmul.mubr.bf16.gmra.mrb[0].mxu0 %v86
  %v153 = vpop.f32.mrb[0].mxu0
  %v154 = vadd.f32 0.0, %v153
  %v155 = vpop.f32.mrb[0].mxu0
  %v156 = vpop.f32.mrb[0].mxu0
  %v157 = vadd.f32 0.0, %v156
  %v158 = vpop.f32.mrb[0].mxu0
  %159 = vmatprep.mubr.bf16.mxu0 0
  %160 = vmatmul.mubr.bf16.gmra.mrb[0].mxu0 %v89
  %v161 = vpop.f32.mrb[0].mxu0
  %v162 = vadd.f32 0.0, %v161
  %v163 = vpop.f32.mrb[0].mxu0
  %v164 = vpop.f32.mrb[0].mxu0
  %v165 = vadd.f32 0.0, %v164
  %v166 = vpop.f32.mrb[0].mxu0
  %167 = vmatprep.mubr.bf16.mxu0 0
  %168 = vmatmul.mubr.bf16.gmra.mrb[0].mxu0 %v92
  %v169 = vpop.f32.mrb[0].mxu0
  %v170 = vadd.f32 0.0, %v169
  %v171 = vpop.f32.mrb[0].mxu0
  %v172 = vpop.f32.mrb[0].mxu0
  %v173 = vadd.f32 0.0, %v172
  %v174 = vpop.f32.mrb[0].mxu0
  %175 = vmatprep.mubr.bf16.mxu0 0
  %176 = vmatmul.mubr.bf16.gmra.mrb[0].mxu0 %v95
  %v177 = vpop.f32.mrb[0].mxu0
  %v178 = vadd.f32 0.0, %v177
  %v179 = vpop.f32.mrb[0].mxu0
  %v180 = vpop.f32.mrb[0].mxu0
  %v181 = vadd.f32 0.0, %v180
  %v182 = vpop.f32.mrb[0].mxu0
  %183 = vmatprep.mubr.bf16.mxu0 0
  %184 = vmatmul.mubr.bf16.gmra.mrb[0].mxu0 %v98
  %v185 = vpop.f32.mrb[0].mxu0
  %v186 = vadd.f32 0.0, %v185
  %v187 = vpop.f32.mrb[0].mxu0
  %v188 = vpop.f32.mrb[0].mxu0
  %v189 = vadd.f32 0.0, %v188
  %v190 = vpop.f32.mrb[0].mxu0
  %191 = vmatprep.mubr.bf16.mxu0 0
  %192 = vmatmul.mubr.bf16.gmra.mrb[0].mxu0 %v101
  %v193 = vpop.f32.mrb[0].mxu0
  %v194 = vadd.f32 0.0, %v193
  %v195 = vpop.f32.mrb[0].mxu0
  %v196 = vpop.f32.mrb[0].mxu0
  %v197 = vadd.f32 0.0, %v196
  %v198 = vpop.f32.mrb[0].mxu0
  %199 = vdwg.mxu0
  %v200 = vpack.c.bf16 %v141, %v138
  %v201 = vpack.c.bf16 %v149, %v146
  %v202 = vpack.c.bf16 %v157, %v154
  %v203 = vpack.c.bf16 %v165, %v162
  %v204 = vpack.c.bf16 %v173, %v170
  %v205 = vpack.c.bf16 %v181, %v178
  %v206 = vpack.c.bf16 %v189, %v186
  %v207 = vpack.c.bf16 %v197, %v194
  %v216 = vunpack.c.l.b16 %v200
  %v217 = vunpack.c.h.b16 %v200
  %v218 = vunpack.c.l.b16 %v201
  %v219 = vunpack.c.h.b16 %v201
  %v220 = vunpack.c.l.b16 %v202
  %v221 = vunpack.c.h.b16 %v202
  %v222 = vunpack.c.l.b16 %v203
  %v223 = vunpack.c.h.b16 %v203
  %v224 = vunpack.c.l.b16 %v204
  %v225 = vunpack.c.h.b16 %v204
  %v226 = vunpack.c.l.b16 %v205
  %v227 = vunpack.c.h.b16 %v205
  %v228 = vunpack.c.l.b16 %v206
  %v229 = vunpack.c.h.b16 %v206
  %v230 = vunpack.c.l.b16 %v207
  %v231 = vunpack.c.h.b16 %v207
  %v232 = vpack.c.b16 %v216, %v216
  %v233 = vpack.c.b16 %v217, %v217
  %v234 = vpack.c.b16 %v218, %v218
  %v235 = vpack.c.b16 %v219, %v219
  %v236 = vpack.c.b16 %v220, %v220
  %v237 = vpack.c.b16 %v221, %v221
  %v238 = vpack.c.b16 %v222, %v222
  %v239 = vpack.c.b16 %v223, %v223
  %v240 = vpack.c.b16 %v224, %v224
  %v241 = vpack.c.b16 %v225, %v225
  %v242 = vpack.c.b16 %v226, %v226
  %v243 = vpack.c.b16 %v227, %v227
  %v244 = vpack.c.b16 %v228, %v228
  %v245 = vpack.c.b16 %v229, %v229
  %v246 = vpack.c.b16 %v230, %v230
  %v247 = vpack.c.b16 %v231, %v231
  %vm264 = vcmask 60416
  %265 = vst.msk [vmem:[%s2] sm:$0xf] %vm264, %v232
  %266 = vst.msk [vmem:[%s2 + $0x4] sm:$0xf] %vm264, %v233
  %267 = vst.msk [vmem:[%s2 + $0x8] sm:$0xf] %vm264, %v234
  %268 = vst.msk [vmem:[%s2 + $0xc] sm:$0xf] %vm264, %v235
  %269 = vst.msk [vmem:[%s2 + $0x10] sm:$0xf] %vm264, %v236
  %270 = vst.msk [vmem:[%s2 + $0x14] sm:$0xf] %vm264, %v237
  %271 = vst.msk [vmem:[%s2 + $0x18] sm:$0xf] %vm264, %v238
  %272 = vst.msk [vmem:[%s2 + $0x1c] sm:$0xf] %vm264, %v239
  %273 = vst.msk [vmem:[%s2 + $0x20] sm:$0xf] %vm264, %v240
  %274 = vst.msk [vmem:[%s2 + $0x24] sm:$0xf] %vm264, %v241
  %275 = vst.msk [vmem:[%s2 + $0x28] sm:$0xf] %vm264, %v242
  %276 = vst.msk [vmem:[%s2 + $0x2c] sm:$0xf] %vm264, %v243
  %277 = vst.msk [vmem:[%s2 + $0x30] sm:$0xf] %vm264, %v244
  %278 = vst.msk [vmem:[%s2 + $0x34] sm:$0xf] %vm264, %v245
  %279 = vst.msk [vmem:[%s2 + $0x38] sm:$0xf] %vm264, %v246
  %280 = vst.msk [vmem:[%s2 + $0x3c] sm:$0xf] %vm264, %v247
  %vm281 = vcmask 64512
  %v282 = vsel %vm281, %v138, 0.0
  %v283 = vsel %vm281, %v141, 0.0
  %v284 = vadd.f32 %v282, %v283
  %v285 = vsel %vm281, %v146, 0.0
  %v286 = vadd.f32 %v284, %v285
  %v287 = vsel %vm281, %v149, 0.0
  %v288 = vadd.f32 %v286, %v287
  %v289 = vsel %vm281, %v154, 0.0
  %v290 = vadd.f32 %v288, %v289
  %v291 = vsel %vm281, %v157, 0.0
  %v292 = vadd.f32 %v290, %v291
  %v293 = vsel %vm281, %v162, 0.0
  %v294 = vadd.f32 %v292, %v293
  %v295 = vsel %vm281, %v165, 0.0
  %v296 = vadd.f32 %v294, %v295
  %v297 = vsel %vm281, %v170, 0.0
  %v298 = vadd.f32 %v296, %v297
  %v299 = vsel %vm281, %v173, 0.0
  %v300 = vadd.f32 %v298, %v299
  %v301 = vsel %vm281, %v178, 0.0
  %v302 = vadd.f32 %v300, %v301
  %v303 = vsel %vm281, %v181, 0.0
  %v304 = vadd.f32 %v302, %v303
  %v305 = vsel %vm281, %v186, 0.0
  %v306 = vadd.f32 %v304, %v305
  %v307 = vsel %vm281, %v189, 0.0
  %v308 = vadd.f32 %v306, %v307
  %v309 = vsel %vm281, %v194, 0.0
  %v310 = vadd.f32 %v308, %v309
  %v311 = vsel %vm281, %v197, 0.0
  %v312 = vadd.f32 %v310, %v311
  %v313 = vrot.slane %v312, 4
  %v314 = vadd.f32 %v312, %v313
  %v315 = vrot.slane %v314, 2
  %v316 = vadd.f32 %v314, %v315
  %v317 = vrot.slane %v316, 1
  %v318 = vadd.f32 %v316, %v317
  %v319 = vmul.f32 %v138, %v138
  %v320 = vmul.f32 %v141, %v141
  %v321 = vmul.f32 %v146, %v146
  %v322 = vmul.f32 %v149, %v149
  %v323 = vmul.f32 %v154, %v154
  %v324 = vmul.f32 %v157, %v157
  %v325 = vmul.f32 %v162, %v162
  %v326 = vmul.f32 %v165, %v165
  %v327 = vmul.f32 %v170, %v170
  %v328 = vmul.f32 %v173, %v173
  %v329 = vmul.f32 %v178, %v178
  %v330 = vmul.f32 %v181, %v181
  %v331 = vmul.f32 %v186, %v186
  %v332 = vmul.f32 %v189, %v189
  %v333 = vmul.f32 %v194, %v194
  %v334 = vmul.f32 %v197, %v197
  %v335 = vsel %vm281, %v319, 0.0
  %v336 = vsel %vm281, %v320, 0.0
  %v337 = vadd.f32 %v335, %v336
  %v338 = vsel %vm281, %v321, 0.0
  %v339 = vadd.f32 %v337, %v338
  %v340 = vsel %vm281, %v322, 0.0
  %v341 = vadd.f32 %v339, %v340
  %v342 = vsel %vm281, %v323, 0.0
  %v343 = vadd.f32 %v341, %v342
  %v344 = vsel %vm281, %v324, 0.0
  %v345 = vadd.f32 %v343, %v344
  %v346 = vsel %vm281, %v325, 0.0
  %v347 = vadd.f32 %v345, %v346
  %v348 = vsel %vm281, %v326, 0.0
  %v349 = vadd.f32 %v347, %v348
  %v350 = vsel %vm281, %v327, 0.0
  %v351 = vadd.f32 %v349, %v350
  %v352 = vsel %vm281, %v328, 0.0
  %v353 = vadd.f32 %v351, %v352
  %v354 = vsel %vm281, %v329, 0.0
  %v355 = vadd.f32 %v353, %v354
  %v356 = vsel %vm281, %v330, 0.0
  %v357 = vadd.f32 %v355, %v356
  %v358 = vsel %vm281, %v331, 0.0
  %v359 = vadd.f32 %v357, %v358
  %v360 = vsel %vm281, %v332, 0.0
  %v361 = vadd.f32 %v359, %v360
  %v362 = vsel %vm281, %v333, 0.0
  %v363 = vadd.f32 %v361, %v362
  %v364 = vsel %vm281, %v334, 0.0
  %v365 = vadd.f32 %v363, %v364
  %v366 = vrot.slane %v365, 4
  %v367 = vadd.f32 %v365, %v366
  %v368 = vrot.slane %v367, 2
  %v369 = vadd.f32 %v367, %v368
  %v370 = vrot.slane %v369, 1
  %v371 = vadd.f32 %v369, %v370
  %v372 = vlaneseq
  %v373 = vshrl.u32 %v372, 7
  %vm374 = vcmp.eq.s32.totalorder %v373, 0
  %vm375 = vcmp.eq.s32.totalorder %v373, 1
  %v376 = vsel %vm375, %v371, 0.0
  %v377 = vsel %vm374, %v318, %v376
  %378 = vst.msk [vmem:[%s3] sm:$0xff] %vm281, %v377
  // Predicated region
  $region10: #{resnet_generator_forward.44} parent=0 // pred_check
    _
  $region11: #{resnet_generator_forward.44} parent=0 // pred_check_branch
    %380 = sbr.rel (0) target = $region13
  $region12: #{resnet_generator_forward.44} parent=0 // pred_region
    _
  $region13: #{resnet_generator_forward.44} parent=0 // pred_fallthru
    _
  // Predicated region
  $region14: #{resnet_generator_forward.44} parent=0 // pred_check
    _
  $region15: #{resnet_generator_forward.44} parent=0 // pred_check_branch
    %382 = sbr.rel (0) target = $region17
  $region16: #{resnet_generator_forward.44} parent=0 // pred_region
    _
  $region17: #{resnet_generator_forward.44} parent=0 // pred_fallthru
    _
  // Predicated region
  $region18: #{resnet_generator_forward.44} parent=0 // pred_check
    _
  $region19: #{resnet_generator_forward.44} parent=0 // pred_check_branch
    %384 = sbr.rel (0) target = $region21
  $region20: #{resnet_generator_forward.44} parent=0 // pred_region
    _
  $region21: #{resnet_generator_forward.44} parent=0 // pred_fallthru
    _
  // Predicated region
  $region22: #{resnet_generator_forward.44} parent=0 // pred_check
    _
  $region23: #{resnet_generator_forward.44} parent=0 // pred_check_branch
    %386 = sbr.rel (0) target = $region25
  $region24: #{resnet_generator_forward.44} parent=0 // pred_region
    _
  $region25: #{resnet_generator_forward.44} parent=0 // pred_fallthru
    _

// kernel: resnet_generator_forward.49
$region0: #{resnet_generator_forward.49}
  #allocation0 [shape = 'u32[]', space=smem, size = 0x4, offset = 0x4, fixed_abs, tag = 'smem constant byte address 0x4 - core index']
  #allocation1 [shape = 'u32[144,128]{1,0:T(1,128)}', space=vmem, size = 0x12000, scoped, tag = 'internal scratch']
  %s0 = inlined_call_operand.vmem [shape: bf16[512,392], index: 0, kind: input, shape index: {}]
  %s1 = inlined_call_operand.vmem [shape: bf16[392,4], index: 1, kind: input, shape index: {}]
  %s2 = inlined_call_operand.vmem [shape: f32[1,4], index: 2, kind: input, shape index: {}]
  %s3 = inlined_call_operand.vmem [shape: f32[512,4], index: 3, kind: output, shape index: {}]
  %s4 = sld [smem:[#allocation0]]
  $region45: #{resnet_generator_forward.49} parent=0
    _
  %s6 = ssub.s32 1, %s4
  %s7 = scalar_select 0, %s6, %s4
  loop: start=0, step=1, limit=4
  $region2: #{resnet_generator_forward.49} parent=0 // loop_pre_header
    _
  $region3: #{resnet_generator_forward.49} parent=0 // loop_header
    %s9 = sphi 0, %s13
    %p10 = scmp.ge.s32.totalorder %s9, 4
    %s19 = sphi 0, %s21
    %s22 = sphi 0, %s19
    %s23 = sphi 0, %s22
    %s39 = sphi 0, %s23
    %s43 = sphi 0, %s43
    %s45 = sphi 0, %s43
    %s46 = sphi 0, %s45
    %s60 = sphi 0, %s46
    %s64 = sphi 0, %s64
    %s66 = sphi 0, %s64
    %s67 = sphi 0, %s66
    %s81 = sphi 0, %s67
    %s87 = sphi 0, %s89
    %s90 = sphi 0, %s87
    %s91 = sphi 0, %s90
    %s107 = sphi 0, %s91
  $region4: #{resnet_generator_forward.49} parent=0 // loop_header_branch
    %12 = sbr.rel (%p10) target = $region8
  $region5: #{resnet_generator_forward.49} parent=0 // loop_body
    %s14 = ssub.s32 %s9, 1
    %s15 = ssub.s32 %s9, 2
    %s16 = sadd.s32 %s9, 1
    %s17 = ssub.s32 %s9, %s16
    %p18 = scmp.eq.s32.totalorder %s17, 0
    %s20 = sadd.s32 %s19, 1
    %s21 = scalar_select %p18, %s19, %s20
    %p24 = pneg %p18
    %p25 = scmp.eq.s32.totalorder %s9, 1
    %p26 = por %p24, %p25
    %p27 = scmp.ne.s32.totalorder %s19, %s22
    %p28 = scmp.eq.s32.totalorder %s9, 0
    %p29 = por %p27, %p28
    %p30 = scmp.ne.s32.totalorder %s19, %s22
    %p31 = scmp.eq.s32.totalorder %s14, 1
    %p32 = por %p30, %p31
    %p33 = scmp.ne.s32.totalorder %s22, %s23
    %p34 = scmp.eq.s32.totalorder %s14, 0
    %p35 = por %p33, %p34
    %p36 = scmp.ne.s32.totalorder %s22, %s23
    %p37 = scmp.eq.s32.totalorder %s15, 1
    %p38 = por %p36, %p37
    %p40 = scmp.ne.s32.totalorder %s23, %s39
    %p41 = scmp.eq.s32.totalorder %s15, 0
    %p42 = por %p40, %p41
    %s44 = sadd.s32 %s43, 1
    %p47 = scmp.eq.s32.totalorder %s9, 1
    %p48 = scmp.ne.s32.totalorder %s43, %s45
    %p49 = scmp.eq.s32.totalorder %s9, 0
    %p50 = por %p48, %p49
    %p51 = scmp.ne.s32.totalorder %s43, %s45
    %p52 = scmp.eq.s32.totalorder %s14, 1
    %p53 = por %p51, %p52
    %p54 = scmp.ne.s32.totalorder %s45, %s46
    %p55 = scmp.eq.s32.totalorder %s14, 0
    %p56 = por %p54, %p55
    %p57 = scmp.ne.s32.totalorder %s45, %s46
    %p58 = scmp.eq.s32.totalorder %s15, 1
    %p59 = por %p57, %p58
    %p61 = scmp.ne.s32.totalorder %s46, %s60
    %p62 = scmp.eq.s32.totalorder %s15, 0
    %p63 = por %p61, %p62
    %s65 = sadd.s32 %s64, 1
    %p68 = scmp.eq.s32.totalorder %s9, 1
    %p69 = scmp.ne.s32.totalorder %s64, %s66
    %p70 = scmp.eq.s32.totalorder %s9, 0
    %p71 = por %p69, %p70
    %p72 = scmp.ne.s32.totalorder %s64, %s66
    %p73 = scmp.eq.s32.totalorder %s14, 1
    %p74 = por %p72, %p73
    %p75 = scmp.ne.s32.totalorder %s66, %s67
    %p76 = scmp.eq.s32.totalorder %s14, 0
    %p77 = por %p75, %p76
    %p78 = scmp.ne.s32.totalorder %s66, %s67
    %p79 = scmp.eq.s32.totalorder %s15, 1
    %p80 = por %p78, %p79
    %p82 = scmp.ne.s32.totalorder %s67, %s81
    %p83 = scmp.eq.s32.totalorder %s15, 0
    %p84 = por %p82, %p83
    %s85 = ssub.s32 %s9, %s16
    %p86 = scmp.eq.s32.totalorder %s85, 0
    %s88 = sadd.s32 %s87, 1
    %s89 = scalar_select %p86, %s87, %s88
    %p92 = pneg %p86
    %p93 = scmp.eq.s32.totalorder %s9, 1
    %p94 = por %p92, %p93
    %p95 = scmp.ne.s32.totalorder %s87, %s90
    %p96 = scmp.eq.s32.totalorder %s9, 0
    %p97 = por %p95, %p96
    %p98 = scmp.ne.s32.totalorder %s87, %s90
    %p99 = scmp.eq.s32.totalorder %s14, 1
    %p100 = por %p98, %p99
    %p101 = scmp.ne.s32.totalorder %s90, %s91
    %p102 = scmp.eq.s32.totalorder %s14, 0
    %p103 = por %p101, %p102
    %p104 = scmp.ne.s32.totalorder %s90, %s91
    %p105 = scmp.eq.s32.totalorder %s15, 1
    %p106 = por %p104, %p105
    %p108 = scmp.ne.s32.totalorder %s91, %s107
    %p109 = scmp.eq.s32.totalorder %s15, 0
    %p110 = por %p108, %p109
    %p111 = scmp.le.s32.totalorder 1, %s9
    %p112 = scmp.lt.s32.totalorder %s9, 3
    %p113 = pnand %p111, %p112
    %p114 = pneg %p113
    // Predicated region
    $region9: #{resnet_generator_forward.49} parent=5 // pred_check
      _
    $region10: #{resnet_generator_forward.49} parent=5 // pred_check_branch
      %116 = sbr.rel (%p113) target = $region12
    $region11: #{resnet_generator_forward.49} parent=5 // pred_region
      %s117 = ssub.s32 %s9, 1
      // Predicated region
      $region13: #{resnet_generator_forward.49} parent=11 // pred_check
        %p118 = pneg %p56
      $region14: #{resnet_generator_forward.49} parent=11 // pred_check_branch
        %120 = sbr.rel (%p118) target = $region16
      $region15: #{resnet_generator_forward.49} parent=11 // pred_region
        _
      $region16: #{resnet_generator_forward.49} parent=11 // pred_fallthru
        _
      // Predicated region
      $region17: #{resnet_generator_forward.49} parent=11 // pred_check
        %p121 = pneg %p77
      $region18: #{resnet_generator_forward.49} parent=11 // pred_check_branch
        %123 = sbr.rel (%p121) target = $region20
      $region19: #{resnet_generator_forward.49} parent=11 // pred_region
        _
      $region20: #{resnet_generator_forward.49} parent=11 // pred_fallthru
        _
    $region12: #{resnet_generator_forward.49} parent=5 // pred_fallthru
      _
    %p124 = scmp.lt.s32.totalorder %s9, 2
    // Predicated region
    $region21: #{resnet_generator_forward.49} parent=5 // pred_check
      %p125 = pneg %p124
    $region22: #{resnet_generator_forward.49} parent=5 // pred_check_branch
      %127 = sbr.rel (%p125) target = $region24
    $region23: #{resnet_generator_forward.49} parent=5 // pred_region
      // Predicated region
      $region25: #{resnet_generator_forward.49} parent=23 // pred_check
        %p128 = pneg %p29
      $region26: #{resnet_generator_forward.49} parent=23 // pred_check_branch
        %130 = sbr.rel (%p128) target = $region28
      $region27: #{resnet_generator_forward.49} parent=23 // pred_region
        %s131 = smul.u32 32, %s9
        %p132 = scmp.lt.s32.totalorder %s131, 63
        %s133 = scalar_select %p132, %s131, 63
        %s134 = smul.addr %s133, 4
        %s135 = smul.addr %s134, 4
        %s136 = scalar_lea.vmem %s0, %s135
        %s137 = smul.u32 32, %s9
      $region28: #{resnet_generator_forward.49} parent=23 // pred_fallthru
        _
    $region24: #{resnet_generator_forward.49} parent=5 // pred_fallthru
      _
    %p138 = scmp.le.s32.totalorder 1, %s9
    %p139 = scmp.lt.s32.totalorder %s9, 3
    %p140 = pnand %p138, %p139
    %p141 = pneg %p140
    // Predicated region
    $region29: #{resnet_generator_forward.49} parent=5 // pred_check
      _
    $region30: #{resnet_generator_forward.49} parent=5 // pred_check_branch
      %143 = sbr.rel (%p140) target = $region32
    $region31: #{resnet_generator_forward.49} parent=5 // pred_region
      %s144 = ssub.s32 %s9, 1
      %s145 = smul.u32 32, %s14
      %p146 = scmp.lt.s32.totalorder %s145, 63
      %s147 = scalar_select %p146, %s145, 63
      %s148 = smul.addr %s147, 4
      %s149 = smul.addr %s148, 4
      %s150 = scalar_lea.vmem %s0, %s149
      %p151 = pneg %p35
      %p152 = pneg %p32
      %p153 = pneg %p56
      %p154 = pneg %p53
      %p155 = pneg %p77
      %p156 = pneg %p74
      %p157 = pneg %p103
      %p158 = pneg %p100
      %s159 = smul.u32 32, %s14
      %p160 = scmp.lt.s32.totalorder %s159, 63
      %s161 = scalar_select %p160, %s159, 63
      %s162 = smul.addr %s161, 8
      %s163 = scalar_lea.vmem %s3, %s162
      %s164 = smul.u32 32, %s14
      %p165 = scmp.lt.s32.totalorder %s164, 63
      %s166 = scalar_select %p165, %s164, 63
      %s167 = smul.addr %s166, 4
      %s168 = smul.addr %s167, 4
      %s169 = scalar_lea.vmem %s0, %s168
      %s170 = smul.u32 32, %s14
      %s171 = smul.u32 32, %s14
      %p172 = scmp.lt.s32.totalorder %s171, 63
      %s173 = scalar_select %p172, %s171, 63
      %s174 = smul.addr %s173, 8
      %s175 = scalar_lea.vmem %s3, %s174
      %s176 = smul.u32 32, %s14
      %v178 = vld [vmem:[%s169] sm:$0xff]
      %v179 = vld [vmem:[%s169 + $0x8] sm:$0xff]
      %v180 = vld [vmem:[%s169 + $0x10] sm:$0xff]
      %v181 = vld [vmem:[%s169 + $0x18] sm:$0xff]
      %v182 = vld [vmem:[%s169 + $0x20] sm:$0xff]
      %v183 = vld [vmem:[%s169 + $0x28] sm:$0xff]
      %v184 = vld [vmem:[%s169 + $0x30] sm:$0xff]
      %v185 = vld [vmem:[%s169 + $0x38] sm:$0xff]
      %v186 = vld [vmem:[%s169 + $0x40] sm:$0xff]
      %v187 = vld [vmem:[%s169 + $0x48] sm:$0xff]
      %v188 = vld [vmem:[%s169 + $0x50] sm:$0xff]
      %v189 = vld [vmem:[%s169 + $0x58] sm:$0xff]
      %v190 = vld [vmem:[%s169 + $0x60] sm:$0xff]
      %v191 = vld [vmem:[%s169 + $0x68] sm:$0xff]
      %v192 = vld [vmem:[%s169 + $0x70] sm:$0xff]
      %v193 = vld [vmem:[%s169 + $0x78] sm:$0xff]
      %v194 = vld [vmem:[%s169 + $0x80] sm:$0xff]
      %v195 = vld [vmem:[%s169 + $0x88] sm:$0xff]
      %v196 = vld [vmem:[%s169 + $0x90] sm:$0xff]
      %v197 = vld [vmem:[%s169 + $0x98] sm:$0xff]
      %v198 = vld [vmem:[%s169 + $0xa0] sm:$0xff]
      %v199 = vld [vmem:[%s169 + $0xa8] sm:$0xff]
      %v200 = vld [vmem:[%s169 + $0xb0] sm:$0xff]
      %v201 = vld [vmem:[%s169 + $0xb8] sm:$0xff]
      %v202 = vld [vmem:[%s169 + $0xc0] sm:$0xff]
      %v203 = vld [vmem:[%s169 + $0xc8] sm:$0xff]
      %v204 = vld [vmem:[%s169 + $0xd0] sm:$0xff]
      %v205 = vld [vmem:[%s169 + $0xd8] sm:$0xff]
      %v206 = vld [vmem:[%s169 + $0xe0] sm:$0xff]
      %v207 = vld [vmem:[%s169 + $0xe8] sm:$0xff]
      %v208 = vld [vmem:[%s169 + $0xf0] sm:$0xff]
      %v209 = vld [vmem:[%s169 + $0xf8] sm:$0xff]
      %v210 = vld [vmem:[%s169 + $0x100] sm:$0xff]
      %v211 = vld [vmem:[%s169 + $0x108] sm:$0xff]
      %v212 = vld [vmem:[%s169 + $0x110] sm:$0xff]
      %v213 = vld [vmem:[%s169 + $0x118] sm:$0xff]
      %v214 = vld [vmem:[%s169 + $0x120] sm:$0xff]
      %v215 = vld [vmem:[%s169 + $0x128] sm:$0xff]
      %v216 = vld [vmem:[%s169 + $0x130] sm:$0xff]
      %v217 = vld [vmem:[%s169 + $0x138] sm:$0xff]
      %v218 = vld [vmem:[%s169 + $0x140] sm:$0xff]
      %v219 = vld [vmem:[%s169 + $0x148] sm:$0xff]
      %v220 = vld [vmem:[%s169 + $0x150] sm:$0xff]
      %v221 = vld [vmem:[%s169 + $0x158] sm:$0xff]
      %v222 = vld [vmem:[%s169 + $0x160] sm:$0xff]
      %v223 = vld [vmem:[%s169 + $0x168] sm:$0xff]
      %v224 = vld [vmem:[%s169 + $0x170] sm:$0xff]
      %v225 = vld [vmem:[%s169 + $0x178] sm:$0xff]
      %v226 = vld [vmem:[%s169 + $0x180] sm:$0xff]
      %v227 = vld [vmem:[%s169 + $0x188] sm:$0xff]
      %v228 = vld [vmem:[%s169 + $0x190] sm:$0xff]
      %v229 = vld [vmem:[%s169 + $0x198] sm:$0xff]
      %v230 = vld [vmem:[%s169 + $0x1a0] sm:$0xff]
      %v231 = vld [vmem:[%s169 + $0x1a8] sm:$0xff]
      %v232 = vld [vmem:[%s169 + $0x1b0] sm:$0xff]
      %v233 = vld [vmem:[%s169 + $0x1b8] sm:$0xff]
      %v234 = vld [vmem:[%s169 + $0x1c0] sm:$0xff]
      %v235 = vld [vmem:[%s169 + $0x1c8] sm:$0xff]
      %v236 = vld [vmem:[%s169 + $0x1d0] sm:$0xff]
      %v237 = vld [vmem:[%s169 + $0x1d8] sm:$0xff]
      %v238 = vld [vmem:[%s169 + $0x1e0] sm:$0xff]
      %v239 = vld [vmem:[%s169 + $0x1e8] sm:$0xff]
      %v240 = vld [vmem:[%s169 + $0x1f0] sm:$0xff]
      %v241 = vld [vmem:[%s169 + $0x1f8] sm:$0xff]
      %v242 = vld [vmem:[%s1] sm:$0xf]
      %v243 = vld [vmem:[%s1 + $0x4] sm:$0xf]
      %v244 = vld [vmem:[%s1 + $0x8] sm:$0xf]
      %v245 = vld [vmem:[%s1 + $0xc] sm:$0xf]
      %v246 = vld [vmem:[%s1 + $0x10] sm:$0xf]
      %v247 = vld [vmem:[%s1 + $0x14] sm:$0xf]
      %v248 = vld [vmem:[%s1 + $0x18] sm:$0xf]
      %v249 = vld [vmem:[%s1 + $0x1c] sm:$0xf]
      %v250 = vld [vmem:[%s1 + $0x20] sm:$0xf]
      %v251 = vld [vmem:[%s1 + $0x24] sm:$0xf]
      %v252 = vld [vmem:[%s1 + $0x28] sm:$0xf]
      %v253 = vld [vmem:[%s1 + $0x2c] sm:$0xf]
      %v254 = vld [vmem:[%s1 + $0x30] sm:$0xf]
      %v255 = vld [vmem:[%s1 + $0x34] sm:$0xf]
      %v256 = vld [vmem:[%s1 + $0x38] sm:$0xf]
      %v257 = vld [vmem:[%s1 + $0x3c] sm:$0xf]
      %v258 = vld [vmem:[%s1 + $0x40] sm:$0xf]
      %v259 = vld [vmem:[%s1 + $0x44] sm:$0xf]
      %v260 = vld [vmem:[%s1 + $0x48] sm:$0xf]
      %v261 = vld [vmem:[%s1 + $0x4c] sm:$0xf]
      %v262 = vld [vmem:[%s1 + $0x50] sm:$0xf]
      %v263 = vld [vmem:[%s1 + $0x54] sm:$0xf]
      %v264 = vld [vmem:[%s1 + $0x58] sm:$0xf]
      %v265 = vld [vmem:[%s1 + $0x5c] sm:$0xf]
      %v266 = vld [vmem:[%s1 + $0x60] sm:$0xf]
      %v267 = vld [vmem:[%s1 + $0x64] sm:$0xf]
      %v268 = vld [vmem:[%s1 + $0x68] sm:$0xf]
      %v269 = vld [vmem:[%s1 + $0x6c] sm:$0xf]
      %v270 = vld [vmem:[%s1 + $0x70] sm:$0xf]
      %v271 = vld [vmem:[%s1 + $0x74] sm:$0xf]
      %v272 = vld [vmem:[%s1 + $0x78] sm:$0xf]
      %v273 = vld [vmem:[%s1 + $0x7c] sm:$0xf]
      %v274 = vld [vmem:[%s1 + $0x80] sm:$0xf]
      %v275 = vld [vmem:[%s1 + $0x84] sm:$0xf]
      %v276 = vld [vmem:[%s1 + $0x88] sm:$0xf]
      %v277 = vld [vmem:[%s1 + $0x8c] sm:$0xf]
      %v278 = vld [vmem:[%s1 + $0x90] sm:$0xf]
      %v279 = vld [vmem:[%s1 + $0x94] sm:$0xf]
      %v280 = vld [vmem:[%s1 + $0x98] sm:$0xf]
      %v281 = vld [vmem:[%s1 + $0x9c] sm:$0xf]
      %v282 = vld [vmem:[%s1 + $0xa0] sm:$0xf]
      %v283 = vld [vmem:[%s1 + $0xa4] sm:$0xf]
      %v284 = vld [vmem:[%s1 + $0xa8] sm:$0xf]
      %v285 = vld [vmem:[%s1 + $0xac] sm:$0xf]
      %v286 = vld [vmem:[%s1 + $0xb0] sm:$0xf]
      %v287 = vld [vmem:[%s1 + $0xb4] sm:$0xf]
      %v288 = vld [vmem:[%s1 + $0xb8] sm:$0xf]
      %v289 = vld [vmem:[%s1 + $0xbc] sm:$0xf]
      %v290 = vld [vmem:[%s1 + $0xc0] sm:$0xf]
      %v291 = vld [vmem:[%s2] sm:$0x1]
      %v293 = vlaneseq
      %v294 = vshrl.u32 %v293, 7
      %v295 = vsub.s32 0, %v294
      %v296 = vrot.slane %v291, %v295
      %v362 = vunpack.c.l.b16 %v178
      %v363 = vunpack.c.h.b16 %v178
      %v364 = vunpack.c.l.b16 %v179
      %v365 = vunpack.c.h.b16 %v179
      %v366 = vunpack.c.l.b16 %v180
      %v367 = vunpack.c.h.b16 %v180
      %v368 = vunpack.c.l.b16 %v181
      %v369 = vunpack.c.h.b16 %v181
      %v370 = vunpack.c.l.b16 %v182
      %v371 = vunpack.c.h.b16 %v182
      %v372 = vunpack.c.l.b16 %v183
      %v373 = vunpack.c.h.b16 %v183
      %v374 = vunpack.c.l.b16 %v184
      %v375 = vunpack.c.h.b16 %v184
      %v376 = vunpack.c.l.b16 %v185
      %v377 = vunpack.c.h.b16 %v185
      %v378 = vunpack.c.l.b16 %v186
      %v379 = vunpack.c.h.b16 %v186
      %v380 = vunpack.c.l.b16 %v187
      %v381 = vunpack.c.h.b16 %v187
      %v382 = vunpack.c.l.b16 %v188
      %v383 = vunpack.c.h.b16 %v188
      %v384 = vunpack.c.l.b16 %v189
      %v385 = vunpack.c.h.b16 %v189
      %v386 = vunpack.c.l.b16 %v190
      %v387 = vunpack.c.h.b16 %v190
      %v388 = vunpack.c.l.b16 %v191
      %v389 = vunpack.c.h.b16 %v191
      %v390 = vunpack.c.l.b16 %v192
      %v391 = vunpack.c.h.b16 %v192
      %v392 = vunpack.c.l.b16 %v193
      %v393 = vunpack.c.h.b16 %v193
      %v394 = vunpack.c.l.b16 %v194
      %v395 = vunpack.c.h.b16 %v194
      %v396 = vunpack.c.l.b16 %v195
      %v397 = vunpack.c.h.b16 %v195
      %v398 = vunpack.c.l.b16 %v196
      %v399 = vunpack.c.h.b16 %v196
      %v400 = vunpack.c.l.b16 %v197
      %v401 = vunpack.c.h.b16 %v197
      %v402 = vunpack.c.l.b16 %v198
      %v403 = vunpack.c.h.b16 %v198
      %v404 = vunpack.c.l.b16 %v199
      %v405 = vunpack.c.h.b16 %v199
      %v406 = vunpack.c.l.b16 %v200
      %v407 = vunpack.c.h.b16 %v200
      %v408 = vunpack.c.l.b16 %v201
      %v409 = vunpack.c.h.b16 %v201
      %v410 = vunpack.c.l.b16 %v202
      %v411 = vunpack.c.h.b16 %v202
      %v412 = vunpack.c.l.b16 %v203
      %v413 = vunpack.c.h.b16 %v203
      %v414 = vunpack.c.l.b16 %v204
      %v415 = vunpack.c.h.b16 %v204
      %v416 = vunpack.c.l.b16 %v205
      %v417 = vunpack.c.h.b16 %v205
      %v418 = vunpack.c.l.b16 %v206
      %v419 = vunpack.c.h.b16 %v206
      %v420 = vunpack.c.l.b16 %v207
      %v421 = vunpack.c.h.b16 %v207
      %v422 = vunpack.c.l.b16 %v208
      %v423 = vunpack.c.h.b16 %v208
      %v424 = vunpack.c.l.b16 %v209
      %v425 = vunpack.c.h.b16 %v209
      %v426 = vunpack.c.l.b16 %v210
      %v427 = vunpack.c.h.b16 %v210
      %v428 = vunpack.c.l.b16 %v211
      %v429 = vunpack.c.h.b16 %v211
      %v430 = vunpack.c.l.b16 %v212
      %v431 = vunpack.c.h.b16 %v212
      %v432 = vunpack.c.l.b16 %v213
      %v433 = vunpack.c.h.b16 %v213
      %v434 = vunpack.c.l.b16 %v214
      %v435 = vunpack.c.h.b16 %v214
      %v436 = vunpack.c.l.b16 %v215
      %v437 = vunpack.c.h.b16 %v215
      %v438 = vunpack.c.l.b16 %v216
      %v439 = vunpack.c.h.b16 %v216
      %v440 = vunpack.c.l.b16 %v217
      %v441 = vunpack.c.h.b16 %v217
      %v442 = vunpack.c.l.b16 %v218
      %v443 = vunpack.c.h.b16 %v218
      %v444 = vunpack.c.l.b16 %v219
      %v445 = vunpack.c.h.b16 %v219
      %v446 = vunpack.c.l.b16 %v220
      %v447 = vunpack.c.h.b16 %v220
      %v448 = vunpack.c.l.b16 %v221
      %v449 = vunpack.c.h.b16 %v221
      %v450 = vunpack.c.l.b16 %v222
      %v451 = vunpack.c.h.b16 %v222
      %v452 = vunpack.c.l.b16 %v223
      %v453 = vunpack.c.h.b16 %v223
      %v454 = vunpack.c.l.b16 %v224
      %v455 = vunpack.c.h.b16 %v224
      %v456 = vunpack.c.l.b16 %v225
      %v457 = vunpack.c.h.b16 %v225
      %v458 = vunpack.c.l.b16 %v226
      %v459 = vunpack.c.h.b16 %v226
      %v460 = vunpack.c.l.b16 %v227
      %v461 = vunpack.c.h.b16 %v227
      %v462 = vunpack.c.l.b16 %v228
      %v463 = vunpack.c.h.b16 %v228
      %v464 = vunpack.c.l.b16 %v229
      %v465 = vunpack.c.h.b16 %v229
      %v466 = vunpack.c.l.b16 %v230
      %v467 = vunpack.c.h.b16 %v230
      %v468 = vunpack.c.l.b16 %v231
      %v469 = vunpack.c.h.b16 %v231
      %v470 = vunpack.c.l.b16 %v232
      %v471 = vunpack.c.h.b16 %v232
      %v472 = vunpack.c.l.b16 %v233
      %v473 = vunpack.c.h.b16 %v233
      %v474 = vunpack.c.l.b16 %v234
      %v475 = vunpack.c.h.b16 %v234
      %v476 = vunpack.c.l.b16 %v235
      %v477 = vunpack.c.h.b16 %v235
      %v478 = vunpack.c.l.b16 %v236
      %v479 = vunpack.c.h.b16 %v236
      %v480 = vunpack.c.l.b16 %v237
      %v481 = vunpack.c.h.b16 %v237
      %v482 = vunpack.c.l.b16 %v238
      %v483 = vunpack.c.h.b16 %v238
      %v484 = vunpack.c.l.b16 %v239
      %v485 = vunpack.c.h.b16 %v239
      %v486 = vunpack.c.l.b16 %v240
      %v487 = vunpack.c.h.b16 %v240
      %v488 = vunpack.c.l.b16 %v241
      %v489 = vunpack.c.h.b16 %v241
      %v490 = vpack.c.b16 %v366, %v362
      %v491 = vpack.c.b16 %v367, %v363
      %v492 = vpack.c.b16 %v368, %v364
      %v493 = vpack.c.b16 %v369, %v365
      %v494 = vpack.c.b16 %v374, %v370
      %v495 = vpack.c.b16 %v375, %v371
      %v496 = vpack.c.b16 %v376, %v372
      %v497 = vpack.c.b16 %v377, %v373
      %v498 = vpack.c.b16 %v382, %v378
      %v499 = vpack.c.b16 %v383, %v379
      %v500 = vpack.c.b16 %v384, %v380
      %v501 = vpack.c.b16 %v385, %v381
      %v502 = vpack.c.b16 %v390, %v386
      %v503 = vpack.c.b16 %v391, %v387
      %v504 = vpack.c.b16 %v392, %v388
      %v505 = vpack.c.b16 %v393, %v389
      %v506 = vpack.c.b16 %v398, %v394
      %v507 = vpack.c.b16 %v399, %v395
      %v508 = vpack.c.b16 %v400, %v396
      %v509 = vpack.c.b16 %v401, %v397
      %v510 = vpack.c.b16 %v406, %v402
      %v511 = vpack.c.b16 %v407, %v403
      %v512 = vpack.c.b16 %v408, %v404
      %v513 = vpack.c.b16 %v409, %v405
      %v514 = vpack.c.b16 %v414, %v410
      %v515 = vpack.c.b16 %v415, %v411
      %v516 = vpack.c.b16 %v416, %v412
      %v517 = vpack.c.b16 %v417, %v413
      %v518 = vpack.c.b16 %v422, %v418
      %v519 = vpack.c.b16 %v423, %v419
      %v520 = vpack.c.b16 %v424, %v420
      %v521 = vpack.c.b16 %v425, %v421
      %v522 = vpack.c.b16 %v430, %v426
      %v523 = vpack.c.b16 %v431, %v427
      %v524 = vpack.c.b16 %v432, %v428
      %v525 = vpack.c.b16 %v433, %v429
      %v526 = vpack.c.b16 %v438, %v434
      %v527 = vpack.c.b16 %v439, %v435
      %v528 = vpack.c.b16 %v440, %v436
      %v529 = vpack.c.b16 %v441, %v437
      %v530 = vpack.c.b16 %v446, %v442
      %v531 = vpack.c.b16 %v447, %v443
      %v532 = vpack.c.b16 %v448, %v444
      %v533 = vpack.c.b16 %v449, %v445
      %v534 = vpack.c.b16 %v454, %v450
      %v535 = vpack.c.b16 %v455, %v451
      %v536 = vpack.c.b16 %v456, %v452
      %v537 = vpack.c.b16 %v457, %v453
      %v538 = vpack.c.b16 %v462, %v458
      %v539 = vpack.c.b16 %v463, %v459
      %v540 = vpack.c.b16 %v464, %v460
      %v541 = vpack.c.b16 %v465, %v461
      %v542 = vpack.c.b16 %v470, %v466
      %v543 = vpack.c.b16 %v471, %v467
      %v544 = vpack.c.b16 %v472, %v468
      %v545 = vpack.c.b16 %v473, %v469
      %v546 = vpack.c.b16 %v478, %v474
      %v547 = vpack.c.b16 %v479, %v475
      %v548 = vpack.c.b16 %v480, %v476
      %v549 = vpack.c.b16 %v481, %v477
      %v550 = vpack.c.b16 %v486, %v482
      %v551 = vpack.c.b16 %v487, %v483
      %v552 = vpack.c.b16 %v488, %v484
      %v553 = vpack.c.b16 %v489, %v485
      %v651 = vunpack.c.l.b16 %v242
      %v652 = vunpack.c.l.b16 %v243
      %v653 = vunpack.c.l.b16 %v244
      %v654 = vunpack.c.l.b16 %v245
      %v655 = vunpack.c.l.b16 %v246
      %v656 = vunpack.c.l.b16 %v247
      %v657 = vunpack.c.l.b16 %v248
      %v658 = vunpack.c.l.b16 %v249
      %v659 = vunpack.c.l.b16 %v250
      %v660 = vunpack.c.l.b16 %v251
      %v661 = vunpack.c.l.b16 %v252
      %v662 = vunpack.c.l.b16 %v253
      %v663 = vunpack.c.l.b16 %v254
      %v664 = vunpack.c.l.b16 %v255
      %v665 = vunpack.c.l.b16 %v256
      %v666 = vunpack.c.l.b16 %v257
      %v667 = vunpack.c.l.b16 %v258
      %v668 = vunpack.c.l.b16 %v259
      %v669 = vunpack.c.l.b16 %v260
      %v670 = vunpack.c.l.b16 %v261
      %v671 = vunpack.c.l.b16 %v262
      %v672 = vunpack.c.l.b16 %v263
      %v673 = vunpack.c.l.b16 %v264
      %v674 = vunpack.c.l.b16 %v265
      %v675 = vunpack.c.l.b16 %v266
      %v676 = vunpack.c.l.b16 %v267
      %v677 = vunpack.c.l.b16 %v268
      %v678 = vunpack.c.l.b16 %v269
      %v679 = vunpack.c.l.b16 %v270
      %v680 = vunpack.c.l.b16 %v271
      %v681 = vunpack.c.l.b16 %v272
      %v682 = vunpack.c.l.b16 %v273
      %v683 = vunpack.c.l.b16 %v274
      %v684 = vunpack.c.l.b16 %v275
      %v685 = vunpack.c.l.b16 %v276
      %v686 = vunpack.c.l.b16 %v277
      %v687 = vunpack.c.l.b16 %v278
      %v688 = vunpack.c.l.b16 %v279
      %v689 = vunpack.c.l.b16 %v280
      %v690 = vunpack.c.l.b16 %v281
      %v691 = vunpack.c.l.b16 %v282
      %v692 = vunpack.c.l.b16 %v283
      %v693 = vunpack.c.l.b16 %v284
      %v694 = vunpack.c.l.b16 %v285
      %v695 = vunpack.c.l.b16 %v286
      %v696 = vunpack.c.l.b16 %v287
      %v697 = vunpack.c.l.b16 %v288
      %v698 = vunpack.c.l.b16 %v289
      %v699 = vunpack.c.l.b16 %v290
      %v700 = vpack.c.b16 %v652, %v651
      %v701 = vpack.c.b16 %v654, %v653
      %v702 = vpack.c.b16 %v656, %v655
      %v703 = vpack.c.b16 %v658, %v657
      %v704 = vpack.c.b16 %v660, %v659
      %v705 = vpack.c.b16 %v662, %v661
      %v706 = vpack.c.b16 %v664, %v663
      %v707 = vpack.c.b16 %v666, %v665
      %v708 = vpack.c.b16 %v668, %v667
      %v709 = vpack.c.b16 %v670, %v669
      %v710 = vpack.c.b16 %v672, %v671
      %v711 = vpack.c.b16 %v674, %v673
      %v712 = vpack.c.b16 %v676, %v675
      %v713 = vpack.c.b16 %v678, %v677
      %v714 = vpack.c.b16 %v680, %v679
      %v715 = vpack.c.b16 %v682, %v681
      %v716 = vpack.c.b16 %v684, %v683
      %v717 = vpack.c.b16 %v686, %v685
      %v718 = vpack.c.b16 %v688, %v687
      %v719 = vpack.c.b16 %v690, %v689
      %v720 = vpack.c.b16 %v692, %v691
      %v721 = vpack.c.b16 %v694, %v693
      %v722 = vpack.c.b16 %v696, %v695
      %v723 = vpack.c.b16 %v698, %v697
      %v724 = vpack.c.b16 %v699, %v699
      %vm749 = vcmask 64512
      %v751 = vsel %vm749, %v493, 0
      %v754 = vsel %vm749, %v497, 0
      %v757 = vsel %vm749, %v501, 0
      %v760 = vsel %vm749, %v505, 0
      %v763 = vsel %vm749, %v509, 0
      %v766 = vsel %vm749, %v513, 0
      %v769 = vsel %vm749, %v517, 0
      %v772 = vsel %vm749, %v521, 0
      %v775 = vsel %vm749, %v525, 0
      %v778 = vsel %vm749, %v529, 0
      %v781 = vsel %vm749, %v533, 0
      %v784 = vsel %vm749, %v537, 0
      %v787 = vsel %vm749, %v541, 0
      %v790 = vsel %vm749, %v545, 0
      %v793 = vsel %vm749, %v549, 0
      %v796 = vsel %vm749, %v553, 0
      %vm798 = vcmask 1043456
      %v800 = vsel %vm798, %v724, 0
      %802 = vmatprep.subr.bf16.mxu0 0
      %803 = vmatpush1.bf16.msra.mxu0 %v700
      %804 = vmatprep.subr.bf16.mxu0 0
      %805 = vmatpush1.bf16.msra.mxu0 %v701
      %806 = vmatprep.subr.bf16.mxu0 0
      %807 = vmatpush1.bf16.msra.mxu0 %v702
      %808 = vmatprep.subr.bf16.mxu0 0
      %809 = vmatpush1.bf16.msra.mxu0 %v703
      %810 = vmatprep.subr.bf16.mxu0 0
      %811 = vmatpush1.bf16.msra.mxu0 %v704
      %812 = vmatprep.subr.bf16.mxu0 0
      %813 = vmatpush1.bf16.msra.mxu0 %v705
      %814 = vmatprep.subr.bf16.mxu0 0
      %815 = vmatpush1.bf16.msra.mxu0 %v706
      %816 = vmatprep.subr.bf16.mxu0 0
      %817 = vmatpush1.bf16.msra.mxu0 %v707
      %818 = vmatprep.subr.bf16.mxu0 0
      %819 = vmatpush1.bf16.msra.mxu0 %v708
      %820 = vmatprep.subr.bf16.mxu0 0
      %821 = vmatpush1.bf16.msra.mxu0 %v709
      %822 = vmatprep.subr.bf16.mxu0 0
      %823 = vmatpush1.bf16.msra.mxu0 %v710
      %824 = vmatprep.subr.bf16.mxu0 0
      %825 = vmatpush1.bf16.msra.mxu0 %v711
      %826 = vmatprep.subr.bf16.mxu0 0
      %827 = vmatpush1.bf16.msra.mxu0 %v712
      %828 = vmatprep.subr.bf16.mxu0 0
      %829 = vmatpush1.bf16.msra.mxu0 %v713
      %830 = vmatprep.subr.bf16.mxu0 0
      %831 = vmatpush1.bf16.msra.mxu0 %v714
      %832 = vmatprep.subr.bf16.mxu0 0
      %833 = vmatpush1.bf16.msra.mxu0 %v715
      %834 = vmatprep.mubr.bf16.mxu0 %v491
      %835 = vmatmul.mubr.bf16.gmra.mrb[0].mxu0 %v490
      %v836 = vpop.f32.mrb[0].mxu0
      %v837 = vadd.f32 %v296, %v836
      %v838 = vpop.f32.mrb[0].mxu0
      %v839 = vpop.f32.mrb[0].mxu0
      %v840 = vadd.f32 %v296, %v839
      %v841 = vpop.f32.mrb[0].mxu0
      %842 = vmatprep.mubr.bf16.mxu0 %v495
      %843 = vmatmul.mubr.bf16.gmra.mrb[0].mxu0 %v494
      %v844 = vpop.f32.mrb[0].mxu0
      %v845 = vadd.f32 %v296, %v844
      %v846 = vpop.f32.mrb[0].mxu0
      %v847 = vpop.f32.mrb[0].mxu0
      %v848 = vadd.f32 %v296, %v847
      %v849 = vpop.f32.mrb[0].mxu0
      %850 = vmatprep.mubr.bf16.mxu0 %v499
      %851 = vmatmul.mubr.bf16.gmra.mrb[0].mxu0 %v498
      %v852 = vpop.f32.mrb[0].mxu0
      %v853 = vadd.f32 %v296, %v852
      %v854 = vpop.f32.mrb[0].mxu0
      %v855 = vpop.f32.mrb[0].mxu0
      %v856 = vadd.f32 %v296, %v855
      %v857 = vpop.f32.mrb[0].mxu0
      %858 = vmatprep.mubr.bf16.mxu0 %v503
      %859 = vmatmul.mubr.bf16.gmra.mrb[0].mxu0 %v502
      %v860 = vpop.f32.mrb[0].mxu0
      %v861 = vadd.f32 %v296, %v860
      %v862 = vpop.f32.mrb[0].mxu0
      %v863 = vpop.f32.mrb[0].mxu0
      %v864 = vadd.f32 %v296, %v863
      %v865 = vpop.f32.mrb[0].mxu0
      %866 = vmatprep.mubr.bf16.mxu0 %v507
      %867 = vmatmul.mubr.bf16.gmra.mrb[0].mxu0 %v506
      %v868 = vpop.f32.mrb[0].mxu0
      %v869 = vadd.f32 %v296, %v868
      %v870 = vpop.f32.mrb[0].mxu0
      %v871 = vpop.f32.mrb[0].mxu0
      %v872 = vadd.f32 %v296, %v871
      %v873 = vpop.f32.mrb[0].mxu0
      %874 = vmatprep.mubr.bf16.mxu0 %v511
      %875 = vmatmul.mubr.bf16.gmra.mrb[0].mxu0 %v510
      %v876 = vpop.f32.mrb[0].mxu0
      %v877 = vadd.f32 %v296, %v876
      %v878 = vpop.f32.mrb[0].mxu0
      %v879 = vpop.f32.mrb[0].mxu0
      %v880 = vadd.f32 %v296, %v879
      %v881 = vpop.f32.mrb[0].mxu0
      %882 = vmatprep.mubr.bf16.mxu0 %v515
      %883 = vmatmul.mubr.bf16.gmra.mrb[0].mxu0 %v514
      %v884 = vpop.f32.mrb[0].mxu0
      %v885 = vadd.f32 %v296, %v884
      %v886 = vpop.f32.mrb[0].mxu0
      %v887 = vpop.f32.mrb[0].mxu0
      %v888 = vadd.f32 %v296, %v887
      %v889 = vpop.f32.mrb[0].mxu0
      %890 = vmatprep.mubr.bf16.mxu0 %v519
      %891 = vmatmul.mubr.bf16.gmra.mrb[0].mxu0 %v518
      %v892 = vpop.f32.mrb[0].mxu0
      %v893 = vadd.f32 %v296, %v892
      %v894 = vpop.f32.mrb[0].mxu0
      %v895 = vpop.f32.mrb[0].mxu0
      %v896 = vadd.f32 %v296, %v895
      %v897 = vpop.f32.mrb[0].mxu0
      %898 = vmatprep.mubr.bf16.mxu0 %v523
      %899 = vmatmul.mubr.bf16.gmra.mrb[0].mxu0 %v522
      %v900 = vpop.f32.mrb[0].mxu0
      %v901 = vadd.f32 %v296, %v900
      %v902 = vpop.f32.mrb[0].mxu0
      %v903 = vpop.f32.mrb[0].mxu0
      %v904 = vadd.f32 %v296, %v903
      %v905 = vpop.f32.mrb[0].mxu0
      %906 = vmatprep.mubr.bf16.mxu0 %v527
      %907 = vmatmul.mubr.bf16.gmra.mrb[0].mxu0 %v526
      %v908 = vpop.f32.mrb[0].mxu0
      %v909 = vadd.f32 %v296, %v908
      %v910 = vpop.f32.mrb[0].mxu0
      %v911 = vpop.f32.mrb[0].mxu0
      %v912 = vadd.f32 %v296, %v911
      %v913 = vpop.f32.mrb[0].mxu0
      %914 = vmatprep.mubr.bf16.mxu0 %v531
      %915 = vmatmul.mubr.bf16.gmra.mrb[0].mxu0 %v530
      %v916 = vpop.f32.mrb[0].mxu0
      %v917 = vadd.f32 %v296, %v916
      %v918 = vpop.f32.mrb[0].mxu0
      %v919 = vpop.f32.mrb[0].mxu0
      %v920 = vadd.f32 %v296, %v919
      %v921 = vpop.f32.mrb[0].mxu0
      %922 = vmatprep.mubr.bf16.mxu0 %v535
      %923 = vmatmul.mubr.bf16.gmra.mrb[0].mxu0 %v534
      %v924 = vpop.f32.mrb[0].mxu0
      %v925 = vadd.f32 %v296, %v924
      %v926 = vpop.f32.mrb[0].mxu0
      %v927 = vpop.f32.mrb[0].mxu0
      %v928 = vadd.f32 %v296, %v927
      %v929 = vpop.f32.mrb[0].mxu0
      %930 = vmatprep.mubr.bf16.mxu0 %v539
      %931 = vmatmul.mubr.bf16.gmra.mrb[0].mxu0 %v538
      %v932 = vpop.f32.mrb[0].mxu0
      %v933 = vadd.f32 %v296, %v932
      %v934 = vpop.f32.mrb[0].mxu0
      %v935 = vpop.f32.mrb[0].mxu0
      %v936 = vadd.f32 %v296, %v935
      %v937 = vpop.f32.mrb[0].mxu0
      %938 = vmatprep.mubr.bf16.mxu0 %v543
      %939 = vmatmul.mubr.bf16.gmra.mrb[0].mxu0 %v542
      %v940 = vpop.f32.mrb[0].mxu0
      %v941 = vadd.f32 %v296, %v940
      %v942 = vpop.f32.mrb[0].mxu0
      %v943 = vpop.f32.mrb[0].mxu0
      %v944 = vadd.f32 %v296, %v943
      %v945 = vpop.f32.mrb[0].mxu0
      %946 = vmatprep.mubr.bf16.mxu0 %v547
      %947 = vmatmul.mubr.bf16.gmra.mrb[0].mxu0 %v546
      %v948 = vpop.f32.mrb[0].mxu0
      %v949 = vadd.f32 %v296, %v948
      %v950 = vpop.f32.mrb[0].mxu0
      %v951 = vpop.f32.mrb[0].mxu0
      %v952 = vadd.f32 %v296, %v951
      %v953 = vpop.f32.mrb[0].mxu0
      %954 = vmatprep.mubr.bf16.mxu0 %v551
      %955 = vmatmul.mubr.bf16.gmra.mrb[0].mxu0 %v550
      %v956 = vpop.f32.mrb[0].mxu0
      %v957 = vadd.f32 %v296, %v956
      %v958 = vpop.f32.mrb[0].mxu0
      %v959 = vpop.f32.mrb[0].mxu0
      %v960 = vadd.f32 %v296, %v959
      %v961 = vpop.f32.mrb[0].mxu0
      %962 = vdwg.mxu0
      %963 = vmatprep.subr.bf16.mxu0 0
      %964 = vmatpush1.bf16.msra.mxu0 %v716
      %965 = vmatprep.subr.bf16.mxu0 0
      %966 = vmatpush1.bf16.msra.mxu0 %v717
      %967 = vmatprep.subr.bf16.mxu0 0
      %968 = vmatpush1.bf16.msra.mxu0 %v718
      %969 = vmatprep.subr.bf16.mxu0 0
      %970 = vmatpush1.bf16.msra.mxu0 %v719
      %971 = vmatprep.subr.bf16.mxu0 0
      %972 = vmatpush1.bf16.msra.mxu0 %v720
      %973 = vmatprep.subr.bf16.mxu0 0
      %974 = vmatpush1.bf16.msra.mxu0 %v721
      %975 = vmatprep.subr.bf16.mxu0 0
      %976 = vmatpush1.bf16.msra.mxu0 %v722
      %977 = vmatprep.subr.bf16.mxu0 0
      %978 = vmatpush1.bf16.msra.mxu0 %v723
      %979 = vmatprep.subr.bf16.mxu0 0
      %980 = vmatpush1.bf16.msra.mxu0 %v800
      %981 = vmatprep.subr.bf16.mxu0 0
      %982 = vmatpush1.bf16.msra.mxu0 0
      %983 = vmatprep.subr.bf16.mxu0 0
      %984 = vmatpush1.bf16.msra.mxu0 0
      %985 = vmatprep.subr.bf16.mxu0 0
      %986 = vmatpush1.bf16.msra.mxu0 0
      %987 = vmatprep.subr.bf16.mxu0 0
      %988 = vmatpush1.bf16.msra.mxu0 0
      %989 = vmatprep.subr.bf16.mxu0 0
      %990 = vmatpush1.bf16.msra.mxu0 0
      %991 = vmatprep.subr.bf16.mxu0 0
      %992 = vmatpush1.bf16.msra.mxu0 0
      %993 = vmatprep.subr.bf16.mxu0 0
      %994 = vmatpush1.bf16.msra.mxu0 0
      %995 = vmatprep.mubr.bf16.mxu0 %v751
      %996 = vmatmul.mubr.bf16.gmra.mrb[0].mxu0 %v492
      %v997 = vpop.f32.mrb[0].mxu0
      %v998 = vadd.f32 %v837, %v997
      %v999 = vpop.f32.mrb[0].mxu0
      %v1000 = vpop.f32.mrb[0].mxu0
      %v1001 = vadd.f32 %v840, %v1000
      %v1002 = vpop.f32.mrb[0].mxu0
      %1003 = vmatprep.mubr.bf16.mxu0 %v754
      %1004 = vmatmul.mubr.bf16.gmra.mrb[0].mxu0 %v496
      %v1005 = vpop.f32.mrb[0].mxu0
      %v1006 = vadd.f32 %v845, %v1005
      %v1007 = vpop.f32.mrb[0].mxu0
      %v1008 = vpop.f32.mrb[0].mxu0
      %v1009 = vadd.f32 %v848, %v1008
      %v1010 = vpop.f32.mrb[0].mxu0
      %1011 = vmatprep.mubr.bf16.mxu0 %v757
      %1012 = vmatmul.mubr.bf16.gmra.mrb[0].mxu0 %v500
      %v1013 = vpop.f32.mrb[0].mxu0
      %v1014 = vadd.f32 %v853, %v1013
      %v1015 = vpop.f32.mrb[0].mxu0
      %v1016 = vpop.f32.mrb[0].mxu0
      %v1017 = vadd.f32 %v856, %v1016
      %v1018 = vpop.f32.mrb[0].mxu0
      %1019 = vmatprep.mubr.bf16.mxu0 %v760
      %1020 = vmatmul.mubr.bf16.gmra.mrb[0].mxu0 %v504
      %v1021 = vpop.f32.mrb[0].mxu0
      %v1022 = vadd.f32 %v861, %v1021
      %v1023 = vpop.f32.mrb[0].mxu0
      %v1024 = vpop.f32.mrb[0].mxu0
      %v1025 = vadd.f32 %v864, %v1024
      %v1026 = vpop.f32.mrb[0].mxu0
      %1027 = vmatprep.mubr.bf16.mxu0 %v763
      %1028 = vmatmul.mubr.bf16.gmra.mrb[0].mxu0 %v508
      %v1029 = vpop.f32.mrb[0].mxu0
      %v1030 = vadd.f32 %v869, %v1029
      %v1031 = vpop.f32.mrb[0].mxu0
      %v1032 = vpop.f32.mrb[0].mxu0
      %v1033 = vadd.f32 %v872, %v1032
      %v1034 = vpop.f32.mrb[0].mxu0
      %1035 = vmatprep.mubr.bf16.mxu0 %v766
      %1036 = vmatmul.mubr.bf16.gmra.mrb[0].mxu0 %v512
      %v1037 = vpop.f32.mrb[0].mxu0
      %v1038 = vadd.f32 %v877, %v1037
      %v1039 = vpop.f32.mrb[0].mxu0
      %v1040 = vpop.f32.mrb[0].mxu0
      %v1041 = vadd.f32 %v880, %v1040
      %v1042 = vpop.f32.mrb[0].mxu0
      %1043 = vmatprep.mubr.bf16.mxu0 %v769
      %1044 = vmatmul.mubr.bf16.gmra.mrb[0].mxu0 %v516
      %v1045 = vpop.f32.mrb[0].mxu0
      %v1046 = vadd.f32 %v885, %v1045
      %v1047 = vpop.f32.mrb[0].mxu0
      %v1048 = vpop.f32.mrb[0].mxu0
      %v1049 = vadd.f32 %v888, %v1048
      %v1050 = vpop.f32.mrb[0].mxu0
      %1051 = vmatprep.mubr.bf16.mxu0 %v772
      %1052 = vmatmul.mubr.bf16.gmra.mrb[0].mxu0 %v520
      %v1053 = vpop.f32.mrb[0].mxu0
      %v1054 = vadd.f32 %v893, %v1053
      %v1055 = vpop.f32.mrb[0].mxu0
      %v1056 = vpop.f32.mrb[0].mxu0
      %v1057 = vadd.f32 %v896, %v1056
      %v1058 = vpop.f32.mrb[0].mxu0
      %1059 = vmatprep.mubr.bf16.mxu0 %v775
      %1060 = vmatmul.mubr.bf16.gmra.mrb[0].mxu0 %v524
      %v1061 = vpop.f32.mrb[0].mxu0
      %v1062 = vadd.f32 %v901, %v1061
      %v1063 = vpop.f32.mrb[0].mxu0
      %v1064 = vpop.f32.mrb[0].mxu0
      %v1065 = vadd.f32 %v904, %v1064
      %v1066 = vpop.f32.mrb[0].mxu0
      %1067 = vmatprep.mubr.bf16.mxu0 %v778
      %1068 = vmatmul.mubr.bf16.gmra.mrb[0].mxu0 %v528
      %v1069 = vpop.f32.mrb[0].mxu0
      %v1070 = vadd.f32 %v909, %v1069
      %v1071 = vpop.f32.mrb[0].mxu0
      %v1072 = vpop.f32.mrb[0].mxu0
      %v1073 = vadd.f32 %v912, %v1072
      %v1074 = vpop.f32.mrb[0].mxu0
      %1075 = vmatprep.mubr.bf16.mxu0 %v781
      %1076 = vmatmul.mubr.bf16.gmra.mrb[0].mxu0 %v532
      %v1077 = vpop.f32.mrb[0].mxu0
      %v1078 = vadd.f32 %v917, %v1077
      %v1079 = vpop.f32.mrb[0].mxu0
      %v1080 = vpop.f32.mrb[0].mxu0
      %v1081 = vadd.f32 %v920, %v1080
      %v1082 = vpop.f32.mrb[0].mxu0
      %1083 = vmatprep.mubr.bf16.mxu0 %v784
      %1084 = vmatmul.mubr.bf16.gmra.mrb[0].mxu0 %v536
      %v1085 = vpop.f32.mrb[0].mxu0
      %v1086 = vadd.f32 %v925, %v1085
      %v1087 = vpop.f32.mrb[0].mxu0
      %v1088 = vpop.f32.mrb[0].mxu0
      %v1089 = vadd.f32 %v928, %v1088
      %v1090 = vpop.f32.mrb[0].mxu0
      %1091 = vmatprep.mubr.bf16.mxu0 %v787
      %1092 = vmatmul.mubr.bf16.gmra.mrb[0].mxu0 %v540
      %v1093 = vpop.f32.mrb[0].mxu0
      %v1094 = vadd.f32 %v933, %v1093
      %v1095 = vpop.f32.mrb[0].mxu0
      %v1096 = vpop.f32.mrb[0].mxu0
      %v1097 = vadd.f32 %v936, %v1096
      %v1098 = vpop.f32.mrb[0].mxu0
      %1099 = vmatprep.mubr.bf16.mxu0 %v790
      %1100 = vmatmul.mubr.bf16.gmra.mrb[0].mxu0 %v544
      %v1101 = vpop.f32.mrb[0].mxu0
      %v1102 = vadd.f32 %v941, %v1101
      %v1103 = vpop.f32.mrb[0].mxu0
      %v1104 = vpop.f32.mrb[0].mxu0
      %v1105 = vadd.f32 %v944, %v1104
      %v1106 = vpop.f32.mrb[0].mxu0
      %1107 = vmatprep.mubr.bf16.mxu0 %v793
      %1108 = vmatmul.mubr.bf16.gmra.mrb[0].mxu0 %v548
      %v1109 = vpop.f32.mrb[0].mxu0
      %v1110 = vadd.f32 %v949, %v1109
      %v1111 = vpop.f32.mrb[0].mxu0
      %v1112 = vpop.f32.mrb[0].mxu0
      %v1113 = vadd.f32 %v952, %v1112
      %v1114 = vpop.f32.mrb[0].mxu0
      %1115 = vmatprep.mubr.bf16.mxu0 %v796
      %1116 = vmatmul.mubr.bf16.gmra.mrb[0].mxu0 %v552
      %v1117 = vpop.f32.mrb[0].mxu0
      %v1118 = vadd.f32 %v957, %v1117
      %v1119 = vpop.f32.mrb[0].mxu0
      %v1120 = vpop.f32.mrb[0].mxu0
      %v1121 = vadd.f32 %v960, %v1120
      %v1122 = vpop.f32.mrb[0].mxu0
      %1123 = vdwg.mxu0
      %v1124 = vtanh.pop %v998
      %v1125 = vtanh.pop %v1001
      %v1126 = vtanh.pop %v1006
      %v1127 = vtanh.pop %v1009
      %v1128 = vtanh.pop %v1014
      %v1129 = vtanh.pop %v1017
      %v1130 = vtanh.pop %v1022
      %v1131 = vtanh.pop %v1025
      %v1132 = vtanh.pop %v1030
      %v1133 = vtanh.pop %v1033
      %v1134 = vtanh.pop %v1038
      %v1135 = vtanh.pop %v1041
      %v1136 = vtanh.pop %v1046
      %v1137 = vtanh.pop %v1049
      %v1138 = vtanh.pop %v1054
      %v1139 = vtanh.pop %v1057
      %v1140 = vtanh.pop %v1062
      %v1141 = vtanh.pop %v1065
      %v1142 = vtanh.pop %v1070
      %v1143 = vtanh.pop %v1073
      %v1144 = vtanh.pop %v1078
      %v1145 = vtanh.pop %v1081
      %v1146 = vtanh.pop %v1086
      %v1147 = vtanh.pop %v1089
      %v1148 = vtanh.pop %v1094
      %v1149 = vtanh.pop %v1097
      %v1150 = vtanh.pop %v1102
      %v1151 = vtanh.pop %v1105
      %v1152 = vtanh.pop %v1110
      %v1153 = vtanh.pop %v1113
      %v1154 = vtanh.pop %v1118
      %v1155 = vtanh.pop %v1121
      %vm1156 = vcmask 31744
      %1157 = vst.msk [vmem:[%s175] sm:$0xff] %vm1156, %v1124
      %1158 = vst.msk [vmem:[%s175 + $0x8] sm:$0xff] %vm1156, %v1125
      %1159 = vst.msk [vmem:[%s175 + $0x10] sm:$0xff] %vm1156, %v1126
      %1160 = vst.msk [vmem:[%s175 + $0x18] sm:$0xff] %vm1156, %v1127
      %1161 = vst.msk [vmem:[%s175 + $0x20] sm:$0xff] %vm1156, %v1128
      %1162 = vst.msk [vmem:[%s175 + $0x28] sm:$0xff] %vm1156, %v1129
      %1163 = vst.msk [vmem:[%s175 + $0x30] sm:$0xff] %vm1156, %v1130
      %1164 = vst.msk [vmem:[%s175 + $0x38] sm:$0xff] %vm1156, %v1131
      %1165 = vst.msk [vmem:[%s175 + $0x40] sm:$0xff] %vm1156, %v1132
      %1166 = vst.msk [vmem:[%s175 + $0x48] sm:$0xff] %vm1156, %v1133
      %1167 = vst.msk [vmem:[%s175 + $0x50] sm:$0xff] %vm1156, %v1134
      %1168 = vst.msk [vmem:[%s175 + $0x58] sm:$0xff] %vm1156, %v1135
      %1169 = vst.msk [vmem:[%s175 + $0x60] sm:$0xff] %vm1156, %v1136
      %1170 = vst.msk [vmem:[%s175 + $0x68] sm:$0xff] %vm1156, %v1137
      %1171 = vst.msk [vmem:[%s175 + $0x70] sm:$0xff] %vm1156, %v1138
      %1172 = vst.msk [vmem:[%s175 + $0x78] sm:$0xff] %vm1156, %v1139
      %1173 = vst.msk [vmem:[%s175 + $0x80] sm:$0xff] %vm1156, %v1140
      %1174 = vst.msk [vmem:[%s175 + $0x88] sm:$0xff] %vm1156, %v1141
      %1175 = vst.msk [vmem:[%s175 + $0x90] sm:$0xff] %vm1156, %v1142
      %1176 = vst.msk [vmem:[%s175 + $0x98] sm:$0xff] %vm1156, %v1143
      %1177 = vst.msk [vmem:[%s175 + $0xa0] sm:$0xff] %vm1156, %v1144
      %1178 = vst.msk [vmem:[%s175 + $0xa8] sm:$0xff] %vm1156, %v1145
      %1179 = vst.msk [vmem:[%s175 + $0xb0] sm:$0xff] %vm1156, %v1146
      %1180 = vst.msk [vmem:[%s175 + $0xb8] sm:$0xff] %vm1156, %v1147
      %1181 = vst.msk [vmem:[%s175 + $0xc0] sm:$0xff] %vm1156, %v1148
      %1182 = vst.msk [vmem:[%s175 + $0xc8] sm:$0xff] %vm1156, %v1149
      %1183 = vst.msk [vmem:[%s175 + $0xd0] sm:$0xff] %vm1156, %v1150
      %1184 = vst.msk [vmem:[%s175 + $0xd8] sm:$0xff] %vm1156, %v1151
      %1185 = vst.msk [vmem:[%s175 + $0xe0] sm:$0xff] %vm1156, %v1152
      %1186 = vst.msk [vmem:[%s175 + $0xe8] sm:$0xff] %vm1156, %v1153
      %1187 = vst.msk [vmem:[%s175 + $0xf0] sm:$0xff] %vm1156, %v1154
      %1188 = vst.msk [vmem:[%s175 + $0xf8] sm:$0xff] %vm1156, %v1155
      %s1189 = smul.u32 32, %s14
      %p1190 = scmp.lt.s32.totalorder %s1189, 63
      %s1191 = scalar_select %p1190, %s1189, 63
      %s1192 = smul.addr %s1191, 8
      %s1193 = scalar_lea.vmem %s3, %s1192
      // Predicated region
      $region33: #{resnet_generator_forward.49} parent=31 // pred_check
        %p1194 = pneg %p100
      $region34: #{resnet_generator_forward.49} parent=31 // pred_check_branch
        %1196 = sbr.rel (%p1194) target = $region36
      $region35: #{resnet_generator_forward.49} parent=31 // pred_region
        %s1197 = smul.u32 32, %s14
      $region36: #{resnet_generator_forward.49} parent=31 // pred_fallthru
        _
    $region32: #{resnet_generator_forward.49} parent=5 // pred_fallthru
      _
    %p1198 = scmp.le.s32.totalorder 2, %s9
    // Predicated region
    $region37: #{resnet_generator_forward.49} parent=5 // pred_check
      %p1199 = pneg %p1198
    $region38: #{resnet_generator_forward.49} parent=5 // pred_check_branch
      %1201 = sbr.rel (%p1199) target = $region40
    $region39: #{resnet_generator_forward.49} parent=5 // pred_region
      %s1202 = ssub.s32 %s9, 2
      // Predicated region
      $region41: #{resnet_generator_forward.49} parent=39 // pred_check
        %p1203 = pneg %p106
      $region42: #{resnet_generator_forward.49} parent=39 // pred_check_branch
        %1205 = sbr.rel (%p1203) target = $region44
      $region43: #{resnet_generator_forward.49} parent=39 // pred_region
        %s1206 = smul.u32 32, %s15
        %p1207 = scmp.lt.s32.totalorder %s1206, 63
        %s1208 = scalar_select %p1207, %s1206, 63
        %s1209 = smul.addr %s1208, 8
        %s1210 = scalar_lea.vmem %s3, %s1209
      $region44: #{resnet_generator_forward.49} parent=39 // pred_fallthru
        _
    $region40: #{resnet_generator_forward.49} parent=5 // pred_fallthru
      _
  $region6: #{resnet_generator_forward.49} parent=0 // loop_footer
    %s13 = sadd.s32 1, %s9
  $region7: #{resnet_generator_forward.49} parent=0 // loop_footer_branch
    %8 = sbr.rel target = $region3
  $region8: #{resnet_generator_forward.49} parent=0 // loop_exit
    _

</llo_original>
